<compile_context>
chip_gen: v7x
topology: tpu7x:2x2x1
jax: 0.10.0
libtpu: 0.0.40
codegen_flags: <defaults>
</compile_context>

<pallas_src>
import functools

import jax
import jax.numpy as jnp
from jax.experimental import pallas as pl
from jax.experimental.pallas import tpu as pltpu

VIEW_ORDER = ("L-CC", "R-CC", "L-MLO", "R-MLO")
LANES = 128


# ---------------------------------------------------------------------------
# VMEM budget + tile selection
# ---------------------------------------------------------------------------
def _vmem_limit_bytes():
    """Generation-aware VMEM limit: ~3/4 of physical VMEM, capped at 96 MiB."""
    cap = 64 * 1024 * 1024  # conservative default == v7x per-TC physical VMEM
    try:
        cap = int(pltpu.get_tpu_info().vmem_capacity_bytes)
    except Exception:
        pass
    return int(min(cap * 3 // 4, 96 * 1024 * 1024))


def _select_pool_tiles(N, C, H, W, itemsize, vmem_limit):
    """Jointly pick (tn, spatial tile) so 4 views x 2 pipeline buffers + resident
    head weights + accumulators fit under vmem_limit.

    The pool is HBM-bound (1 add per loaded element), so arithmetic intensity
    does not care about tn; DMA efficiency and per-step overhead favor small tn
    and the widest lane tile the budget allows."""
    HW = H * W
    D = 2 * C
    # Output block is (tn, 1): tn must be a multiple of 8 or equal the full N.
    tn = 8 if N % 8 == 0 else N
    weight_bytes = 2 * (2 * D * D + 4 * D) * 4          # w1/b1/w2, x2 pipeline buffers

    if HW % LANES == 0:
        acc_bytes = 4 * tn * C * LANES * 4               # wide f32 accumulators
        input_budget = max(vmem_limit - weight_bytes - acc_bytes - (2 << 20), 4 << 20)
        per_unit = 4 * 2 * tn * C * itemsize             # input bytes per unit of thw
        thw = max(LANES, min(HW, (input_budget // per_unit) // LANES * LANES))
        while HW % thw != 0:                             # must divide HW; 128 always does
            thw -= LANES
        return tn, "lanes", thw

    # Fallback: HW not a multiple of 128 -> tile over H with (tn, C, th, W) blocks.
    acc_bytes = 4 * tn * C * 4
    input_budget = max(vmem_limit - weight_bytes - acc_bytes - (2 << 20), 4 << 20)
    per_unit = 4 * 2 * tn * C * W * itemsize             # input bytes per unit of th
    max_th = max(1, input_budget // per_unit)
    if H % 8 == 0 and max_th >= 8:
        th = min(H, max_th // 8 * 8)
        while H % th != 0:
            th -= 8
    else:
        # TODO(synk): for very large W with H not a multiple of 8, additionally tile W
        # in 128-lane chunks; here a full-H block is assumed to fit the budget.
        th = H
    return tn, "rows", th


# ---------------------------------------------------------------------------
# Fused FC head (fc1 -> ReLU -> fc2 -> sigmoid -> mean) on a finished tile
# ---------------------------------------------------------------------------
def _apply_head(h_views, w1_ref, b1_ref, w2_ref, b2_ref, o_ref):
    """h_views = [h_lcc, h_rcc, h_lmlo, h_rmlo], each a (tn, C) f32 pooled tile."""
    h_lcc, h_rcc, h_lmlo, h_rmlo = h_views
    ys = []
    for p, (hl, hr) in enumerate(((h_lcc, h_rcc), (h_lmlo, h_rmlo))):   # 0=CC, 1=MLO
        # fc1(cat(hl, hr)) == hl @ W1_top + hr @ W1_bot; w1 is pre-split into
        # per-view halves so no in-kernel concat / (tn, 512) temporaries are needed.
        z = (jnp.dot(hl, w1_ref[2 * p + 0], preferred_element_type=jnp.float32)
             + jnp.dot(hr, w1_ref[2 * p + 1], preferred_element_type=jnp.float32)
             + b1_ref[p])
        z = jnp.maximum(z, 0.0)                                          # ReLU
        # fc2 (512 -> 1) as an elementwise mul + lane reduce (once per N tile).
        logit = jnp.sum(z * w2_ref[p], axis=-1, keepdims=True) + b2_ref[p]
        ys.append(jax.nn.sigmoid(logit))                                 # (tn, 1)
    o_ref[...] = ((ys[0] + ys[1]) * 0.5).astype(o_ref.dtype)             # mean over views


# ---------------------------------------------------------------------------
# Kernel, main path: HW % 128 == 0, blocks are (tn, C, thw)
#   grid = (N/tn, HW/thw); the spatial axis is the innermost ("arbitrary")
#   reduction axis -- required for the scratch init/finalize logic below.
# ---------------------------------------------------------------------------
def _pool_head_kernel_lanes(lcc_ref, rcc_ref, lmlo_ref, rmlo_ref,
                            w1_ref, b1_ref, w2_ref, b2_ref, o_ref,
                            a_lcc, a_rcc, a_lmlo, a_rmlo, *, inv_hw):
    s = pl.program_id(1)
    accs = (a_lcc, a_rcc, a_lmlo, a_rmlo)

    @pl.when(s == 0)
    def _init():
        for acc in accs:
            acc[...] = jnp.zeros_like(acc)

    def accumulate(acc, ref):
        # Fold the thw lane axis into a 128-wide accumulator with lane-aligned
        # static slices: pure VPU vreg adds, no XLU cross-lane reduce in the loop.
        k = ref.shape[-1] // LANES
        part = ref[:, :, :LANES].astype(jnp.float32)
        for i in range(1, k):
            part = part + ref[:, :, i * LANES:(i + 1) * LANES].astype(jnp.float32)
        acc[...] += part

    accumulate(a_lcc, lcc_ref)
    accumulate(a_rcc, rcc_ref)
    accumulate(a_lmlo, lmlo_ref)
    accumulate(a_rmlo, rmlo_ref)

    @pl.when(s == pl.num_programs(1) - 1)
    def _finalize():
        # Single 128 -> 1 cross-lane reduce per view, once per N tile, then the head.
        h = [acc[...].sum(axis=-1) * inv_hw for acc in accs]      # (tn, C) each
        _apply_head(h, w1_ref, b1_ref, w2_ref, b2_ref, o_ref)


# ---------------------------------------------------------------------------
# Kernel, fallback path: HW % 128 != 0, blocks are (tn, C, th, W) tiled over H
# ---------------------------------------------------------------------------
def _pool_head_kernel_rows(lcc_ref, rcc_ref, lmlo_ref, rmlo_ref,
                           w1_ref, b1_ref, w2_ref, b2_ref, o_ref,
                           a_lcc, a_rcc, a_lmlo, a_rmlo, *, inv_hw):
    s = pl.program_id(1)
    accs = (a_lcc, a_rcc, a_lmlo, a_rmlo)

    @pl.when(s == 0)
    def _init():
        for acc in accs:
            acc[...] = jnp.zeros_like(acc)

    def accumulate(acc, ref):
        x = ref[...].astype(jnp.float32)                  # (tn, C, th, W)
        # TODO(synk): this per-block XLU reduce only runs on the HW % 128 != 0
        # fallback; the main path keeps cross-lane reduces out of the hot loop.
        acc[...] += x.sum(axis=(2, 3))

    accumulate(a_lcc, lcc_ref)
    accumulate(a_rcc, rcc_ref)
    accumulate(a_lmlo, lmlo_ref)
    accumulate(a_rmlo, rmlo_ref)

    @pl.when(s == pl.num_programs(1) - 1)
    def _finalize():
        h = [acc[...] * inv_hw for acc in accs]           # (tn, C) each
        _apply_head(h, w1_ref, b1_ref, w2_ref, b2_ref, o_ref)


# ---------------------------------------------------------------------------
# Forward: one fused Pallas launch (pool + concat + both heads + mean)
# ---------------------------------------------------------------------------
def view_wise_risk_forward(f_maps, params, *, n_tile=None, hw_tile=None):
    """f_maps: dict view -> (N, C=256, H, W) NCHW feature maps from the backbone.
    params: w1 (2, 512, 512) transposed-vs-torch (in, out) stacked [cc, mlo],
            b1 (2, 1, 512), w2 (2, 1, 512) (torch fc2 weight rows), b2 (2,).
    Returns (N,) risk scores."""
    views = [f_maps[v] for v in VIEW_ORDER]
    N, C, H, W = views[0].shape
    assert C % 8 == 0
    HW = H * W
    D = 2 * C
    itemsize = jnp.dtype(views[0].dtype).itemsize

    # Pad odd batch sizes (> 8) to a multiple of 8 so tn stays small and the
    # (tn, 1) output block stays layout-legal; padded rows are sliced off below.
    n_pad = (-N) % 8 if (N % 8 != 0 and N > 8) else 0
    if n_pad:
        views = [jnp.pad(v, ((0, n_pad), (0, 0), (0, 0), (0, 0))) for v in views]
    Np = N + n_pad

    vmem_limit = _vmem_limit_bytes()
    tn, mode, tile = _select_pool_tiles(Np, C, H, W, itemsize, vmem_limit)
    if n_tile is not None:
        tn = n_tile
    if hw_tile is not None:
        mode, tile = "lanes", hw_tile
    assert Np % tn == 0 and (tn % 8 == 0 or tn == Np)

    # Pre-split fc1 weights into per-view halves: (2, 2C, 2C) -> (4, C, 2C) with
    # order [cc_top, cc_bot, mlo_top, mlo_bot] (a free, metadata-only reshape).
    w1 = params["w1"].reshape(4, C, D)
    b1, w2, b2 = params["b1"], params["w2"], params["b2"]
    assert b1.shape == (2, 1, D) and w2.shape == (2, 1, D) and b2.shape == (2,)

    # Head weights (~2 MiB) are resident VMEM blocks (constant index_map);
    # the two fc2 biases are scalars in SMEM.
    w1_spec = pl.BlockSpec((4, C, D), lambda n, s: (0, 0, 0))
    b1_spec = pl.BlockSpec((2, 1, D), lambda n, s: (0, 0, 0))
    w2_spec = pl.BlockSpec((2, 1, D), lambda n, s: (0, 0, 0))
    b2_spec = pl.BlockSpec(memory_space=pltpu.MemorySpace.SMEM)

    if mode == "lanes":
        thw = tile
        assert HW % thw == 0 and (thw % LANES == 0 or thw == HW)
        # Collapsing contiguous minor dims is a metadata-only reshape of the
        # native NCHW layout (no HBM transpose pass).
        view_args = [v.reshape(Np, C, HW) for v in views]
        view_spec = pl.BlockSpec((tn, C, thw), lambda n, s: (n, 0, s))
        grid = (Np // tn, HW // thw)      # spatial reduction axis MUST stay innermost
        kernel = functools.partial(_pool_head_kernel_lanes, inv_hw=1.0 / HW)
        acc_shape = (tn, C, LANES)
    else:
        th = tile
        assert H % th == 0 and (th % 8 == 0 or th == H)
        view_args = views
        view_spec = pl.BlockSpec((tn, C, th, W), lambda n, s: (n, 0, s, 0))
        grid = (Np // tn, H // th)        # spatial reduction axis MUST stay innermost
        kernel = functools.partial(_pool_head_kernel_rows, inv_hw=1.0 / HW)
        acc_shape = (tn, C)

    out = pl.pallas_call(
        kernel,
        out_shape=jax.ShapeDtypeStruct((Np, 1), jnp.float32),
        grid=grid,
        in_specs=[view_spec] * 4 + [w1_spec, b1_spec, w2_spec, b2_spec],
        out_specs=pl.BlockSpec((tn, 1), lambda n, s: (n, 0)),
        scratch_shapes=[pltpu.VMEM(acc_shape, jnp.float32) for _ in range(4)],
        compiler_params=pltpu.CompilerParams(
            # N tiles are independent (megacore-shardable on v7x); the spatial axis
            # is the reduction and drives the scratch init/accumulate/finalize.
            dimension_semantics=("parallel", "arbitrary"),
            vmem_limit_bytes=vmem_limit,
        ),
    )(*view_args, w1, b1, w2, b2)

    return out[:N, 0]                                               # (N,)


# ---------------------------------------------------------------------------
# Pure-JAX reference for the correctness check
# ---------------------------------------------------------------------------
def _reference_forward(f_maps, params):
    h = {v: jnp.mean(f_maps[v].astype(jnp.float32), axis=(2, 3)) for v in VIEW_ORDER}
    h_cc = jnp.concatenate([h["L-CC"], h["R-CC"]], axis=1)          # (N, 512)
    h_mlo = jnp.concatenate([h["L-MLO"], h["R-MLO"]], axis=1)       # (N, 512)

    def head(hp, w1, b1, w2, b2):
        z = jnp.maximum(hp @ w1 + b1, 0.0)
        return jax.nn.sigmoid(jnp.sum(z * w2, axis=-1, keepdims=True) + b2)

    y_cc = head(h_cc, params["w1"][0], params["b1"][0], params["w2"][0], params["b2"][0])
    y_mlo = head(h_mlo, params["w1"][1], params["b1"][1], params["w2"][1], params["b2"][1])
    return jnp.concatenate([y_cc, y_mlo], axis=1).mean(axis=1)


if __name__ == "__main__":
    key = jax.random.PRNGKey(0)
    kx, k0, k1, k2, k3 = jax.random.split(key, 5)

    # Small shapes consistent with the module: the fc head is hard-wired to
    # 256 channels per view (512 after the per-pair concat).
    N, C, H, W = 2, 256, 16, 16
    D = 2 * C  # 512

    view_keys = jax.random.split(kx, len(VIEW_ORDER))
    f_maps = {
        v: jax.random.normal(view_keys[i], (N, C, H, W), jnp.float32)
        for i, v in enumerate(VIEW_ORDER)
    }

    # Deterministic synthetic parameters. fc1 weights are stored transposed vs
    # torch.nn.Linear (i.e. (in, out)) and stacked [cc, mlo]; fc2 weights are
    # the torch (1, 512) rows; fc2 biases are a (2,) scalar vector (SMEM).
    params = {
        "w1": jax.random.normal(k0, (2, D, D), jnp.float32) / jnp.sqrt(D),
        "b1": jax.random.normal(k1, (2, 1, D), jnp.float32) * 0.01,
        "w2": jax.random.normal(k2, (2, 1, D), jnp.float32) / jnp.sqrt(D),
        "b2": jax.random.normal(k3, (2,), jnp.float32) * 0.01,
    }

    # hw_tile=128 forces two spatial reduction steps over H*W (exercises the
    # init / accumulate / finalize path of the tiled pool + fused head).
    y = jax.block_until_ready(view_wise_risk_forward(f_maps, params, hw_tile=128))
    y_ref = jax.block_until_ready(_reference_forward(f_maps, params))

    assert y.shape == (N,)
    # Tolerance covers XLA-default vs in-kernel MXU matmul precision differences.
    assert jnp.allclose(y, y_ref, atol=1e-3, rtol=1e-3), (y, y_ref)
    print("KERNEL_OK")
</pallas_src>

<mosaic_0001>
module attributes {stable_mosaic.version = 11 : i64} {
  func.func @_pool_head_kernel_lanes(%arg0: i32, %arg1: i32, %arg2: memref<2x256x128xf32, #tpu.memory_space<vmem>>, %arg3: memref<2x256x128xf32, #tpu.memory_space<vmem>>, %arg4: memref<2x256x128xf32, #tpu.memory_space<vmem>>, %arg5: memref<2x256x128xf32, #tpu.memory_space<vmem>>, %arg6: memref<4x256x512xf32, #tpu.memory_space<vmem>>, %arg7: memref<2x1x512xf32, #tpu.memory_space<vmem>>, %arg8: memref<2x1x512xf32, #tpu.memory_space<vmem>>, %arg9: memref<2xf32, #tpu.memory_space<smem>>, %arg10: memref<2x1xf32, #tpu.memory_space<vmem>>, %arg11: memref<2x256x128xf32, #tpu.memory_space<vmem>>, %arg12: memref<2x256x128xf32, #tpu.memory_space<vmem>>, %arg13: memref<2x256x128xf32, #tpu.memory_space<vmem>>, %arg14: memref<2x256x128xf32, #tpu.memory_space<vmem>>) attributes {dimension_semantics = [#tpu.dimension_semantics<parallel>, #tpu.dimension_semantics<arbitrary>], iteration_bounds = array<i64: 1, 2>, scalar_prefetch = 0 : i64, scratch_operands = 4 : i64, tpu.core_type = #tpu.core_type<tc>, window_params = [{transform_indices = @transform_0, window_bounds = array<i64: 2, 256, 128>}, {transform_indices = @transform_1, window_bounds = array<i64: 2, 256, 128>}, {transform_indices = @transform_2, window_bounds = array<i64: 2, 256, 128>}, {transform_indices = @transform_3, window_bounds = array<i64: 2, 256, 128>}, {pipeline_mode = #tpu.pipeline_mode<synchronous>, transform_indices = @transform_4, window_bounds = array<i64: 4, 256, 512>}, {pipeline_mode = #tpu.pipeline_mode<synchronous>, transform_indices = @transform_5, window_bounds = array<i64: 2, 1, 512>}, {pipeline_mode = #tpu.pipeline_mode<synchronous>, transform_indices = @transform_6, window_bounds = array<i64: 2, 1, 512>}, {transform_indices = @transform_7, window_bounds = array<i64: 2>}, {transform_indices = @transform_8, window_bounds = array<i64: 2, 1>}]} {
    %c0_i32 = arith.constant 0 : i32
    %0 = arith.cmpi eq, %arg1, %c0_i32 : i32
    %1 = arith.extui %0 : i1 to i32
    %c0_i32_0 = arith.constant 0 : i32
    %2 = arith.cmpi ne, %1, %c0_i32_0 : i32
    scf.if %2 {
      %cst = arith.constant 0.000000e+00 : f32
      %22 = vector.broadcast %cst : f32 to vector<2x256x128xf32>
      %c0_37 = arith.constant 0 : index
      %c0_38 = arith.constant 0 : index
      %c0_39 = arith.constant 0 : index
      %23 = vector.load %arg11[%c0_37, %c0_38, %c0_39] : memref<2x256x128xf32, #tpu.memory_space<vmem>>, vector<2x256x128xf32>
      tpu.vector_store %arg11[%c0_37, %c0_38, %c0_39], %22 {strides = array<i32>} : memref<2x256x128xf32, #tpu.memory_space<vmem>>, vector<2x256x128xf32>,
      %cst_40 = arith.constant 0.000000e+00 : f32
      %24 = vector.broadcast %cst_40 : f32 to vector<2x256x128xf32>
      %c0_41 = arith.constant 0 : index
      %c0_42 = arith.constant 0 : index
      %c0_43 = arith.constant 0 : index
      %25 = vector.load %arg12[%c0_41, %c0_42, %c0_43] : memref<2x256x128xf32, #tpu.memory_space<vmem>>, vector<2x256x128xf32>
      tpu.vector_store %arg12[%c0_41, %c0_42, %c0_43], %24 {strides = array<i32>} : memref<2x256x128xf32, #tpu.memory_space<vmem>>, vector<2x256x128xf32>,
      %cst_44 = arith.constant 0.000000e+00 : f32
      %26 = vector.broadcast %cst_44 : f32 to vector<2x256x128xf32>
      %c0_45 = arith.constant 0 : index
      %c0_46 = arith.constant 0 : index
      %c0_47 = arith.constant 0 : index
      %27 = vector.load %arg13[%c0_45, %c0_46, %c0_47] : memref<2x256x128xf32, #tpu.memory_space<vmem>>, vector<2x256x128xf32>
      tpu.vector_store %arg13[%c0_45, %c0_46, %c0_47], %26 {strides = array<i32>} : memref<2x256x128xf32, #tpu.memory_space<vmem>>, vector<2x256x128xf32>,
      %cst_48 = arith.constant 0.000000e+00 : f32
      %28 = vector.broadcast %cst_48 : f32 to vector<2x256x128xf32>
      %c0_49 = arith.constant 0 : index
      %c0_50 = arith.constant 0 : index
      %c0_51 = arith.constant 0 : index
      %29 = vector.load %arg14[%c0_49, %c0_50, %c0_51] : memref<2x256x128xf32, #tpu.memory_space<vmem>>, vector<2x256x128xf32>
      tpu.vector_store %arg14[%c0_49, %c0_50, %c0_51], %28 {strides = array<i32>} : memref<2x256x128xf32, #tpu.memory_space<vmem>>, vector<2x256x128xf32>,
    } else {
    }
    %c0 = arith.constant 0 : index
    %c0_1 = arith.constant 0 : index
    %c0_2 = arith.constant 0 : index
    %3 = vector.load %arg2[%c0, %c0_1, %c0_2] : memref<2x256x128xf32, #tpu.memory_space<vmem>>, vector<2x256x128xf32>
    %c0_3 = arith.constant 0 : index
    %c0_4 = arith.constant 0 : index
    %c0_5 = arith.constant 0 : index
    %4 = vector.load %arg11[%c0_3, %c0_4, %c0_5] : memref<2x256x128xf32, #tpu.memory_space<vmem>>, vector<2x256x128xf32>
    %5 = arith.addf %4, %3 : vector<2x256x128xf32>
    %c0_6 = arith.constant 0 : index
    %c0_7 = arith.constant 0 : index
    %c0_8 = arith.constant 0 : index
    %6 = vector.load %arg11[%c0_6, %c0_7, %c0_8] : memref<2x256x128xf32, #tpu.memory_space<vmem>>, vector<2x256x128xf32>
    tpu.vector_store %arg11[%c0_6, %c0_7, %c0_8], %5 {strides = array<i32>} : memref<2x256x128xf32, #tpu.memory_space<vmem>>, vector<2x256x128xf32>,
    %c0_9 = arith.constant 0 : index
    %c0_10 = arith.constant 0 : index
    %c0_11 = arith.constant 0 : index
    %7 = vector.load %arg3[%c0_9, %c0_10, %c0_11] : memref<2x256x128xf32, #tpu.memory_space<vmem>>, vector<2x256x128xf32>
    %c0_12 = arith.constant 0 : index
    %c0_13 = arith.constant 0 : index
    %c0_14 = arith.constant 0 : index
    %8 = vector.load %arg12[%c0_12, %c0_13, %c0_14] : memref<2x256x128xf32, #tpu.memory_space<vmem>>, vector<2x256x128xf32>
    %9 = arith.addf %8, %7 : vector<2x256x128xf32>
    %c0_15 = arith.constant 0 : index
    %c0_16 = arith.constant 0 : index
    %c0_17 = arith.constant 0 : index
    %10 = vector.load %arg12[%c0_15, %c0_16, %c0_17] : memref<2x256x128xf32, #tpu.memory_space<vmem>>, vector<2x256x128xf32>
    tpu.vector_store %arg12[%c0_15, %c0_16, %c0_17], %9 {strides = array<i32>} : memref<2x256x128xf32, #tpu.memory_space<vmem>>, vector<2x256x128xf32>,
    %c0_18 = arith.constant 0 : index
    %c0_19 = arith.constant 0 : index
    %c0_20 = arith.constant 0 : index
    %11 = vector.load %arg4[%c0_18, %c0_19, %c0_20] : memref<2x256x128xf32, #tpu.memory_space<vmem>>, vector<2x256x128xf32>
    %c0_21 = arith.constant 0 : index
    %c0_22 = arith.constant 0 : index
    %c0_23 = arith.constant 0 : index
    %12 = vector.load %arg13[%c0_21, %c0_22, %c0_23] : memref<2x256x128xf32, #tpu.memory_space<vmem>>, vector<2x256x128xf32>
    %13 = arith.addf %12, %11 : vector<2x256x128xf32>
    %c0_24 = arith.constant 0 : index
    %c0_25 = arith.constant 0 : index
    %c0_26 = arith.constant 0 : index
    %14 = vector.load %arg13[%c0_24, %c0_25, %c0_26] : memref<2x256x128xf32, #tpu.memory_space<vmem>>, vector<2x256x128xf32>
    tpu.vector_store %arg13[%c0_24, %c0_25, %c0_26], %13 {strides = array<i32>} : memref<2x256x128xf32, #tpu.memory_space<vmem>>, vector<2x256x128xf32>,
    %c0_27 = arith.constant 0 : index
    %c0_28 = arith.constant 0 : index
    %c0_29 = arith.constant 0 : index
    %15 = vector.load %arg5[%c0_27, %c0_28, %c0_29] : memref<2x256x128xf32, #tpu.memory_space<vmem>>, vector<2x256x128xf32>
    %c0_30 = arith.constant 0 : index
    %c0_31 = arith.constant 0 : index
    %c0_32 = arith.constant 0 : index
    %16 = vector.load %arg14[%c0_30, %c0_31, %c0_32] : memref<2x256x128xf32, #tpu.memory_space<vmem>>, vector<2x256x128xf32>
    %17 = arith.addf %16, %15 : vector<2x256x128xf32>
    %c0_33 = arith.constant 0 : index
    %c0_34 = arith.constant 0 : index
    %c0_35 = arith.constant 0 : index
    %18 = vector.load %arg14[%c0_33, %c0_34, %c0_35] : memref<2x256x128xf32, #tpu.memory_space<vmem>>, vector<2x256x128xf32>
    tpu.vector_store %arg14[%c0_33, %c0_34, %c0_35], %17 {strides = array<i32>} : memref<2x256x128xf32, #tpu.memory_space<vmem>>, vector<2x256x128xf32>,
    %c1_i32 = arith.constant 1 : i32
    %19 = arith.cmpi eq, %arg1, %c1_i32 : i32
    %20 = arith.extui %19 : i1 to i32
    %c0_i32_36 = arith.constant 0 : i32
    %21 = arith.cmpi ne, %20, %c0_i32_36 : i32
    scf.if %21 {
      %c0_37 = arith.constant 0 : index
      %c0_38 = arith.constant 0 : index
      %c0_39 = arith.constant 0 : index
      %22 = vector.load %arg11[%c0_37, %c0_38, %c0_39] : memref<2x256x128xf32, #tpu.memory_space<vmem>>, vector<2x256x128xf32>
      %cst = arith.constant dense<0.000000e+00> : vector<2x256xf32>
      %23 = vector.multi_reduction <add>, %22, %cst [2] : vector<2x256x128xf32> to vector<2x256xf32>
      %cst_40 = arith.constant 3.906250e-03 : f32
      %24 = vector.broadcast %cst_40 : f32 to vector<2x256xf32>
      %25 = arith.mulf %23, %24 : vector<2x256xf32>
      %c0_41 = arith.constant 0 : index
      %c0_42 = arith.constant 0 : index
      %c0_43 = arith.constant 0 : index
      %26 = vector.load %arg12[%c0_41, %c0_42, %c0_43] : memref<2x256x128xf32, #tpu.memory_space<vmem>>, vector<2x256x128xf32>
      %cst_44 = arith.constant dense<0.000000e+00> : vector<2x256xf32>
      %27 = vector.multi_reduction <add>, %26, %cst_44 [2] : vector<2x256x128xf32> to vector<2x256xf32>
      %cst_45 = arith.constant 3.906250e-03 : f32
      %28 = vector.broadcast %cst_45 : f32 to vector<2x256xf32>
      %29 = arith.mulf %27, %28 : vector<2x256xf32>
      %c0_46 = arith.constant 0 : index
      %c0_47 = arith.constant 0 : index
      %c0_48 = arith.constant 0 : index
      %30 = vector.load %arg13[%c0_46, %c0_47, %c0_48] : memref<2x256x128xf32, #tpu.memory_space<vmem>>, vector<2x256x128xf32>
      %cst_49 = arith.constant dense<0.000000e+00> : vector<2x256xf32>
      %31 = vector.multi_reduction <add>, %30, %cst_49 [2] : vector<2x256x128xf32> to vector<2x256xf32>
      %cst_50 = arith.constant 3.906250e-03 : f32
      %32 = vector.broadcast %cst_50 : f32 to vector<2x256xf32>
      %33 = arith.mulf %31, %32 : vector<2x256xf32>
      %c0_51 = arith.constant 0 : index
      %c0_52 = arith.constant 0 : index
      %c0_53 = arith.constant 0 : index
      %34 = vector.load %arg14[%c0_51, %c0_52, %c0_53] : memref<2x256x128xf32, #tpu.memory_space<vmem>>, vector<2x256x128xf32>
      %cst_54 = arith.constant dense<0.000000e+00> : vector<2x256xf32>
      %35 = vector.multi_reduction <add>, %34, %cst_54 [2] : vector<2x256x128xf32> to vector<2x256xf32>
      %cst_55 = arith.constant 3.906250e-03 : f32
      %36 = vector.broadcast %cst_55 : f32 to vector<2x256xf32>
      %37 = arith.mulf %35, %36 : vector<2x256xf32>
      %c0_56 = arith.constant 0 : index
      %c0_57 = arith.constant 0 : index
      %c0_58 = arith.constant 0 : index
      %38 = vector.load %arg6[%c0_56, %c0_57, %c0_58] : memref<4x256x512xf32, #tpu.memory_space<vmem>>, vector<1x256x512xf32>
      %39 = vector.shape_cast %38 : vector<1x256x512xf32> to vector<256x512xf32>
      %cst_59 = arith.constant dense<0.000000e+00> : vector<2x512xf32>
      %40 = tpu.matmul %25, %39, %cst_59 {dimension_numbers = #tpu.dot_dimension_numbers<[1], [0], [0], [1], [0, 0, 1, 1], [], []>} : vector<2x256xf32>, vector<256x512xf32>, vector<2x512xf32> -> vector<2x512xf32>
      %c1 = arith.constant 1 : index
      %c0_60 = arith.constant 0 : index
      %c0_61 = arith.constant 0 : index
      %41 = vector.load %arg6[%c1, %c0_60, %c0_61] : memref<4x256x512xf32, #tpu.memory_space<vmem>>, vector<1x256x512xf32>
      %42 = vector.shape_cast %41 : vector<1x256x512xf32> to vector<256x512xf32>
      %cst_62 = arith.constant dense<0.000000e+00> : vector<2x512xf32>
      %43 = tpu.matmul %29, %42, %cst_62 {dimension_numbers = #tpu.dot_dimension_numbers<[1], [0], [0], [1], [0, 0, 1, 1], [], []>} : vector<2x256xf32>, vector<256x512xf32>, vector<2x512xf32> -> vector<2x512xf32>
      %44 = arith.addf %40, %43 : vector<2x512xf32>
      %c0_63 = arith.constant 0 : index
      %c0_64 = arith.constant 0 : index
      %c0_65 = arith.constant 0 : index
      %45 = vector.load %arg7[%c0_63, %c0_64, %c0_65] : memref<2x1x512xf32, #tpu.memory_space<vmem>>, vector<1x1x512xf32>
      %46 = vector.shape_cast %45 : vector<1x1x512xf32> to vector<1x512xf32>
      %47 = vector.broadcast %46 : vector<1x512xf32> to vector<2x512xf32>
      %48 = arith.addf %44, %47 : vector<2x512xf32>
      %cst_66 = arith.constant 0.000000e+00 : f32
      %49 = vector.broadcast %cst_66 : f32 to vector<2x512xf32>
      %50 = arith.maximumf %48, %49 : vector<2x512xf32>
      %c0_67 = arith.constant 0 : index
      %c0_68 = arith.constant 0 : index
      %c0_69 = arith.constant 0 : index
      %51 = vector.load %arg8[%c0_67, %c0_68, %c0_69] : memref<2x1x512xf32, #tpu.memory_space<vmem>>, vector<1x1x512xf32>
      %52 = vector.shape_cast %51 : vector<1x1x512xf32> to vector<1x512xf32>
      %53 = vector.broadcast %52 : vector<1x512xf32> to vector<2x512xf32>
      %54 = arith.mulf %50, %53 : vector<2x512xf32>
      %cst_70 = arith.constant dense<0.000000e+00> : vector<2xf32>
      %55 = vector.multi_reduction <add>, %54, %cst_70 [1] : vector<2x512xf32> to vector<2xf32>
      %56 = vector.shape_cast %55 : vector<2xf32> to vector<2x1xf32>
      %c0_71 = arith.constant 0 : index
      %57 = memref.load %arg9[%c0_71] : memref<2xf32, #tpu.memory_space<smem>>
      %58 = vector.broadcast %57 : f32 to vector<2x1xf32>
      %59 = arith.addf %56, %58 : vector<2x1xf32>
      %60 = arith.negf %59 : vector<2x1xf32>
      %61 = math.exp %60 : vector<2x1xf32>
      %cst_72 = arith.constant 1.000000e+00 : f32
      %62 = vector.broadcast %cst_72 : f32 to vector<2x1xf32>
      %63 = arith.addf %62, %61 : vector<2x1xf32>
      %64 = arith.divf %62, %63 : vector<2x1xf32>
      %c2 = arith.constant 2 : index
      %c0_73 = arith.constant 0 : index
      %c0_74 = arith.constant 0 : index
      %65 = vector.load %arg6[%c2, %c0_73, %c0_74] : memref<4x256x512xf32, #tpu.memory_space<vmem>>, vector<1x256x512xf32>
      %66 = vector.shape_cast %65 : vector<1x256x512xf32> to vector<256x512xf32>
      %cst_75 = arith.constant dense<0.000000e+00> : vector<2x512xf32>
      %67 = tpu.matmul %33, %66, %cst_75 {dimension_numbers = #tpu.dot_dimension_numbers<[1], [0], [0], [1], [0, 0, 1, 1], [], []>} : vector<2x256xf32>, vector<256x512xf32>, vector<2x512xf32> -> vector<2x512xf32>
      %c3 = arith.constant 3 : index
      %c0_76 = arith.constant 0 : index
      %c0_77 = arith.constant 0 : index
      %68 = vector.load %arg6[%c3, %c0_76, %c0_77] : memref<4x256x512xf32, #tpu.memory_space<vmem>>, vector<1x256x512xf32>
      %69 = vector.shape_cast %68 : vector<1x256x512xf32> to vector<256x512xf32>
      %cst_78 = arith.constant dense<0.000000e+00> : vector<2x512xf32>
      %70 = tpu.matmul %37, %69, %cst_78 {dimension_numbers = #tpu.dot_dimension_numbers<[1], [0], [0], [1], [0, 0, 1, 1], [], []>} : vector<2x256xf32>, vector<256x512xf32>, vector<2x512xf32> -> vector<2x512xf32>
      %71 = arith.addf %67, %70 : vector<2x512xf32>
      %c1_79 = arith.constant 1 : index
      %c0_80 = arith.constant 0 : index
      %c0_81 = arith.constant 0 : index
      %72 = vector.load %arg7[%c1_79, %c0_80, %c0_81] : memref<2x1x512xf32, #tpu.memory_space<vmem>>, vector<1x1x512xf32>
      %73 = vector.shape_cast %72 : vector<1x1x512xf32> to vector<1x512xf32>
      %74 = vector.broadcast %73 : vector<1x512xf32> to vector<2x512xf32>
      %75 = arith.addf %71, %74 : vector<2x512xf32>
      %cst_82 = arith.constant 0.000000e+00 : f32
      %76 = vector.broadcast %cst_82 : f32 to vector<2x512xf32>
      %77 = arith.maximumf %75, %76 : vector<2x512xf32>
      %c1_83 = arith.constant 1 : index
      %c0_84 = arith.constant 0 : index
      %c0_85 = arith.constant 0 : index
      %78 = vector.load %arg8[%c1_83, %c0_84, %c0_85] : memref<2x1x512xf32, #tpu.memory_space<vmem>>, vector<1x1x512xf32>
      %79 = vector.shape_cast %78 : vector<1x1x512xf32> to vector<1x512xf32>
      %80 = vector.broadcast %79 : vector<1x512xf32> to vector<2x512xf32>
      %81 = arith.mulf %77, %80 : vector<2x512xf32>
      %cst_86 = arith.constant dense<0.000000e+00> : vector<2xf32>
      %82 = vector.multi_reduction <add>, %81, %cst_86 [1] : vector<2x512xf32> to vector<2xf32>
      %83 = vector.shape_cast %82 : vector<2xf32> to vector<2x1xf32>
      %c1_87 = arith.constant 1 : index
      %84 = memref.load %arg9[%c1_87] : memref<2xf32, #tpu.memory_space<smem>>
      %85 = vector.broadcast %84 : f32 to vector<2x1xf32>
      %86 = arith.addf %83, %85 : vector<2x1xf32>
      %87 = arith.negf %86 : vector<2x1xf32>
      %88 = math.exp %87 : vector<2x1xf32>
      %cst_88 = arith.constant 1.000000e+00 : f32
      %89 = vector.broadcast %cst_88 : f32 to vector<2x1xf32>
      %90 = arith.addf %89, %88 : vector<2x1xf32>
      %91 = arith.divf %89, %90 : vector<2x1xf32>
      %92 = arith.addf %64, %91 : vector<2x1xf32>
      %cst_89 = arith.constant 5.000000e-01 : f32
      %93 = vector.broadcast %cst_89 : f32 to vector<2x1xf32>
      %94 = arith.mulf %92, %93 : vector<2x1xf32>
      %c0_90 = arith.constant 0 : index
      %c0_91 = arith.constant 0 : index
      %95 = vector.load %arg10[%c0_90, %c0_91] : memref<2x1xf32, #tpu.memory_space<vmem>>, vector<2x1xf32>
      tpu.vector_store %arg10[%c0_90, %c0_91], %94 {strides = array<i32>} : memref<2x1xf32, #tpu.memory_space<vmem>>, vector<2x1xf32>,
    } else {
    }
    return
  }
  func.func @transform_0(%arg0: i32, %arg1: i32) -> (i32, i32, i32) {
    %c0_i32 = arith.constant 0 : i32
    %c0_i32_0 = arith.constant 0 : i32
    return %arg0, %c0_i32, %arg1 : i32, i32, i32
  }
  func.func @transform_1(%arg0: i32, %arg1: i32) -> (i32, i32, i32) {
    %c0_i32 = arith.constant 0 : i32
    %c0_i32_0 = arith.constant 0 : i32
    return %arg0, %c0_i32, %arg1 : i32, i32, i32
  }
  func.func @transform_2(%arg0: i32, %arg1: i32) -> (i32, i32, i32) {
    %c0_i32 = arith.constant 0 : i32
    %c0_i32_0 = arith.constant 0 : i32
    return %arg0, %c0_i32, %arg1 : i32, i32, i32
  }
  func.func @transform_3(%arg0: i32, %arg1: i32) -> (i32, i32, i32) {
    %c0_i32 = arith.constant 0 : i32
    %c0_i32_0 = arith.constant 0 : i32
    return %arg0, %c0_i32, %arg1 : i32, i32, i32
  }
  func.func @transform_4(%arg0: i32, %arg1: i32) -> (i32, i32, i32) {
    %c0_i32 = arith.constant 0 : i32
    %c0_i32_0 = arith.constant 0 : i32
    %c0_i32_1 = arith.constant 0 : i32
    %c0_i32_2 = arith.constant 0 : i32
    return %c0_i32, %c0_i32_0, %c0_i32_1 : i32, i32, i32
  }
  func.func @transform_5(%arg0: i32, %arg1: i32) -> (i32, i32, i32) {
    %c0_i32 = arith.constant 0 : i32
    %c0_i32_0 = arith.constant 0 : i32
    %c0_i32_1 = arith.constant 0 : i32
    %c0_i32_2 = arith.constant 0 : i32
    return %c0_i32, %c0_i32_0, %c0_i32_1 : i32, i32, i32
  }
  func.func @transform_6(%arg0: i32, %arg1: i32) -> (i32, i32, i32) {
    %c0_i32 = arith.constant 0 : i32
    %c0_i32_0 = arith.constant 0 : i32
    %c0_i32_1 = arith.constant 0 : i32
    %c0_i32_2 = arith.constant 0 : i32
    return %c0_i32, %c0_i32_0, %c0_i32_1 : i32, i32, i32
  }
  func.func @transform_7(%arg0: i32, %arg1: i32) -> i32 {
    %c0_i32 = arith.constant 0 : i32
    %c0_i32_0 = arith.constant 0 : i32
    return %c0_i32 : i32
  }
  func.func @transform_8(%arg0: i32, %arg1: i32) -> (i32, i32) {
    %c0_i32 = arith.constant 0 : i32
    %c0_i32_0 = arith.constant 0 : i32
    return %arg0, %c0_i32 : i32, i32
  }
}

</mosaic_0001>

<llo_original>
// kernel: tpu_custom_call.1
$region0: #{tpu_custom_call.1}
  #allocation0 [shape = 'u32[]', space=smem, size = 0x4, offset = 0x4, fixed_abs, tag = 'smem constant byte address 0x4 - core index']
  #allocation1 [shape = 'u32[144,128]{1,0:T(1,128)}', space=vmem, size = 0x12000, scoped, tag = 'internal scratch']
  #allocation2 [shape = 'f32[2,256,128]{2,1,0:T(8,128)}', space=vmem, size = 0x40000, scoped, tag = 'scratch operand']
  #allocation3 [shape = 'f32[2,256,128]{2,1,0:T(8,128)}', space=vmem, size = 0x40000, scoped, tag = 'scratch operand']
  #allocation4 [shape = 'f32[2,256,128]{2,1,0:T(8,128)}', space=vmem, size = 0x40000, scoped, tag = 'scratch operand']
  #allocation5 [shape = 'f32[2,256,128]{2,1,0:T(8,128)}', space=vmem, size = 0x40000, scoped, tag = 'scratch operand']
  %s0 = inlined_call_operand.hbm [shape: f32[2,256,256], index: 0, kind: input, shape index: {}]
  %s1 = inlined_call_operand.hbm [shape: f32[2,256,256], index: 1, kind: input, shape index: {}]
  %s2 = inlined_call_operand.hbm [shape: f32[2,256,256], index: 2, kind: input, shape index: {}]
  %s3 = inlined_call_operand.hbm [shape: f32[2,256,256], index: 3, kind: input, shape index: {}]
  %s4 = inlined_call_operand.hbm [shape: f32[4,256,512], index: 4, kind: input, shape index: {}]
  %s5 = inlined_call_operand.hbm [shape: f32[2,1,512], index: 5, kind: input, shape index: {}]
  %s6 = inlined_call_operand.hbm [shape: f32[2,1,512], index: 6, kind: input, shape index: {}]
  %s7 = inlined_call_operand.hbm [shape: f32[2], index: 7, kind: input, shape index: {}]
  %s8 = inlined_call_operand.vmem [shape: f32[2,1], index: 8, kind: output, shape index: {}]
  %s9 = sld [smem:[#allocation0]]
  $region105: #{tpu_custom_call.1} parent=0
    _
  %s11 = ssub.s32 1, %s9
  %s12 = scalar_select 0, %s11, %s9
  $region1: #{tpu_custom_call.1} parent=0
    #allocation6 [shape = 'u8[524288]{0}', space=vmem, size = 0x80000, scoped, tag = 'input window, operand 0']
    #allocation7 [shape = 's32[2]{0}', space=sflag, size = 0x8, scoped, tag = 'scoped memory for tpu_custom_call.1']
    #allocation8 [shape = 's32[2]{0}', space=sflag, size = 0x8, scoped, tag = 'scoped memory for tpu_custom_call.1']
    #allocation9 [shape = 'u8[524288]{0}', space=vmem, size = 0x80000, scoped, tag = 'input window, operand 1']
    #allocation10 [shape = 's32[2]{0}', space=sflag, size = 0x8, scoped, tag = 'scoped memory for tpu_custom_call.1']
    #allocation11 [shape = 'u8[524288]{0}', space=vmem, size = 0x80000, scoped, tag = 'input window, operand 2']
    #allocation12 [shape = 'u8[524288]{0}', space=vmem, size = 0x80000, scoped, tag = 'input window, operand 3']
    #allocation13 [shape = 's32[2]{0}', space=sflag, size = 0x8, scoped, tag = 'scoped memory for tpu_custom_call.1']
    #allocation14 [shape = 'u8[2097152]{0}', space=vmem, size = 0x200000, scoped, tag = 'input window, operand 4, single buffered']
    #allocation15 [shape = 'u8[4096]{0}', space=vmem, size = 0x1000, scoped, tag = 'input window, operand 5, single buffered']
    #allocation16 [shape = 's32[1]{0}', space=sflag, size = 0x4, scoped, tag = 'scoped memory for tpu_custom_call.1']
    #allocation17 [shape = 'u8[4096]{0}', space=vmem, size = 0x1000, scoped, tag = 'input window, operand 6, single buffered']
    #allocation18 [shape = 'u8[512]{0}', space=smem, size = 0x200, scoped, tag = 'input window, operand 7, single buffered']
    %13 = vsyncpa [#allocation7], 0
    %s14 = scalar_lea.sflag [#allocation7], 1
    %15 = vsyncpa %s14, 0
    %16 = vsyncpa [#allocation10], 0
    %s17 = scalar_lea.sflag [#allocation10], 1
    %18 = vsyncpa %s17, 0
    %19 = vsyncpa [#allocation13], 0
    %s20 = scalar_lea.sflag [#allocation13], 1
    %21 = vsyncpa %s20, 0
    %22 = vsyncpa [#allocation16], 0
    %23 = vsyncpa [#allocation8], 0
    loop: start=0, step=1, limit=4
    $region2: #{tpu_custom_call.1} parent=1 // loop_pre_header
      _
    $region3: #{tpu_custom_call.1} parent=1 // loop_header
      %s25 = sphi 0, %s29
      %p26 = scmp.ge.s32.totalorder %s25, 4
      %s32 = sphi 0, %s44
      %s33 = sphi 0, %s40
      %s34 = sphi 0, %s32
      %s35 = sphi 0, %s33
      %s36 = sphi 0, %s34
      %s37 = sphi 0, %s35
      %s49 = sphi 0, %s51
      %s52 = sphi 0, %s49
      %s53 = sphi 0, %s52
      %s69 = sphi 0, %s53
      %s77 = sphi 0, %s79
      %s80 = sphi 0, %s77
      %s81 = sphi 0, %s80
      %s97 = sphi 0, %s81
      %s105 = sphi 0, %s107
      %s108 = sphi 0, %s105
      %s109 = sphi 0, %s108
      %s125 = sphi 0, %s109
      %s133 = sphi 0, %s135
      %s136 = sphi 0, %s133
      %s137 = sphi 0, %s136
      %s153 = sphi 0, %s137
      %s157 = sphi 0, %s157
      %s159 = sphi 0, %s157
      %s160 = sphi 0, %s159
      %s174 = sphi 0, %s160
      %s178 = sphi 0, %s178
      %s180 = sphi 0, %s178
      %s181 = sphi 0, %s180
      %s195 = sphi 0, %s181
      %s199 = sphi 0, %s199
      %s201 = sphi 0, %s199
      %s202 = sphi 0, %s201
      %s216 = sphi 0, %s202
      %s220 = sphi 0, %s220
      %s222 = sphi 0, %s220
      %s223 = sphi 0, %s222
      %s237 = sphi 0, %s223
      %s243 = sphi 0, %s245
      %s246 = sphi 0, %s243
      %s247 = sphi 0, %s246
      %s263 = sphi 0, %s247
    $region4: #{tpu_custom_call.1} parent=1 // loop_header_branch
      %28 = sbr.rel (%p26) target = $region8
    $region5: #{tpu_custom_call.1} parent=1 // loop_body
      %s30 = ssub.s32 %s25, 1
      %s31 = ssub.s32 %s25, 2
      %s38 = sadd.s32 1, %s33
      %p39 = scmp.ge.s32.totalorder %s38, 2
      %s40 = scalar_select %p39, 0, %s38
      %s41 = sadd.s32 1, %s32
      %s42 = scalar_select %p39, %s41, %s32
      %p43 = scmp.ge.s32.totalorder %s42, 1
      %s44 = scalar_select %p43, 0, %s42
      %s45 = ssub.s32 %s32, %s44
      %s46 = ssub.s32 %s33, %s40
      %s47 = sor.u32 %s45, %s46
      %p48 = scmp.eq.s32.totalorder %s47, 0
      %s50 = sadd.s32 %s49, 1
      %s51 = scalar_select %p48, %s49, %s50
      %p54 = pneg %p48
      %p55 = scmp.eq.s32.totalorder %s25, 1
      %p56 = por %p54, %p55
      %p57 = scmp.ne.s32.totalorder %s49, %s52
      %p58 = scmp.eq.s32.totalorder %s25, 0
      %p59 = por %p57, %p58
      %p60 = scmp.ne.s32.totalorder %s49, %s52
      %p61 = scmp.eq.s32.totalorder %s30, 1
      %p62 = por %p60, %p61
      %p63 = scmp.ne.s32.totalorder %s52, %s53
      %p64 = scmp.eq.s32.totalorder %s30, 0
      %p65 = por %p63, %p64
      %p66 = scmp.ne.s32.totalorder %s52, %s53
      %p67 = scmp.eq.s32.totalorder %s31, 1
      %p68 = por %p66, %p67
      %p70 = scmp.ne.s32.totalorder %s53, %s69
      %p71 = scmp.eq.s32.totalorder %s31, 0
      %p72 = por %p70, %p71
      %s73 = ssub.s32 %s32, %s44
      %s74 = ssub.s32 %s33, %s40
      %s75 = sor.u32 %s73, %s74
      %p76 = scmp.eq.s32.totalorder %s75, 0
      %s78 = sadd.s32 %s77, 1
      %s79 = scalar_select %p76, %s77, %s78
      %p82 = pneg %p76
      %p83 = scmp.eq.s32.totalorder %s25, 1
      %p84 = por %p82, %p83
      %p85 = scmp.ne.s32.totalorder %s77, %s80
      %p86 = scmp.eq.s32.totalorder %s25, 0
      %p87 = por %p85, %p86
      %p88 = scmp.ne.s32.totalorder %s77, %s80
      %p89 = scmp.eq.s32.totalorder %s30, 1
      %p90 = por %p88, %p89
      %p91 = scmp.ne.s32.totalorder %s80, %s81
      %p92 = scmp.eq.s32.totalorder %s30, 0
      %p93 = por %p91, %p92
      %p94 = scmp.ne.s32.totalorder %s80, %s81
      %p95 = scmp.eq.s32.totalorder %s31, 1
      %p96 = por %p94, %p95
      %p98 = scmp.ne.s32.totalorder %s81, %s97
      %p99 = scmp.eq.s32.totalorder %s31, 0
      %p100 = por %p98, %p99
      %s101 = ssub.s32 %s32, %s44
      %s102 = ssub.s32 %s33, %s40
      %s103 = sor.u32 %s101, %s102
      %p104 = scmp.eq.s32.totalorder %s103, 0
      %s106 = sadd.s32 %s105, 1
      %s107 = scalar_select %p104, %s105, %s106
      %p110 = pneg %p104
      %p111 = scmp.eq.s32.totalorder %s25, 1
      %p112 = por %p110, %p111
      %p113 = scmp.ne.s32.totalorder %s105, %s108
      %p114 = scmp.eq.s32.totalorder %s25, 0
      %p115 = por %p113, %p114
      %p116 = scmp.ne.s32.totalorder %s105, %s108
      %p117 = scmp.eq.s32.totalorder %s30, 1
      %p118 = por %p116, %p117
      %p119 = scmp.ne.s32.totalorder %s108, %s109
      %p120 = scmp.eq.s32.totalorder %s30, 0
      %p121 = por %p119, %p120
      %p122 = scmp.ne.s32.totalorder %s108, %s109
      %p123 = scmp.eq.s32.totalorder %s31, 1
      %p124 = por %p122, %p123
      %p126 = scmp.ne.s32.totalorder %s109, %s125
      %p127 = scmp.eq.s32.totalorder %s31, 0
      %p128 = por %p126, %p127
      %s129 = ssub.s32 %s32, %s44
      %s130 = ssub.s32 %s33, %s40
      %s131 = sor.u32 %s129, %s130
      %p132 = scmp.eq.s32.totalorder %s131, 0
      %s134 = sadd.s32 %s133, 1
      %s135 = scalar_select %p132, %s133, %s134
      %p138 = pneg %p132
      %p139 = scmp.eq.s32.totalorder %s25, 1
      %p140 = por %p138, %p139
      %p141 = scmp.ne.s32.totalorder %s133, %s136
      %p142 = scmp.eq.s32.totalorder %s25, 0
      %p143 = por %p141, %p142
      %p144 = scmp.ne.s32.totalorder %s133, %s136
      %p145 = scmp.eq.s32.totalorder %s30, 1
      %p146 = por %p144, %p145
      %p147 = scmp.ne.s32.totalorder %s136, %s137
      %p148 = scmp.eq.s32.totalorder %s30, 0
      %p149 = por %p147, %p148
      %p150 = scmp.ne.s32.totalorder %s136, %s137
      %p151 = scmp.eq.s32.totalorder %s31, 1
      %p152 = por %p150, %p151
      %p154 = scmp.ne.s32.totalorder %s137, %s153
      %p155 = scmp.eq.s32.totalorder %s31, 0
      %p156 = por %p154, %p155
      %s158 = sadd.s32 %s157, 1
      %p161 = scmp.eq.s32.totalorder %s25, 1
      %p162 = scmp.ne.s32.totalorder %s157, %s159
      %p163 = scmp.eq.s32.totalorder %s25, 0
      %p164 = por %p162, %p163
      %p165 = scmp.ne.s32.totalorder %s157, %s159
      %p166 = scmp.eq.s32.totalorder %s30, 1
      %p167 = por %p165, %p166
      %p168 = scmp.ne.s32.totalorder %s159, %s160
      %p169 = scmp.eq.s32.totalorder %s30, 0
      %p170 = por %p168, %p169
      %p171 = scmp.ne.s32.totalorder %s159, %s160
      %p172 = scmp.eq.s32.totalorder %s31, 1
      %p173 = por %p171, %p172
      %p175 = scmp.ne.s32.totalorder %s160, %s174
      %p176 = scmp.eq.s32.totalorder %s31, 0
      %p177 = por %p175, %p176
      %s179 = sadd.s32 %s178, 1
      %p182 = scmp.eq.s32.totalorder %s25, 1
      %p183 = scmp.ne.s32.totalorder %s178, %s180
      %p184 = scmp.eq.s32.totalorder %s25, 0
      %p185 = por %p183, %p184
      %p186 = scmp.ne.s32.totalorder %s178, %s180
      %p187 = scmp.eq.s32.totalorder %s30, 1
      %p188 = por %p186, %p187
      %p189 = scmp.ne.s32.totalorder %s180, %s181
      %p190 = scmp.eq.s32.totalorder %s30, 0
      %p191 = por %p189, %p190
      %p192 = scmp.ne.s32.totalorder %s180, %s181
      %p193 = scmp.eq.s32.totalorder %s31, 1
      %p194 = por %p192, %p193
      %p196 = scmp.ne.s32.totalorder %s181, %s195
      %p197 = scmp.eq.s32.totalorder %s31, 0
      %p198 = por %p196, %p197
      %s200 = sadd.s32 %s199, 1
      %p203 = scmp.eq.s32.totalorder %s25, 1
      %p204 = scmp.ne.s32.totalorder %s199, %s201
      %p205 = scmp.eq.s32.totalorder %s25, 0
      %p206 = por %p204, %p205
      %p207 = scmp.ne.s32.totalorder %s199, %s201
      %p208 = scmp.eq.s32.totalorder %s30, 1
      %p209 = por %p207, %p208
      %p210 = scmp.ne.s32.totalorder %s201, %s202
      %p211 = scmp.eq.s32.totalorder %s30, 0
      %p212 = por %p210, %p211
      %p213 = scmp.ne.s32.totalorder %s201, %s202
      %p214 = scmp.eq.s32.totalorder %s31, 1
      %p215 = por %p213, %p214
      %p217 = scmp.ne.s32.totalorder %s202, %s216
      %p218 = scmp.eq.s32.totalorder %s31, 0
      %p219 = por %p217, %p218
      %s221 = sadd.s32 %s220, 1
      %p224 = scmp.eq.s32.totalorder %s25, 1
      %p225 = scmp.ne.s32.totalorder %s220, %s222
      %p226 = scmp.eq.s32.totalorder %s25, 0
      %p227 = por %p225, %p226
      %p228 = scmp.ne.s32.totalorder %s220, %s222
      %p229 = scmp.eq.s32.totalorder %s30, 1
      %p230 = por %p228, %p229
      %p231 = scmp.ne.s32.totalorder %s222, %s223
      %p232 = scmp.eq.s32.totalorder %s30, 0
      %p233 = por %p231, %p232
      %p234 = scmp.ne.s32.totalorder %s222, %s223
      %p235 = scmp.eq.s32.totalorder %s31, 1
      %p236 = por %p234, %p235
      %p238 = scmp.ne.s32.totalorder %s223, %s237
      %p239 = scmp.eq.s32.totalorder %s31, 0
      %p240 = por %p238, %p239
      %s241 = ssub.s32 %s32, %s44
      %p242 = scmp.eq.s32.totalorder %s241, 0
      %s244 = sadd.s32 %s243, 1
      %s245 = scalar_select %p242, %s243, %s244
      %p248 = pneg %p242
      %p249 = scmp.eq.s32.totalorder %s25, 1
      %p250 = por %p248, %p249
      %p251 = scmp.ne.s32.totalorder %s243, %s246
      %p252 = scmp.eq.s32.totalorder %s25, 0
      %p253 = por %p251, %p252
      %p254 = scmp.ne.s32.totalorder %s243, %s246
      %p255 = scmp.eq.s32.totalorder %s30, 1
      %p256 = por %p254, %p255
      %p257 = scmp.ne.s32.totalorder %s246, %s247
      %p258 = scmp.eq.s32.totalorder %s30, 0
      %p259 = por %p257, %p258
      %p260 = scmp.ne.s32.totalorder %s246, %s247
      %p261 = scmp.eq.s32.totalorder %s31, 1
      %p262 = por %p260, %p261
      %p264 = scmp.ne.s32.totalorder %s247, %s263
      %p265 = scmp.eq.s32.totalorder %s31, 0
      %p266 = por %p264, %p265
      %p267 = scmp.le.s32.totalorder 1, %s25
      %p268 = scmp.lt.s32.totalorder %s25, 3
      %p269 = pnand %p267, %p268
      %p270 = pneg %p269
      // Predicated region
      $region9: #{tpu_custom_call.1} parent=5 // pred_check
        _
      $region10: #{tpu_custom_call.1} parent=5 // pred_check_branch
        %272 = sbr.rel (%p269) target = $region12
      $region11: #{tpu_custom_call.1} parent=5 // pred_region
        %s273 = ssub.s32 %s25, 1
        // Predicated region
        $region13: #{tpu_custom_call.1} parent=11 // pred_check
          %p274 = pneg %p170
        $region14: #{tpu_custom_call.1} parent=11 // pred_check_branch
          %276 = sbr.rel (%p274) target = $region16
        $region15: #{tpu_custom_call.1} parent=11 // pred_region
          %s278 = ssub.s32 65536, 65536
          %279 = vsyncadd [#allocation13], %s278
          %s280 = sshll.u32 [#allocation14], 4
          %s281 = int_to_ptr.vmem [resolvable:$true] %s280
          %286 = dma.hbm_to_vmem [thread:$0]  %s4, 65536, %s281, [#allocation13], 512, 512, 32
        $region16: #{tpu_custom_call.1} parent=11 // pred_fallthru
          _
        // Predicated region
        $region17: #{tpu_custom_call.1} parent=11 // pred_check
          %p287 = pneg %p191
        $region18: #{tpu_custom_call.1} parent=11 // pred_check_branch
          %289 = sbr.rel (%p287) target = $region20
        $region19: #{tpu_custom_call.1} parent=11 // pred_region
          %s291 = ssub.s32 128, 128
          %292 = vsyncadd [#allocation16], %s291
          %s293 = sshll.u32 [#allocation15], 4
          %s294 = int_to_ptr.vmem [resolvable:$true] %s293
          %299 = dma.hbm_to_vmem [thread:$0]  %s5, 128, %s294, [#allocation16], 64, 64, 4
        $region20: #{tpu_custom_call.1} parent=11 // pred_fallthru
          _
        // Predicated region
        $region21: #{tpu_custom_call.1} parent=11 // pred_check
          %p300 = pneg %p212
        $region22: #{tpu_custom_call.1} parent=11 // pred_check_branch
          %302 = sbr.rel (%p300) target = $region24
        $region23: #{tpu_custom_call.1} parent=11 // pred_region
          %s304 = ssub.s32 128, 128
          %305 = vsyncadd [#allocation16], %s304
          %s306 = sshll.u32 [#allocation17], 4
          %s307 = int_to_ptr.vmem [resolvable:$true] %s306
          %312 = dma.hbm_to_vmem [thread:$0]  %s6, 128, %s307, [#allocation16], 64, 64, 4
        $region24: #{tpu_custom_call.1} parent=11 // pred_fallthru
          _
        // Predicated region
        $region25: #{tpu_custom_call.1} parent=11 // pred_check
          %p313 = pneg %p233
        $region26: #{tpu_custom_call.1} parent=11 // pred_check_branch
          %315 = sbr.rel (%p313) target = $region28
        $region27: #{tpu_custom_call.1} parent=11 // pred_region
          %s317 = ssub.s32 16, 16
          %318 = vsyncadd [#allocation8], %s317
          %321 = dma.hbm_to_smem %s7, 16, [#allocation18], [#allocation8]
        $region28: #{tpu_custom_call.1} parent=11 // pred_fallthru
          _
      $region12: #{tpu_custom_call.1} parent=5 // pred_fallthru
        _
      %p322 = scmp.lt.s32.totalorder %s25, 2
      // Predicated region
      $region29: #{tpu_custom_call.1} parent=5 // pred_check
        %p323 = pneg %p322
      $region30: #{tpu_custom_call.1} parent=5 // pred_check_branch
        %325 = sbr.rel (%p323) target = $region32
      $region31: #{tpu_custom_call.1} parent=5 // pred_region
        // Predicated region
        $region33: #{tpu_custom_call.1} parent=31 // pred_check
          %p326 = pneg %p59
        $region34: #{tpu_custom_call.1} parent=31 // pred_check_branch
          %328 = sbr.rel (%p326) target = $region36
        $region35: #{tpu_custom_call.1} parent=31 // pred_region
          %s329 = sand.u32 %s49, 1
          %s330 = scalar_lea.sflag [#allocation7], %s329
          %s331 = sand.u32 %s49, 1
          %s332 = smul.addr %s331, 512
          %s333 = scalar_lea.vmem [#allocation6], %s332
          %s334 = smul.u32 2, %s32
          %s336 = ssub.s32 8192, 8192
          %337 = vsyncadd %s330, %s336
          %s338 = smul.addr %s334, 64
          %s339 = sadd.s32 %s33, %s338
          %s340 = smul.addr %s339, 128
          %s341 = scalar_lea.hbm %s0, %s340
          %s342 = sshll.u32 %s333, 4
          %s343 = int_to_ptr.vmem [resolvable:$true] %s342
          %348 = dma.hbm_to_vmem [thread:$0]  %s341, 8192, %s343, %s330, 256, 128, 8
        $region36: #{tpu_custom_call.1} parent=31 // pred_fallthru
          _
        // Predicated region
        $region37: #{tpu_custom_call.1} parent=31 // pred_check
          %p349 = pneg %p87
        $region38: #{tpu_custom_call.1} parent=31 // pred_check_branch
          %351 = sbr.rel (%p349) target = $region40
        $region39: #{tpu_custom_call.1} parent=31 // pred_region
          %s352 = sand.u32 %s25, 1
          %s353 = scalar_lea.sflag [#allocation10], %s352
          %s354 = sand.u32 %s77, 1
          %s355 = smul.addr %s354, 512
          %s356 = scalar_lea.vmem [#allocation9], %s355
          %s357 = smul.u32 2, %s32
          %s359 = ssub.s32 8192, 8192
          %360 = vsyncadd %s353, %s359
          %s361 = smul.addr %s357, 64
          %s362 = sadd.s32 %s33, %s361
          %s363 = smul.addr %s362, 128
          %s364 = scalar_lea.hbm %s1, %s363
          %s365 = sshll.u32 %s356, 4
          %s366 = int_to_ptr.vmem [resolvable:$true] %s365
          %371 = dma.hbm_to_vmem [thread:$0]  %s364, 8192, %s366, %s353, 256, 128, 8
        $region40: #{tpu_custom_call.1} parent=31 // pred_fallthru
          _
        // Predicated region
        $region41: #{tpu_custom_call.1} parent=31 // pred_check
          %p372 = pneg %p115
        $region42: #{tpu_custom_call.1} parent=31 // pred_check_branch
          %374 = sbr.rel (%p372) target = $region44
        $region43: #{tpu_custom_call.1} parent=31 // pred_region
          %s375 = sand.u32 %s25, 1
          %s376 = scalar_lea.sflag [#allocation10], %s375
          %s377 = sand.u32 %s105, 1
          %s378 = smul.addr %s377, 512
          %s379 = scalar_lea.vmem [#allocation11], %s378
          %s380 = smul.u32 2, %s32
          %s382 = ssub.s32 8192, 8192
          %383 = vsyncadd %s376, %s382
          %s384 = smul.addr %s380, 64
          %s385 = sadd.s32 %s33, %s384
          %s386 = smul.addr %s385, 128
          %s387 = scalar_lea.hbm %s2, %s386
          %s388 = sshll.u32 %s379, 4
          %s389 = int_to_ptr.vmem [resolvable:$true] %s388
          %394 = dma.hbm_to_vmem [thread:$0]  %s387, 8192, %s389, %s376, 256, 128, 8
        $region44: #{tpu_custom_call.1} parent=31 // pred_fallthru
          _
        // Predicated region
        $region45: #{tpu_custom_call.1} parent=31 // pred_check
          %p395 = pneg %p143
        $region46: #{tpu_custom_call.1} parent=31 // pred_check_branch
          %397 = sbr.rel (%p395) target = $region48
        $region47: #{tpu_custom_call.1} parent=31 // pred_region
          %s398 = sand.u32 %s25, 1
          %s399 = scalar_lea.sflag [#allocation13], %s398
          %s400 = sand.u32 %s133, 1
          %s401 = smul.addr %s400, 512
          %s402 = scalar_lea.vmem [#allocation12], %s401
          %s403 = smul.u32 2, %s32
          %s405 = ssub.s32 8192, 8192
          %406 = vsyncadd %s399, %s405
          %s407 = smul.addr %s403, 64
          %s408 = sadd.s32 %s33, %s407
          %s409 = smul.addr %s408, 128
          %s410 = scalar_lea.hbm %s3, %s409
          %s411 = sshll.u32 %s402, 4
          %s412 = int_to_ptr.vmem [resolvable:$true] %s411
          %417 = dma.hbm_to_vmem [thread:$0]  %s410, 8192, %s412, %s399, 256, 128, 8
        $region48: #{tpu_custom_call.1} parent=31 // pred_fallthru
          _
      $region32: #{tpu_custom_call.1} parent=5 // pred_fallthru
        _
      %p418 = scmp.le.s32.totalorder 1, %s25
      %p419 = scmp.lt.s32.totalorder %s25, 3
      %p420 = pnand %p418, %p419
      %p421 = pneg %p420
      // Predicated region
      $region49: #{tpu_custom_call.1} parent=5 // pred_check
        _
      $region50: #{tpu_custom_call.1} parent=5 // pred_check_branch
        %423 = sbr.rel (%p420) target = $region52
      $region51: #{tpu_custom_call.1} parent=5 // pred_region
        %s424 = ssub.s32 %s25, 1
        %s425 = sand.u32 %s52, 1
        %s426 = scalar_lea.sflag [#allocation7], %s425
        %s427 = sand.u32 %s52, 1
        %s428 = smul.addr %s427, 512
        %s429 = scalar_lea.vmem [#allocation6], %s428
        // Predicated region
        $region53: #{tpu_custom_call.1} parent=51 // pred_check
          %p430 = pneg %p65
        $region54: #{tpu_custom_call.1} parent=51 // pred_check_branch
          %432 = sbr.rel (%p430) target = $region56
        $region55: #{tpu_custom_call.1} parent=51 // pred_region
          %433 = dma.done %s426, 8192
        $region56: #{tpu_custom_call.1} parent=51 // pred_fallthru
          _
        %s434 = sand.u32 %s30, 1
        %s435 = scalar_lea.sflag [#allocation10], %s434
        %s436 = sand.u32 %s80, 1
        %s437 = smul.addr %s436, 512
        %s438 = scalar_lea.vmem [#allocation9], %s437
        // Predicated region
        $region57: #{tpu_custom_call.1} parent=51 // pred_check
          %p439 = pneg %p93
        $region58: #{tpu_custom_call.1} parent=51 // pred_check_branch
          %441 = sbr.rel (%p439) target = $region60
        $region59: #{tpu_custom_call.1} parent=51 // pred_region
          %442 = dma.done %s435, 8192
        $region60: #{tpu_custom_call.1} parent=51 // pred_fallthru
          _
        %s443 = sand.u32 %s30, 1
        %s444 = scalar_lea.sflag [#allocation10], %s443
        %s445 = sand.u32 %s108, 1
        %s446 = smul.addr %s445, 512
        %s447 = scalar_lea.vmem [#allocation11], %s446
        // Predicated region
        $region61: #{tpu_custom_call.1} parent=51 // pred_check
          %p448 = pneg %p121
        $region62: #{tpu_custom_call.1} parent=51 // pred_check_branch
          %450 = sbr.rel (%p448) target = $region64
        $region63: #{tpu_custom_call.1} parent=51 // pred_region
          %451 = dma.done %s444, 8192
        $region64: #{tpu_custom_call.1} parent=51 // pred_fallthru
          _
        %s452 = sand.u32 %s30, 1
        %s453 = scalar_lea.sflag [#allocation13], %s452
        %s454 = sand.u32 %s136, 1
        %s455 = smul.addr %s454, 512
        %s456 = scalar_lea.vmem [#allocation12], %s455
        // Predicated region
        $region65: #{tpu_custom_call.1} parent=51 // pred_check
          %p457 = pneg %p149
        $region66: #{tpu_custom_call.1} parent=51 // pred_check_branch
          %459 = sbr.rel (%p457) target = $region68
        $region67: #{tpu_custom_call.1} parent=51 // pred_region
          %460 = dma.done %s453, 8192
        $region68: #{tpu_custom_call.1} parent=51 // pred_fallthru
          _
        // Predicated region
        $region69: #{tpu_custom_call.1} parent=51 // pred_check
          %p461 = pneg %p170
        $region70: #{tpu_custom_call.1} parent=51 // pred_check_branch
          %463 = sbr.rel (%p461) target = $region72
        $region71: #{tpu_custom_call.1} parent=51 // pred_region
          %464 = dma.done [#allocation13], 65536
        $region72: #{tpu_custom_call.1} parent=51 // pred_fallthru
          _
        // Predicated region
        $region73: #{tpu_custom_call.1} parent=51 // pred_check
          %p465 = pneg %p191
        $region74: #{tpu_custom_call.1} parent=51 // pred_check_branch
          %467 = sbr.rel (%p465) target = $region76
        $region75: #{tpu_custom_call.1} parent=51 // pred_region
          %468 = dma.done [#allocation16], 128
        $region76: #{tpu_custom_call.1} parent=51 // pred_fallthru
          _
        // Predicated region
        $region77: #{tpu_custom_call.1} parent=51 // pred_check
          %p469 = pneg %p212
        $region78: #{tpu_custom_call.1} parent=51 // pred_check_branch
          %471 = sbr.rel (%p469) target = $region80
        $region79: #{tpu_custom_call.1} parent=51 // pred_region
          %472 = dma.done [#allocation16], 128
        $region80: #{tpu_custom_call.1} parent=51 // pred_fallthru
          _
        // Predicated region
        $region81: #{tpu_custom_call.1} parent=51 // pred_check
          %p473 = pneg %p233
        $region82: #{tpu_custom_call.1} parent=51 // pred_check_branch
          %475 = sbr.rel (%p473) target = $region84
        $region83: #{tpu_custom_call.1} parent=51 // pred_region
          %476 = dma.done [#allocation8], 16
        $region84: #{tpu_custom_call.1} parent=51 // pred_fallthru
          _
        %477 = sfence
        %s478 = sand.u32 %s52, 1
        %s479 = scalar_lea.sflag [#allocation7], %s478
        %s480 = sand.u32 %s52, 1
        %s481 = smul.addr %s480, 512
        %s482 = scalar_lea.vmem [#allocation6], %s481
        %p483 = pneg %p65
        %p484 = pneg %p62
        %s485 = sand.u32 %s30, 1
        %s486 = scalar_lea.sflag [#allocation10], %s485
        %s487 = sand.u32 %s80, 1
        %s488 = smul.addr %s487, 512
        %s489 = scalar_lea.vmem [#allocation9], %s488
        %p490 = pneg %p93
        %p491 = pneg %p90
        %s492 = sand.u32 %s30, 1
        %s493 = scalar_lea.sflag [#allocation10], %s492
        %s494 = sand.u32 %s108, 1
        %s495 = smul.addr %s494, 512
        %s496 = scalar_lea.vmem [#allocation11], %s495
        %p497 = pneg %p121
        %p498 = pneg %p118
        %s499 = sand.u32 %s30, 1
        %s500 = scalar_lea.sflag [#allocation13], %s499
        %s501 = sand.u32 %s136, 1
        %s502 = smul.addr %s501, 512
        %s503 = scalar_lea.vmem [#allocation12], %s502
        %p504 = pneg %p149
        %p505 = pneg %p146
        %p506 = pneg %p170
        %p507 = pneg %p167
        %p508 = pneg %p191
        %p509 = pneg %p188
        %p510 = pneg %p212
        %p511 = pneg %p209
        %p512 = pneg %p233
        %p513 = pneg %p230
        %p514 = pneg %p259
        %p515 = pneg %p256
        %p516 = scmp.lt.s32.totalorder %s34, 0
        %s517 = scalar_select %p516, %s34, 0
        %s518 = smul.addr %s517, 2
        %s519 = scalar_lea.vmem %s8, %s518
        %s520 = smul.u32 2, %s34
        %s521 = smul.u32 2, %s34
        %s522 = smul.u32 2, %s34
        %s523 = smul.u32 2, %s34
        %p524 = scmp.lt.s32.totalorder %s34, 0
        %s525 = scalar_select %p524, %s34, 0
        %s526 = smul.addr %s525, 2
        %s527 = scalar_lea.vmem %s8, %s526
        %p528 = scmp.eq.s32.totalorder %s35, 0
        // Predicated region
        $region85: #{tpu_custom_call.1} parent=51 // pred_check
          %p529 = pneg %p528
        $region86: #{tpu_custom_call.1} parent=51 // pred_check_branch
          %531 = sbr.rel (%p529) target = $region88
        $region87: #{tpu_custom_call.1} parent=51 // pred_region
          %532 = vst [vmem:[#allocation2] sm:$0xff] 0.0
          %533 = vst [vmem:[#allocation2 + $0x8] sm:$0xff] 0.0
          %534 = vst [vmem:[#allocation2 + $0x10] sm:$0xff] 0.0
          %535 = vst [vmem:[#allocation2 + $0x18] sm:$0xff] 0.0
          %536 = vst [vmem:[#allocation2 + $0x20] sm:$0xff] 0.0
          %537 = vst [vmem:[#allocation2 + $0x28] sm:$0xff] 0.0
          %538 = vst [vmem:[#allocation2 + $0x30] sm:$0xff] 0.0
          %539 = vst [vmem:[#allocation2 + $0x38] sm:$0xff] 0.0
          %540 = vst [vmem:[#allocation2 + $0x40] sm:$0xff] 0.0
          %541 = vst [vmem:[#allocation2 + $0x48] sm:$0xff] 0.0
          %542 = vst [vmem:[#allocation2 + $0x50] sm:$0xff] 0.0
          %543 = vst [vmem:[#allocation2 + $0x58] sm:$0xff] 0.0
          %544 = vst [vmem:[#allocation2 + $0x60] sm:$0xff] 0.0
          %545 = vst [vmem:[#allocation2 + $0x68] sm:$0xff] 0.0
          %546 = vst [vmem:[#allocation2 + $0x70] sm:$0xff] 0.0
          %547 = vst [vmem:[#allocation2 + $0x78] sm:$0xff] 0.0
          %548 = vst [vmem:[#allocation2 + $0x80] sm:$0xff] 0.0
          %549 = vst [vmem:[#allocation2 + $0x88] sm:$0xff] 0.0
          %550 = vst [vmem:[#allocation2 + $0x90] sm:$0xff] 0.0
          %551 = vst [vmem:[#allocation2 + $0x98] sm:$0xff] 0.0
          %552 = vst [vmem:[#allocation2 + $0xa0] sm:$0xff] 0.0
          %553 = vst [vmem:[#allocation2 + $0xa8] sm:$0xff] 0.0
          %554 = vst [vmem:[#allocation2 + $0xb0] sm:$0xff] 0.0
          %555 = vst [vmem:[#allocation2 + $0xb8] sm:$0xff] 0.0
          %556 = vst [vmem:[#allocation2 + $0xc0] sm:$0xff] 0.0
          %557 = vst [vmem:[#allocation2 + $0xc8] sm:$0xff] 0.0
          %558 = vst [vmem:[#allocation2 + $0xd0] sm:$0xff] 0.0
          %559 = vst [vmem:[#allocation2 + $0xd8] sm:$0xff] 0.0
          %560 = vst [vmem:[#allocation2 + $0xe0] sm:$0xff] 0.0
          %561 = vst [vmem:[#allocation2 + $0xe8] sm:$0xff] 0.0
          %562 = vst [vmem:[#allocation2 + $0xf0] sm:$0xff] 0.0
          %563 = vst [vmem:[#allocation2 + $0xf8] sm:$0xff] 0.0
          %564 = vst [vmem:[#allocation2 + $0x100] sm:$0xff] 0.0
          %565 = vst [vmem:[#allocation2 + $0x108] sm:$0xff] 0.0
          %566 = vst [vmem:[#allocation2 + $0x110] sm:$0xff] 0.0
          %567 = vst [vmem:[#allocation2 + $0x118] sm:$0xff] 0.0
          %568 = vst [vmem:[#allocation2 + $0x120] sm:$0xff] 0.0
          %569 = vst [vmem:[#allocation2 + $0x128] sm:$0xff] 0.0
          %570 = vst [vmem:[#allocation2 + $0x130] sm:$0xff] 0.0
          %571 = vst [vmem:[#allocation2 + $0x138] sm:$0xff] 0.0
          %572 = vst [vmem:[#allocation2 + $0x140] sm:$0xff] 0.0
          %573 = vst [vmem:[#allocation2 + $0x148] sm:$0xff] 0.0
          %574 = vst [vmem:[#allocation2 + $0x150] sm:$0xff] 0.0
          %575 = vst [vmem:[#allocation2 + $0x158] sm:$0xff] 0.0
          %576 = vst [vmem:[#allocation2 + $0x160] sm:$0xff] 0.0
          %577 = vst [vmem:[#allocation2 + $0x168] sm:$0xff] 0.0
          %578 = vst [vmem:[#allocation2 + $0x170] sm:$0xff] 0.0
          %579 = vst [vmem:[#allocation2 + $0x178] sm:$0xff] 0.0
          %580 = vst [vmem:[#allocation2 + $0x180] sm:$0xff] 0.0
          %581 = vst [vmem:[#allocation2 + $0x188] sm:$0xff] 0.0
          %582 = vst [vmem:[#allocation2 + $0x190] sm:$0xff] 0.0
          %583 = vst [vmem:[#allocation2 + $0x198] sm:$0xff] 0.0
          %584 = vst [vmem:[#allocation2 + $0x1a0] sm:$0xff] 0.0
          %585 = vst [vmem:[#allocation2 + $0x1a8] sm:$0xff] 0.0
          %586 = vst [vmem:[#allocation2 + $0x1b0] sm:$0xff] 0.0
          %587 = vst [vmem:[#allocation2 + $0x1b8] sm:$0xff] 0.0
          %588 = vst [vmem:[#allocation2 + $0x1c0] sm:$0xff] 0.0
          %589 = vst [vmem:[#allocation2 + $0x1c8] sm:$0xff] 0.0
          %590 = vst [vmem:[#allocation2 + $0x1d0] sm:$0xff] 0.0
          %591 = vst [vmem:[#allocation2 + $0x1d8] sm:$0xff] 0.0
          %592 = vst [vmem:[#allocation2 + $0x1e0] sm:$0xff] 0.0
          %593 = vst [vmem:[#allocation2 + $0x1e8] sm:$0xff] 0.0
          %594 = vst [vmem:[#allocation2 + $0x1f0] sm:$0xff] 0.0
          %595 = vst [vmem:[#allocation2 + $0x1f8] sm:$0xff] 0.0
          %596 = vst [vmem:[#allocation3] sm:$0xff] 0.0
          %597 = vst [vmem:[#allocation3 + $0x8] sm:$0xff] 0.0
          %598 = vst [vmem:[#allocation3 + $0x10] sm:$0xff] 0.0
          %599 = vst [vmem:[#allocation3 + $0x18] sm:$0xff] 0.0
          %600 = vst [vmem:[#allocation3 + $0x20] sm:$0xff] 0.0
          %601 = vst [vmem:[#allocation3 + $0x28] sm:$0xff] 0.0
          %602 = vst [vmem:[#allocation3 + $0x30] sm:$0xff] 0.0
          %603 = vst [vmem:[#allocation3 + $0x38] sm:$0xff] 0.0
          %604 = vst [vmem:[#allocation3 + $0x40] sm:$0xff] 0.0
          %605 = vst [vmem:[#allocation3 + $0x48] sm:$0xff] 0.0
          %606 = vst [vmem:[#allocation3 + $0x50] sm:$0xff] 0.0
          %607 = vst [vmem:[#allocation3 + $0x58] sm:$0xff] 0.0
          %608 = vst [vmem:[#allocation3 + $0x60] sm:$0xff] 0.0
          %609 = vst [vmem:[#allocation3 + $0x68] sm:$0xff] 0.0
          %610 = vst [vmem:[#allocation3 + $0x70] sm:$0xff] 0.0
          %611 = vst [vmem:[#allocation3 + $0x78] sm:$0xff] 0.0
          %612 = vst [vmem:[#allocation3 + $0x80] sm:$0xff] 0.0
          %613 = vst [vmem:[#allocation3 + $0x88] sm:$0xff] 0.0
          %614 = vst [vmem:[#allocation3 + $0x90] sm:$0xff] 0.0
          %615 = vst [vmem:[#allocation3 + $0x98] sm:$0xff] 0.0
          %616 = vst [vmem:[#allocation3 + $0xa0] sm:$0xff] 0.0
          %617 = vst [vmem:[#allocation3 + $0xa8] sm:$0xff] 0.0
          %618 = vst [vmem:[#allocation3 + $0xb0] sm:$0xff] 0.0
          %619 = vst [vmem:[#allocation3 + $0xb8] sm:$0xff] 0.0
          %620 = vst [vmem:[#allocation3 + $0xc0] sm:$0xff] 0.0
          %621 = vst [vmem:[#allocation3 + $0xc8] sm:$0xff] 0.0
          %622 = vst [vmem:[#allocation3 + $0xd0] sm:$0xff] 0.0
          %623 = vst [vmem:[#allocation3 + $0xd8] sm:$0xff] 0.0
          %624 = vst [vmem:[#allocation3 + $0xe0] sm:$0xff] 0.0
          %625 = vst [vmem:[#allocation3 + $0xe8] sm:$0xff] 0.0
          %626 = vst [vmem:[#allocation3 + $0xf0] sm:$0xff] 0.0
          %627 = vst [vmem:[#allocation3 + $0xf8] sm:$0xff] 0.0
          %628 = vst [vmem:[#allocation3 + $0x100] sm:$0xff] 0.0
          %629 = vst [vmem:[#allocation3 + $0x108] sm:$0xff] 0.0
          %630 = vst [vmem:[#allocation3 + $0x110] sm:$0xff] 0.0
          %631 = vst [vmem:[#allocation3 + $0x118] sm:$0xff] 0.0
          %632 = vst [vmem:[#allocation3 + $0x120] sm:$0xff] 0.0
          %633 = vst [vmem:[#allocation3 + $0x128] sm:$0xff] 0.0
          %634 = vst [vmem:[#allocation3 + $0x130] sm:$0xff] 0.0
          %635 = vst [vmem:[#allocation3 + $0x138] sm:$0xff] 0.0
          %636 = vst [vmem:[#allocation3 + $0x140] sm:$0xff] 0.0
          %637 = vst [vmem:[#allocation3 + $0x148] sm:$0xff] 0.0
          %638 = vst [vmem:[#allocation3 + $0x150] sm:$0xff] 0.0
          %639 = vst [vmem:[#allocation3 + $0x158] sm:$0xff] 0.0
          %640 = vst [vmem:[#allocation3 + $0x160] sm:$0xff] 0.0
          %641 = vst [vmem:[#allocation3 + $0x168] sm:$0xff] 0.0
          %642 = vst [vmem:[#allocation3 + $0x170] sm:$0xff] 0.0
          %643 = vst [vmem:[#allocation3 + $0x178] sm:$0xff] 0.0
          %644 = vst [vmem:[#allocation3 + $0x180] sm:$0xff] 0.0
          %645 = vst [vmem:[#allocation3 + $0x188] sm:$0xff] 0.0
          %646 = vst [vmem:[#allocation3 + $0x190] sm:$0xff] 0.0
          %647 = vst [vmem:[#allocation3 + $0x198] sm:$0xff] 0.0
          %648 = vst [vmem:[#allocation3 + $0x1a0] sm:$0xff] 0.0
          %649 = vst [vmem:[#allocation3 + $0x1a8] sm:$0xff] 0.0
          %650 = vst [vmem:[#allocation3 + $0x1b0] sm:$0xff] 0.0
          %651 = vst [vmem:[#allocation3 + $0x1b8] sm:$0xff] 0.0
          %652 = vst [vmem:[#allocation3 + $0x1c0] sm:$0xff] 0.0
          %653 = vst [vmem:[#allocation3 + $0x1c8] sm:$0xff] 0.0
          %654 = vst [vmem:[#allocation3 + $0x1d0] sm:$0xff] 0.0
          %655 = vst [vmem:[#allocation3 + $0x1d8] sm:$0xff] 0.0
          %656 = vst [vmem:[#allocation3 + $0x1e0] sm:$0xff] 0.0
          %657 = vst [vmem:[#allocation3 + $0x1e8] sm:$0xff] 0.0
          %658 = vst [vmem:[#allocation3 + $0x1f0] sm:$0xff] 0.0
          %659 = vst [vmem:[#allocation3 + $0x1f8] sm:$0xff] 0.0
          %660 = vst [vmem:[#allocation4] sm:$0xff] 0.0
          %661 = vst [vmem:[#allocation4 + $0x8] sm:$0xff] 0.0
          %662 = vst [vmem:[#allocation4 + $0x10] sm:$0xff] 0.0
          %663 = vst [vmem:[#allocation4 + $0x18] sm:$0xff] 0.0
          %664 = vst [vmem:[#allocation4 + $0x20] sm:$0xff] 0.0
          %665 = vst [vmem:[#allocation4 + $0x28] sm:$0xff] 0.0
          %666 = vst [vmem:[#allocation4 + $0x30] sm:$0xff] 0.0
          %667 = vst [vmem:[#allocation4 + $0x38] sm:$0xff] 0.0
          %668 = vst [vmem:[#allocation4 + $0x40] sm:$0xff] 0.0
          %669 = vst [vmem:[#allocation4 + $0x48] sm:$0xff] 0.0
          %670 = vst [vmem:[#allocation4 + $0x50] sm:$0xff] 0.0
          %671 = vst [vmem:[#allocation4 + $0x58] sm:$0xff] 0.0
          %672 = vst [vmem:[#allocation4 + $0x60] sm:$0xff] 0.0
          %673 = vst [vmem:[#allocation4 + $0x68] sm:$0xff] 0.0
          %674 = vst [vmem:[#allocation4 + $0x70] sm:$0xff] 0.0
          %675 = vst [vmem:[#allocation4 + $0x78] sm:$0xff] 0.0
          %676 = vst [vmem:[#allocation4 + $0x80] sm:$0xff] 0.0
          %677 = vst [vmem:[#allocation4 + $0x88] sm:$0xff] 0.0
          %678 = vst [vmem:[#allocation4 + $0x90] sm:$0xff] 0.0
          %679 = vst [vmem:[#allocation4 + $0x98] sm:$0xff] 0.0
          %680 = vst [vmem:[#allocation4 + $0xa0] sm:$0xff] 0.0
          %681 = vst [vmem:[#allocation4 + $0xa8] sm:$0xff] 0.0
          %682 = vst [vmem:[#allocation4 + $0xb0] sm:$0xff] 0.0
          %683 = vst [vmem:[#allocation4 + $0xb8] sm:$0xff] 0.0
          %684 = vst [vmem:[#allocation4 + $0xc0] sm:$0xff] 0.0
          %685 = vst [vmem:[#allocation4 + $0xc8] sm:$0xff] 0.0
          %686 = vst [vmem:[#allocation4 + $0xd0] sm:$0xff] 0.0
          %687 = vst [vmem:[#allocation4 + $0xd8] sm:$0xff] 0.0
          %688 = vst [vmem:[#allocation4 + $0xe0] sm:$0xff] 0.0
          %689 = vst [vmem:[#allocation4 + $0xe8] sm:$0xff] 0.0
          %690 = vst [vmem:[#allocation4 + $0xf0] sm:$0xff] 0.0
          %691 = vst [vmem:[#allocation4 + $0xf8] sm:$0xff] 0.0
          %692 = vst [vmem:[#allocation4 + $0x100] sm:$0xff] 0.0
          %693 = vst [vmem:[#allocation4 + $0x108] sm:$0xff] 0.0
          %694 = vst [vmem:[#allocation4 + $0x110] sm:$0xff] 0.0
          %695 = vst [vmem:[#allocation4 + $0x118] sm:$0xff] 0.0
          %696 = vst [vmem:[#allocation4 + $0x120] sm:$0xff] 0.0
          %697 = vst [vmem:[#allocation4 + $0x128] sm:$0xff] 0.0
          %698 = vst [vmem:[#allocation4 + $0x130] sm:$0xff] 0.0
          %699 = vst [vmem:[#allocation4 + $0x138] sm:$0xff] 0.0
          %700 = vst [vmem:[#allocation4 + $0x140] sm:$0xff] 0.0
          %701 = vst [vmem:[#allocation4 + $0x148] sm:$0xff] 0.0
          %702 = vst [vmem:[#allocation4 + $0x150] sm:$0xff] 0.0
          %703 = vst [vmem:[#allocation4 + $0x158] sm:$0xff] 0.0
          %704 = vst [vmem:[#allocation4 + $0x160] sm:$0xff] 0.0
          %705 = vst [vmem:[#allocation4 + $0x168] sm:$0xff] 0.0
          %706 = vst [vmem:[#allocation4 + $0x170] sm:$0xff] 0.0
          %707 = vst [vmem:[#allocation4 + $0x178] sm:$0xff] 0.0
          %708 = vst [vmem:[#allocation4 + $0x180] sm:$0xff] 0.0
          %709 = vst [vmem:[#allocation4 + $0x188] sm:$0xff] 0.0
          %710 = vst [vmem:[#allocation4 + $0x190] sm:$0xff] 0.0
          %711 = vst [vmem:[#allocation4 + $0x198] sm:$0xff] 0.0
          %712 = vst [vmem:[#allocation4 + $0x1a0] sm:$0xff] 0.0
          %713 = vst [vmem:[#allocation4 + $0x1a8] sm:$0xff] 0.0
          %714 = vst [vmem:[#allocation4 + $0x1b0] sm:$0xff] 0.0
          %715 = vst [vmem:[#allocation4 + $0x1b8] sm:$0xff] 0.0
          %716 = vst [vmem:[#allocation4 + $0x1c0] sm:$0xff] 0.0
          %717 = vst [vmem:[#allocation4 + $0x1c8] sm:$0xff] 0.0
          %718 = vst [vmem:[#allocation4 + $0x1d0] sm:$0xff] 0.0
          %719 = vst [vmem:[#allocation4 + $0x1d8] sm:$0xff] 0.0
          %720 = vst [vmem:[#allocation4 + $0x1e0] sm:$0xff] 0.0
          %721 = vst [vmem:[#allocation4 + $0x1e8] sm:$0xff] 0.0
          %722 = vst [vmem:[#allocation4 + $0x1f0] sm:$0xff] 0.0
          %723 = vst [vmem:[#allocation4 + $0x1f8] sm:$0xff] 0.0
          %724 = vst [vmem:[#allocation5] sm:$0xff] 0.0
          %725 = vst [vmem:[#allocation5 + $0x8] sm:$0xff] 0.0
          %726 = vst [vmem:[#allocation5 + $0x10] sm:$0xff] 0.0
          %727 = vst [vmem:[#allocation5 + $0x18] sm:$0xff] 0.0
          %728 = vst [vmem:[#allocation5 + $0x20] sm:$0xff] 0.0
          %729 = vst [vmem:[#allocation5 + $0x28] sm:$0xff] 0.0
          %730 = vst [vmem:[#allocation5 + $0x30] sm:$0xff] 0.0
          %731 = vst [vmem:[#allocation5 + $0x38] sm:$0xff] 0.0
          %732 = vst [vmem:[#allocation5 + $0x40] sm:$0xff] 0.0
          %733 = vst [vmem:[#allocation5 + $0x48] sm:$0xff] 0.0
          %734 = vst [vmem:[#allocation5 + $0x50] sm:$0xff] 0.0
          %735 = vst [vmem:[#allocation5 + $0x58] sm:$0xff] 0.0
          %736 = vst [vmem:[#allocation5 + $0x60] sm:$0xff] 0.0
          %737 = vst [vmem:[#allocation5 + $0x68] sm:$0xff] 0.0
          %738 = vst [vmem:[#allocation5 + $0x70] sm:$0xff] 0.0
          %739 = vst [vmem:[#allocation5 + $0x78] sm:$0xff] 0.0
          %740 = vst [vmem:[#allocation5 + $0x80] sm:$0xff] 0.0
          %741 = vst [vmem:[#allocation5 + $0x88] sm:$0xff] 0.0
          %742 = vst [vmem:[#allocation5 + $0x90] sm:$0xff] 0.0
          %743 = vst [vmem:[#allocation5 + $0x98] sm:$0xff] 0.0
          %744 = vst [vmem:[#allocation5 + $0xa0] sm:$0xff] 0.0
          %745 = vst [vmem:[#allocation5 + $0xa8] sm:$0xff] 0.0
          %746 = vst [vmem:[#allocation5 + $0xb0] sm:$0xff] 0.0
          %747 = vst [vmem:[#allocation5 + $0xb8] sm:$0xff] 0.0
          %748 = vst [vmem:[#allocation5 + $0xc0] sm:$0xff] 0.0
          %749 = vst [vmem:[#allocation5 + $0xc8] sm:$0xff] 0.0
          %750 = vst [vmem:[#allocation5 + $0xd0] sm:$0xff] 0.0
          %751 = vst [vmem:[#allocation5 + $0xd8] sm:$0xff] 0.0
          %752 = vst [vmem:[#allocation5 + $0xe0] sm:$0xff] 0.0
          %753 = vst [vmem:[#allocation5 + $0xe8] sm:$0xff] 0.0
          %754 = vst [vmem:[#allocation5 + $0xf0] sm:$0xff] 0.0
          %755 = vst [vmem:[#allocation5 + $0xf8] sm:$0xff] 0.0
          %756 = vst [vmem:[#allocation5 + $0x100] sm:$0xff] 0.0
          %757 = vst [vmem:[#allocation5 + $0x108] sm:$0xff] 0.0
          %758 = vst [vmem:[#allocation5 + $0x110] sm:$0xff] 0.0
          %759 = vst [vmem:[#allocation5 + $0x118] sm:$0xff] 0.0
          %760 = vst [vmem:[#allocation5 + $0x120] sm:$0xff] 0.0
          %761 = vst [vmem:[#allocation5 + $0x128] sm:$0xff] 0.0
          %762 = vst [vmem:[#allocation5 + $0x130] sm:$0xff] 0.0
          %763 = vst [vmem:[#allocation5 + $0x138] sm:$0xff] 0.0
          %764 = vst [vmem:[#allocation5 + $0x140] sm:$0xff] 0.0
          %765 = vst [vmem:[#allocation5 + $0x148] sm:$0xff] 0.0
          %766 = vst [vmem:[#allocation5 + $0x150] sm:$0xff] 0.0
          %767 = vst [vmem:[#allocation5 + $0x158] sm:$0xff] 0.0
          %768 = vst [vmem:[#allocation5 + $0x160] sm:$0xff] 0.0
          %769 = vst [vmem:[#allocation5 + $0x168] sm:$0xff] 0.0
          %770 = vst [vmem:[#allocation5 + $0x170] sm:$0xff] 0.0
          %771 = vst [vmem:[#allocation5 + $0x178] sm:$0xff] 0.0
          %772 = vst [vmem:[#allocation5 + $0x180] sm:$0xff] 0.0
          %773 = vst [vmem:[#allocation5 + $0x188] sm:$0xff] 0.0
          %774 = vst [vmem:[#allocation5 + $0x190] sm:$0xff] 0.0
          %775 = vst [vmem:[#allocation5 + $0x198] sm:$0xff] 0.0
          %776 = vst [vmem:[#allocation5 + $0x1a0] sm:$0xff] 0.0
          %777 = vst [vmem:[#allocation5 + $0x1a8] sm:$0xff] 0.0
          %778 = vst [vmem:[#allocation5 + $0x1b0] sm:$0xff] 0.0
          %779 = vst [vmem:[#allocation5 + $0x1b8] sm:$0xff] 0.0
          %780 = vst [vmem:[#allocation5 + $0x1c0] sm:$0xff] 0.0
          %781 = vst [vmem:[#allocation5 + $0x1c8] sm:$0xff] 0.0
          %782 = vst [vmem:[#allocation5 + $0x1d0] sm:$0xff] 0.0
          %783 = vst [vmem:[#allocation5 + $0x1d8] sm:$0xff] 0.0
          %784 = vst [vmem:[#allocation5 + $0x1e0] sm:$0xff] 0.0
          %785 = vst [vmem:[#allocation5 + $0x1e8] sm:$0xff] 0.0
          %786 = vst [vmem:[#allocation5 + $0x1f0] sm:$0xff] 0.0
          %787 = vst [vmem:[#allocation5 + $0x1f8] sm:$0xff] 0.0
        $region88: #{tpu_custom_call.1} parent=51 // pred_fallthru
          _
        %v788 = vld [vmem:[%s429] sm:$0xff]
        %v789 = vld [vmem:[%s429 + $0x8] sm:$0xff]
        %v790 = vld [vmem:[%s429 + $0x10] sm:$0xff]
        %v791 = vld [vmem:[%s429 + $0x18] sm:$0xff]
        %v792 = vld [vmem:[%s429 + $0x20] sm:$0xff]
        %v793 = vld [vmem:[%s429 + $0x28] sm:$0xff]
        %v794 = vld [vmem:[%s429 + $0x30] sm:$0xff]
        %v795 = vld [vmem:[%s429 + $0x38] sm:$0xff]
        %v796 = vld [vmem:[%s429 + $0x40] sm:$0xff]
        %v797 = vld [vmem:[%s429 + $0x48] sm:$0xff]
        %v798 = vld [vmem:[%s429 + $0x50] sm:$0xff]
        %v799 = vld [vmem:[%s429 + $0x58] sm:$0xff]
        %v800 = vld [vmem:[%s429 + $0x60] sm:$0xff]
        %v801 = vld [vmem:[%s429 + $0x68] sm:$0xff]
        %v802 = vld [vmem:[%s429 + $0x70] sm:$0xff]
        %v803 = vld [vmem:[%s429 + $0x78] sm:$0xff]
        %v804 = vld [vmem:[%s429 + $0x80] sm:$0xff]
        %v805 = vld [vmem:[%s429 + $0x88] sm:$0xff]
        %v806 = vld [vmem:[%s429 + $0x90] sm:$0xff]
        %v807 = vld [vmem:[%s429 + $0x98] sm:$0xff]
        %v808 = vld [vmem:[%s429 + $0xa0] sm:$0xff]
        %v809 = vld [vmem:[%s429 + $0xa8] sm:$0xff]
        %v810 = vld [vmem:[%s429 + $0xb0] sm:$0xff]
        %v811 = vld [vmem:[%s429 + $0xb8] sm:$0xff]
        %v812 = vld [vmem:[%s429 + $0xc0] sm:$0xff]
        %v813 = vld [vmem:[%s429 + $0xc8] sm:$0xff]
        %v814 = vld [vmem:[%s429 + $0xd0] sm:$0xff]
        %v815 = vld [vmem:[%s429 + $0xd8] sm:$0xff]
        %v816 = vld [vmem:[%s429 + $0xe0] sm:$0xff]
        %v817 = vld [vmem:[%s429 + $0xe8] sm:$0xff]
        %v818 = vld [vmem:[%s429 + $0xf0] sm:$0xff]
        %v819 = vld [vmem:[%s429 + $0xf8] sm:$0xff]
        %v820 = vld [vmem:[%s429 + $0x100] sm:$0xff]
        %v821 = vld [vmem:[%s429 + $0x108] sm:$0xff]
        %v822 = vld [vmem:[%s429 + $0x110] sm:$0xff]
        %v823 = vld [vmem:[%s429 + $0x118] sm:$0xff]
        %v824 = vld [vmem:[%s429 + $0x120] sm:$0xff]
        %v825 = vld [vmem:[%s429 + $0x128] sm:$0xff]
        %v826 = vld [vmem:[%s429 + $0x130] sm:$0xff]
        %v827 = vld [vmem:[%s429 + $0x138] sm:$0xff]
        %v828 = vld [vmem:[%s429 + $0x140] sm:$0xff]
        %v829 = vld [vmem:[%s429 + $0x148] sm:$0xff]
        %v830 = vld [vmem:[%s429 + $0x150] sm:$0xff]
        %v831 = vld [vmem:[%s429 + $0x158] sm:$0xff]
        %v832 = vld [vmem:[%s429 + $0x160] sm:$0xff]
        %v833 = vld [vmem:[%s429 + $0x168] sm:$0xff]
        %v834 = vld [vmem:[%s429 + $0x170] sm:$0xff]
        %v835 = vld [vmem:[%s429 + $0x178] sm:$0xff]
        %v836 = vld [vmem:[%s429 + $0x180] sm:$0xff]
        %v837 = vld [vmem:[%s429 + $0x188] sm:$0xff]
        %v838 = vld [vmem:[%s429 + $0x190] sm:$0xff]
        %v839 = vld [vmem:[%s429 + $0x198] sm:$0xff]
        %v840 = vld [vmem:[%s429 + $0x1a0] sm:$0xff]
        %v841 = vld [vmem:[%s429 + $0x1a8] sm:$0xff]
        %v842 = vld [vmem:[%s429 + $0x1b0] sm:$0xff]
        %v843 = vld [vmem:[%s429 + $0x1b8] sm:$0xff]
        %v844 = vld [vmem:[%s429 + $0x1c0] sm:$0xff]
        %v845 = vld [vmem:[%s429 + $0x1c8] sm:$0xff]
        %v846 = vld [vmem:[%s429 + $0x1d0] sm:$0xff]
        %v847 = vld [vmem:[%s429 + $0x1d8] sm:$0xff]
        %v848 = vld [vmem:[%s429 + $0x1e0] sm:$0xff]
        %v849 = vld [vmem:[%s429 + $0x1e8] sm:$0xff]
        %v850 = vld [vmem:[%s429 + $0x1f0] sm:$0xff]
        %v851 = vld [vmem:[%s429 + $0x1f8] sm:$0xff]
        %v852 = vld [vmem:[#allocation2] sm:$0xff]
        %v853 = vld [vmem:[#allocation2 + $0x8] sm:$0xff]
        %v854 = vld [vmem:[#allocation2 + $0x10] sm:$0xff]
        %v855 = vld [vmem:[#allocation2 + $0x18] sm:$0xff]
        %v856 = vld [vmem:[#allocation2 + $0x20] sm:$0xff]
        %v857 = vld [vmem:[#allocation2 + $0x28] sm:$0xff]
        %v858 = vld [vmem:[#allocation2 + $0x30] sm:$0xff]
        %v859 = vld [vmem:[#allocation2 + $0x38] sm:$0xff]
        %v860 = vld [vmem:[#allocation2 + $0x40] sm:$0xff]
        %v861 = vld [vmem:[#allocation2 + $0x48] sm:$0xff]
        %v862 = vld [vmem:[#allocation2 + $0x50] sm:$0xff]
        %v863 = vld [vmem:[#allocation2 + $0x58] sm:$0xff]
        %v864 = vld [vmem:[#allocation2 + $0x60] sm:$0xff]
        %v865 = vld [vmem:[#allocation2 + $0x68] sm:$0xff]
        %v866 = vld [vmem:[#allocation2 + $0x70] sm:$0xff]
        %v867 = vld [vmem:[#allocation2 + $0x78] sm:$0xff]
        %v868 = vld [vmem:[#allocation2 + $0x80] sm:$0xff]
        %v869 = vld [vmem:[#allocation2 + $0x88] sm:$0xff]
        %v870 = vld [vmem:[#allocation2 + $0x90] sm:$0xff]
        %v871 = vld [vmem:[#allocation2 + $0x98] sm:$0xff]
        %v872 = vld [vmem:[#allocation2 + $0xa0] sm:$0xff]
        %v873 = vld [vmem:[#allocation2 + $0xa8] sm:$0xff]
        %v874 = vld [vmem:[#allocation2 + $0xb0] sm:$0xff]
        %v875 = vld [vmem:[#allocation2 + $0xb8] sm:$0xff]
        %v876 = vld [vmem:[#allocation2 + $0xc0] sm:$0xff]
        %v877 = vld [vmem:[#allocation2 + $0xc8] sm:$0xff]
        %v878 = vld [vmem:[#allocation2 + $0xd0] sm:$0xff]
        %v879 = vld [vmem:[#allocation2 + $0xd8] sm:$0xff]
        %v880 = vld [vmem:[#allocation2 + $0xe0] sm:$0xff]
        %v881 = vld [vmem:[#allocation2 + $0xe8] sm:$0xff]
        %v882 = vld [vmem:[#allocation2 + $0xf0] sm:$0xff]
        %v883 = vld [vmem:[#allocation2 + $0xf8] sm:$0xff]
        %v884 = vld [vmem:[#allocation2 + $0x100] sm:$0xff]
        %v885 = vld [vmem:[#allocation2 + $0x108] sm:$0xff]
        %v886 = vld [vmem:[#allocation2 + $0x110] sm:$0xff]
        %v887 = vld [vmem:[#allocation2 + $0x118] sm:$0xff]
        %v888 = vld [vmem:[#allocation2 + $0x120] sm:$0xff]
        %v889 = vld [vmem:[#allocation2 + $0x128] sm:$0xff]
        %v890 = vld [vmem:[#allocation2 + $0x130] sm:$0xff]
        %v891 = vld [vmem:[#allocation2 + $0x138] sm:$0xff]
        %v892 = vld [vmem:[#allocation2 + $0x140] sm:$0xff]
        %v893 = vld [vmem:[#allocation2 + $0x148] sm:$0xff]
        %v894 = vld [vmem:[#allocation2 + $0x150] sm:$0xff]
        %v895 = vld [vmem:[#allocation2 + $0x158] sm:$0xff]
        %v896 = vld [vmem:[#allocation2 + $0x160] sm:$0xff]
        %v897 = vld [vmem:[#allocation2 + $0x168] sm:$0xff]
        %v898 = vld [vmem:[#allocation2 + $0x170] sm:$0xff]
        %v899 = vld [vmem:[#allocation2 + $0x178] sm:$0xff]
        %v900 = vld [vmem:[#allocation2 + $0x180] sm:$0xff]
        %v901 = vld [vmem:[#allocation2 + $0x188] sm:$0xff]
        %v902 = vld [vmem:[#allocation2 + $0x190] sm:$0xff]
        %v903 = vld [vmem:[#allocation2 + $0x198] sm:$0xff]
        %v904 = vld [vmem:[#allocation2 + $0x1a0] sm:$0xff]
        %v905 = vld [vmem:[#allocation2 + $0x1a8] sm:$0xff]
        %v906 = vld [vmem:[#allocation2 + $0x1b0] sm:$0xff]
        %v907 = vld [vmem:[#allocation2 + $0x1b8] sm:$0xff]
        %v908 = vld [vmem:[#allocation2 + $0x1c0] sm:$0xff]
        %v909 = vld [vmem:[#allocation2 + $0x1c8] sm:$0xff]
        %v910 = vld [vmem:[#allocation2 + $0x1d0] sm:$0xff]
        %v911 = vld [vmem:[#allocation2 + $0x1d8] sm:$0xff]
        %v912 = vld [vmem:[#allocation2 + $0x1e0] sm:$0xff]
        %v913 = vld [vmem:[#allocation2 + $0x1e8] sm:$0xff]
        %v914 = vld [vmem:[#allocation2 + $0x1f0] sm:$0xff]
        %v915 = vld [vmem:[#allocation2 + $0x1f8] sm:$0xff]
        %v916 = vadd.f32 %v852, %v788
        %v917 = vadd.f32 %v853, %v789
        %v918 = vadd.f32 %v854, %v790
        %v919 = vadd.f32 %v855, %v791
        %v920 = vadd.f32 %v856, %v792
        %v921 = vadd.f32 %v857, %v793
        %v922 = vadd.f32 %v858, %v794
        %v923 = vadd.f32 %v859, %v795
        %v924 = vadd.f32 %v860, %v796
        %v925 = vadd.f32 %v861, %v797
        %v926 = vadd.f32 %v862, %v798
        %v927 = vadd.f32 %v863, %v799
        %v928 = vadd.f32 %v864, %v800
        %v929 = vadd.f32 %v865, %v801
        %v930 = vadd.f32 %v866, %v802
        %v931 = vadd.f32 %v867, %v803
        %v932 = vadd.f32 %v868, %v804
        %v933 = vadd.f32 %v869, %v805
        %v934 = vadd.f32 %v870, %v806
        %v935 = vadd.f32 %v871, %v807
        %v936 = vadd.f32 %v872, %v808
        %v937 = vadd.f32 %v873, %v809
        %v938 = vadd.f32 %v874, %v810
        %v939 = vadd.f32 %v875, %v811
        %v940 = vadd.f32 %v876, %v812
        %v941 = vadd.f32 %v877, %v813
        %v942 = vadd.f32 %v878, %v814
        %v943 = vadd.f32 %v879, %v815
        %v944 = vadd.f32 %v880, %v816
        %v945 = vadd.f32 %v881, %v817
        %v946 = vadd.f32 %v882, %v818
        %v947 = vadd.f32 %v883, %v819
        %v948 = vadd.f32 %v884, %v820
        %v949 = vadd.f32 %v885, %v821
        %v950 = vadd.f32 %v886, %v822
        %v951 = vadd.f32 %v887, %v823
        %v952 = vadd.f32 %v888, %v824
        %v953 = vadd.f32 %v889, %v825
        %v954 = vadd.f32 %v890, %v826
        %v955 = vadd.f32 %v891, %v827
        %v956 = vadd.f32 %v892, %v828
        %v957 = vadd.f32 %v893, %v829
        %v958 = vadd.f32 %v894, %v830
        %v959 = vadd.f32 %v895, %v831
        %v960 = vadd.f32 %v896, %v832
        %v961 = vadd.f32 %v897, %v833
        %v962 = vadd.f32 %v898, %v834
        %v963 = vadd.f32 %v899, %v835
        %v964 = vadd.f32 %v900, %v836
        %v965 = vadd.f32 %v901, %v837
        %v966 = vadd.f32 %v902, %v838
        %v967 = vadd.f32 %v903, %v839
        %v968 = vadd.f32 %v904, %v840
        %v969 = vadd.f32 %v905, %v841
        %v970 = vadd.f32 %v906, %v842
        %v971 = vadd.f32 %v907, %v843
        %v972 = vadd.f32 %v908, %v844
        %v973 = vadd.f32 %v909, %v845
        %v974 = vadd.f32 %v910, %v846
        %v975 = vadd.f32 %v911, %v847
        %v976 = vadd.f32 %v912, %v848
        %v977 = vadd.f32 %v913, %v849
        %v978 = vadd.f32 %v914, %v850
        %v979 = vadd.f32 %v915, %v851
        %980 = vst [vmem:[#allocation2] sm:$0xff] %v916
        %981 = vst [vmem:[#allocation2 + $0x8] sm:$0xff] %v917
        %982 = vst [vmem:[#allocation2 + $0x10] sm:$0xff] %v918
        %983 = vst [vmem:[#allocation2 + $0x18] sm:$0xff] %v919
        %984 = vst [vmem:[#allocation2 + $0x20] sm:$0xff] %v920
        %985 = vst [vmem:[#allocation2 + $0x28] sm:$0xff] %v921
        %986 = vst [vmem:[#allocation2 + $0x30] sm:$0xff] %v922
        %987 = vst [vmem:[#allocation2 + $0x38] sm:$0xff] %v923
        %988 = vst [vmem:[#allocation2 + $0x40] sm:$0xff] %v924
        %989 = vst [vmem:[#allocation2 + $0x48] sm:$0xff] %v925
        %990 = vst [vmem:[#allocation2 + $0x50] sm:$0xff] %v926
        %991 = vst [vmem:[#allocation2 + $0x58] sm:$0xff] %v927
        %992 = vst [vmem:[#allocation2 + $0x60] sm:$0xff] %v928
        %993 = vst [vmem:[#allocation2 + $0x68] sm:$0xff] %v929
        %994 = vst [vmem:[#allocation2 + $0x70] sm:$0xff] %v930
        %995 = vst [vmem:[#allocation2 + $0x78] sm:$0xff] %v931
        %996 = vst [vmem:[#allocation2 + $0x80] sm:$0xff] %v932
        %997 = vst [vmem:[#allocation2 + $0x88] sm:$0xff] %v933
        %998 = vst [vmem:[#allocation2 + $0x90] sm:$0xff] %v934
        %999 = vst [vmem:[#allocation2 + $0x98] sm:$0xff] %v935
        %1000 = vst [vmem:[#allocation2 + $0xa0] sm:$0xff] %v936
        %1001 = vst [vmem:[#allocation2 + $0xa8] sm:$0xff] %v937
        %1002 = vst [vmem:[#allocation2 + $0xb0] sm:$0xff] %v938
        %1003 = vst [vmem:[#allocation2 + $0xb8] sm:$0xff] %v939
        %1004 = vst [vmem:[#allocation2 + $0xc0] sm:$0xff] %v940
        %1005 = vst [vmem:[#allocation2 + $0xc8] sm:$0xff] %v941
        %1006 = vst [vmem:[#allocation2 + $0xd0] sm:$0xff] %v942
        %1007 = vst [vmem:[#allocation2 + $0xd8] sm:$0xff] %v943
        %1008 = vst [vmem:[#allocation2 + $0xe0] sm:$0xff] %v944
        %1009 = vst [vmem:[#allocation2 + $0xe8] sm:$0xff] %v945
        %1010 = vst [vmem:[#allocation2 + $0xf0] sm:$0xff] %v946
        %1011 = vst [vmem:[#allocation2 + $0xf8] sm:$0xff] %v947
        %1012 = vst [vmem:[#allocation2 + $0x100] sm:$0xff] %v948
        %1013 = vst [vmem:[#allocation2 + $0x108] sm:$0xff] %v949
        %1014 = vst [vmem:[#allocation2 + $0x110] sm:$0xff] %v950
        %1015 = vst [vmem:[#allocation2 + $0x118] sm:$0xff] %v951
        %1016 = vst [vmem:[#allocation2 + $0x120] sm:$0xff] %v952
        %1017 = vst [vmem:[#allocation2 + $0x128] sm:$0xff] %v953
        %1018 = vst [vmem:[#allocation2 + $0x130] sm:$0xff] %v954
        %1019 = vst [vmem:[#allocation2 + $0x138] sm:$0xff] %v955
        %1020 = vst [vmem:[#allocation2 + $0x140] sm:$0xff] %v956
        %1021 = vst [vmem:[#allocation2 + $0x148] sm:$0xff] %v957
        %1022 = vst [vmem:[#allocation2 + $0x150] sm:$0xff] %v958
        %1023 = vst [vmem:[#allocation2 + $0x158] sm:$0xff] %v959
        %1024 = vst [vmem:[#allocation2 + $0x160] sm:$0xff] %v960
        %1025 = vst [vmem:[#allocation2 + $0x168] sm:$0xff] %v961
        %1026 = vst [vmem:[#allocation2 + $0x170] sm:$0xff] %v962
        %1027 = vst [vmem:[#allocation2 + $0x178] sm:$0xff] %v963
        %1028 = vst [vmem:[#allocation2 + $0x180] sm:$0xff] %v964
        %1029 = vst [vmem:[#allocation2 + $0x188] sm:$0xff] %v965
        %1030 = vst [vmem:[#allocation2 + $0x190] sm:$0xff] %v966
        %1031 = vst [vmem:[#allocation2 + $0x198] sm:$0xff] %v967
        %1032 = vst [vmem:[#allocation2 + $0x1a0] sm:$0xff] %v968
        %1033 = vst [vmem:[#allocation2 + $0x1a8] sm:$0xff] %v969
        %1034 = vst [vmem:[#allocation2 + $0x1b0] sm:$0xff] %v970
        %1035 = vst [vmem:[#allocation2 + $0x1b8] sm:$0xff] %v971
        %1036 = vst [vmem:[#allocation2 + $0x1c0] sm:$0xff] %v972
        %1037 = vst [vmem:[#allocation2 + $0x1c8] sm:$0xff] %v973
        %1038 = vst [vmem:[#allocation2 + $0x1d0] sm:$0xff] %v974
        %1039 = vst [vmem:[#allocation2 + $0x1d8] sm:$0xff] %v975
        %1040 = vst [vmem:[#allocation2 + $0x1e0] sm:$0xff] %v976
        %1041 = vst [vmem:[#allocation2 + $0x1e8] sm:$0xff] %v977
        %1042 = vst [vmem:[#allocation2 + $0x1f0] sm:$0xff] %v978
        %1043 = vst [vmem:[#allocation2 + $0x1f8] sm:$0xff] %v979
        %v1044 = vld [vmem:[%s438] sm:$0xff]
        %v1045 = vld [vmem:[%s438 + $0x8] sm:$0xff]
        %v1046 = vld [vmem:[%s438 + $0x10] sm:$0xff]
        %v1047 = vld [vmem:[%s438 + $0x18] sm:$0xff]
        %v1048 = vld [vmem:[%s438 + $0x20] sm:$0xff]
        %v1049 = vld [vmem:[%s438 + $0x28] sm:$0xff]
        %v1050 = vld [vmem:[%s438 + $0x30] sm:$0xff]
        %v1051 = vld [vmem:[%s438 + $0x38] sm:$0xff]
        %v1052 = vld [vmem:[%s438 + $0x40] sm:$0xff]
        %v1053 = vld [vmem:[%s438 + $0x48] sm:$0xff]
        %v1054 = vld [vmem:[%s438 + $0x50] sm:$0xff]
        %v1055 = vld [vmem:[%s438 + $0x58] sm:$0xff]
        %v1056 = vld [vmem:[%s438 + $0x60] sm:$0xff]
        %v1057 = vld [vmem:[%s438 + $0x68] sm:$0xff]
        %v1058 = vld [vmem:[%s438 + $0x70] sm:$0xff]
        %v1059 = vld [vmem:[%s438 + $0x78] sm:$0xff]
        %v1060 = vld [vmem:[%s438 + $0x80] sm:$0xff]
        %v1061 = vld [vmem:[%s438 + $0x88] sm:$0xff]
        %v1062 = vld [vmem:[%s438 + $0x90] sm:$0xff]
        %v1063 = vld [vmem:[%s438 + $0x98] sm:$0xff]
        %v1064 = vld [vmem:[%s438 + $0xa0] sm:$0xff]
        %v1065 = vld [vmem:[%s438 + $0xa8] sm:$0xff]
        %v1066 = vld [vmem:[%s438 + $0xb0] sm:$0xff]
        %v1067 = vld [vmem:[%s438 + $0xb8] sm:$0xff]
        %v1068 = vld [vmem:[%s438 + $0xc0] sm:$0xff]
        %v1069 = vld [vmem:[%s438 + $0xc8] sm:$0xff]
        %v1070 = vld [vmem:[%s438 + $0xd0] sm:$0xff]
        %v1071 = vld [vmem:[%s438 + $0xd8] sm:$0xff]
        %v1072 = vld [vmem:[%s438 + $0xe0] sm:$0xff]
        %v1073 = vld [vmem:[%s438 + $0xe8] sm:$0xff]
        %v1074 = vld [vmem:[%s438 + $0xf0] sm:$0xff]
        %v1075 = vld [vmem:[%s438 + $0xf8] sm:$0xff]
        %v1076 = vld [vmem:[%s438 + $0x100] sm:$0xff]
        %v1077 = vld [vmem:[%s438 + $0x108] sm:$0xff]
        %v1078 = vld [vmem:[%s438 + $0x110] sm:$0xff]
        %v1079 = vld [vmem:[%s438 + $0x118] sm:$0xff]
        %v1080 = vld [vmem:[%s438 + $0x120] sm:$0xff]
        %v1081 = vld [vmem:[%s438 + $0x128] sm:$0xff]
        %v1082 = vld [vmem:[%s438 + $0x130] sm:$0xff]
        %v1083 = vld [vmem:[%s438 + $0x138] sm:$0xff]
        %v1084 = vld [vmem:[%s438 + $0x140] sm:$0xff]
        %v1085 = vld [vmem:[%s438 + $0x148] sm:$0xff]
        %v1086 = vld [vmem:[%s438 + $0x150] sm:$0xff]
        %v1087 = vld [vmem:[%s438 + $0x158] sm:$0xff]
        %v1088 = vld [vmem:[%s438 + $0x160] sm:$0xff]
        %v1089 = vld [vmem:[%s438 + $0x168] sm:$0xff]
        %v1090 = vld [vmem:[%s438 + $0x170] sm:$0xff]
        %v1091 = vld [vmem:[%s438 + $0x178] sm:$0xff]
        %v1092 = vld [vmem:[%s438 + $0x180] sm:$0xff]
        %v1093 = vld [vmem:[%s438 + $0x188] sm:$0xff]
        %v1094 = vld [vmem:[%s438 + $0x190] sm:$0xff]
        %v1095 = vld [vmem:[%s438 + $0x198] sm:$0xff]
        %v1096 = vld [vmem:[%s438 + $0x1a0] sm:$0xff]
        %v1097 = vld [vmem:[%s438 + $0x1a8] sm:$0xff]
        %v1098 = vld [vmem:[%s438 + $0x1b0] sm:$0xff]
        %v1099 = vld [vmem:[%s438 + $0x1b8] sm:$0xff]
        %v1100 = vld [vmem:[%s438 + $0x1c0] sm:$0xff]
        %v1101 = vld [vmem:[%s438 + $0x1c8] sm:$0xff]
        %v1102 = vld [vmem:[%s438 + $0x1d0] sm:$0xff]
        %v1103 = vld [vmem:[%s438 + $0x1d8] sm:$0xff]
        %v1104 = vld [vmem:[%s438 + $0x1e0] sm:$0xff]
        %v1105 = vld [vmem:[%s438 + $0x1e8] sm:$0xff]
        %v1106 = vld [vmem:[%s438 + $0x1f0] sm:$0xff]
        %v1107 = vld [vmem:[%s438 + $0x1f8] sm:$0xff]
        %v1108 = vld [vmem:[#allocation3] sm:$0xff]
        %v1109 = vld [vmem:[#allocation3 + $0x8] sm:$0xff]
        %v1110 = vld [vmem:[#allocation3 + $0x10] sm:$0xff]
        %v1111 = vld [vmem:[#allocation3 + $0x18] sm:$0xff]
        %v1112 = vld [vmem:[#allocation3 + $0x20] sm:$0xff]
        %v1113 = vld [vmem:[#allocation3 + $0x28] sm:$0xff]
        %v1114 = vld [vmem:[#allocation3 + $0x30] sm:$0xff]
        %v1115 = vld [vmem:[#allocation3 + $0x38] sm:$0xff]
        %v1116 = vld [vmem:[#allocation3 + $0x40] sm:$0xff]
        %v1117 = vld [vmem:[#allocation3 + $0x48] sm:$0xff]
        %v1118 = vld [vmem:[#allocation3 + $0x50] sm:$0xff]
        %v1119 = vld [vmem:[#allocation3 + $0x58] sm:$0xff]
        %v1120 = vld [vmem:[#allocation3 + $0x60] sm:$0xff]
        %v1121 = vld [vmem:[#allocation3 + $0x68] sm:$0xff]
        %v1122 = vld [vmem:[#allocation3 + $0x70] sm:$0xff]
        %v1123 = vld [vmem:[#allocation3 + $0x78] sm:$0xff]
        %v1124 = vld [vmem:[#allocation3 + $0x80] sm:$0xff]
        %v1125 = vld [vmem:[#allocation3 + $0x88] sm:$0xff]
        %v1126 = vld [vmem:[#allocation3 + $0x90] sm:$0xff]
        %v1127 = vld [vmem:[#allocation3 + $0x98] sm:$0xff]
        %v1128 = vld [vmem:[#allocation3 + $0xa0] sm:$0xff]
        %v1129 = vld [vmem:[#allocation3 + $0xa8] sm:$0xff]
        %v1130 = vld [vmem:[#allocation3 + $0xb0] sm:$0xff]
        %v1131 = vld [vmem:[#allocation3 + $0xb8] sm:$0xff]
        %v1132 = vld [vmem:[#allocation3 + $0xc0] sm:$0xff]
        %v1133 = vld [vmem:[#allocation3 + $0xc8] sm:$0xff]
        %v1134 = vld [vmem:[#allocation3 + $0xd0] sm:$0xff]
        %v1135 = vld [vmem:[#allocation3 + $0xd8] sm:$0xff]
        %v1136 = vld [vmem:[#allocation3 + $0xe0] sm:$0xff]
        %v1137 = vld [vmem:[#allocation3 + $0xe8] sm:$0xff]
        %v1138 = vld [vmem:[#allocation3 + $0xf0] sm:$0xff]
        %v1139 = vld [vmem:[#allocation3 + $0xf8] sm:$0xff]
        %v1140 = vld [vmem:[#allocation3 + $0x100] sm:$0xff]
        %v1141 = vld [vmem:[#allocation3 + $0x108] sm:$0xff]
        %v1142 = vld [vmem:[#allocation3 + $0x110] sm:$0xff]
        %v1143 = vld [vmem:[#allocation3 + $0x118] sm:$0xff]
        %v1144 = vld [vmem:[#allocation3 + $0x120] sm:$0xff]
        %v1145 = vld [vmem:[#allocation3 + $0x128] sm:$0xff]
        %v1146 = vld [vmem:[#allocation3 + $0x130] sm:$0xff]
        %v1147 = vld [vmem:[#allocation3 + $0x138] sm:$0xff]
        %v1148 = vld [vmem:[#allocation3 + $0x140] sm:$0xff]
        %v1149 = vld [vmem:[#allocation3 + $0x148] sm:$0xff]
        %v1150 = vld [vmem:[#allocation3 + $0x150] sm:$0xff]
        %v1151 = vld [vmem:[#allocation3 + $0x158] sm:$0xff]
        %v1152 = vld [vmem:[#allocation3 + $0x160] sm:$0xff]
        %v1153 = vld [vmem:[#allocation3 + $0x168] sm:$0xff]
        %v1154 = vld [vmem:[#allocation3 + $0x170] sm:$0xff]
        %v1155 = vld [vmem:[#allocation3 + $0x178] sm:$0xff]
        %v1156 = vld [vmem:[#allocation3 + $0x180] sm:$0xff]
        %v1157 = vld [vmem:[#allocation3 + $0x188] sm:$0xff]
        %v1158 = vld [vmem:[#allocation3 + $0x190] sm:$0xff]
        %v1159 = vld [vmem:[#allocation3 + $0x198] sm:$0xff]
        %v1160 = vld [vmem:[#allocation3 + $0x1a0] sm:$0xff]
        %v1161 = vld [vmem:[#allocation3 + $0x1a8] sm:$0xff]
        %v1162 = vld [vmem:[#allocation3 + $0x1b0] sm:$0xff]
        %v1163 = vld [vmem:[#allocation3 + $0x1b8] sm:$0xff]
        %v1164 = vld [vmem:[#allocation3 + $0x1c0] sm:$0xff]
        %v1165 = vld [vmem:[#allocation3 + $0x1c8] sm:$0xff]
        %v1166 = vld [vmem:[#allocation3 + $0x1d0] sm:$0xff]
        %v1167 = vld [vmem:[#allocation3 + $0x1d8] sm:$0xff]
        %v1168 = vld [vmem:[#allocation3 + $0x1e0] sm:$0xff]
        %v1169 = vld [vmem:[#allocation3 + $0x1e8] sm:$0xff]
        %v1170 = vld [vmem:[#allocation3 + $0x1f0] sm:$0xff]
        %v1171 = vld [vmem:[#allocation3 + $0x1f8] sm:$0xff]
        %v1172 = vadd.f32 %v1108, %v1044
        %v1173 = vadd.f32 %v1109, %v1045
        %v1174 = vadd.f32 %v1110, %v1046
        %v1175 = vadd.f32 %v1111, %v1047
        %v1176 = vadd.f32 %v1112, %v1048
        %v1177 = vadd.f32 %v1113, %v1049
        %v1178 = vadd.f32 %v1114, %v1050
        %v1179 = vadd.f32 %v1115, %v1051
        %v1180 = vadd.f32 %v1116, %v1052
        %v1181 = vadd.f32 %v1117, %v1053
        %v1182 = vadd.f32 %v1118, %v1054
        %v1183 = vadd.f32 %v1119, %v1055
        %v1184 = vadd.f32 %v1120, %v1056
        %v1185 = vadd.f32 %v1121, %v1057
        %v1186 = vadd.f32 %v1122, %v1058
        %v1187 = vadd.f32 %v1123, %v1059
        %v1188 = vadd.f32 %v1124, %v1060
        %v1189 = vadd.f32 %v1125, %v1061
        %v1190 = vadd.f32 %v1126, %v1062
        %v1191 = vadd.f32 %v1127, %v1063
        %v1192 = vadd.f32 %v1128, %v1064
        %v1193 = vadd.f32 %v1129, %v1065
        %v1194 = vadd.f32 %v1130, %v1066
        %v1195 = vadd.f32 %v1131, %v1067
        %v1196 = vadd.f32 %v1132, %v1068
        %v1197 = vadd.f32 %v1133, %v1069
        %v1198 = vadd.f32 %v1134, %v1070
        %v1199 = vadd.f32 %v1135, %v1071
        %v1200 = vadd.f32 %v1136, %v1072
        %v1201 = vadd.f32 %v1137, %v1073
        %v1202 = vadd.f32 %v1138, %v1074
        %v1203 = vadd.f32 %v1139, %v1075
        %v1204 = vadd.f32 %v1140, %v1076
        %v1205 = vadd.f32 %v1141, %v1077
        %v1206 = vadd.f32 %v1142, %v1078
        %v1207 = vadd.f32 %v1143, %v1079
        %v1208 = vadd.f32 %v1144, %v1080
        %v1209 = vadd.f32 %v1145, %v1081
        %v1210 = vadd.f32 %v1146, %v1082
        %v1211 = vadd.f32 %v1147, %v1083
        %v1212 = vadd.f32 %v1148, %v1084
        %v1213 = vadd.f32 %v1149, %v1085
        %v1214 = vadd.f32 %v1150, %v1086
        %v1215 = vadd.f32 %v1151, %v1087
        %v1216 = vadd.f32 %v1152, %v1088
        %v1217 = vadd.f32 %v1153, %v1089
        %v1218 = vadd.f32 %v1154, %v1090
        %v1219 = vadd.f32 %v1155, %v1091
        %v1220 = vadd.f32 %v1156, %v1092
        %v1221 = vadd.f32 %v1157, %v1093
        %v1222 = vadd.f32 %v1158, %v1094
        %v1223 = vadd.f32 %v1159, %v1095
        %v1224 = vadd.f32 %v1160, %v1096
        %v1225 = vadd.f32 %v1161, %v1097
        %v1226 = vadd.f32 %v1162, %v1098
        %v1227 = vadd.f32 %v1163, %v1099
        %v1228 = vadd.f32 %v1164, %v1100
        %v1229 = vadd.f32 %v1165, %v1101
        %v1230 = vadd.f32 %v1166, %v1102
        %v1231 = vadd.f32 %v1167, %v1103
        %v1232 = vadd.f32 %v1168, %v1104
        %v1233 = vadd.f32 %v1169, %v1105
        %v1234 = vadd.f32 %v1170, %v1106
        %v1235 = vadd.f32 %v1171, %v1107
        %1236 = vst [vmem:[#allocation3] sm:$0xff] %v1172
        %1237 = vst [vmem:[#allocation3 + $0x8] sm:$0xff] %v1173
        %1238 = vst [vmem:[#allocation3 + $0x10] sm:$0xff] %v1174
        %1239 = vst [vmem:[#allocation3 + $0x18] sm:$0xff] %v1175
        %1240 = vst [vmem:[#allocation3 + $0x20] sm:$0xff] %v1176
        %1241 = vst [vmem:[#allocation3 + $0x28] sm:$0xff] %v1177
        %1242 = vst [vmem:[#allocation3 + $0x30] sm:$0xff] %v1178
        %1243 = vst [vmem:[#allocation3 + $0x38] sm:$0xff] %v1179
        %1244 = vst [vmem:[#allocation3 + $0x40] sm:$0xff] %v1180
        %1245 = vst [vmem:[#allocation3 + $0x48] sm:$0xff] %v1181
        %1246 = vst [vmem:[#allocation3 + $0x50] sm:$0xff] %v1182
        %1247 = vst [vmem:[#allocation3 + $0x58] sm:$0xff] %v1183
        %1248 = vst [vmem:[#allocation3 + $0x60] sm:$0xff] %v1184
        %1249 = vst [vmem:[#allocation3 + $0x68] sm:$0xff] %v1185
        %1250 = vst [vmem:[#allocation3 + $0x70] sm:$0xff] %v1186
        %1251 = vst [vmem:[#allocation3 + $0x78] sm:$0xff] %v1187
        %1252 = vst [vmem:[#allocation3 + $0x80] sm:$0xff] %v1188
        %1253 = vst [vmem:[#allocation3 + $0x88] sm:$0xff] %v1189
        %1254 = vst [vmem:[#allocation3 + $0x90] sm:$0xff] %v1190
        %1255 = vst [vmem:[#allocation3 + $0x98] sm:$0xff] %v1191
        %1256 = vst [vmem:[#allocation3 + $0xa0] sm:$0xff] %v1192
        %1257 = vst [vmem:[#allocation3 + $0xa8] sm:$0xff] %v1193
        %1258 = vst [vmem:[#allocation3 + $0xb0] sm:$0xff] %v1194
        %1259 = vst [vmem:[#allocation3 + $0xb8] sm:$0xff] %v1195
        %1260 = vst [vmem:[#allocation3 + $0xc0] sm:$0xff] %v1196
        %1261 = vst [vmem:[#allocation3 + $0xc8] sm:$0xff] %v1197
        %1262 = vst [vmem:[#allocation3 + $0xd0] sm:$0xff] %v1198
        %1263 = vst [vmem:[#allocation3 + $0xd8] sm:$0xff] %v1199
        %1264 = vst [vmem:[#allocation3 + $0xe0] sm:$0xff] %v1200
        %1265 = vst [vmem:[#allocation3 + $0xe8] sm:$0xff] %v1201
        %1266 = vst [vmem:[#allocation3 + $0xf0] sm:$0xff] %v1202
        %1267 = vst [vmem:[#allocation3 + $0xf8] sm:$0xff] %v1203
        %1268 = vst [vmem:[#allocation3 + $0x100] sm:$0xff] %v1204
        %1269 = vst [vmem:[#allocation3 + $0x108] sm:$0xff] %v1205
        %1270 = vst [vmem:[#allocation3 + $0x110] sm:$0xff] %v1206
        %1271 = vst [vmem:[#allocation3 + $0x118] sm:$0xff] %v1207
        %1272 = vst [vmem:[#allocation3 + $0x120] sm:$0xff] %v1208
        %1273 = vst [vmem:[#allocation3 + $0x128] sm:$0xff] %v1209
        %1274 = vst [vmem:[#allocation3 + $0x130] sm:$0xff] %v1210
        %1275 = vst [vmem:[#allocation3 + $0x138] sm:$0xff] %v1211
        %1276 = vst [vmem:[#allocation3 + $0x140] sm:$0xff] %v1212
        %1277 = vst [vmem:[#allocation3 + $0x148] sm:$0xff] %v1213
        %1278 = vst [vmem:[#allocation3 + $0x150] sm:$0xff] %v1214
        %1279 = vst [vmem:[#allocation3 + $0x158] sm:$0xff] %v1215
        %1280 = vst [vmem:[#allocation3 + $0x160] sm:$0xff] %v1216
        %1281 = vst [vmem:[#allocation3 + $0x168] sm:$0xff] %v1217
        %1282 = vst [vmem:[#allocation3 + $0x170] sm:$0xff] %v1218
        %1283 = vst [vmem:[#allocation3 + $0x178] sm:$0xff] %v1219
        %1284 = vst [vmem:[#allocation3 + $0x180] sm:$0xff] %v1220
        %1285 = vst [vmem:[#allocation3 + $0x188] sm:$0xff] %v1221
        %1286 = vst [vmem:[#allocation3 + $0x190] sm:$0xff] %v1222
        %1287 = vst [vmem:[#allocation3 + $0x198] sm:$0xff] %v1223
        %1288 = vst [vmem:[#allocation3 + $0x1a0] sm:$0xff] %v1224
        %1289 = vst [vmem:[#allocation3 + $0x1a8] sm:$0xff] %v1225
        %1290 = vst [vmem:[#allocation3 + $0x1b0] sm:$0xff] %v1226
        %1291 = vst [vmem:[#allocation3 + $0x1b8] sm:$0xff] %v1227
        %1292 = vst [vmem:[#allocation3 + $0x1c0] sm:$0xff] %v1228
        %1293 = vst [vmem:[#allocation3 + $0x1c8] sm:$0xff] %v1229
        %1294 = vst [vmem:[#allocation3 + $0x1d0] sm:$0xff] %v1230
        %1295 = vst [vmem:[#allocation3 + $0x1d8] sm:$0xff] %v1231
        %1296 = vst [vmem:[#allocation3 + $0x1e0] sm:$0xff] %v1232
        %1297 = vst [vmem:[#allocation3 + $0x1e8] sm:$0xff] %v1233
        %1298 = vst [vmem:[#allocation3 + $0x1f0] sm:$0xff] %v1234
        %1299 = vst [vmem:[#allocation3 + $0x1f8] sm:$0xff] %v1235
        %v1300 = vld [vmem:[%s447] sm:$0xff]
        %v1301 = vld [vmem:[%s447 + $0x8] sm:$0xff]
        %v1302 = vld [vmem:[%s447 + $0x10] sm:$0xff]
        %v1303 = vld [vmem:[%s447 + $0x18] sm:$0xff]
        %v1304 = vld [vmem:[%s447 + $0x20] sm:$0xff]
        %v1305 = vld [vmem:[%s447 + $0x28] sm:$0xff]
        %v1306 = vld [vmem:[%s447 + $0x30] sm:$0xff]
        %v1307 = vld [vmem:[%s447 + $0x38] sm:$0xff]
        %v1308 = vld [vmem:[%s447 + $0x40] sm:$0xff]
        %v1309 = vld [vmem:[%s447 + $0x48] sm:$0xff]
        %v1310 = vld [vmem:[%s447 + $0x50] sm:$0xff]
        %v1311 = vld [vmem:[%s447 + $0x58] sm:$0xff]
        %v1312 = vld [vmem:[%s447 + $0x60] sm:$0xff]
        %v1313 = vld [vmem:[%s447 + $0x68] sm:$0xff]
        %v1314 = vld [vmem:[%s447 + $0x70] sm:$0xff]
        %v1315 = vld [vmem:[%s447 + $0x78] sm:$0xff]
        %v1316 = vld [vmem:[%s447 + $0x80] sm:$0xff]
        %v1317 = vld [vmem:[%s447 + $0x88] sm:$0xff]
        %v1318 = vld [vmem:[%s447 + $0x90] sm:$0xff]
        %v1319 = vld [vmem:[%s447 + $0x98] sm:$0xff]
        %v1320 = vld [vmem:[%s447 + $0xa0] sm:$0xff]
        %v1321 = vld [vmem:[%s447 + $0xa8] sm:$0xff]
        %v1322 = vld [vmem:[%s447 + $0xb0] sm:$0xff]
        %v1323 = vld [vmem:[%s447 + $0xb8] sm:$0xff]
        %v1324 = vld [vmem:[%s447 + $0xc0] sm:$0xff]
        %v1325 = vld [vmem:[%s447 + $0xc8] sm:$0xff]
        %v1326 = vld [vmem:[%s447 + $0xd0] sm:$0xff]
        %v1327 = vld [vmem:[%s447 + $0xd8] sm:$0xff]
        %v1328 = vld [vmem:[%s447 + $0xe0] sm:$0xff]
        %v1329 = vld [vmem:[%s447 + $0xe8] sm:$0xff]
        %v1330 = vld [vmem:[%s447 + $0xf0] sm:$0xff]
        %v1331 = vld [vmem:[%s447 + $0xf8] sm:$0xff]
        %v1332 = vld [vmem:[%s447 + $0x100] sm:$0xff]
        %v1333 = vld [vmem:[%s447 + $0x108] sm:$0xff]
        %v1334 = vld [vmem:[%s447 + $0x110] sm:$0xff]
        %v1335 = vld [vmem:[%s447 + $0x118] sm:$0xff]
        %v1336 = vld [vmem:[%s447 + $0x120] sm:$0xff]
        %v1337 = vld [vmem:[%s447 + $0x128] sm:$0xff]
        %v1338 = vld [vmem:[%s447 + $0x130] sm:$0xff]
        %v1339 = vld [vmem:[%s447 + $0x138] sm:$0xff]
        %v1340 = vld [vmem:[%s447 + $0x140] sm:$0xff]
        %v1341 = vld [vmem:[%s447 + $0x148] sm:$0xff]
        %v1342 = vld [vmem:[%s447 + $0x150] sm:$0xff]
        %v1343 = vld [vmem:[%s447 + $0x158] sm:$0xff]
        %v1344 = vld [vmem:[%s447 + $0x160] sm:$0xff]
        %v1345 = vld [vmem:[%s447 + $0x168] sm:$0xff]
        %v1346 = vld [vmem:[%s447 + $0x170] sm:$0xff]
        %v1347 = vld [vmem:[%s447 + $0x178] sm:$0xff]
        %v1348 = vld [vmem:[%s447 + $0x180] sm:$0xff]
        %v1349 = vld [vmem:[%s447 + $0x188] sm:$0xff]
        %v1350 = vld [vmem:[%s447 + $0x190] sm:$0xff]
        %v1351 = vld [vmem:[%s447 + $0x198] sm:$0xff]
        %v1352 = vld [vmem:[%s447 + $0x1a0] sm:$0xff]
        %v1353 = vld [vmem:[%s447 + $0x1a8] sm:$0xff]
        %v1354 = vld [vmem:[%s447 + $0x1b0] sm:$0xff]
        %v1355 = vld [vmem:[%s447 + $0x1b8] sm:$0xff]
        %v1356 = vld [vmem:[%s447 + $0x1c0] sm:$0xff]
        %v1357 = vld [vmem:[%s447 + $0x1c8] sm:$0xff]
        %v1358 = vld [vmem:[%s447 + $0x1d0] sm:$0xff]
        %v1359 = vld [vmem:[%s447 + $0x1d8] sm:$0xff]
        %v1360 = vld [vmem:[%s447 + $0x1e0] sm:$0xff]
        %v1361 = vld [vmem:[%s447 + $0x1e8] sm:$0xff]
        %v1362 = vld [vmem:[%s447 + $0x1f0] sm:$0xff]
        %v1363 = vld [vmem:[%s447 + $0x1f8] sm:$0xff]
        %v1364 = vld [vmem:[#allocation4] sm:$0xff]
        %v1365 = vld [vmem:[#allocation4 + $0x8] sm:$0xff]
        %v1366 = vld [vmem:[#allocation4 + $0x10] sm:$0xff]
        %v1367 = vld [vmem:[#allocation4 + $0x18] sm:$0xff]
        %v1368 = vld [vmem:[#allocation4 + $0x20] sm:$0xff]
        %v1369 = vld [vmem:[#allocation4 + $0x28] sm:$0xff]
        %v1370 = vld [vmem:[#allocation4 + $0x30] sm:$0xff]
        %v1371 = vld [vmem:[#allocation4 + $0x38] sm:$0xff]
        %v1372 = vld [vmem:[#allocation4 + $0x40] sm:$0xff]
        %v1373 = vld [vmem:[#allocation4 + $0x48] sm:$0xff]
        %v1374 = vld [vmem:[#allocation4 + $0x50] sm:$0xff]
        %v1375 = vld [vmem:[#allocation4 + $0x58] sm:$0xff]
        %v1376 = vld [vmem:[#allocation4 + $0x60] sm:$0xff]
        %v1377 = vld [vmem:[#allocation4 + $0x68] sm:$0xff]
        %v1378 = vld [vmem:[#allocation4 + $0x70] sm:$0xff]
        %v1379 = vld [vmem:[#allocation4 + $0x78] sm:$0xff]
        %v1380 = vld [vmem:[#allocation4 + $0x80] sm:$0xff]
        %v1381 = vld [vmem:[#allocation4 + $0x88] sm:$0xff]
        %v1382 = vld [vmem:[#allocation4 + $0x90] sm:$0xff]
        %v1383 = vld [vmem:[#allocation4 + $0x98] sm:$0xff]
        %v1384 = vld [vmem:[#allocation4 + $0xa0] sm:$0xff]
        %v1385 = vld [vmem:[#allocation4 + $0xa8] sm:$0xff]
        %v1386 = vld [vmem:[#allocation4 + $0xb0] sm:$0xff]
        %v1387 = vld [vmem:[#allocation4 + $0xb8] sm:$0xff]
        %v1388 = vld [vmem:[#allocation4 + $0xc0] sm:$0xff]
        %v1389 = vld [vmem:[#allocation4 + $0xc8] sm:$0xff]
        %v1390 = vld [vmem:[#allocation4 + $0xd0] sm:$0xff]
        %v1391 = vld [vmem:[#allocation4 + $0xd8] sm:$0xff]
        %v1392 = vld [vmem:[#allocation4 + $0xe0] sm:$0xff]
        %v1393 = vld [vmem:[#allocation4 + $0xe8] sm:$0xff]
        %v1394 = vld [vmem:[#allocation4 + $0xf0] sm:$0xff]
        %v1395 = vld [vmem:[#allocation4 + $0xf8] sm:$0xff]
        %v1396 = vld [vmem:[#allocation4 + $0x100] sm:$0xff]
        %v1397 = vld [vmem:[#allocation4 + $0x108] sm:$0xff]
        %v1398 = vld [vmem:[#allocation4 + $0x110] sm:$0xff]
        %v1399 = vld [vmem:[#allocation4 + $0x118] sm:$0xff]
        %v1400 = vld [vmem:[#allocation4 + $0x120] sm:$0xff]
        %v1401 = vld [vmem:[#allocation4 + $0x128] sm:$0xff]
        %v1402 = vld [vmem:[#allocation4 + $0x130] sm:$0xff]
        %v1403 = vld [vmem:[#allocation4 + $0x138] sm:$0xff]
        %v1404 = vld [vmem:[#allocation4 + $0x140] sm:$0xff]
        %v1405 = vld [vmem:[#allocation4 + $0x148] sm:$0xff]
        %v1406 = vld [vmem:[#allocation4 + $0x150] sm:$0xff]
        %v1407 = vld [vmem:[#allocation4 + $0x158] sm:$0xff]
        %v1408 = vld [vmem:[#allocation4 + $0x160] sm:$0xff]
        %v1409 = vld [vmem:[#allocation4 + $0x168] sm:$0xff]
        %v1410 = vld [vmem:[#allocation4 + $0x170] sm:$0xff]
        %v1411 = vld [vmem:[#allocation4 + $0x178] sm:$0xff]
        %v1412 = vld [vmem:[#allocation4 + $0x180] sm:$0xff]
        %v1413 = vld [vmem:[#allocation4 + $0x188] sm:$0xff]
        %v1414 = vld [vmem:[#allocation4 + $0x190] sm:$0xff]
        %v1415 = vld [vmem:[#allocation4 + $0x198] sm:$0xff]
        %v1416 = vld [vmem:[#allocation4 + $0x1a0] sm:$0xff]
        %v1417 = vld [vmem:[#allocation4 + $0x1a8] sm:$0xff]
        %v1418 = vld [vmem:[#allocation4 + $0x1b0] sm:$0xff]
        %v1419 = vld [vmem:[#allocation4 + $0x1b8] sm:$0xff]
        %v1420 = vld [vmem:[#allocation4 + $0x1c0] sm:$0xff]
        %v1421 = vld [vmem:[#allocation4 + $0x1c8] sm:$0xff]
        %v1422 = vld [vmem:[#allocation4 + $0x1d0] sm:$0xff]
        %v1423 = vld [vmem:[#allocation4 + $0x1d8] sm:$0xff]
        %v1424 = vld [vmem:[#allocation4 + $0x1e0] sm:$0xff]
        %v1425 = vld [vmem:[#allocation4 + $0x1e8] sm:$0xff]
        %v1426 = vld [vmem:[#allocation4 + $0x1f0] sm:$0xff]
        %v1427 = vld [vmem:[#allocation4 + $0x1f8] sm:$0xff]
        %v1428 = vadd.f32 %v1364, %v1300
        %v1429 = vadd.f32 %v1365, %v1301
        %v1430 = vadd.f32 %v1366, %v1302
        %v1431 = vadd.f32 %v1367, %v1303
        %v1432 = vadd.f32 %v1368, %v1304
        %v1433 = vadd.f32 %v1369, %v1305
        %v1434 = vadd.f32 %v1370, %v1306
        %v1435 = vadd.f32 %v1371, %v1307
        %v1436 = vadd.f32 %v1372, %v1308
        %v1437 = vadd.f32 %v1373, %v1309
        %v1438 = vadd.f32 %v1374, %v1310
        %v1439 = vadd.f32 %v1375, %v1311
        %v1440 = vadd.f32 %v1376, %v1312
        %v1441 = vadd.f32 %v1377, %v1313
        %v1442 = vadd.f32 %v1378, %v1314
        %v1443 = vadd.f32 %v1379, %v1315
        %v1444 = vadd.f32 %v1380, %v1316
        %v1445 = vadd.f32 %v1381, %v1317
        %v1446 = vadd.f32 %v1382, %v1318
        %v1447 = vadd.f32 %v1383, %v1319
        %v1448 = vadd.f32 %v1384, %v1320
        %v1449 = vadd.f32 %v1385, %v1321
        %v1450 = vadd.f32 %v1386, %v1322
        %v1451 = vadd.f32 %v1387, %v1323
        %v1452 = vadd.f32 %v1388, %v1324
        %v1453 = vadd.f32 %v1389, %v1325
        %v1454 = vadd.f32 %v1390, %v1326
        %v1455 = vadd.f32 %v1391, %v1327
        %v1456 = vadd.f32 %v1392, %v1328
        %v1457 = vadd.f32 %v1393, %v1329
        %v1458 = vadd.f32 %v1394, %v1330
        %v1459 = vadd.f32 %v1395, %v1331
        %v1460 = vadd.f32 %v1396, %v1332
        %v1461 = vadd.f32 %v1397, %v1333
        %v1462 = vadd.f32 %v1398, %v1334
        %v1463 = vadd.f32 %v1399, %v1335
        %v1464 = vadd.f32 %v1400, %v1336
        %v1465 = vadd.f32 %v1401, %v1337
        %v1466 = vadd.f32 %v1402, %v1338
        %v1467 = vadd.f32 %v1403, %v1339
        %v1468 = vadd.f32 %v1404, %v1340
        %v1469 = vadd.f32 %v1405, %v1341
        %v1470 = vadd.f32 %v1406, %v1342
        %v1471 = vadd.f32 %v1407, %v1343
        %v1472 = vadd.f32 %v1408, %v1344
        %v1473 = vadd.f32 %v1409, %v1345
        %v1474 = vadd.f32 %v1410, %v1346
        %v1475 = vadd.f32 %v1411, %v1347
        %v1476 = vadd.f32 %v1412, %v1348
        %v1477 = vadd.f32 %v1413, %v1349
        %v1478 = vadd.f32 %v1414, %v1350
        %v1479 = vadd.f32 %v1415, %v1351
        %v1480 = vadd.f32 %v1416, %v1352
        %v1481 = vadd.f32 %v1417, %v1353
        %v1482 = vadd.f32 %v1418, %v1354
        %v1483 = vadd.f32 %v1419, %v1355
        %v1484 = vadd.f32 %v1420, %v1356
        %v1485 = vadd.f32 %v1421, %v1357
        %v1486 = vadd.f32 %v1422, %v1358
        %v1487 = vadd.f32 %v1423, %v1359
        %v1488 = vadd.f32 %v1424, %v1360
        %v1489 = vadd.f32 %v1425, %v1361
        %v1490 = vadd.f32 %v1426, %v1362
        %v1491 = vadd.f32 %v1427, %v1363
        %1492 = vst [vmem:[#allocation4] sm:$0xff] %v1428
        %1493 = vst [vmem:[#allocation4 + $0x8] sm:$0xff] %v1429
        %1494 = vst [vmem:[#allocation4 + $0x10] sm:$0xff] %v1430
        %1495 = vst [vmem:[#allocation4 + $0x18] sm:$0xff] %v1431
        %1496 = vst [vmem:[#allocation4 + $0x20] sm:$0xff] %v1432
        %1497 = vst [vmem:[#allocation4 + $0x28] sm:$0xff] %v1433
        %1498 = vst [vmem:[#allocation4 + $0x30] sm:$0xff] %v1434
        %1499 = vst [vmem:[#allocation4 + $0x38] sm:$0xff] %v1435
        %1500 = vst [vmem:[#allocation4 + $0x40] sm:$0xff] %v1436
        %1501 = vst [vmem:[#allocation4 + $0x48] sm:$0xff] %v1437
        %1502 = vst [vmem:[#allocation4 + $0x50] sm:$0xff] %v1438
        %1503 = vst [vmem:[#allocation4 + $0x58] sm:$0xff] %v1439
        %1504 = vst [vmem:[#allocation4 + $0x60] sm:$0xff] %v1440
        %1505 = vst [vmem:[#allocation4 + $0x68] sm:$0xff] %v1441
        %1506 = vst [vmem:[#allocation4 + $0x70] sm:$0xff] %v1442
        %1507 = vst [vmem:[#allocation4 + $0x78] sm:$0xff] %v1443
        %1508 = vst [vmem:[#allocation4 + $0x80] sm:$0xff] %v1444
        %1509 = vst [vmem:[#allocation4 + $0x88] sm:$0xff] %v1445
        %1510 = vst [vmem:[#allocation4 + $0x90] sm:$0xff] %v1446
        %1511 = vst [vmem:[#allocation4 + $0x98] sm:$0xff] %v1447
        %1512 = vst [vmem:[#allocation4 + $0xa0] sm:$0xff] %v1448
        %1513 = vst [vmem:[#allocation4 + $0xa8] sm:$0xff] %v1449
        %1514 = vst [vmem:[#allocation4 + $0xb0] sm:$0xff] %v1450
        %1515 = vst [vmem:[#allocation4 + $0xb8] sm:$0xff] %v1451
        %1516 = vst [vmem:[#allocation4 + $0xc0] sm:$0xff] %v1452
        %1517 = vst [vmem:[#allocation4 + $0xc8] sm:$0xff] %v1453
        %1518 = vst [vmem:[#allocation4 + $0xd0] sm:$0xff] %v1454
        %1519 = vst [vmem:[#allocation4 + $0xd8] sm:$0xff] %v1455
        %1520 = vst [vmem:[#allocation4 + $0xe0] sm:$0xff] %v1456
        %1521 = vst [vmem:[#allocation4 + $0xe8] sm:$0xff] %v1457
        %1522 = vst [vmem:[#allocation4 + $0xf0] sm:$0xff] %v1458
        %1523 = vst [vmem:[#allocation4 + $0xf8] sm:$0xff] %v1459
        %1524 = vst [vmem:[#allocation4 + $0x100] sm:$0xff] %v1460
        %1525 = vst [vmem:[#allocation4 + $0x108] sm:$0xff] %v1461
        %1526 = vst [vmem:[#allocation4 + $0x110] sm:$0xff] %v1462
        %1527 = vst [vmem:[#allocation4 + $0x118] sm:$0xff] %v1463
        %1528 = vst [vmem:[#allocation4 + $0x120] sm:$0xff] %v1464
        %1529 = vst [vmem:[#allocation4 + $0x128] sm:$0xff] %v1465
        %1530 = vst [vmem:[#allocation4 + $0x130] sm:$0xff] %v1466
        %1531 = vst [vmem:[#allocation4 + $0x138] sm:$0xff] %v1467
        %1532 = vst [vmem:[#allocation4 + $0x140] sm:$0xff] %v1468
        %1533 = vst [vmem:[#allocation4 + $0x148] sm:$0xff] %v1469
        %1534 = vst [vmem:[#allocation4 + $0x150] sm:$0xff] %v1470
        %1535 = vst [vmem:[#allocation4 + $0x158] sm:$0xff] %v1471
        %1536 = vst [vmem:[#allocation4 + $0x160] sm:$0xff] %v1472
        %1537 = vst [vmem:[#allocation4 + $0x168] sm:$0xff] %v1473
        %1538 = vst [vmem:[#allocation4 + $0x170] sm:$0xff] %v1474
        %1539 = vst [vmem:[#allocation4 + $0x178] sm:$0xff] %v1475
        %1540 = vst [vmem:[#allocation4 + $0x180] sm:$0xff] %v1476
        %1541 = vst [vmem:[#allocation4 + $0x188] sm:$0xff] %v1477
        %1542 = vst [vmem:[#allocation4 + $0x190] sm:$0xff] %v1478
        %1543 = vst [vmem:[#allocation4 + $0x198] sm:$0xff] %v1479
        %1544 = vst [vmem:[#allocation4 + $0x1a0] sm:$0xff] %v1480
        %1545 = vst [vmem:[#allocation4 + $0x1a8] sm:$0xff] %v1481
        %1546 = vst [vmem:[#allocation4 + $0x1b0] sm:$0xff] %v1482
        %1547 = vst [vmem:[#allocation4 + $0x1b8] sm:$0xff] %v1483
        %1548 = vst [vmem:[#allocation4 + $0x1c0] sm:$0xff] %v1484
        %1549 = vst [vmem:[#allocation4 + $0x1c8] sm:$0xff] %v1485
        %1550 = vst [vmem:[#allocation4 + $0x1d0] sm:$0xff] %v1486
        %1551 = vst [vmem:[#allocation4 + $0x1d8] sm:$0xff] %v1487
        %1552 = vst [vmem:[#allocation4 + $0x1e0] sm:$0xff] %v1488
        %1553 = vst [vmem:[#allocation4 + $0x1e8] sm:$0xff] %v1489
        %1554 = vst [vmem:[#allocation4 + $0x1f0] sm:$0xff] %v1490
        %1555 = vst [vmem:[#allocation4 + $0x1f8] sm:$0xff] %v1491
        %v1556 = vld [vmem:[%s456] sm:$0xff]
        %v1557 = vld [vmem:[%s456 + $0x8] sm:$0xff]
        %v1558 = vld [vmem:[%s456 + $0x10] sm:$0xff]
        %v1559 = vld [vmem:[%s456 + $0x18] sm:$0xff]
        %v1560 = vld [vmem:[%s456 + $0x20] sm:$0xff]
        %v1561 = vld [vmem:[%s456 + $0x28] sm:$0xff]
        %v1562 = vld [vmem:[%s456 + $0x30] sm:$0xff]
        %v1563 = vld [vmem:[%s456 + $0x38] sm:$0xff]
        %v1564 = vld [vmem:[%s456 + $0x40] sm:$0xff]
        %v1565 = vld [vmem:[%s456 + $0x48] sm:$0xff]
        %v1566 = vld [vmem:[%s456 + $0x50] sm:$0xff]
        %v1567 = vld [vmem:[%s456 + $0x58] sm:$0xff]
        %v1568 = vld [vmem:[%s456 + $0x60] sm:$0xff]
        %v1569 = vld [vmem:[%s456 + $0x68] sm:$0xff]
        %v1570 = vld [vmem:[%s456 + $0x70] sm:$0xff]
        %v1571 = vld [vmem:[%s456 + $0x78] sm:$0xff]
        %v1572 = vld [vmem:[%s456 + $0x80] sm:$0xff]
        %v1573 = vld [vmem:[%s456 + $0x88] sm:$0xff]
        %v1574 = vld [vmem:[%s456 + $0x90] sm:$0xff]
        %v1575 = vld [vmem:[%s456 + $0x98] sm:$0xff]
        %v1576 = vld [vmem:[%s456 + $0xa0] sm:$0xff]
        %v1577 = vld [vmem:[%s456 + $0xa8] sm:$0xff]
        %v1578 = vld [vmem:[%s456 + $0xb0] sm:$0xff]
        %v1579 = vld [vmem:[%s456 + $0xb8] sm:$0xff]
        %v1580 = vld [vmem:[%s456 + $0xc0] sm:$0xff]
        %v1581 = vld [vmem:[%s456 + $0xc8] sm:$0xff]
        %v1582 = vld [vmem:[%s456 + $0xd0] sm:$0xff]
        %v1583 = vld [vmem:[%s456 + $0xd8] sm:$0xff]
        %v1584 = vld [vmem:[%s456 + $0xe0] sm:$0xff]
        %v1585 = vld [vmem:[%s456 + $0xe8] sm:$0xff]
        %v1586 = vld [vmem:[%s456 + $0xf0] sm:$0xff]
        %v1587 = vld [vmem:[%s456 + $0xf8] sm:$0xff]
        %v1588 = vld [vmem:[%s456 + $0x100] sm:$0xff]
        %v1589 = vld [vmem:[%s456 + $0x108] sm:$0xff]
        %v1590 = vld [vmem:[%s456 + $0x110] sm:$0xff]
        %v1591 = vld [vmem:[%s456 + $0x118] sm:$0xff]
        %v1592 = vld [vmem:[%s456 + $0x120] sm:$0xff]
        %v1593 = vld [vmem:[%s456 + $0x128] sm:$0xff]
        %v1594 = vld [vmem:[%s456 + $0x130] sm:$0xff]
        %v1595 = vld [vmem:[%s456 + $0x138] sm:$0xff]
        %v1596 = vld [vmem:[%s456 + $0x140] sm:$0xff]
        %v1597 = vld [vmem:[%s456 + $0x148] sm:$0xff]
        %v1598 = vld [vmem:[%s456 + $0x150] sm:$0xff]
        %v1599 = vld [vmem:[%s456 + $0x158] sm:$0xff]
        %v1600 = vld [vmem:[%s456 + $0x160] sm:$0xff]
        %v1601 = vld [vmem:[%s456 + $0x168] sm:$0xff]
        %v1602 = vld [vmem:[%s456 + $0x170] sm:$0xff]
        %v1603 = vld [vmem:[%s456 + $0x178] sm:$0xff]
        %v1604 = vld [vmem:[%s456 + $0x180] sm:$0xff]
        %v1605 = vld [vmem:[%s456 + $0x188] sm:$0xff]
        %v1606 = vld [vmem:[%s456 + $0x190] sm:$0xff]
        %v1607 = vld [vmem:[%s456 + $0x198] sm:$0xff]
        %v1608 = vld [vmem:[%s456 + $0x1a0] sm:$0xff]
        %v1609 = vld [vmem:[%s456 + $0x1a8] sm:$0xff]
        %v1610 = vld [vmem:[%s456 + $0x1b0] sm:$0xff]
        %v1611 = vld [vmem:[%s456 + $0x1b8] sm:$0xff]
        %v1612 = vld [vmem:[%s456 + $0x1c0] sm:$0xff]
        %v1613 = vld [vmem:[%s456 + $0x1c8] sm:$0xff]
        %v1614 = vld [vmem:[%s456 + $0x1d0] sm:$0xff]
        %v1615 = vld [vmem:[%s456 + $0x1d8] sm:$0xff]
        %v1616 = vld [vmem:[%s456 + $0x1e0] sm:$0xff]
        %v1617 = vld [vmem:[%s456 + $0x1e8] sm:$0xff]
        %v1618 = vld [vmem:[%s456 + $0x1f0] sm:$0xff]
        %v1619 = vld [vmem:[%s456 + $0x1f8] sm:$0xff]
        %v1620 = vld [vmem:[#allocation5] sm:$0xff]
        %v1621 = vld [vmem:[#allocation5 + $0x8] sm:$0xff]
        %v1622 = vld [vmem:[#allocation5 + $0x10] sm:$0xff]
        %v1623 = vld [vmem:[#allocation5 + $0x18] sm:$0xff]
        %v1624 = vld [vmem:[#allocation5 + $0x20] sm:$0xff]
        %v1625 = vld [vmem:[#allocation5 + $0x28] sm:$0xff]
        %v1626 = vld [vmem:[#allocation5 + $0x30] sm:$0xff]
        %v1627 = vld [vmem:[#allocation5 + $0x38] sm:$0xff]
        %v1628 = vld [vmem:[#allocation5 + $0x40] sm:$0xff]
        %v1629 = vld [vmem:[#allocation5 + $0x48] sm:$0xff]
        %v1630 = vld [vmem:[#allocation5 + $0x50] sm:$0xff]
        %v1631 = vld [vmem:[#allocation5 + $0x58] sm:$0xff]
        %v1632 = vld [vmem:[#allocation5 + $0x60] sm:$0xff]
        %v1633 = vld [vmem:[#allocation5 + $0x68] sm:$0xff]
        %v1634 = vld [vmem:[#allocation5 + $0x70] sm:$0xff]
        %v1635 = vld [vmem:[#allocation5 + $0x78] sm:$0xff]
        %v1636 = vld [vmem:[#allocation5 + $0x80] sm:$0xff]
        %v1637 = vld [vmem:[#allocation5 + $0x88] sm:$0xff]
        %v1638 = vld [vmem:[#allocation5 + $0x90] sm:$0xff]
        %v1639 = vld [vmem:[#allocation5 + $0x98] sm:$0xff]
        %v1640 = vld [vmem:[#allocation5 + $0xa0] sm:$0xff]
        %v1641 = vld [vmem:[#allocation5 + $0xa8] sm:$0xff]
        %v1642 = vld [vmem:[#allocation5 + $0xb0] sm:$0xff]
        %v1643 = vld [vmem:[#allocation5 + $0xb8] sm:$0xff]
        %v1644 = vld [vmem:[#allocation5 + $0xc0] sm:$0xff]
        %v1645 = vld [vmem:[#allocation5 + $0xc8] sm:$0xff]
        %v1646 = vld [vmem:[#allocation5 + $0xd0] sm:$0xff]
        %v1647 = vld [vmem:[#allocation5 + $0xd8] sm:$0xff]
        %v1648 = vld [vmem:[#allocation5 + $0xe0] sm:$0xff]
        %v1649 = vld [vmem:[#allocation5 + $0xe8] sm:$0xff]
        %v1650 = vld [vmem:[#allocation5 + $0xf0] sm:$0xff]
        %v1651 = vld [vmem:[#allocation5 + $0xf8] sm:$0xff]
        %v1652 = vld [vmem:[#allocation5 + $0x100] sm:$0xff]
        %v1653 = vld [vmem:[#allocation5 + $0x108] sm:$0xff]
        %v1654 = vld [vmem:[#allocation5 + $0x110] sm:$0xff]
        %v1655 = vld [vmem:[#allocation5 + $0x118] sm:$0xff]
        %v1656 = vld [vmem:[#allocation5 + $0x120] sm:$0xff]
        %v1657 = vld [vmem:[#allocation5 + $0x128] sm:$0xff]
        %v1658 = vld [vmem:[#allocation5 + $0x130] sm:$0xff]
        %v1659 = vld [vmem:[#allocation5 + $0x138] sm:$0xff]
        %v1660 = vld [vmem:[#allocation5 + $0x140] sm:$0xff]
        %v1661 = vld [vmem:[#allocation5 + $0x148] sm:$0xff]
        %v1662 = vld [vmem:[#allocation5 + $0x150] sm:$0xff]
        %v1663 = vld [vmem:[#allocation5 + $0x158] sm:$0xff]
        %v1664 = vld [vmem:[#allocation5 + $0x160] sm:$0xff]
        %v1665 = vld [vmem:[#allocation5 + $0x168] sm:$0xff]
        %v1666 = vld [vmem:[#allocation5 + $0x170] sm:$0xff]
        %v1667 = vld [vmem:[#allocation5 + $0x178] sm:$0xff]
        %v1668 = vld [vmem:[#allocation5 + $0x180] sm:$0xff]
        %v1669 = vld [vmem:[#allocation5 + $0x188] sm:$0xff]
        %v1670 = vld [vmem:[#allocation5 + $0x190] sm:$0xff]
        %v1671 = vld [vmem:[#allocation5 + $0x198] sm:$0xff]
        %v1672 = vld [vmem:[#allocation5 + $0x1a0] sm:$0xff]
        %v1673 = vld [vmem:[#allocation5 + $0x1a8] sm:$0xff]
        %v1674 = vld [vmem:[#allocation5 + $0x1b0] sm:$0xff]
        %v1675 = vld [vmem:[#allocation5 + $0x1b8] sm:$0xff]
        %v1676 = vld [vmem:[#allocation5 + $0x1c0] sm:$0xff]
        %v1677 = vld [vmem:[#allocation5 + $0x1c8] sm:$0xff]
        %v1678 = vld [vmem:[#allocation5 + $0x1d0] sm:$0xff]
        %v1679 = vld [vmem:[#allocation5 + $0x1d8] sm:$0xff]
        %v1680 = vld [vmem:[#allocation5 + $0x1e0] sm:$0xff]
        %v1681 = vld [vmem:[#allocation5 + $0x1e8] sm:$0xff]
        %v1682 = vld [vmem:[#allocation5 + $0x1f0] sm:$0xff]
        %v1683 = vld [vmem:[#allocation5 + $0x1f8] sm:$0xff]
        %v1684 = vadd.f32 %v1620, %v1556
        %v1685 = vadd.f32 %v1621, %v1557
        %v1686 = vadd.f32 %v1622, %v1558
        %v1687 = vadd.f32 %v1623, %v1559
        %v1688 = vadd.f32 %v1624, %v1560
        %v1689 = vadd.f32 %v1625, %v1561
        %v1690 = vadd.f32 %v1626, %v1562
        %v1691 = vadd.f32 %v1627, %v1563
        %v1692 = vadd.f32 %v1628, %v1564
        %v1693 = vadd.f32 %v1629, %v1565
        %v1694 = vadd.f32 %v1630, %v1566
        %v1695 = vadd.f32 %v1631, %v1567
        %v1696 = vadd.f32 %v1632, %v1568
        %v1697 = vadd.f32 %v1633, %v1569
        %v1698 = vadd.f32 %v1634, %v1570
        %v1699 = vadd.f32 %v1635, %v1571
        %v1700 = vadd.f32 %v1636, %v1572
        %v1701 = vadd.f32 %v1637, %v1573
        %v1702 = vadd.f32 %v1638, %v1574
        %v1703 = vadd.f32 %v1639, %v1575
        %v1704 = vadd.f32 %v1640, %v1576
        %v1705 = vadd.f32 %v1641, %v1577
        %v1706 = vadd.f32 %v1642, %v1578
        %v1707 = vadd.f32 %v1643, %v1579
        %v1708 = vadd.f32 %v1644, %v1580
        %v1709 = vadd.f32 %v1645, %v1581
        %v1710 = vadd.f32 %v1646, %v1582
        %v1711 = vadd.f32 %v1647, %v1583
        %v1712 = vadd.f32 %v1648, %v1584
        %v1713 = vadd.f32 %v1649, %v1585
        %v1714 = vadd.f32 %v1650, %v1586
        %v1715 = vadd.f32 %v1651, %v1587
        %v1716 = vadd.f32 %v1652, %v1588
        %v1717 = vadd.f32 %v1653, %v1589
        %v1718 = vadd.f32 %v1654, %v1590
        %v1719 = vadd.f32 %v1655, %v1591
        %v1720 = vadd.f32 %v1656, %v1592
        %v1721 = vadd.f32 %v1657, %v1593
        %v1722 = vadd.f32 %v1658, %v1594
        %v1723 = vadd.f32 %v1659, %v1595
        %v1724 = vadd.f32 %v1660, %v1596
        %v1725 = vadd.f32 %v1661, %v1597
        %v1726 = vadd.f32 %v1662, %v1598
        %v1727 = vadd.f32 %v1663, %v1599
        %v1728 = vadd.f32 %v1664, %v1600
        %v1729 = vadd.f32 %v1665, %v1601
        %v1730 = vadd.f32 %v1666, %v1602
        %v1731 = vadd.f32 %v1667, %v1603
        %v1732 = vadd.f32 %v1668, %v1604
        %v1733 = vadd.f32 %v1669, %v1605
        %v1734 = vadd.f32 %v1670, %v1606
        %v1735 = vadd.f32 %v1671, %v1607
        %v1736 = vadd.f32 %v1672, %v1608
        %v1737 = vadd.f32 %v1673, %v1609
        %v1738 = vadd.f32 %v1674, %v1610
        %v1739 = vadd.f32 %v1675, %v1611
        %v1740 = vadd.f32 %v1676, %v1612
        %v1741 = vadd.f32 %v1677, %v1613
        %v1742 = vadd.f32 %v1678, %v1614
        %v1743 = vadd.f32 %v1679, %v1615
        %v1744 = vadd.f32 %v1680, %v1616
        %v1745 = vadd.f32 %v1681, %v1617
        %v1746 = vadd.f32 %v1682, %v1618
        %v1747 = vadd.f32 %v1683, %v1619
        %1748 = vst [vmem:[#allocation5] sm:$0xff] %v1684
        %1749 = vst [vmem:[#allocation5 + $0x8] sm:$0xff] %v1685
        %1750 = vst [vmem:[#allocation5 + $0x10] sm:$0xff] %v1686
        %1751 = vst [vmem:[#allocation5 + $0x18] sm:$0xff] %v1687
        %1752 = vst [vmem:[#allocation5 + $0x20] sm:$0xff] %v1688
        %1753 = vst [vmem:[#allocation5 + $0x28] sm:$0xff] %v1689
        %1754 = vst [vmem:[#allocation5 + $0x30] sm:$0xff] %v1690
        %1755 = vst [vmem:[#allocation5 + $0x38] sm:$0xff] %v1691
        %1756 = vst [vmem:[#allocation5 + $0x40] sm:$0xff] %v1692
        %1757 = vst [vmem:[#allocation5 + $0x48] sm:$0xff] %v1693
        %1758 = vst [vmem:[#allocation5 + $0x50] sm:$0xff] %v1694
        %1759 = vst [vmem:[#allocation5 + $0x58] sm:$0xff] %v1695
        %1760 = vst [vmem:[#allocation5 + $0x60] sm:$0xff] %v1696
        %1761 = vst [vmem:[#allocation5 + $0x68] sm:$0xff] %v1697
        %1762 = vst [vmem:[#allocation5 + $0x70] sm:$0xff] %v1698
        %1763 = vst [vmem:[#allocation5 + $0x78] sm:$0xff] %v1699
        %1764 = vst [vmem:[#allocation5 + $0x80] sm:$0xff] %v1700
        %1765 = vst [vmem:[#allocation5 + $0x88] sm:$0xff] %v1701
        %1766 = vst [vmem:[#allocation5 + $0x90] sm:$0xff] %v1702
        %1767 = vst [vmem:[#allocation5 + $0x98] sm:$0xff] %v1703
        %1768 = vst [vmem:[#allocation5 + $0xa0] sm:$0xff] %v1704
        %1769 = vst [vmem:[#allocation5 + $0xa8] sm:$0xff] %v1705
        %1770 = vst [vmem:[#allocation5 + $0xb0] sm:$0xff] %v1706
        %1771 = vst [vmem:[#allocation5 + $0xb8] sm:$0xff] %v1707
        %1772 = vst [vmem:[#allocation5 + $0xc0] sm:$0xff] %v1708
        %1773 = vst [vmem:[#allocation5 + $0xc8] sm:$0xff] %v1709
        %1774 = vst [vmem:[#allocation5 + $0xd0] sm:$0xff] %v1710
        %1775 = vst [vmem:[#allocation5 + $0xd8] sm:$0xff] %v1711
        %1776 = vst [vmem:[#allocation5 + $0xe0] sm:$0xff] %v1712
        %1777 = vst [vmem:[#allocation5 + $0xe8] sm:$0xff] %v1713
        %1778 = vst [vmem:[#allocation5 + $0xf0] sm:$0xff] %v1714
        %1779 = vst [vmem:[#allocation5 + $0xf8] sm:$0xff] %v1715
        %1780 = vst [vmem:[#allocation5 + $0x100] sm:$0xff] %v1716
        %1781 = vst [vmem:[#allocation5 + $0x108] sm:$0xff] %v1717
        %1782 = vst [vmem:[#allocation5 + $0x110] sm:$0xff] %v1718
        %1783 = vst [vmem:[#allocation5 + $0x118] sm:$0xff] %v1719
        %1784 = vst [vmem:[#allocation5 + $0x120] sm:$0xff] %v1720
        %1785 = vst [vmem:[#allocation5 + $0x128] sm:$0xff] %v1721
        %1786 = vst [vmem:[#allocation5 + $0x130] sm:$0xff] %v1722
        %1787 = vst [vmem:[#allocation5 + $0x138] sm:$0xff] %v1723
        %1788 = vst [vmem:[#allocation5 + $0x140] sm:$0xff] %v1724
        %1789 = vst [vmem:[#allocation5 + $0x148] sm:$0xff] %v1725
        %1790 = vst [vmem:[#allocation5 + $0x150] sm:$0xff] %v1726
        %1791 = vst [vmem:[#allocation5 + $0x158] sm:$0xff] %v1727
        %1792 = vst [vmem:[#allocation5 + $0x160] sm:$0xff] %v1728
        %1793 = vst [vmem:[#allocation5 + $0x168] sm:$0xff] %v1729
        %1794 = vst [vmem:[#allocation5 + $0x170] sm:$0xff] %v1730
        %1795 = vst [vmem:[#allocation5 + $0x178] sm:$0xff] %v1731
        %1796 = vst [vmem:[#allocation5 + $0x180] sm:$0xff] %v1732
        %1797 = vst [vmem:[#allocation5 + $0x188] sm:$0xff] %v1733
        %1798 = vst [vmem:[#allocation5 + $0x190] sm:$0xff] %v1734
        %1799 = vst [vmem:[#allocation5 + $0x198] sm:$0xff] %v1735
        %1800 = vst [vmem:[#allocation5 + $0x1a0] sm:$0xff] %v1736
        %1801 = vst [vmem:[#allocation5 + $0x1a8] sm:$0xff] %v1737
        %1802 = vst [vmem:[#allocation5 + $0x1b0] sm:$0xff] %v1738
        %1803 = vst [vmem:[#allocation5 + $0x1b8] sm:$0xff] %v1739
        %1804 = vst [vmem:[#allocation5 + $0x1c0] sm:$0xff] %v1740
        %1805 = vst [vmem:[#allocation5 + $0x1c8] sm:$0xff] %v1741
        %1806 = vst [vmem:[#allocation5 + $0x1d0] sm:$0xff] %v1742
        %1807 = vst [vmem:[#allocation5 + $0x1d8] sm:$0xff] %v1743
        %1808 = vst [vmem:[#allocation5 + $0x1e0] sm:$0xff] %v1744
        %1809 = vst [vmem:[#allocation5 + $0x1e8] sm:$0xff] %v1745
        %1810 = vst [vmem:[#allocation5 + $0x1f0] sm:$0xff] %v1746
        %1811 = vst [vmem:[#allocation5 + $0x1f8] sm:$0xff] %v1747
        %p1812 = scmp.eq.s32.totalorder %s35, 1
        // Predicated region
        $region89: #{tpu_custom_call.1} parent=51 // pred_check
          %p1813 = pneg %p1812
        $region90: #{tpu_custom_call.1} parent=51 // pred_check_branch
          %1815 = sbr.rel (%p1813) target = $region92
        $region91: #{tpu_custom_call.1} parent=51 // pred_region
          %v1816 = vld [vmem:[#allocation2] sm:$0xff]
          %v1817 = vld [vmem:[#allocation2 + $0x8] sm:$0xff]
          %v1818 = vld [vmem:[#allocation2 + $0x10] sm:$0xff]
          %v1819 = vld [vmem:[#allocation2 + $0x18] sm:$0xff]
          %v1820 = vld [vmem:[#allocation2 + $0x20] sm:$0xff]
          %v1821 = vld [vmem:[#allocation2 + $0x28] sm:$0xff]
          %v1822 = vld [vmem:[#allocation2 + $0x30] sm:$0xff]
          %v1823 = vld [vmem:[#allocation2 + $0x38] sm:$0xff]
          %v1824 = vld [vmem:[#allocation2 + $0x40] sm:$0xff]
          %v1825 = vld [vmem:[#allocation2 + $0x48] sm:$0xff]
          %v1826 = vld [vmem:[#allocation2 + $0x50] sm:$0xff]
          %v1827 = vld [vmem:[#allocation2 + $0x58] sm:$0xff]
          %v1828 = vld [vmem:[#allocation2 + $0x60] sm:$0xff]
          %v1829 = vld [vmem:[#allocation2 + $0x68] sm:$0xff]
          %v1830 = vld [vmem:[#allocation2 + $0x70] sm:$0xff]
          %v1831 = vld [vmem:[#allocation2 + $0x78] sm:$0xff]
          %v1832 = vld [vmem:[#allocation2 + $0x80] sm:$0xff]
          %v1833 = vld [vmem:[#allocation2 + $0x88] sm:$0xff]
          %v1834 = vld [vmem:[#allocation2 + $0x90] sm:$0xff]
          %v1835 = vld [vmem:[#allocation2 + $0x98] sm:$0xff]
          %v1836 = vld [vmem:[#allocation2 + $0xa0] sm:$0xff]
          %v1837 = vld [vmem:[#allocation2 + $0xa8] sm:$0xff]
          %v1838 = vld [vmem:[#allocation2 + $0xb0] sm:$0xff]
          %v1839 = vld [vmem:[#allocation2 + $0xb8] sm:$0xff]
          %v1840 = vld [vmem:[#allocation2 + $0xc0] sm:$0xff]
          %v1841 = vld [vmem:[#allocation2 + $0xc8] sm:$0xff]
          %v1842 = vld [vmem:[#allocation2 + $0xd0] sm:$0xff]
          %v1843 = vld [vmem:[#allocation2 + $0xd8] sm:$0xff]
          %v1844 = vld [vmem:[#allocation2 + $0xe0] sm:$0xff]
          %v1845 = vld [vmem:[#allocation2 + $0xe8] sm:$0xff]
          %v1846 = vld [vmem:[#allocation2 + $0xf0] sm:$0xff]
          %v1847 = vld [vmem:[#allocation2 + $0xf8] sm:$0xff]
          %v1848 = vld [vmem:[#allocation2 + $0x100] sm:$0xff]
          %v1849 = vld [vmem:[#allocation2 + $0x108] sm:$0xff]
          %v1850 = vld [vmem:[#allocation2 + $0x110] sm:$0xff]
          %v1851 = vld [vmem:[#allocation2 + $0x118] sm:$0xff]
          %v1852 = vld [vmem:[#allocation2 + $0x120] sm:$0xff]
          %v1853 = vld [vmem:[#allocation2 + $0x128] sm:$0xff]
          %v1854 = vld [vmem:[#allocation2 + $0x130] sm:$0xff]
          %v1855 = vld [vmem:[#allocation2 + $0x138] sm:$0xff]
          %v1856 = vld [vmem:[#allocation2 + $0x140] sm:$0xff]
          %v1857 = vld [vmem:[#allocation2 + $0x148] sm:$0xff]
          %v1858 = vld [vmem:[#allocation2 + $0x150] sm:$0xff]
          %v1859 = vld [vmem:[#allocation2 + $0x158] sm:$0xff]
          %v1860 = vld [vmem:[#allocation2 + $0x160] sm:$0xff]
          %v1861 = vld [vmem:[#allocation2 + $0x168] sm:$0xff]
          %v1862 = vld [vmem:[#allocation2 + $0x170] sm:$0xff]
          %v1863 = vld [vmem:[#allocation2 + $0x178] sm:$0xff]
          %v1864 = vld [vmem:[#allocation2 + $0x180] sm:$0xff]
          %v1865 = vld [vmem:[#allocation2 + $0x188] sm:$0xff]
          %v1866 = vld [vmem:[#allocation2 + $0x190] sm:$0xff]
          %v1867 = vld [vmem:[#allocation2 + $0x198] sm:$0xff]
          %v1868 = vld [vmem:[#allocation2 + $0x1a0] sm:$0xff]
          %v1869 = vld [vmem:[#allocation2 + $0x1a8] sm:$0xff]
          %v1870 = vld [vmem:[#allocation2 + $0x1b0] sm:$0xff]
          %v1871 = vld [vmem:[#allocation2 + $0x1b8] sm:$0xff]
          %v1872 = vld [vmem:[#allocation2 + $0x1c0] sm:$0xff]
          %v1873 = vld [vmem:[#allocation2 + $0x1c8] sm:$0xff]
          %v1874 = vld [vmem:[#allocation2 + $0x1d0] sm:$0xff]
          %v1875 = vld [vmem:[#allocation2 + $0x1d8] sm:$0xff]
          %v1876 = vld [vmem:[#allocation2 + $0x1e0] sm:$0xff]
          %v1877 = vld [vmem:[#allocation2 + $0x1e8] sm:$0xff]
          %v1878 = vld [vmem:[#allocation2 + $0x1f0] sm:$0xff]
          %v1879 = vld [vmem:[#allocation2 + $0x1f8] sm:$0xff]
          %1880 = vadd.xlane.f32.xlu0 %v1816
          %v1881 = vpop.xlane.xlu0 %1880
          %1882 = vadd.xlane.f32.xlu0 %v1817
          %v1883 = vpop.xlane.xlu0 %1882
          %1884 = vadd.xlane.f32.xlu0 %v1818
          %v1885 = vpop.xlane.xlu0 %1884
          %1886 = vadd.xlane.f32.xlu0 %v1819
          %v1887 = vpop.xlane.xlu0 %1886
          %1888 = vadd.xlane.f32.xlu0 %v1820
          %v1889 = vpop.xlane.xlu0 %1888
          %1890 = vadd.xlane.f32.xlu0 %v1821
          %v1891 = vpop.xlane.xlu0 %1890
          %1892 = vadd.xlane.f32.xlu0 %v1822
          %v1893 = vpop.xlane.xlu0 %1892
          %1894 = vadd.xlane.f32.xlu0 %v1823
          %v1895 = vpop.xlane.xlu0 %1894
          %1896 = vadd.xlane.f32.xlu0 %v1824
          %v1897 = vpop.xlane.xlu0 %1896
          %1898 = vadd.xlane.f32.xlu0 %v1825
          %v1899 = vpop.xlane.xlu0 %1898
          %1900 = vadd.xlane.f32.xlu0 %v1826
          %v1901 = vpop.xlane.xlu0 %1900
          %1902 = vadd.xlane.f32.xlu0 %v1827
          %v1903 = vpop.xlane.xlu0 %1902
          %1904 = vadd.xlane.f32.xlu0 %v1828
          %v1905 = vpop.xlane.xlu0 %1904
          %1906 = vadd.xlane.f32.xlu0 %v1829
          %v1907 = vpop.xlane.xlu0 %1906
          %1908 = vadd.xlane.f32.xlu0 %v1830
          %v1909 = vpop.xlane.xlu0 %1908
          %1910 = vadd.xlane.f32.xlu0 %v1831
          %v1911 = vpop.xlane.xlu0 %1910
          %1912 = vadd.xlane.f32.xlu0 %v1832
          %v1913 = vpop.xlane.xlu0 %1912
          %1914 = vadd.xlane.f32.xlu0 %v1833
          %v1915 = vpop.xlane.xlu0 %1914
          %1916 = vadd.xlane.f32.xlu0 %v1834
          %v1917 = vpop.xlane.xlu0 %1916
          %1918 = vadd.xlane.f32.xlu0 %v1835
          %v1919 = vpop.xlane.xlu0 %1918
          %1920 = vadd.xlane.f32.xlu0 %v1836
          %v1921 = vpop.xlane.xlu0 %1920
          %1922 = vadd.xlane.f32.xlu0 %v1837
          %v1923 = vpop.xlane.xlu0 %1922
          %1924 = vadd.xlane.f32.xlu0 %v1838
          %v1925 = vpop.xlane.xlu0 %1924
          %1926 = vadd.xlane.f32.xlu0 %v1839
          %v1927 = vpop.xlane.xlu0 %1926
          %1928 = vadd.xlane.f32.xlu0 %v1840
          %v1929 = vpop.xlane.xlu0 %1928
          %1930 = vadd.xlane.f32.xlu0 %v1841
          %v1931 = vpop.xlane.xlu0 %1930
          %1932 = vadd.xlane.f32.xlu0 %v1842
          %v1933 = vpop.xlane.xlu0 %1932
          %1934 = vadd.xlane.f32.xlu0 %v1843
          %v1935 = vpop.xlane.xlu0 %1934
          %1936 = vadd.xlane.f32.xlu0 %v1844
          %v1937 = vpop.xlane.xlu0 %1936
          %1938 = vadd.xlane.f32.xlu0 %v1845
          %v1939 = vpop.xlane.xlu0 %1938
          %1940 = vadd.xlane.f32.xlu0 %v1846
          %v1941 = vpop.xlane.xlu0 %1940
          %1942 = vadd.xlane.f32.xlu0 %v1847
          %v1943 = vpop.xlane.xlu0 %1942
          %1944 = vadd.xlane.f32.xlu0 %v1848
          %v1945 = vpop.xlane.xlu0 %1944
          %1946 = vadd.xlane.f32.xlu0 %v1849
          %v1947 = vpop.xlane.xlu0 %1946
          %1948 = vadd.xlane.f32.xlu0 %v1850
          %v1949 = vpop.xlane.xlu0 %1948
          %1950 = vadd.xlane.f32.xlu0 %v1851
          %v1951 = vpop.xlane.xlu0 %1950
          %1952 = vadd.xlane.f32.xlu0 %v1852
          %v1953 = vpop.xlane.xlu0 %1952
          %1954 = vadd.xlane.f32.xlu0 %v1853
          %v1955 = vpop.xlane.xlu0 %1954
          %1956 = vadd.xlane.f32.xlu0 %v1854
          %v1957 = vpop.xlane.xlu0 %1956
          %1958 = vadd.xlane.f32.xlu0 %v1855
          %v1959 = vpop.xlane.xlu0 %1958
          %1960 = vadd.xlane.f32.xlu0 %v1856
          %v1961 = vpop.xlane.xlu0 %1960
          %1962 = vadd.xlane.f32.xlu0 %v1857
          %v1963 = vpop.xlane.xlu0 %1962
          %1964 = vadd.xlane.f32.xlu0 %v1858
          %v1965 = vpop.xlane.xlu0 %1964
          %1966 = vadd.xlane.f32.xlu0 %v1859
          %v1967 = vpop.xlane.xlu0 %1966
          %1968 = vadd.xlane.f32.xlu0 %v1860
          %v1969 = vpop.xlane.xlu0 %1968
          %1970 = vadd.xlane.f32.xlu0 %v1861
          %v1971 = vpop.xlane.xlu0 %1970
          %1972 = vadd.xlane.f32.xlu0 %v1862
          %v1973 = vpop.xlane.xlu0 %1972
          %1974 = vadd.xlane.f32.xlu0 %v1863
          %v1975 = vpop.xlane.xlu0 %1974
          %1976 = vadd.xlane.f32.xlu0 %v1864
          %v1977 = vpop.xlane.xlu0 %1976
          %1978 = vadd.xlane.f32.xlu0 %v1865
          %v1979 = vpop.xlane.xlu0 %1978
          %1980 = vadd.xlane.f32.xlu0 %v1866
          %v1981 = vpop.xlane.xlu0 %1980
          %1982 = vadd.xlane.f32.xlu0 %v1867
          %v1983 = vpop.xlane.xlu0 %1982
          %1984 = vadd.xlane.f32.xlu0 %v1868
          %v1985 = vpop.xlane.xlu0 %1984
          %1986 = vadd.xlane.f32.xlu0 %v1869
          %v1987 = vpop.xlane.xlu0 %1986
          %1988 = vadd.xlane.f32.xlu0 %v1870
          %v1989 = vpop.xlane.xlu0 %1988
          %1990 = vadd.xlane.f32.xlu0 %v1871
          %v1991 = vpop.xlane.xlu0 %1990
          %1992 = vadd.xlane.f32.xlu0 %v1872
          %v1993 = vpop.xlane.xlu0 %1992
          %1994 = vadd.xlane.f32.xlu0 %v1873
          %v1995 = vpop.xlane.xlu0 %1994
          %1996 = vadd.xlane.f32.xlu0 %v1874
          %v1997 = vpop.xlane.xlu0 %1996
          %1998 = vadd.xlane.f32.xlu0 %v1875
          %v1999 = vpop.xlane.xlu0 %1998
          %2000 = vadd.xlane.f32.xlu0 %v1876
          %v2001 = vpop.xlane.xlu0 %2000
          %2002 = vadd.xlane.f32.xlu0 %v1877
          %v2003 = vpop.xlane.xlu0 %2002
          %2004 = vadd.xlane.f32.xlu0 %v1878
          %v2005 = vpop.xlane.xlu0 %2004
          %2006 = vadd.xlane.f32.xlu0 %v1879
          %v2007 = vpop.xlane.xlu0 %2006
          %v2008 = vmul.f32 %v1881, 0.00390625
          %v2009 = vmul.f32 %v1883, 0.00390625
          %v2010 = vmul.f32 %v1885, 0.00390625
          %v2011 = vmul.f32 %v1887, 0.00390625
          %v2012 = vmul.f32 %v1889, 0.00390625
          %v2013 = vmul.f32 %v1891, 0.00390625
          %v2014 = vmul.f32 %v1893, 0.00390625
          %v2015 = vmul.f32 %v1895, 0.00390625
          %v2016 = vmul.f32 %v1897, 0.00390625
          %v2017 = vmul.f32 %v1899, 0.00390625
          %v2018 = vmul.f32 %v1901, 0.00390625
          %v2019 = vmul.f32 %v1903, 0.00390625
          %v2020 = vmul.f32 %v1905, 0.00390625
          %v2021 = vmul.f32 %v1907, 0.00390625
          %v2022 = vmul.f32 %v1909, 0.00390625
          %v2023 = vmul.f32 %v1911, 0.00390625
          %v2024 = vmul.f32 %v1913, 0.00390625
          %v2025 = vmul.f32 %v1915, 0.00390625
          %v2026 = vmul.f32 %v1917, 0.00390625
          %v2027 = vmul.f32 %v1919, 0.00390625
          %v2028 = vmul.f32 %v1921, 0.00390625
          %v2029 = vmul.f32 %v1923, 0.00390625
          %v2030 = vmul.f32 %v1925, 0.00390625
          %v2031 = vmul.f32 %v1927, 0.00390625
          %v2032 = vmul.f32 %v1929, 0.00390625
          %v2033 = vmul.f32 %v1931, 0.00390625
          %v2034 = vmul.f32 %v1933, 0.00390625
          %v2035 = vmul.f32 %v1935, 0.00390625
          %v2036 = vmul.f32 %v1937, 0.00390625
          %v2037 = vmul.f32 %v1939, 0.00390625
          %v2038 = vmul.f32 %v1941, 0.00390625
          %v2039 = vmul.f32 %v1943, 0.00390625
          %v2040 = vmul.f32 %v1945, 0.00390625
          %v2041 = vmul.f32 %v1947, 0.00390625
          %v2042 = vmul.f32 %v1949, 0.00390625
          %v2043 = vmul.f32 %v1951, 0.00390625
          %v2044 = vmul.f32 %v1953, 0.00390625
          %v2045 = vmul.f32 %v1955, 0.00390625
          %v2046 = vmul.f32 %v1957, 0.00390625
          %v2047 = vmul.f32 %v1959, 0.00390625
          %v2048 = vmul.f32 %v1961, 0.00390625
          %v2049 = vmul.f32 %v1963, 0.00390625
          %v2050 = vmul.f32 %v1965, 0.00390625
          %v2051 = vmul.f32 %v1967, 0.00390625
          %v2052 = vmul.f32 %v1969, 0.00390625
          %v2053 = vmul.f32 %v1971, 0.00390625
          %v2054 = vmul.f32 %v1973, 0.00390625
          %v2055 = vmul.f32 %v1975, 0.00390625
          %v2056 = vmul.f32 %v1977, 0.00390625
          %v2057 = vmul.f32 %v1979, 0.00390625
          %v2058 = vmul.f32 %v1981, 0.00390625
          %v2059 = vmul.f32 %v1983, 0.00390625
          %v2060 = vmul.f32 %v1985, 0.00390625
          %v2061 = vmul.f32 %v1987, 0.00390625
          %v2062 = vmul.f32 %v1989, 0.00390625
          %v2063 = vmul.f32 %v1991, 0.00390625
          %v2064 = vmul.f32 %v1993, 0.00390625
          %v2065 = vmul.f32 %v1995, 0.00390625
          %v2066 = vmul.f32 %v1997, 0.00390625
          %v2067 = vmul.f32 %v1999, 0.00390625
          %v2068 = vmul.f32 %v2001, 0.00390625
          %v2069 = vmul.f32 %v2003, 0.00390625
          %v2070 = vmul.f32 %v2005, 0.00390625
          %v2071 = vmul.f32 %v2007, 0.00390625
          %v2072 = vld [vmem:[#allocation3] sm:$0xff]
          %v2073 = vld [vmem:[#allocation3 + $0x8] sm:$0xff]
          %v2074 = vld [vmem:[#allocation3 + $0x10] sm:$0xff]
          %v2075 = vld [vmem:[#allocation3 + $0x18] sm:$0xff]
          %v2076 = vld [vmem:[#allocation3 + $0x20] sm:$0xff]
          %v2077 = vld [vmem:[#allocation3 + $0x28] sm:$0xff]
          %v2078 = vld [vmem:[#allocation3 + $0x30] sm:$0xff]
          %v2079 = vld [vmem:[#allocation3 + $0x38] sm:$0xff]
          %v2080 = vld [vmem:[#allocation3 + $0x40] sm:$0xff]
          %v2081 = vld [vmem:[#allocation3 + $0x48] sm:$0xff]
          %v2082 = vld [vmem:[#allocation3 + $0x50] sm:$0xff]
          %v2083 = vld [vmem:[#allocation3 + $0x58] sm:$0xff]
          %v2084 = vld [vmem:[#allocation3 + $0x60] sm:$0xff]
          %v2085 = vld [vmem:[#allocation3 + $0x68] sm:$0xff]
          %v2086 = vld [vmem:[#allocation3 + $0x70] sm:$0xff]
          %v2087 = vld [vmem:[#allocation3 + $0x78] sm:$0xff]
          %v2088 = vld [vmem:[#allocation3 + $0x80] sm:$0xff]
          %v2089 = vld [vmem:[#allocation3 + $0x88] sm:$0xff]
          %v2090 = vld [vmem:[#allocation3 + $0x90] sm:$0xff]
          %v2091 = vld [vmem:[#allocation3 + $0x98] sm:$0xff]
          %v2092 = vld [vmem:[#allocation3 + $0xa0] sm:$0xff]
          %v2093 = vld [vmem:[#allocation3 + $0xa8] sm:$0xff]
          %v2094 = vld [vmem:[#allocation3 + $0xb0] sm:$0xff]
          %v2095 = vld [vmem:[#allocation3 + $0xb8] sm:$0xff]
          %v2096 = vld [vmem:[#allocation3 + $0xc0] sm:$0xff]
          %v2097 = vld [vmem:[#allocation3 + $0xc8] sm:$0xff]
          %v2098 = vld [vmem:[#allocation3 + $0xd0] sm:$0xff]
          %v2099 = vld [vmem:[#allocation3 + $0xd8] sm:$0xff]
          %v2100 = vld [vmem:[#allocation3 + $0xe0] sm:$0xff]
          %v2101 = vld [vmem:[#allocation3 + $0xe8] sm:$0xff]
          %v2102 = vld [vmem:[#allocation3 + $0xf0] sm:$0xff]
          %v2103 = vld [vmem:[#allocation3 + $0xf8] sm:$0xff]
          %v2104 = vld [vmem:[#allocation3 + $0x100] sm:$0xff]
          %v2105 = vld [vmem:[#allocation3 + $0x108] sm:$0xff]
          %v2106 = vld [vmem:[#allocation3 + $0x110] sm:$0xff]
          %v2107 = vld [vmem:[#allocation3 + $0x118] sm:$0xff]
          %v2108 = vld [vmem:[#allocation3 + $0x120] sm:$0xff]
          %v2109 = vld [vmem:[#allocation3 + $0x128] sm:$0xff]
          %v2110 = vld [vmem:[#allocation3 + $0x130] sm:$0xff]
          %v2111 = vld [vmem:[#allocation3 + $0x138] sm:$0xff]
          %v2112 = vld [vmem:[#allocation3 + $0x140] sm:$0xff]
          %v2113 = vld [vmem:[#allocation3 + $0x148] sm:$0xff]
          %v2114 = vld [vmem:[#allocation3 + $0x150] sm:$0xff]
          %v2115 = vld [vmem:[#allocation3 + $0x158] sm:$0xff]
          %v2116 = vld [vmem:[#allocation3 + $0x160] sm:$0xff]
          %v2117 = vld [vmem:[#allocation3 + $0x168] sm:$0xff]
          %v2118 = vld [vmem:[#allocation3 + $0x170] sm:$0xff]
          %v2119 = vld [vmem:[#allocation3 + $0x178] sm:$0xff]
          %v2120 = vld [vmem:[#allocation3 + $0x180] sm:$0xff]
          %v2121 = vld [vmem:[#allocation3 + $0x188] sm:$0xff]
          %v2122 = vld [vmem:[#allocation3 + $0x190] sm:$0xff]
          %v2123 = vld [vmem:[#allocation3 + $0x198] sm:$0xff]
          %v2124 = vld [vmem:[#allocation3 + $0x1a0] sm:$0xff]
          %v2125 = vld [vmem:[#allocation3 + $0x1a8] sm:$0xff]
          %v2126 = vld [vmem:[#allocation3 + $0x1b0] sm:$0xff]
          %v2127 = vld [vmem:[#allocation3 + $0x1b8] sm:$0xff]
          %v2128 = vld [vmem:[#allocation3 + $0x1c0] sm:$0xff]
          %v2129 = vld [vmem:[#allocation3 + $0x1c8] sm:$0xff]
          %v2130 = vld [vmem:[#allocation3 + $0x1d0] sm:$0xff]
          %v2131 = vld [vmem:[#allocation3 + $0x1d8] sm:$0xff]
          %v2132 = vld [vmem:[#allocation3 + $0x1e0] sm:$0xff]
          %v2133 = vld [vmem:[#allocation3 + $0x1e8] sm:$0xff]
          %v2134 = vld [vmem:[#allocation3 + $0x1f0] sm:$0xff]
          %v2135 = vld [vmem:[#allocation3 + $0x1f8] sm:$0xff]
          %2136 = vadd.xlane.f32.xlu0 %v2072
          %v2137 = vpop.xlane.xlu0 %2136
          %2138 = vadd.xlane.f32.xlu0 %v2073
          %v2139 = vpop.xlane.xlu0 %2138
          %2140 = vadd.xlane.f32.xlu0 %v2074
          %v2141 = vpop.xlane.xlu0 %2140
          %2142 = vadd.xlane.f32.xlu0 %v2075
          %v2143 = vpop.xlane.xlu0 %2142
          %2144 = vadd.xlane.f32.xlu0 %v2076
          %v2145 = vpop.xlane.xlu0 %2144
          %2146 = vadd.xlane.f32.xlu0 %v2077
          %v2147 = vpop.xlane.xlu0 %2146
          %2148 = vadd.xlane.f32.xlu0 %v2078
          %v2149 = vpop.xlane.xlu0 %2148
          %2150 = vadd.xlane.f32.xlu0 %v2079
          %v2151 = vpop.xlane.xlu0 %2150
          %2152 = vadd.xlane.f32.xlu0 %v2080
          %v2153 = vpop.xlane.xlu0 %2152
          %2154 = vadd.xlane.f32.xlu0 %v2081
          %v2155 = vpop.xlane.xlu0 %2154
          %2156 = vadd.xlane.f32.xlu0 %v2082
          %v2157 = vpop.xlane.xlu0 %2156
          %2158 = vadd.xlane.f32.xlu0 %v2083
          %v2159 = vpop.xlane.xlu0 %2158
          %2160 = vadd.xlane.f32.xlu0 %v2084
          %v2161 = vpop.xlane.xlu0 %2160
          %2162 = vadd.xlane.f32.xlu0 %v2085
          %v2163 = vpop.xlane.xlu0 %2162
          %2164 = vadd.xlane.f32.xlu0 %v2086
          %v2165 = vpop.xlane.xlu0 %2164
          %2166 = vadd.xlane.f32.xlu0 %v2087
          %v2167 = vpop.xlane.xlu0 %2166
          %2168 = vadd.xlane.f32.xlu0 %v2088
          %v2169 = vpop.xlane.xlu0 %2168
          %2170 = vadd.xlane.f32.xlu0 %v2089
          %v2171 = vpop.xlane.xlu0 %2170
          %2172 = vadd.xlane.f32.xlu0 %v2090
          %v2173 = vpop.xlane.xlu0 %2172
          %2174 = vadd.xlane.f32.xlu0 %v2091
          %v2175 = vpop.xlane.xlu0 %2174
          %2176 = vadd.xlane.f32.xlu0 %v2092
          %v2177 = vpop.xlane.xlu0 %2176
          %2178 = vadd.xlane.f32.xlu0 %v2093
          %v2179 = vpop.xlane.xlu0 %2178
          %2180 = vadd.xlane.f32.xlu0 %v2094
          %v2181 = vpop.xlane.xlu0 %2180
          %2182 = vadd.xlane.f32.xlu0 %v2095
          %v2183 = vpop.xlane.xlu0 %2182
          %2184 = vadd.xlane.f32.xlu0 %v2096
          %v2185 = vpop.xlane.xlu0 %2184
          %2186 = vadd.xlane.f32.xlu0 %v2097
          %v2187 = vpop.xlane.xlu0 %2186
          %2188 = vadd.xlane.f32.xlu0 %v2098
          %v2189 = vpop.xlane.xlu0 %2188
          %2190 = vadd.xlane.f32.xlu0 %v2099
          %v2191 = vpop.xlane.xlu0 %2190
          %2192 = vadd.xlane.f32.xlu0 %v2100
          %v2193 = vpop.xlane.xlu0 %2192
          %2194 = vadd.xlane.f32.xlu0 %v2101
          %v2195 = vpop.xlane.xlu0 %2194
          %2196 = vadd.xlane.f32.xlu0 %v2102
          %v2197 = vpop.xlane.xlu0 %2196
          %2198 = vadd.xlane.f32.xlu0 %v2103
          %v2199 = vpop.xlane.xlu0 %2198
          %2200 = vadd.xlane.f32.xlu0 %v2104
          %v2201 = vpop.xlane.xlu0 %2200
          %2202 = vadd.xlane.f32.xlu0 %v2105
          %v2203 = vpop.xlane.xlu0 %2202
          %2204 = vadd.xlane.f32.xlu0 %v2106
          %v2205 = vpop.xlane.xlu0 %2204
          %2206 = vadd.xlane.f32.xlu0 %v2107
          %v2207 = vpop.xlane.xlu0 %2206
          %2208 = vadd.xlane.f32.xlu0 %v2108
          %v2209 = vpop.xlane.xlu0 %2208
          %2210 = vadd.xlane.f32.xlu0 %v2109
          %v2211 = vpop.xlane.xlu0 %2210
          %2212 = vadd.xlane.f32.xlu0 %v2110
          %v2213 = vpop.xlane.xlu0 %2212
          %2214 = vadd.xlane.f32.xlu0 %v2111
          %v2215 = vpop.xlane.xlu0 %2214
          %2216 = vadd.xlane.f32.xlu0 %v2112
          %v2217 = vpop.xlane.xlu0 %2216
          %2218 = vadd.xlane.f32.xlu0 %v2113
          %v2219 = vpop.xlane.xlu0 %2218
          %2220 = vadd.xlane.f32.xlu0 %v2114
          %v2221 = vpop.xlane.xlu0 %2220
          %2222 = vadd.xlane.f32.xlu0 %v2115
          %v2223 = vpop.xlane.xlu0 %2222
          %2224 = vadd.xlane.f32.xlu0 %v2116
          %v2225 = vpop.xlane.xlu0 %2224
          %2226 = vadd.xlane.f32.xlu0 %v2117
          %v2227 = vpop.xlane.xlu0 %2226
          %2228 = vadd.xlane.f32.xlu0 %v2118
          %v2229 = vpop.xlane.xlu0 %2228
          %2230 = vadd.xlane.f32.xlu0 %v2119
          %v2231 = vpop.xlane.xlu0 %2230
          %2232 = vadd.xlane.f32.xlu0 %v2120
          %v2233 = vpop.xlane.xlu0 %2232
          %2234 = vadd.xlane.f32.xlu0 %v2121
          %v2235 = vpop.xlane.xlu0 %2234
          %2236 = vadd.xlane.f32.xlu0 %v2122
          %v2237 = vpop.xlane.xlu0 %2236
          %2238 = vadd.xlane.f32.xlu0 %v2123
          %v2239 = vpop.xlane.xlu0 %2238
          %2240 = vadd.xlane.f32.xlu0 %v2124
          %v2241 = vpop.xlane.xlu0 %2240
          %2242 = vadd.xlane.f32.xlu0 %v2125
          %v2243 = vpop.xlane.xlu0 %2242
          %2244 = vadd.xlane.f32.xlu0 %v2126
          %v2245 = vpop.xlane.xlu0 %2244
          %2246 = vadd.xlane.f32.xlu0 %v2127
          %v2247 = vpop.xlane.xlu0 %2246
          %2248 = vadd.xlane.f32.xlu0 %v2128
          %v2249 = vpop.xlane.xlu0 %2248
          %2250 = vadd.xlane.f32.xlu0 %v2129
          %v2251 = vpop.xlane.xlu0 %2250
          %2252 = vadd.xlane.f32.xlu0 %v2130
          %v2253 = vpop.xlane.xlu0 %2252
          %2254 = vadd.xlane.f32.xlu0 %v2131
          %v2255 = vpop.xlane.xlu0 %2254
          %2256 = vadd.xlane.f32.xlu0 %v2132
          %v2257 = vpop.xlane.xlu0 %2256
          %2258 = vadd.xlane.f32.xlu0 %v2133
          %v2259 = vpop.xlane.xlu0 %2258
          %2260 = vadd.xlane.f32.xlu0 %v2134
          %v2261 = vpop.xlane.xlu0 %2260
          %2262 = vadd.xlane.f32.xlu0 %v2135
          %v2263 = vpop.xlane.xlu0 %2262
          %v2264 = vmul.f32 %v2137, 0.00390625
          %v2265 = vmul.f32 %v2139, 0.00390625
          %v2266 = vmul.f32 %v2141, 0.00390625
          %v2267 = vmul.f32 %v2143, 0.00390625
          %v2268 = vmul.f32 %v2145, 0.00390625
          %v2269 = vmul.f32 %v2147, 0.00390625
          %v2270 = vmul.f32 %v2149, 0.00390625
          %v2271 = vmul.f32 %v2151, 0.00390625
          %v2272 = vmul.f32 %v2153, 0.00390625
          %v2273 = vmul.f32 %v2155, 0.00390625
          %v2274 = vmul.f32 %v2157, 0.00390625
          %v2275 = vmul.f32 %v2159, 0.00390625
          %v2276 = vmul.f32 %v2161, 0.00390625
          %v2277 = vmul.f32 %v2163, 0.00390625
          %v2278 = vmul.f32 %v2165, 0.00390625
          %v2279 = vmul.f32 %v2167, 0.00390625
          %v2280 = vmul.f32 %v2169, 0.00390625
          %v2281 = vmul.f32 %v2171, 0.00390625
          %v2282 = vmul.f32 %v2173, 0.00390625
          %v2283 = vmul.f32 %v2175, 0.00390625
          %v2284 = vmul.f32 %v2177, 0.00390625
          %v2285 = vmul.f32 %v2179, 0.00390625
          %v2286 = vmul.f32 %v2181, 0.00390625
          %v2287 = vmul.f32 %v2183, 0.00390625
          %v2288 = vmul.f32 %v2185, 0.00390625
          %v2289 = vmul.f32 %v2187, 0.00390625
          %v2290 = vmul.f32 %v2189, 0.00390625
          %v2291 = vmul.f32 %v2191, 0.00390625
          %v2292 = vmul.f32 %v2193, 0.00390625
          %v2293 = vmul.f32 %v2195, 0.00390625
          %v2294 = vmul.f32 %v2197, 0.00390625
          %v2295 = vmul.f32 %v2199, 0.00390625
          %v2296 = vmul.f32 %v2201, 0.00390625
          %v2297 = vmul.f32 %v2203, 0.00390625
          %v2298 = vmul.f32 %v2205, 0.00390625
          %v2299 = vmul.f32 %v2207, 0.00390625
          %v2300 = vmul.f32 %v2209, 0.00390625
          %v2301 = vmul.f32 %v2211, 0.00390625
          %v2302 = vmul.f32 %v2213, 0.00390625
          %v2303 = vmul.f32 %v2215, 0.00390625
          %v2304 = vmul.f32 %v2217, 0.00390625
          %v2305 = vmul.f32 %v2219, 0.00390625
          %v2306 = vmul.f32 %v2221, 0.00390625
          %v2307 = vmul.f32 %v2223, 0.00390625
          %v2308 = vmul.f32 %v2225, 0.00390625
          %v2309 = vmul.f32 %v2227, 0.00390625
          %v2310 = vmul.f32 %v2229, 0.00390625
          %v2311 = vmul.f32 %v2231, 0.00390625
          %v2312 = vmul.f32 %v2233, 0.00390625
          %v2313 = vmul.f32 %v2235, 0.00390625
          %v2314 = vmul.f32 %v2237, 0.00390625
          %v2315 = vmul.f32 %v2239, 0.00390625
          %v2316 = vmul.f32 %v2241, 0.00390625
          %v2317 = vmul.f32 %v2243, 0.00390625
          %v2318 = vmul.f32 %v2245, 0.00390625
          %v2319 = vmul.f32 %v2247, 0.00390625
          %v2320 = vmul.f32 %v2249, 0.00390625
          %v2321 = vmul.f32 %v2251, 0.00390625
          %v2322 = vmul.f32 %v2253, 0.00390625
          %v2323 = vmul.f32 %v2255, 0.00390625
          %v2324 = vmul.f32 %v2257, 0.00390625
          %v2325 = vmul.f32 %v2259, 0.00390625
          %v2326 = vmul.f32 %v2261, 0.00390625
          %v2327 = vmul.f32 %v2263, 0.00390625
          %v2328 = vld [vmem:[#allocation4] sm:$0xff]
          %v2329 = vld [vmem:[#allocation4 + $0x8] sm:$0xff]
          %v2330 = vld [vmem:[#allocation4 + $0x10] sm:$0xff]
          %v2331 = vld [vmem:[#allocation4 + $0x18] sm:$0xff]
          %v2332 = vld [vmem:[#allocation4 + $0x20] sm:$0xff]
          %v2333 = vld [vmem:[#allocation4 + $0x28] sm:$0xff]
          %v2334 = vld [vmem:[#allocation4 + $0x30] sm:$0xff]
          %v2335 = vld [vmem:[#allocation4 + $0x38] sm:$0xff]
          %v2336 = vld [vmem:[#allocation4 + $0x40] sm:$0xff]
          %v2337 = vld [vmem:[#allocation4 + $0x48] sm:$0xff]
          %v2338 = vld [vmem:[#allocation4 + $0x50] sm:$0xff]
          %v2339 = vld [vmem:[#allocation4 + $0x58] sm:$0xff]
          %v2340 = vld [vmem:[#allocation4 + $0x60] sm:$0xff]
          %v2341 = vld [vmem:[#allocation4 + $0x68] sm:$0xff]
          %v2342 = vld [vmem:[#allocation4 + $0x70] sm:$0xff]
          %v2343 = vld [vmem:[#allocation4 + $0x78] sm:$0xff]
          %v2344 = vld [vmem:[#allocation4 + $0x80] sm:$0xff]
          %v2345 = vld [vmem:[#allocation4 + $0x88] sm:$0xff]
          %v2346 = vld [vmem:[#allocation4 + $0x90] sm:$0xff]
          %v2347 = vld [vmem:[#allocation4 + $0x98] sm:$0xff]
          %v2348 = vld [vmem:[#allocation4 + $0xa0] sm:$0xff]
          %v2349 = vld [vmem:[#allocation4 + $0xa8] sm:$0xff]
          %v2350 = vld [vmem:[#allocation4 + $0xb0] sm:$0xff]
          %v2351 = vld [vmem:[#allocation4 + $0xb8] sm:$0xff]
          %v2352 = vld [vmem:[#allocation4 + $0xc0] sm:$0xff]
          %v2353 = vld [vmem:[#allocation4 + $0xc8] sm:$0xff]
          %v2354 = vld [vmem:[#allocation4 + $0xd0] sm:$0xff]
          %v2355 = vld [vmem:[#allocation4 + $0xd8] sm:$0xff]
          %v2356 = vld [vmem:[#allocation4 + $0xe0] sm:$0xff]
          %v2357 = vld [vmem:[#allocation4 + $0xe8] sm:$0xff]
          %v2358 = vld [vmem:[#allocation4 + $0xf0] sm:$0xff]
          %v2359 = vld [vmem:[#allocation4 + $0xf8] sm:$0xff]
          %v2360 = vld [vmem:[#allocation4 + $0x100] sm:$0xff]
          %v2361 = vld [vmem:[#allocation4 + $0x108] sm:$0xff]
          %v2362 = vld [vmem:[#allocation4 + $0x110] sm:$0xff]
          %v2363 = vld [vmem:[#allocation4 + $0x118] sm:$0xff]
          %v2364 = vld [vmem:[#allocation4 + $0x120] sm:$0xff]
          %v2365 = vld [vmem:[#allocation4 + $0x128] sm:$0xff]
          %v2366 = vld [vmem:[#allocation4 + $0x130] sm:$0xff]
          %v2367 = vld [vmem:[#allocation4 + $0x138] sm:$0xff]
          %v2368 = vld [vmem:[#allocation4 + $0x140] sm:$0xff]
          %v2369 = vld [vmem:[#allocation4 + $0x148] sm:$0xff]
          %v2370 = vld [vmem:[#allocation4 + $0x150] sm:$0xff]
          %v2371 = vld [vmem:[#allocation4 + $0x158] sm:$0xff]
          %v2372 = vld [vmem:[#allocation4 + $0x160] sm:$0xff]
          %v2373 = vld [vmem:[#allocation4 + $0x168] sm:$0xff]
          %v2374 = vld [vmem:[#allocation4 + $0x170] sm:$0xff]
          %v2375 = vld [vmem:[#allocation4 + $0x178] sm:$0xff]
          %v2376 = vld [vmem:[#allocation4 + $0x180] sm:$0xff]
          %v2377 = vld [vmem:[#allocation4 + $0x188] sm:$0xff]
          %v2378 = vld [vmem:[#allocation4 + $0x190] sm:$0xff]
          %v2379 = vld [vmem:[#allocation4 + $0x198] sm:$0xff]
          %v2380 = vld [vmem:[#allocation4 + $0x1a0] sm:$0xff]
          %v2381 = vld [vmem:[#allocation4 + $0x1a8] sm:$0xff]
          %v2382 = vld [vmem:[#allocation4 + $0x1b0] sm:$0xff]
          %v2383 = vld [vmem:[#allocation4 + $0x1b8] sm:$0xff]
          %v2384 = vld [vmem:[#allocation4 + $0x1c0] sm:$0xff]
          %v2385 = vld [vmem:[#allocation4 + $0x1c8] sm:$0xff]
          %v2386 = vld [vmem:[#allocation4 + $0x1d0] sm:$0xff]
          %v2387 = vld [vmem:[#allocation4 + $0x1d8] sm:$0xff]
          %v2388 = vld [vmem:[#allocation4 + $0x1e0] sm:$0xff]
          %v2389 = vld [vmem:[#allocation4 + $0x1e8] sm:$0xff]
          %v2390 = vld [vmem:[#allocation4 + $0x1f0] sm:$0xff]
          %v2391 = vld [vmem:[#allocation4 + $0x1f8] sm:$0xff]
          %2392 = vadd.xlane.f32.xlu0 %v2328
          %v2393 = vpop.xlane.xlu0 %2392
          %2394 = vadd.xlane.f32.xlu0 %v2329
          %v2395 = vpop.xlane.xlu0 %2394
          %2396 = vadd.xlane.f32.xlu0 %v2330
          %v2397 = vpop.xlane.xlu0 %2396
          %2398 = vadd.xlane.f32.xlu0 %v2331
          %v2399 = vpop.xlane.xlu0 %2398
          %2400 = vadd.xlane.f32.xlu0 %v2332
          %v2401 = vpop.xlane.xlu0 %2400
          %2402 = vadd.xlane.f32.xlu0 %v2333
          %v2403 = vpop.xlane.xlu0 %2402
          %2404 = vadd.xlane.f32.xlu0 %v2334
          %v2405 = vpop.xlane.xlu0 %2404
          %2406 = vadd.xlane.f32.xlu0 %v2335
          %v2407 = vpop.xlane.xlu0 %2406
          %2408 = vadd.xlane.f32.xlu0 %v2336
          %v2409 = vpop.xlane.xlu0 %2408
          %2410 = vadd.xlane.f32.xlu0 %v2337
          %v2411 = vpop.xlane.xlu0 %2410
          %2412 = vadd.xlane.f32.xlu0 %v2338
          %v2413 = vpop.xlane.xlu0 %2412
          %2414 = vadd.xlane.f32.xlu0 %v2339
          %v2415 = vpop.xlane.xlu0 %2414
          %2416 = vadd.xlane.f32.xlu0 %v2340
          %v2417 = vpop.xlane.xlu0 %2416
          %2418 = vadd.xlane.f32.xlu0 %v2341
          %v2419 = vpop.xlane.xlu0 %2418
          %2420 = vadd.xlane.f32.xlu0 %v2342
          %v2421 = vpop.xlane.xlu0 %2420
          %2422 = vadd.xlane.f32.xlu0 %v2343
          %v2423 = vpop.xlane.xlu0 %2422
          %2424 = vadd.xlane.f32.xlu0 %v2344
          %v2425 = vpop.xlane.xlu0 %2424
          %2426 = vadd.xlane.f32.xlu0 %v2345
          %v2427 = vpop.xlane.xlu0 %2426
          %2428 = vadd.xlane.f32.xlu0 %v2346
          %v2429 = vpop.xlane.xlu0 %2428
          %2430 = vadd.xlane.f32.xlu0 %v2347
          %v2431 = vpop.xlane.xlu0 %2430
          %2432 = vadd.xlane.f32.xlu0 %v2348
          %v2433 = vpop.xlane.xlu0 %2432
          %2434 = vadd.xlane.f32.xlu0 %v2349
          %v2435 = vpop.xlane.xlu0 %2434
          %2436 = vadd.xlane.f32.xlu0 %v2350
          %v2437 = vpop.xlane.xlu0 %2436
          %2438 = vadd.xlane.f32.xlu0 %v2351
          %v2439 = vpop.xlane.xlu0 %2438
          %2440 = vadd.xlane.f32.xlu0 %v2352
          %v2441 = vpop.xlane.xlu0 %2440
          %2442 = vadd.xlane.f32.xlu0 %v2353
          %v2443 = vpop.xlane.xlu0 %2442
          %2444 = vadd.xlane.f32.xlu0 %v2354
          %v2445 = vpop.xlane.xlu0 %2444
          %2446 = vadd.xlane.f32.xlu0 %v2355
          %v2447 = vpop.xlane.xlu0 %2446
          %2448 = vadd.xlane.f32.xlu0 %v2356
          %v2449 = vpop.xlane.xlu0 %2448
          %2450 = vadd.xlane.f32.xlu0 %v2357
          %v2451 = vpop.xlane.xlu0 %2450
          %2452 = vadd.xlane.f32.xlu0 %v2358
          %v2453 = vpop.xlane.xlu0 %2452
          %2454 = vadd.xlane.f32.xlu0 %v2359
          %v2455 = vpop.xlane.xlu0 %2454
          %2456 = vadd.xlane.f32.xlu0 %v2360
          %v2457 = vpop.xlane.xlu0 %2456
          %2458 = vadd.xlane.f32.xlu0 %v2361
          %v2459 = vpop.xlane.xlu0 %2458
          %2460 = vadd.xlane.f32.xlu0 %v2362
          %v2461 = vpop.xlane.xlu0 %2460
          %2462 = vadd.xlane.f32.xlu0 %v2363
          %v2463 = vpop.xlane.xlu0 %2462
          %2464 = vadd.xlane.f32.xlu0 %v2364
          %v2465 = vpop.xlane.xlu0 %2464
          %2466 = vadd.xlane.f32.xlu0 %v2365
          %v2467 = vpop.xlane.xlu0 %2466
          %2468 = vadd.xlane.f32.xlu0 %v2366
          %v2469 = vpop.xlane.xlu0 %2468
          %2470 = vadd.xlane.f32.xlu0 %v2367
          %v2471 = vpop.xlane.xlu0 %2470
          %2472 = vadd.xlane.f32.xlu0 %v2368
          %v2473 = vpop.xlane.xlu0 %2472
          %2474 = vadd.xlane.f32.xlu0 %v2369
          %v2475 = vpop.xlane.xlu0 %2474
          %2476 = vadd.xlane.f32.xlu0 %v2370
          %v2477 = vpop.xlane.xlu0 %2476
          %2478 = vadd.xlane.f32.xlu0 %v2371
          %v2479 = vpop.xlane.xlu0 %2478
          %2480 = vadd.xlane.f32.xlu0 %v2372
          %v2481 = vpop.xlane.xlu0 %2480
          %2482 = vadd.xlane.f32.xlu0 %v2373
          %v2483 = vpop.xlane.xlu0 %2482
          %2484 = vadd.xlane.f32.xlu0 %v2374
          %v2485 = vpop.xlane.xlu0 %2484
          %2486 = vadd.xlane.f32.xlu0 %v2375
          %v2487 = vpop.xlane.xlu0 %2486
          %2488 = vadd.xlane.f32.xlu0 %v2376
          %v2489 = vpop.xlane.xlu0 %2488
          %2490 = vadd.xlane.f32.xlu0 %v2377
          %v2491 = vpop.xlane.xlu0 %2490
          %2492 = vadd.xlane.f32.xlu0 %v2378
          %v2493 = vpop.xlane.xlu0 %2492
          %2494 = vadd.xlane.f32.xlu0 %v2379
          %v2495 = vpop.xlane.xlu0 %2494
          %2496 = vadd.xlane.f32.xlu0 %v2380
          %v2497 = vpop.xlane.xlu0 %2496
          %2498 = vadd.xlane.f32.xlu0 %v2381
          %v2499 = vpop.xlane.xlu0 %2498
          %2500 = vadd.xlane.f32.xlu0 %v2382
          %v2501 = vpop.xlane.xlu0 %2500
          %2502 = vadd.xlane.f32.xlu0 %v2383
          %v2503 = vpop.xlane.xlu0 %2502
          %2504 = vadd.xlane.f32.xlu0 %v2384
          %v2505 = vpop.xlane.xlu0 %2504
          %2506 = vadd.xlane.f32.xlu0 %v2385
          %v2507 = vpop.xlane.xlu0 %2506
          %2508 = vadd.xlane.f32.xlu0 %v2386
          %v2509 = vpop.xlane.xlu0 %2508
          %2510 = vadd.xlane.f32.xlu0 %v2387
          %v2511 = vpop.xlane.xlu0 %2510
          %2512 = vadd.xlane.f32.xlu0 %v2388
          %v2513 = vpop.xlane.xlu0 %2512
          %2514 = vadd.xlane.f32.xlu0 %v2389
          %v2515 = vpop.xlane.xlu0 %2514
          %2516 = vadd.xlane.f32.xlu0 %v2390
          %v2517 = vpop.xlane.xlu0 %2516
          %2518 = vadd.xlane.f32.xlu0 %v2391
          %v2519 = vpop.xlane.xlu0 %2518
          %v2520 = vmul.f32 %v2393, 0.00390625
          %v2521 = vmul.f32 %v2395, 0.00390625
          %v2522 = vmul.f32 %v2397, 0.00390625
          %v2523 = vmul.f32 %v2399, 0.00390625
          %v2524 = vmul.f32 %v2401, 0.00390625
          %v2525 = vmul.f32 %v2403, 0.00390625
          %v2526 = vmul.f32 %v2405, 0.00390625
          %v2527 = vmul.f32 %v2407, 0.00390625
          %v2528 = vmul.f32 %v2409, 0.00390625
          %v2529 = vmul.f32 %v2411, 0.00390625
          %v2530 = vmul.f32 %v2413, 0.00390625
          %v2531 = vmul.f32 %v2415, 0.00390625
          %v2532 = vmul.f32 %v2417, 0.00390625
          %v2533 = vmul.f32 %v2419, 0.00390625
          %v2534 = vmul.f32 %v2421, 0.00390625
          %v2535 = vmul.f32 %v2423, 0.00390625
          %v2536 = vmul.f32 %v2425, 0.00390625
          %v2537 = vmul.f32 %v2427, 0.00390625
          %v2538 = vmul.f32 %v2429, 0.00390625
          %v2539 = vmul.f32 %v2431, 0.00390625
          %v2540 = vmul.f32 %v2433, 0.00390625
          %v2541 = vmul.f32 %v2435, 0.00390625
          %v2542 = vmul.f32 %v2437, 0.00390625
          %v2543 = vmul.f32 %v2439, 0.00390625
          %v2544 = vmul.f32 %v2441, 0.00390625
          %v2545 = vmul.f32 %v2443, 0.00390625
          %v2546 = vmul.f32 %v2445, 0.00390625
          %v2547 = vmul.f32 %v2447, 0.00390625
          %v2548 = vmul.f32 %v2449, 0.00390625
          %v2549 = vmul.f32 %v2451, 0.00390625
          %v2550 = vmul.f32 %v2453, 0.00390625
          %v2551 = vmul.f32 %v2455, 0.00390625
          %v2552 = vmul.f32 %v2457, 0.00390625
          %v2553 = vmul.f32 %v2459, 0.00390625
          %v2554 = vmul.f32 %v2461, 0.00390625
          %v2555 = vmul.f32 %v2463, 0.00390625
          %v2556 = vmul.f32 %v2465, 0.00390625
          %v2557 = vmul.f32 %v2467, 0.00390625
          %v2558 = vmul.f32 %v2469, 0.00390625
          %v2559 = vmul.f32 %v2471, 0.00390625
          %v2560 = vmul.f32 %v2473, 0.00390625
          %v2561 = vmul.f32 %v2475, 0.00390625
          %v2562 = vmul.f32 %v2477, 0.00390625
          %v2563 = vmul.f32 %v2479, 0.00390625
          %v2564 = vmul.f32 %v2481, 0.00390625
          %v2565 = vmul.f32 %v2483, 0.00390625
          %v2566 = vmul.f32 %v2485, 0.00390625
          %v2567 = vmul.f32 %v2487, 0.00390625
          %v2568 = vmul.f32 %v2489, 0.00390625
          %v2569 = vmul.f32 %v2491, 0.00390625
          %v2570 = vmul.f32 %v2493, 0.00390625
          %v2571 = vmul.f32 %v2495, 0.00390625
          %v2572 = vmul.f32 %v2497, 0.00390625
          %v2573 = vmul.f32 %v2499, 0.00390625
          %v2574 = vmul.f32 %v2501, 0.00390625
          %v2575 = vmul.f32 %v2503, 0.00390625
          %v2576 = vmul.f32 %v2505, 0.00390625
          %v2577 = vmul.f32 %v2507, 0.00390625
          %v2578 = vmul.f32 %v2509, 0.00390625
          %v2579 = vmul.f32 %v2511, 0.00390625
          %v2580 = vmul.f32 %v2513, 0.00390625
          %v2581 = vmul.f32 %v2515, 0.00390625
          %v2582 = vmul.f32 %v2517, 0.00390625
          %v2583 = vmul.f32 %v2519, 0.00390625
          %v2584 = vld [vmem:[#allocation5] sm:$0xff]
          %v2585 = vld [vmem:[#allocation5 + $0x8] sm:$0xff]
          %v2586 = vld [vmem:[#allocation5 + $0x10] sm:$0xff]
          %v2587 = vld [vmem:[#allocation5 + $0x18] sm:$0xff]
          %v2588 = vld [vmem:[#allocation5 + $0x20] sm:$0xff]
          %v2589 = vld [vmem:[#allocation5 + $0x28] sm:$0xff]
          %v2590 = vld [vmem:[#allocation5 + $0x30] sm:$0xff]
          %v2591 = vld [vmem:[#allocation5 + $0x38] sm:$0xff]
          %v2592 = vld [vmem:[#allocation5 + $0x40] sm:$0xff]
          %v2593 = vld [vmem:[#allocation5 + $0x48] sm:$0xff]
          %v2594 = vld [vmem:[#allocation5 + $0x50] sm:$0xff]
          %v2595 = vld [vmem:[#allocation5 + $0x58] sm:$0xff]
          %v2596 = vld [vmem:[#allocation5 + $0x60] sm:$0xff]
          %v2597 = vld [vmem:[#allocation5 + $0x68] sm:$0xff]
          %v2598 = vld [vmem:[#allocation5 + $0x70] sm:$0xff]
          %v2599 = vld [vmem:[#allocation5 + $0x78] sm:$0xff]
          %v2600 = vld [vmem:[#allocation5 + $0x80] sm:$0xff]
          %v2601 = vld [vmem:[#allocation5 + $0x88] sm:$0xff]
          %v2602 = vld [vmem:[#allocation5 + $0x90] sm:$0xff]
          %v2603 = vld [vmem:[#allocation5 + $0x98] sm:$0xff]
          %v2604 = vld [vmem:[#allocation5 + $0xa0] sm:$0xff]
          %v2605 = vld [vmem:[#allocation5 + $0xa8] sm:$0xff]
          %v2606 = vld [vmem:[#allocation5 + $0xb0] sm:$0xff]
          %v2607 = vld [vmem:[#allocation5 + $0xb8] sm:$0xff]
          %v2608 = vld [vmem:[#allocation5 + $0xc0] sm:$0xff]
          %v2609 = vld [vmem:[#allocation5 + $0xc8] sm:$0xff]
          %v2610 = vld [vmem:[#allocation5 + $0xd0] sm:$0xff]
          %v2611 = vld [vmem:[#allocation5 + $0xd8] sm:$0xff]
          %v2612 = vld [vmem:[#allocation5 + $0xe0] sm:$0xff]
          %v2613 = vld [vmem:[#allocation5 + $0xe8] sm:$0xff]
          %v2614 = vld [vmem:[#allocation5 + $0xf0] sm:$0xff]
          %v2615 = vld [vmem:[#allocation5 + $0xf8] sm:$0xff]
          %v2616 = vld [vmem:[#allocation5 + $0x100] sm:$0xff]
          %v2617 = vld [vmem:[#allocation5 + $0x108] sm:$0xff]
          %v2618 = vld [vmem:[#allocation5 + $0x110] sm:$0xff]
          %v2619 = vld [vmem:[#allocation5 + $0x118] sm:$0xff]
          %v2620 = vld [vmem:[#allocation5 + $0x120] sm:$0xff]
          %v2621 = vld [vmem:[#allocation5 + $0x128] sm:$0xff]
          %v2622 = vld [vmem:[#allocation5 + $0x130] sm:$0xff]
          %v2623 = vld [vmem:[#allocation5 + $0x138] sm:$0xff]
          %v2624 = vld [vmem:[#allocation5 + $0x140] sm:$0xff]
          %v2625 = vld [vmem:[#allocation5 + $0x148] sm:$0xff]
          %v2626 = vld [vmem:[#allocation5 + $0x150] sm:$0xff]
          %v2627 = vld [vmem:[#allocation5 + $0x158] sm:$0xff]
          %v2628 = vld [vmem:[#allocation5 + $0x160] sm:$0xff]
          %v2629 = vld [vmem:[#allocation5 + $0x168] sm:$0xff]
          %v2630 = vld [vmem:[#allocation5 + $0x170] sm:$0xff]
          %v2631 = vld [vmem:[#allocation5 + $0x178] sm:$0xff]
          %v2632 = vld [vmem:[#allocation5 + $0x180] sm:$0xff]
          %v2633 = vld [vmem:[#allocation5 + $0x188] sm:$0xff]
          %v2634 = vld [vmem:[#allocation5 + $0x190] sm:$0xff]
          %v2635 = vld [vmem:[#allocation5 + $0x198] sm:$0xff]
          %v2636 = vld [vmem:[#allocation5 + $0x1a0] sm:$0xff]
          %v2637 = vld [vmem:[#allocation5 + $0x1a8] sm:$0xff]
          %v2638 = vld [vmem:[#allocation5 + $0x1b0] sm:$0xff]
          %v2639 = vld [vmem:[#allocation5 + $0x1b8] sm:$0xff]
          %v2640 = vld [vmem:[#allocation5 + $0x1c0] sm:$0xff]
          %v2641 = vld [vmem:[#allocation5 + $0x1c8] sm:$0xff]
          %v2642 = vld [vmem:[#allocation5 + $0x1d0] sm:$0xff]
          %v2643 = vld [vmem:[#allocation5 + $0x1d8] sm:$0xff]
          %v2644 = vld [vmem:[#allocation5 + $0x1e0] sm:$0xff]
          %v2645 = vld [vmem:[#allocation5 + $0x1e8] sm:$0xff]
          %v2646 = vld [vmem:[#allocation5 + $0x1f0] sm:$0xff]
          %v2647 = vld [vmem:[#allocation5 + $0x1f8] sm:$0xff]
          %2648 = vadd.xlane.f32.xlu0 %v2584
          %v2649 = vpop.xlane.xlu0 %2648
          %2650 = vadd.xlane.f32.xlu0 %v2585
          %v2651 = vpop.xlane.xlu0 %2650
          %2652 = vadd.xlane.f32.xlu0 %v2586
          %v2653 = vpop.xlane.xlu0 %2652
          %2654 = vadd.xlane.f32.xlu0 %v2587
          %v2655 = vpop.xlane.xlu0 %2654
          %2656 = vadd.xlane.f32.xlu0 %v2588
          %v2657 = vpop.xlane.xlu0 %2656
          %2658 = vadd.xlane.f32.xlu0 %v2589
          %v2659 = vpop.xlane.xlu0 %2658
          %2660 = vadd.xlane.f32.xlu0 %v2590
          %v2661 = vpop.xlane.xlu0 %2660
          %2662 = vadd.xlane.f32.xlu0 %v2591
          %v2663 = vpop.xlane.xlu0 %2662
          %2664 = vadd.xlane.f32.xlu0 %v2592
          %v2665 = vpop.xlane.xlu0 %2664
          %2666 = vadd.xlane.f32.xlu0 %v2593
          %v2667 = vpop.xlane.xlu0 %2666
          %2668 = vadd.xlane.f32.xlu0 %v2594
          %v2669 = vpop.xlane.xlu0 %2668
          %2670 = vadd.xlane.f32.xlu0 %v2595
          %v2671 = vpop.xlane.xlu0 %2670
          %2672 = vadd.xlane.f32.xlu0 %v2596
          %v2673 = vpop.xlane.xlu0 %2672
          %2674 = vadd.xlane.f32.xlu0 %v2597
          %v2675 = vpop.xlane.xlu0 %2674
          %2676 = vadd.xlane.f32.xlu0 %v2598
          %v2677 = vpop.xlane.xlu0 %2676
          %2678 = vadd.xlane.f32.xlu0 %v2599
          %v2679 = vpop.xlane.xlu0 %2678
          %2680 = vadd.xlane.f32.xlu0 %v2600
          %v2681 = vpop.xlane.xlu0 %2680
          %2682 = vadd.xlane.f32.xlu0 %v2601
          %v2683 = vpop.xlane.xlu0 %2682
          %2684 = vadd.xlane.f32.xlu0 %v2602
          %v2685 = vpop.xlane.xlu0 %2684
          %2686 = vadd.xlane.f32.xlu0 %v2603
          %v2687 = vpop.xlane.xlu0 %2686
          %2688 = vadd.xlane.f32.xlu0 %v2604
          %v2689 = vpop.xlane.xlu0 %2688
          %2690 = vadd.xlane.f32.xlu0 %v2605
          %v2691 = vpop.xlane.xlu0 %2690
          %2692 = vadd.xlane.f32.xlu0 %v2606
          %v2693 = vpop.xlane.xlu0 %2692
          %2694 = vadd.xlane.f32.xlu0 %v2607
          %v2695 = vpop.xlane.xlu0 %2694
          %2696 = vadd.xlane.f32.xlu0 %v2608
          %v2697 = vpop.xlane.xlu0 %2696
          %2698 = vadd.xlane.f32.xlu0 %v2609
          %v2699 = vpop.xlane.xlu0 %2698
          %2700 = vadd.xlane.f32.xlu0 %v2610
          %v2701 = vpop.xlane.xlu0 %2700
          %2702 = vadd.xlane.f32.xlu0 %v2611
          %v2703 = vpop.xlane.xlu0 %2702
          %2704 = vadd.xlane.f32.xlu0 %v2612
          %v2705 = vpop.xlane.xlu0 %2704
          %2706 = vadd.xlane.f32.xlu0 %v2613
          %v2707 = vpop.xlane.xlu0 %2706
          %2708 = vadd.xlane.f32.xlu0 %v2614
          %v2709 = vpop.xlane.xlu0 %2708
          %2710 = vadd.xlane.f32.xlu0 %v2615
          %v2711 = vpop.xlane.xlu0 %2710
          %2712 = vadd.xlane.f32.xlu0 %v2616
          %v2713 = vpop.xlane.xlu0 %2712
          %2714 = vadd.xlane.f32.xlu0 %v2617
          %v2715 = vpop.xlane.xlu0 %2714
          %2716 = vadd.xlane.f32.xlu0 %v2618
          %v2717 = vpop.xlane.xlu0 %2716
          %2718 = vadd.xlane.f32.xlu0 %v2619
          %v2719 = vpop.xlane.xlu0 %2718
          %2720 = vadd.xlane.f32.xlu0 %v2620
          %v2721 = vpop.xlane.xlu0 %2720
          %2722 = vadd.xlane.f32.xlu0 %v2621
          %v2723 = vpop.xlane.xlu0 %2722
          %2724 = vadd.xlane.f32.xlu0 %v2622
          %v2725 = vpop.xlane.xlu0 %2724
          %2726 = vadd.xlane.f32.xlu0 %v2623
          %v2727 = vpop.xlane.xlu0 %2726
          %2728 = vadd.xlane.f32.xlu0 %v2624
          %v2729 = vpop.xlane.xlu0 %2728
          %2730 = vadd.xlane.f32.xlu0 %v2625
          %v2731 = vpop.xlane.xlu0 %2730
          %2732 = vadd.xlane.f32.xlu0 %v2626
          %v2733 = vpop.xlane.xlu0 %2732
          %2734 = vadd.xlane.f32.xlu0 %v2627
          %v2735 = vpop.xlane.xlu0 %2734
          %2736 = vadd.xlane.f32.xlu0 %v2628
          %v2737 = vpop.xlane.xlu0 %2736
          %2738 = vadd.xlane.f32.xlu0 %v2629
          %v2739 = vpop.xlane.xlu0 %2738
          %2740 = vadd.xlane.f32.xlu0 %v2630
          %v2741 = vpop.xlane.xlu0 %2740
          %2742 = vadd.xlane.f32.xlu0 %v2631
          %v2743 = vpop.xlane.xlu0 %2742
          %2744 = vadd.xlane.f32.xlu0 %v2632
          %v2745 = vpop.xlane.xlu0 %2744
          %2746 = vadd.xlane.f32.xlu0 %v2633
          %v2747 = vpop.xlane.xlu0 %2746
          %2748 = vadd.xlane.f32.xlu0 %v2634
          %v2749 = vpop.xlane.xlu0 %2748
          %2750 = vadd.xlane.f32.xlu0 %v2635
          %v2751 = vpop.xlane.xlu0 %2750
          %2752 = vadd.xlane.f32.xlu0 %v2636
          %v2753 = vpop.xlane.xlu0 %2752
          %2754 = vadd.xlane.f32.xlu0 %v2637
          %v2755 = vpop.xlane.xlu0 %2754
          %2756 = vadd.xlane.f32.xlu0 %v2638
          %v2757 = vpop.xlane.xlu0 %2756
          %2758 = vadd.xlane.f32.xlu0 %v2639
          %v2759 = vpop.xlane.xlu0 %2758
          %2760 = vadd.xlane.f32.xlu0 %v2640
          %v2761 = vpop.xlane.xlu0 %2760
          %2762 = vadd.xlane.f32.xlu0 %v2641
          %v2763 = vpop.xlane.xlu0 %2762
          %2764 = vadd.xlane.f32.xlu0 %v2642
          %v2765 = vpop.xlane.xlu0 %2764
          %2766 = vadd.xlane.f32.xlu0 %v2643
          %v2767 = vpop.xlane.xlu0 %2766
          %2768 = vadd.xlane.f32.xlu0 %v2644
          %v2769 = vpop.xlane.xlu0 %2768
          %2770 = vadd.xlane.f32.xlu0 %v2645
          %v2771 = vpop.xlane.xlu0 %2770
          %2772 = vadd.xlane.f32.xlu0 %v2646
          %v2773 = vpop.xlane.xlu0 %2772
          %2774 = vadd.xlane.f32.xlu0 %v2647
          %v2775 = vpop.xlane.xlu0 %2774
          %v2776 = vmul.f32 %v2649, 0.00390625
          %v2777 = vmul.f32 %v2651, 0.00390625
          %v2778 = vmul.f32 %v2653, 0.00390625
          %v2779 = vmul.f32 %v2655, 0.00390625
          %v2780 = vmul.f32 %v2657, 0.00390625
          %v2781 = vmul.f32 %v2659, 0.00390625
          %v2782 = vmul.f32 %v2661, 0.00390625
          %v2783 = vmul.f32 %v2663, 0.00390625
          %v2784 = vmul.f32 %v2665, 0.00390625
          %v2785 = vmul.f32 %v2667, 0.00390625
          %v2786 = vmul.f32 %v2669, 0.00390625
          %v2787 = vmul.f32 %v2671, 0.00390625
          %v2788 = vmul.f32 %v2673, 0.00390625
          %v2789 = vmul.f32 %v2675, 0.00390625
          %v2790 = vmul.f32 %v2677, 0.00390625
          %v2791 = vmul.f32 %v2679, 0.00390625
          %v2792 = vmul.f32 %v2681, 0.00390625
          %v2793 = vmul.f32 %v2683, 0.00390625
          %v2794 = vmul.f32 %v2685, 0.00390625
          %v2795 = vmul.f32 %v2687, 0.00390625
          %v2796 = vmul.f32 %v2689, 0.00390625
          %v2797 = vmul.f32 %v2691, 0.00390625
          %v2798 = vmul.f32 %v2693, 0.00390625
          %v2799 = vmul.f32 %v2695, 0.00390625
          %v2800 = vmul.f32 %v2697, 0.00390625
          %v2801 = vmul.f32 %v2699, 0.00390625
          %v2802 = vmul.f32 %v2701, 0.00390625
          %v2803 = vmul.f32 %v2703, 0.00390625
          %v2804 = vmul.f32 %v2705, 0.00390625
          %v2805 = vmul.f32 %v2707, 0.00390625
          %v2806 = vmul.f32 %v2709, 0.00390625
          %v2807 = vmul.f32 %v2711, 0.00390625
          %v2808 = vmul.f32 %v2713, 0.00390625
          %v2809 = vmul.f32 %v2715, 0.00390625
          %v2810 = vmul.f32 %v2717, 0.00390625
          %v2811 = vmul.f32 %v2719, 0.00390625
          %v2812 = vmul.f32 %v2721, 0.00390625
          %v2813 = vmul.f32 %v2723, 0.00390625
          %v2814 = vmul.f32 %v2725, 0.00390625
          %v2815 = vmul.f32 %v2727, 0.00390625
          %v2816 = vmul.f32 %v2729, 0.00390625
          %v2817 = vmul.f32 %v2731, 0.00390625
          %v2818 = vmul.f32 %v2733, 0.00390625
          %v2819 = vmul.f32 %v2735, 0.00390625
          %v2820 = vmul.f32 %v2737, 0.00390625
          %v2821 = vmul.f32 %v2739, 0.00390625
          %v2822 = vmul.f32 %v2741, 0.00390625
          %v2823 = vmul.f32 %v2743, 0.00390625
          %v2824 = vmul.f32 %v2745, 0.00390625
          %v2825 = vmul.f32 %v2747, 0.00390625
          %v2826 = vmul.f32 %v2749, 0.00390625
          %v2827 = vmul.f32 %v2751, 0.00390625
          %v2828 = vmul.f32 %v2753, 0.00390625
          %v2829 = vmul.f32 %v2755, 0.00390625
          %v2830 = vmul.f32 %v2757, 0.00390625
          %v2831 = vmul.f32 %v2759, 0.00390625
          %v2832 = vmul.f32 %v2761, 0.00390625
          %v2833 = vmul.f32 %v2763, 0.00390625
          %v2834 = vmul.f32 %v2765, 0.00390625
          %v2835 = vmul.f32 %v2767, 0.00390625
          %v2836 = vmul.f32 %v2769, 0.00390625
          %v2837 = vmul.f32 %v2771, 0.00390625
          %v2838 = vmul.f32 %v2773, 0.00390625
          %v2839 = vmul.f32 %v2775, 0.00390625
          %v2840 = vld [vmem:[#allocation14] sm:$0xff]
          %v2841 = vld [vmem:[#allocation14 + $0x8] sm:$0xff]
          %v2842 = vld [vmem:[#allocation14 + $0x10] sm:$0xff]
          %v2843 = vld [vmem:[#allocation14 + $0x18] sm:$0xff]
          %v2844 = vld [vmem:[#allocation14 + $0x20] sm:$0xff]
          %v2845 = vld [vmem:[#allocation14 + $0x28] sm:$0xff]
          %v2846 = vld [vmem:[#allocation14 + $0x30] sm:$0xff]
          %v2847 = vld [vmem:[#allocation14 + $0x38] sm:$0xff]
          %v2848 = vld [vmem:[#allocation14 + $0x40] sm:$0xff]
          %v2849 = vld [vmem:[#allocation14 + $0x48] sm:$0xff]
          %v2850 = vld [vmem:[#allocation14 + $0x50] sm:$0xff]
          %v2851 = vld [vmem:[#allocation14 + $0x58] sm:$0xff]
          %v2852 = vld [vmem:[#allocation14 + $0x60] sm:$0xff]
          %v2853 = vld [vmem:[#allocation14 + $0x68] sm:$0xff]
          %v2854 = vld [vmem:[#allocation14 + $0x70] sm:$0xff]
          %v2855 = vld [vmem:[#allocation14 + $0x78] sm:$0xff]
          %v2856 = vld [vmem:[#allocation14 + $0x80] sm:$0xff]
          %v2857 = vld [vmem:[#allocation14 + $0x88] sm:$0xff]
          %v2858 = vld [vmem:[#allocation14 + $0x90] sm:$0xff]
          %v2859 = vld [vmem:[#allocation14 + $0x98] sm:$0xff]
          %v2860 = vld [vmem:[#allocation14 + $0xa0] sm:$0xff]
          %v2861 = vld [vmem:[#allocation14 + $0xa8] sm:$0xff]
          %v2862 = vld [vmem:[#allocation14 + $0xb0] sm:$0xff]
          %v2863 = vld [vmem:[#allocation14 + $0xb8] sm:$0xff]
          %v2864 = vld [vmem:[#allocation14 + $0xc0] sm:$0xff]
          %v2865 = vld [vmem:[#allocation14 + $0xc8] sm:$0xff]
          %v2866 = vld [vmem:[#allocation14 + $0xd0] sm:$0xff]
          %v2867 = vld [vmem:[#allocation14 + $0xd8] sm:$0xff]
          %v2868 = vld [vmem:[#allocation14 + $0xe0] sm:$0xff]
          %v2869 = vld [vmem:[#allocation14 + $0xe8] sm:$0xff]
          %v2870 = vld [vmem:[#allocation14 + $0xf0] sm:$0xff]
          %v2871 = vld [vmem:[#allocation14 + $0xf8] sm:$0xff]
          %v2872 = vld [vmem:[#allocation14 + $0x100] sm:$0xff]
          %v2873 = vld [vmem:[#allocation14 + $0x108] sm:$0xff]
          %v2874 = vld [vmem:[#allocation14 + $0x110] sm:$0xff]
          %v2875 = vld [vmem:[#allocation14 + $0x118] sm:$0xff]
          %v2876 = vld [vmem:[#allocation14 + $0x120] sm:$0xff]
          %v2877 = vld [vmem:[#allocation14 + $0x128] sm:$0xff]
          %v2878 = vld [vmem:[#allocation14 + $0x130] sm:$0xff]
          %v2879 = vld [vmem:[#allocation14 + $0x138] sm:$0xff]
          %v2880 = vld [vmem:[#allocation14 + $0x140] sm:$0xff]
          %v2881 = vld [vmem:[#allocation14 + $0x148] sm:$0xff]
          %v2882 = vld [vmem:[#allocation14 + $0x150] sm:$0xff]
          %v2883 = vld [vmem:[#allocation14 + $0x158] sm:$0xff]
          %v2884 = vld [vmem:[#allocation14 + $0x160] sm:$0xff]
          %v2885 = vld [vmem:[#allocation14 + $0x168] sm:$0xff]
          %v2886 = vld [vmem:[#allocation14 + $0x170] sm:$0xff]
          %v2887 = vld [vmem:[#allocation14 + $0x178] sm:$0xff]
          %v2888 = vld [vmem:[#allocation14 + $0x180] sm:$0xff]
          %v2889 = vld [vmem:[#allocation14 + $0x188] sm:$0xff]
          %v2890 = vld [vmem:[#allocation14 + $0x190] sm:$0xff]
          %v2891 = vld [vmem:[#allocation14 + $0x198] sm:$0xff]
          %v2892 = vld [vmem:[#allocation14 + $0x1a0] sm:$0xff]
          %v2893 = vld [vmem:[#allocation14 + $0x1a8] sm:$0xff]
          %v2894 = vld [vmem:[#allocation14 + $0x1b0] sm:$0xff]
          %v2895 = vld [vmem:[#allocation14 + $0x1b8] sm:$0xff]
          %v2896 = vld [vmem:[#allocation14 + $0x1c0] sm:$0xff]
          %v2897 = vld [vmem:[#allocation14 + $0x1c8] sm:$0xff]
          %v2898 = vld [vmem:[#allocation14 + $0x1d0] sm:$0xff]
          %v2899 = vld [vmem:[#allocation14 + $0x1d8] sm:$0xff]
          %v2900 = vld [vmem:[#allocation14 + $0x1e0] sm:$0xff]
          %v2901 = vld [vmem:[#allocation14 + $0x1e8] sm:$0xff]
          %v2902 = vld [vmem:[#allocation14 + $0x1f0] sm:$0xff]
          %v2903 = vld [vmem:[#allocation14 + $0x1f8] sm:$0xff]
          %v2904 = vld [vmem:[#allocation14 + $0x200] sm:$0xff]
          %v2905 = vld [vmem:[#allocation14 + $0x208] sm:$0xff]
          %v2906 = vld [vmem:[#allocation14 + $0x210] sm:$0xff]
          %v2907 = vld [vmem:[#allocation14 + $0x218] sm:$0xff]
          %v2908 = vld [vmem:[#allocation14 + $0x220] sm:$0xff]
          %v2909 = vld [vmem:[#allocation14 + $0x228] sm:$0xff]
          %v2910 = vld [vmem:[#allocation14 + $0x230] sm:$0xff]
          %v2911 = vld [vmem:[#allocation14 + $0x238] sm:$0xff]
          %v2912 = vld [vmem:[#allocation14 + $0x240] sm:$0xff]
          %v2913 = vld [vmem:[#allocation14 + $0x248] sm:$0xff]
          %v2914 = vld [vmem:[#allocation14 + $0x250] sm:$0xff]
          %v2915 = vld [vmem:[#allocation14 + $0x258] sm:$0xff]
          %v2916 = vld [vmem:[#allocation14 + $0x260] sm:$0xff]
          %v2917 = vld [vmem:[#allocation14 + $0x268] sm:$0xff]
          %v2918 = vld [vmem:[#allocation14 + $0x270] sm:$0xff]
          %v2919 = vld [vmem:[#allocation14 + $0x278] sm:$0xff]
          %v2920 = vld [vmem:[#allocation14 + $0x280] sm:$0xff]
          %v2921 = vld [vmem:[#allocation14 + $0x288] sm:$0xff]
          %v2922 = vld [vmem:[#allocation14 + $0x290] sm:$0xff]
          %v2923 = vld [vmem:[#allocation14 + $0x298] sm:$0xff]
          %v2924 = vld [vmem:[#allocation14 + $0x2a0] sm:$0xff]
          %v2925 = vld [vmem:[#allocation14 + $0x2a8] sm:$0xff]
          %v2926 = vld [vmem:[#allocation14 + $0x2b0] sm:$0xff]
          %v2927 = vld [vmem:[#allocation14 + $0x2b8] sm:$0xff]
          %v2928 = vld [vmem:[#allocation14 + $0x2c0] sm:$0xff]
          %v2929 = vld [vmem:[#allocation14 + $0x2c8] sm:$0xff]
          %v2930 = vld [vmem:[#allocation14 + $0x2d0] sm:$0xff]
          %v2931 = vld [vmem:[#allocation14 + $0x2d8] sm:$0xff]
          %v2932 = vld [vmem:[#allocation14 + $0x2e0] sm:$0xff]
          %v2933 = vld [vmem:[#allocation14 + $0x2e8] sm:$0xff]
          %v2934 = vld [vmem:[#allocation14 + $0x2f0] sm:$0xff]
          %v2935 = vld [vmem:[#allocation14 + $0x2f8] sm:$0xff]
          %v2936 = vld [vmem:[#allocation14 + $0x300] sm:$0xff]
          %v2937 = vld [vmem:[#allocation14 + $0x308] sm:$0xff]
          %v2938 = vld [vmem:[#allocation14 + $0x310] sm:$0xff]
          %v2939 = vld [vmem:[#allocation14 + $0x318] sm:$0xff]
          %v2940 = vld [vmem:[#allocation14 + $0x320] sm:$0xff]
          %v2941 = vld [vmem:[#allocation14 + $0x328] sm:$0xff]
          %v2942 = vld [vmem:[#allocation14 + $0x330] sm:$0xff]
          %v2943 = vld [vmem:[#allocation14 + $0x338] sm:$0xff]
          %v2944 = vld [vmem:[#allocation14 + $0x340] sm:$0xff]
          %v2945 = vld [vmem:[#allocation14 + $0x348] sm:$0xff]
          %v2946 = vld [vmem:[#allocation14 + $0x350] sm:$0xff]
          %v2947 = vld [vmem:[#allocation14 + $0x358] sm:$0xff]
          %v2948 = vld [vmem:[#allocation14 + $0x360] sm:$0xff]
          %v2949 = vld [vmem:[#allocation14 + $0x368] sm:$0xff]
          %v2950 = vld [vmem:[#allocation14 + $0x370] sm:$0xff]
          %v2951 = vld [vmem:[#allocation14 + $0x378] sm:$0xff]
          %v2952 = vld [vmem:[#allocation14 + $0x380] sm:$0xff]
          %v2953 = vld [vmem:[#allocation14 + $0x388] sm:$0xff]
          %v2954 = vld [vmem:[#allocation14 + $0x390] sm:$0xff]
          %v2955 = vld [vmem:[#allocation14 + $0x398] sm:$0xff]
          %v2956 = vld [vmem:[#allocation14 + $0x3a0] sm:$0xff]
          %v2957 = vld [vmem:[#allocation14 + $0x3a8] sm:$0xff]
          %v2958 = vld [vmem:[#allocation14 + $0x3b0] sm:$0xff]
          %v2959 = vld [vmem:[#allocation14 + $0x3b8] sm:$0xff]
          %v2960 = vld [vmem:[#allocation14 + $0x3c0] sm:$0xff]
          %v2961 = vld [vmem:[#allocation14 + $0x3c8] sm:$0xff]
          %v2962 = vld [vmem:[#allocation14 + $0x3d0] sm:$0xff]
          %v2963 = vld [vmem:[#allocation14 + $0x3d8] sm:$0xff]
          %v2964 = vld [vmem:[#allocation14 + $0x3e0] sm:$0xff]
          %v2965 = vld [vmem:[#allocation14 + $0x3e8] sm:$0xff]
          %v2966 = vld [vmem:[#allocation14 + $0x3f0] sm:$0xff]
          %v2967 = vld [vmem:[#allocation14 + $0x3f8] sm:$0xff]
          %s2968 = scalar_lea.vmem [#allocation14], 1024
          %v2969 = vld [vmem:[%s2968] sm:$0xff]
          %v2970 = vld [vmem:[%s2968 + $0x8] sm:$0xff]
          %v2971 = vld [vmem:[%s2968 + $0x10] sm:$0xff]
          %v2972 = vld [vmem:[%s2968 + $0x18] sm:$0xff]
          %v2973 = vld [vmem:[%s2968 + $0x20] sm:$0xff]
          %v2974 = vld [vmem:[%s2968 + $0x28] sm:$0xff]
          %v2975 = vld [vmem:[%s2968 + $0x30] sm:$0xff]
          %v2976 = vld [vmem:[%s2968 + $0x38] sm:$0xff]
          %v2977 = vld [vmem:[%s2968 + $0x40] sm:$0xff]
          %v2978 = vld [vmem:[%s2968 + $0x48] sm:$0xff]
          %v2979 = vld [vmem:[%s2968 + $0x50] sm:$0xff]
          %v2980 = vld [vmem:[%s2968 + $0x58] sm:$0xff]
          %v2981 = vld [vmem:[%s2968 + $0x60] sm:$0xff]
          %v2982 = vld [vmem:[%s2968 + $0x68] sm:$0xff]
          %v2983 = vld [vmem:[%s2968 + $0x70] sm:$0xff]
          %v2984 = vld [vmem:[%s2968 + $0x78] sm:$0xff]
          %v2985 = vld [vmem:[%s2968 + $0x80] sm:$0xff]
          %v2986 = vld [vmem:[%s2968 + $0x88] sm:$0xff]
          %v2987 = vld [vmem:[%s2968 + $0x90] sm:$0xff]
          %v2988 = vld [vmem:[%s2968 + $0x98] sm:$0xff]
          %v2989 = vld [vmem:[%s2968 + $0xa0] sm:$0xff]
          %v2990 = vld [vmem:[%s2968 + $0xa8] sm:$0xff]
          %v2991 = vld [vmem:[%s2968 + $0xb0] sm:$0xff]
          %v2992 = vld [vmem:[%s2968 + $0xb8] sm:$0xff]
          %v2993 = vld [vmem:[%s2968 + $0xc0] sm:$0xff]
          %v2994 = vld [vmem:[%s2968 + $0xc8] sm:$0xff]
          %v2995 = vld [vmem:[%s2968 + $0xd0] sm:$0xff]
          %v2996 = vld [vmem:[%s2968 + $0xd8] sm:$0xff]
          %v2997 = vld [vmem:[%s2968 + $0xe0] sm:$0xff]
          %v2998 = vld [vmem:[%s2968 + $0xe8] sm:$0xff]
          %v2999 = vld [vmem:[%s2968 + $0xf0] sm:$0xff]
          %v3000 = vld [vmem:[%s2968 + $0xf8] sm:$0xff]
          %v3001 = vld [vmem:[%s2968 + $0x100] sm:$0xff]
          %v3002 = vld [vmem:[%s2968 + $0x108] sm:$0xff]
          %v3003 = vld [vmem:[%s2968 + $0x110] sm:$0xff]
          %v3004 = vld [vmem:[%s2968 + $0x118] sm:$0xff]
          %v3005 = vld [vmem:[%s2968 + $0x120] sm:$0xff]
          %v3006 = vld [vmem:[%s2968 + $0x128] sm:$0xff]
          %v3007 = vld [vmem:[%s2968 + $0x130] sm:$0xff]
          %v3008 = vld [vmem:[%s2968 + $0x138] sm:$0xff]
          %v3009 = vld [vmem:[%s2968 + $0x140] sm:$0xff]
          %v3010 = vld [vmem:[%s2968 + $0x148] sm:$0xff]
          %v3011 = vld [vmem:[%s2968 + $0x150] sm:$0xff]
          %v3012 = vld [vmem:[%s2968 + $0x158] sm:$0xff]
          %v3013 = vld [vmem:[%s2968 + $0x160] sm:$0xff]
          %v3014 = vld [vmem:[%s2968 + $0x168] sm:$0xff]
          %v3015 = vld [vmem:[%s2968 + $0x170] sm:$0xff]
          %v3016 = vld [vmem:[%s2968 + $0x178] sm:$0xff]
          %v3017 = vld [vmem:[%s2968 + $0x180] sm:$0xff]
          %v3018 = vld [vmem:[%s2968 + $0x188] sm:$0xff]
          %v3019 = vld [vmem:[%s2968 + $0x190] sm:$0xff]
          %v3020 = vld [vmem:[%s2968 + $0x198] sm:$0xff]
          %v3021 = vld [vmem:[%s2968 + $0x1a0] sm:$0xff]
          %v3022 = vld [vmem:[%s2968 + $0x1a8] sm:$0xff]
          %v3023 = vld [vmem:[%s2968 + $0x1b0] sm:$0xff]
          %v3024 = vld [vmem:[%s2968 + $0x1b8] sm:$0xff]
          %v3025 = vld [vmem:[%s2968 + $0x1c0] sm:$0xff]
          %v3026 = vld [vmem:[%s2968 + $0x1c8] sm:$0xff]
          %v3027 = vld [vmem:[%s2968 + $0x1d0] sm:$0xff]
          %v3028 = vld [vmem:[%s2968 + $0x1d8] sm:$0xff]
          %v3029 = vld [vmem:[%s2968 + $0x1e0] sm:$0xff]
          %v3030 = vld [vmem:[%s2968 + $0x1e8] sm:$0xff]
          %v3031 = vld [vmem:[%s2968 + $0x1f0] sm:$0xff]
          %v3032 = vld [vmem:[%s2968 + $0x1f8] sm:$0xff]
          %v3033 = vld [vmem:[%s2968 + $0x200] sm:$0xff]
          %v3034 = vld [vmem:[%s2968 + $0x208] sm:$0xff]
          %v3035 = vld [vmem:[%s2968 + $0x210] sm:$0xff]
          %v3036 = vld [vmem:[%s2968 + $0x218] sm:$0xff]
          %v3037 = vld [vmem:[%s2968 + $0x220] sm:$0xff]
          %v3038 = vld [vmem:[%s2968 + $0x228] sm:$0xff]
          %v3039 = vld [vmem:[%s2968 + $0x230] sm:$0xff]
          %v3040 = vld [vmem:[%s2968 + $0x238] sm:$0xff]
          %v3041 = vld [vmem:[%s2968 + $0x240] sm:$0xff]
          %v3042 = vld [vmem:[%s2968 + $0x248] sm:$0xff]
          %v3043 = vld [vmem:[%s2968 + $0x250] sm:$0xff]
          %v3044 = vld [vmem:[%s2968 + $0x258] sm:$0xff]
          %v3045 = vld [vmem:[%s2968 + $0x260] sm:$0xff]
          %v3046 = vld [vmem:[%s2968 + $0x268] sm:$0xff]
          %v3047 = vld [vmem:[%s2968 + $0x270] sm:$0xff]
          %v3048 = vld [vmem:[%s2968 + $0x278] sm:$0xff]
          %v3049 = vld [vmem:[%s2968 + $0x280] sm:$0xff]
          %v3050 = vld [vmem:[%s2968 + $0x288] sm:$0xff]
          %v3051 = vld [vmem:[%s2968 + $0x290] sm:$0xff]
          %v3052 = vld [vmem:[%s2968 + $0x298] sm:$0xff]
          %v3053 = vld [vmem:[%s2968 + $0x2a0] sm:$0xff]
          %v3054 = vld [vmem:[%s2968 + $0x2a8] sm:$0xff]
          %v3055 = vld [vmem:[%s2968 + $0x2b0] sm:$0xff]
          %v3056 = vld [vmem:[%s2968 + $0x2b8] sm:$0xff]
          %v3057 = vld [vmem:[%s2968 + $0x2c0] sm:$0xff]
          %v3058 = vld [vmem:[%s2968 + $0x2c8] sm:$0xff]
          %v3059 = vld [vmem:[%s2968 + $0x2d0] sm:$0xff]
          %v3060 = vld [vmem:[%s2968 + $0x2d8] sm:$0xff]
          %v3061 = vld [vmem:[%s2968 + $0x2e0] sm:$0xff]
          %v3062 = vld [vmem:[%s2968 + $0x2e8] sm:$0xff]
          %v3063 = vld [vmem:[%s2968 + $0x2f0] sm:$0xff]
          %v3064 = vld [vmem:[%s2968 + $0x2f8] sm:$0xff]
          %v3065 = vld [vmem:[%s2968 + $0x300] sm:$0xff]
          %v3066 = vld [vmem:[%s2968 + $0x308] sm:$0xff]
          %v3067 = vld [vmem:[%s2968 + $0x310] sm:$0xff]
          %v3068 = vld [vmem:[%s2968 + $0x318] sm:$0xff]
          %v3069 = vld [vmem:[%s2968 + $0x320] sm:$0xff]
          %v3070 = vld [vmem:[%s2968 + $0x328] sm:$0xff]
          %v3071 = vld [vmem:[%s2968 + $0x330] sm:$0xff]
          %v3072 = vld [vmem:[%s2968 + $0x338] sm:$0xff]
          %v3073 = vld [vmem:[%s2968 + $0x340] sm:$0xff]
          %v3074 = vld [vmem:[%s2968 + $0x348] sm:$0xff]
          %v3075 = vld [vmem:[%s2968 + $0x350] sm:$0xff]
          %v3076 = vld [vmem:[%s2968 + $0x358] sm:$0xff]
          %v3077 = vld [vmem:[%s2968 + $0x360] sm:$0xff]
          %v3078 = vld [vmem:[%s2968 + $0x368] sm:$0xff]
          %v3079 = vld [vmem:[%s2968 + $0x370] sm:$0xff]
          %v3080 = vld [vmem:[%s2968 + $0x378] sm:$0xff]
          %v3081 = vld [vmem:[%s2968 + $0x380] sm:$0xff]
          %v3082 = vld [vmem:[%s2968 + $0x388] sm:$0xff]
          %v3083 = vld [vmem:[%s2968 + $0x390] sm:$0xff]
          %v3084 = vld [vmem:[%s2968 + $0x398] sm:$0xff]
          %v3085 = vld [vmem:[%s2968 + $0x3a0] sm:$0xff]
          %v3086 = vld [vmem:[%s2968 + $0x3a8] sm:$0xff]
          %v3087 = vld [vmem:[%s2968 + $0x3b0] sm:$0xff]
          %v3088 = vld [vmem:[%s2968 + $0x3b8] sm:$0xff]
          %v3089 = vld [vmem:[%s2968 + $0x3c0] sm:$0xff]
          %v3090 = vld [vmem:[%s2968 + $0x3c8] sm:$0xff]
          %v3091 = vld [vmem:[%s2968 + $0x3d0] sm:$0xff]
          %v3092 = vld [vmem:[%s2968 + $0x3d8] sm:$0xff]
          %v3093 = vld [vmem:[%s2968 + $0x3e0] sm:$0xff]
          %v3094 = vld [vmem:[%s2968 + $0x3e8] sm:$0xff]
          %v3095 = vld [vmem:[%s2968 + $0x3f0] sm:$0xff]
          %v3096 = vld [vmem:[%s2968 + $0x3f8] sm:$0xff]
          %v3161 = vlaneseq
          %v3162 = vand.u32 %v3161, 127
          %v3163 = vlaneseq
          %v3164 = vshrl.u32 %v3163, 7
          %v3165 = vsub.s32 %v3162, %v3164
          %v3166 = vrot.slane %v2264, %v3165
          %v3167 = vadd.s32 %v3162, 4294967288
          %v3168 = vlaneseq
          %v3169 = vshrl.u32 %v3168, 7
          %v3170 = vsub.s32 %v3167, %v3169
          %v3171 = vrot.slane %v2265, %v3170
          %vm3172 = vcmask 130112
          %v3173 = vsel %vm3172, %v3171, %v3166
          %v3174 = vadd.s32 %v3162, 4294967280
          %v3175 = vlaneseq
          %v3176 = vshrl.u32 %v3175, 7
          %v3177 = vsub.s32 %v3174, %v3176
          %v3178 = vrot.slane %v2266, %v3177
          %vm3179 = vcmask 195712
          %v3180 = vsel %vm3179, %v3178, %v3173
          %v3181 = vadd.s32 %v3162, 4294967272
          %v3182 = vlaneseq
          %v3183 = vshrl.u32 %v3182, 7
          %v3184 = vsub.s32 %v3181, %v3183
          %v3185 = vrot.slane %v2267, %v3184
          %vm3186 = vcmask 261312
          %v3187 = vsel %vm3186, %v3185, %v3180
          %v3188 = vadd.s32 %v3162, 4294967264
          %v3189 = vlaneseq
          %v3190 = vshrl.u32 %v3189, 7
          %v3191 = vsub.s32 %v3188, %v3190
          %v3192 = vrot.slane %v2268, %v3191
          %vm3193 = vcmask 326912
          %v3194 = vsel %vm3193, %v3192, %v3187
          %v3195 = vadd.s32 %v3162, 4294967256
          %v3196 = vlaneseq
          %v3197 = vshrl.u32 %v3196, 7
          %v3198 = vsub.s32 %v3195, %v3197
          %v3199 = vrot.slane %v2269, %v3198
          %vm3200 = vcmask 392512
          %v3201 = vsel %vm3200, %v3199, %v3194
          %v3202 = vadd.s32 %v3162, 4294967248
          %v3203 = vlaneseq
          %v3204 = vshrl.u32 %v3203, 7
          %v3205 = vsub.s32 %v3202, %v3204
          %v3206 = vrot.slane %v2270, %v3205
          %vm3207 = vcmask 458112
          %v3208 = vsel %vm3207, %v3206, %v3201
          %v3209 = vadd.s32 %v3162, 4294967240
          %v3210 = vlaneseq
          %v3211 = vshrl.u32 %v3210, 7
          %v3212 = vsub.s32 %v3209, %v3211
          %v3213 = vrot.slane %v2271, %v3212
          %vm3214 = vcmask 523712
          %v3215 = vsel %vm3214, %v3213, %v3208
          %v3216 = vadd.s32 %v3162, 4294967232
          %v3217 = vlaneseq
          %v3218 = vshrl.u32 %v3217, 7
          %v3219 = vsub.s32 %v3216, %v3218
          %v3220 = vrot.slane %v2272, %v3219
          %vm3221 = vcmask 589312
          %v3222 = vsel %vm3221, %v3220, %v3215
          %v3223 = vadd.s32 %v3162, 4294967224
          %v3224 = vlaneseq
          %v3225 = vshrl.u32 %v3224, 7
          %v3226 = vsub.s32 %v3223, %v3225
          %v3227 = vrot.slane %v2273, %v3226
          %vm3228 = vcmask 654912
          %v3229 = vsel %vm3228, %v3227, %v3222
          %v3230 = vadd.s32 %v3162, 4294967216
          %v3231 = vlaneseq
          %v3232 = vshrl.u32 %v3231, 7
          %v3233 = vsub.s32 %v3230, %v3232
          %v3234 = vrot.slane %v2274, %v3233
          %vm3235 = vcmask 720512
          %v3236 = vsel %vm3235, %v3234, %v3229
          %v3237 = vadd.s32 %v3162, 4294967208
          %v3238 = vlaneseq
          %v3239 = vshrl.u32 %v3238, 7
          %v3240 = vsub.s32 %v3237, %v3239
          %v3241 = vrot.slane %v2275, %v3240
          %vm3242 = vcmask 786112
          %v3243 = vsel %vm3242, %v3241, %v3236
          %v3244 = vadd.s32 %v3162, 4294967200
          %v3245 = vlaneseq
          %v3246 = vshrl.u32 %v3245, 7
          %v3247 = vsub.s32 %v3244, %v3246
          %v3248 = vrot.slane %v2276, %v3247
          %vm3249 = vcmask 851712
          %v3250 = vsel %vm3249, %v3248, %v3243
          %v3251 = vadd.s32 %v3162, 4294967192
          %v3252 = vlaneseq
          %v3253 = vshrl.u32 %v3252, 7
          %v3254 = vsub.s32 %v3251, %v3253
          %v3255 = vrot.slane %v2277, %v3254
          %vm3256 = vcmask 917312
          %v3257 = vsel %vm3256, %v3255, %v3250
          %v3258 = vadd.s32 %v3162, 4294967184
          %v3259 = vlaneseq
          %v3260 = vshrl.u32 %v3259, 7
          %v3261 = vsub.s32 %v3258, %v3260
          %v3262 = vrot.slane %v2278, %v3261
          %vm3263 = vcmask 982912
          %v3264 = vsel %vm3263, %v3262, %v3257
          %v3265 = vadd.s32 %v3162, 4294967176
          %v3266 = vlaneseq
          %v3267 = vshrl.u32 %v3266, 7
          %v3268 = vsub.s32 %v3265, %v3267
          %v3269 = vrot.slane %v2279, %v3268
          %vm3270 = vcmask 1048512
          %v3271 = vsel %vm3270, %v3269, %v3264
          %v3272 = vlaneseq
          %v3273 = vshrl.u32 %v3272, 7
          %v3274 = vsub.s32 %v3162, %v3273
          %v3275 = vrot.slane %v2280, %v3274
          %v3276 = vlaneseq
          %v3277 = vshrl.u32 %v3276, 7
          %v3278 = vsub.s32 %v3167, %v3277
          %v3279 = vrot.slane %v2281, %v3278
          %v3280 = vsel %vm3172, %v3279, %v3275
          %v3281 = vlaneseq
          %v3282 = vshrl.u32 %v3281, 7
          %v3283 = vsub.s32 %v3174, %v3282
          %v3284 = vrot.slane %v2282, %v3283
          %v3285 = vsel %vm3179, %v3284, %v3280
          %v3286 = vlaneseq
          %v3287 = vshrl.u32 %v3286, 7
          %v3288 = vsub.s32 %v3181, %v3287
          %v3289 = vrot.slane %v2283, %v3288
          %v3290 = vsel %vm3186, %v3289, %v3285
          %v3291 = vlaneseq
          %v3292 = vshrl.u32 %v3291, 7
          %v3293 = vsub.s32 %v3188, %v3292
          %v3294 = vrot.slane %v2284, %v3293
          %v3295 = vsel %vm3193, %v3294, %v3290
          %v3296 = vlaneseq
          %v3297 = vshrl.u32 %v3296, 7
          %v3298 = vsub.s32 %v3195, %v3297
          %v3299 = vrot.slane %v2285, %v3298
          %v3300 = vsel %vm3200, %v3299, %v3295
          %v3301 = vlaneseq
          %v3302 = vshrl.u32 %v3301, 7
          %v3303 = vsub.s32 %v3202, %v3302
          %v3304 = vrot.slane %v2286, %v3303
          %v3305 = vsel %vm3207, %v3304, %v3300
          %v3306 = vlaneseq
          %v3307 = vshrl.u32 %v3306, 7
          %v3308 = vsub.s32 %v3209, %v3307
          %v3309 = vrot.slane %v2287, %v3308
          %v3310 = vsel %vm3214, %v3309, %v3305
          %v3311 = vlaneseq
          %v3312 = vshrl.u32 %v3311, 7
          %v3313 = vsub.s32 %v3216, %v3312
          %v3314 = vrot.slane %v2288, %v3313
          %v3315 = vsel %vm3221, %v3314, %v3310
          %v3316 = vlaneseq
          %v3317 = vshrl.u32 %v3316, 7
          %v3318 = vsub.s32 %v3223, %v3317
          %v3319 = vrot.slane %v2289, %v3318
          %v3320 = vsel %vm3228, %v3319, %v3315
          %v3321 = vlaneseq
          %v3322 = vshrl.u32 %v3321, 7
          %v3323 = vsub.s32 %v3230, %v3322
          %v3324 = vrot.slane %v2290, %v3323
          %v3325 = vsel %vm3235, %v3324, %v3320
          %v3326 = vlaneseq
          %v3327 = vshrl.u32 %v3326, 7
          %v3328 = vsub.s32 %v3237, %v3327
          %v3329 = vrot.slane %v2291, %v3328
          %v3330 = vsel %vm3242, %v3329, %v3325
          %v3331 = vlaneseq
          %v3332 = vshrl.u32 %v3331, 7
          %v3333 = vsub.s32 %v3244, %v3332
          %v3334 = vrot.slane %v2292, %v3333
          %v3335 = vsel %vm3249, %v3334, %v3330
          %v3336 = vlaneseq
          %v3337 = vshrl.u32 %v3336, 7
          %v3338 = vsub.s32 %v3251, %v3337
          %v3339 = vrot.slane %v2293, %v3338
          %v3340 = vsel %vm3256, %v3339, %v3335
          %v3341 = vlaneseq
          %v3342 = vshrl.u32 %v3341, 7
          %v3343 = vsub.s32 %v3258, %v3342
          %v3344 = vrot.slane %v2294, %v3343
          %v3345 = vsel %vm3263, %v3344, %v3340
          %v3346 = vlaneseq
          %v3347 = vshrl.u32 %v3346, 7
          %v3348 = vsub.s32 %v3265, %v3347
          %v3349 = vrot.slane %v2295, %v3348
          %v3350 = vsel %vm3270, %v3349, %v3345
          %v3351 = vlaneseq
          %v3352 = vshrl.u32 %v3351, 7
          %v3353 = vsub.s32 %v3162, %v3352
          %v3354 = vrot.slane %v2296, %v3353
          %v3355 = vlaneseq
          %v3356 = vshrl.u32 %v3355, 7
          %v3357 = vsub.s32 %v3167, %v3356
          %v3358 = vrot.slane %v2297, %v3357
          %v3359 = vsel %vm3172, %v3358, %v3354
          %v3360 = vlaneseq
          %v3361 = vshrl.u32 %v3360, 7
          %v3362 = vsub.s32 %v3174, %v3361
          %v3363 = vrot.slane %v2298, %v3362
          %v3364 = vsel %vm3179, %v3363, %v3359
          %v3365 = vlaneseq
          %v3366 = vshrl.u32 %v3365, 7
          %v3367 = vsub.s32 %v3181, %v3366
          %v3368 = vrot.slane %v2299, %v3367
          %v3369 = vsel %vm3186, %v3368, %v3364
          %v3370 = vlaneseq
          %v3371 = vshrl.u32 %v3370, 7
          %v3372 = vsub.s32 %v3188, %v3371
          %v3373 = vrot.slane %v2300, %v3372
          %v3374 = vsel %vm3193, %v3373, %v3369
          %v3375 = vlaneseq
          %v3376 = vshrl.u32 %v3375, 7
          %v3377 = vsub.s32 %v3195, %v3376
          %v3378 = vrot.slane %v2301, %v3377
          %v3379 = vsel %vm3200, %v3378, %v3374
          %v3380 = vlaneseq
          %v3381 = vshrl.u32 %v3380, 7
          %v3382 = vsub.s32 %v3202, %v3381
          %v3383 = vrot.slane %v2302, %v3382
          %v3384 = vsel %vm3207, %v3383, %v3379
          %v3385 = vlaneseq
          %v3386 = vshrl.u32 %v3385, 7
          %v3387 = vsub.s32 %v3209, %v3386
          %v3388 = vrot.slane %v2303, %v3387
          %v3389 = vsel %vm3214, %v3388, %v3384
          %v3390 = vlaneseq
          %v3391 = vshrl.u32 %v3390, 7
          %v3392 = vsub.s32 %v3216, %v3391
          %v3393 = vrot.slane %v2304, %v3392
          %v3394 = vsel %vm3221, %v3393, %v3389
          %v3395 = vlaneseq
          %v3396 = vshrl.u32 %v3395, 7
          %v3397 = vsub.s32 %v3223, %v3396
          %v3398 = vrot.slane %v2305, %v3397
          %v3399 = vsel %vm3228, %v3398, %v3394
          %v3400 = vlaneseq
          %v3401 = vshrl.u32 %v3400, 7
          %v3402 = vsub.s32 %v3230, %v3401
          %v3403 = vrot.slane %v2306, %v3402
          %v3404 = vsel %vm3235, %v3403, %v3399
          %v3405 = vlaneseq
          %v3406 = vshrl.u32 %v3405, 7
          %v3407 = vsub.s32 %v3237, %v3406
          %v3408 = vrot.slane %v2307, %v3407
          %v3409 = vsel %vm3242, %v3408, %v3404
          %v3410 = vlaneseq
          %v3411 = vshrl.u32 %v3410, 7
          %v3412 = vsub.s32 %v3244, %v3411
          %v3413 = vrot.slane %v2308, %v3412
          %v3414 = vsel %vm3249, %v3413, %v3409
          %v3415 = vlaneseq
          %v3416 = vshrl.u32 %v3415, 7
          %v3417 = vsub.s32 %v3251, %v3416
          %v3418 = vrot.slane %v2309, %v3417
          %v3419 = vsel %vm3256, %v3418, %v3414
          %v3420 = vlaneseq
          %v3421 = vshrl.u32 %v3420, 7
          %v3422 = vsub.s32 %v3258, %v3421
          %v3423 = vrot.slane %v2310, %v3422
          %v3424 = vsel %vm3263, %v3423, %v3419
          %v3425 = vlaneseq
          %v3426 = vshrl.u32 %v3425, 7
          %v3427 = vsub.s32 %v3265, %v3426
          %v3428 = vrot.slane %v2311, %v3427
          %v3429 = vsel %vm3270, %v3428, %v3424
          %v3430 = vlaneseq
          %v3431 = vshrl.u32 %v3430, 7
          %v3432 = vsub.s32 %v3162, %v3431
          %v3433 = vrot.slane %v2312, %v3432
          %v3434 = vlaneseq
          %v3435 = vshrl.u32 %v3434, 7
          %v3436 = vsub.s32 %v3167, %v3435
          %v3437 = vrot.slane %v2313, %v3436
          %v3438 = vsel %vm3172, %v3437, %v3433
          %v3439 = vlaneseq
          %v3440 = vshrl.u32 %v3439, 7
          %v3441 = vsub.s32 %v3174, %v3440
          %v3442 = vrot.slane %v2314, %v3441
          %v3443 = vsel %vm3179, %v3442, %v3438
          %v3444 = vlaneseq
          %v3445 = vshrl.u32 %v3444, 7
          %v3446 = vsub.s32 %v3181, %v3445
          %v3447 = vrot.slane %v2315, %v3446
          %v3448 = vsel %vm3186, %v3447, %v3443
          %v3449 = vlaneseq
          %v3450 = vshrl.u32 %v3449, 7
          %v3451 = vsub.s32 %v3188, %v3450
          %v3452 = vrot.slane %v2316, %v3451
          %v3453 = vsel %vm3193, %v3452, %v3448
          %v3454 = vlaneseq
          %v3455 = vshrl.u32 %v3454, 7
          %v3456 = vsub.s32 %v3195, %v3455
          %v3457 = vrot.slane %v2317, %v3456
          %v3458 = vsel %vm3200, %v3457, %v3453
          %v3459 = vlaneseq
          %v3460 = vshrl.u32 %v3459, 7
          %v3461 = vsub.s32 %v3202, %v3460
          %v3462 = vrot.slane %v2318, %v3461
          %v3463 = vsel %vm3207, %v3462, %v3458
          %v3464 = vlaneseq
          %v3465 = vshrl.u32 %v3464, 7
          %v3466 = vsub.s32 %v3209, %v3465
          %v3467 = vrot.slane %v2319, %v3466
          %v3468 = vsel %vm3214, %v3467, %v3463
          %v3469 = vlaneseq
          %v3470 = vshrl.u32 %v3469, 7
          %v3471 = vsub.s32 %v3216, %v3470
          %v3472 = vrot.slane %v2320, %v3471
          %v3473 = vsel %vm3221, %v3472, %v3468
          %v3474 = vlaneseq
          %v3475 = vshrl.u32 %v3474, 7
          %v3476 = vsub.s32 %v3223, %v3475
          %v3477 = vrot.slane %v2321, %v3476
          %v3478 = vsel %vm3228, %v3477, %v3473
          %v3479 = vlaneseq
          %v3480 = vshrl.u32 %v3479, 7
          %v3481 = vsub.s32 %v3230, %v3480
          %v3482 = vrot.slane %v2322, %v3481
          %v3483 = vsel %vm3235, %v3482, %v3478
          %v3484 = vlaneseq
          %v3485 = vshrl.u32 %v3484, 7
          %v3486 = vsub.s32 %v3237, %v3485
          %v3487 = vrot.slane %v2323, %v3486
          %v3488 = vsel %vm3242, %v3487, %v3483
          %v3489 = vlaneseq
          %v3490 = vshrl.u32 %v3489, 7
          %v3491 = vsub.s32 %v3244, %v3490
          %v3492 = vrot.slane %v2324, %v3491
          %v3493 = vsel %vm3249, %v3492, %v3488
          %v3494 = vlaneseq
          %v3495 = vshrl.u32 %v3494, 7
          %v3496 = vsub.s32 %v3251, %v3495
          %v3497 = vrot.slane %v2325, %v3496
          %v3498 = vsel %vm3256, %v3497, %v3493
          %v3499 = vlaneseq
          %v3500 = vshrl.u32 %v3499, 7
          %v3501 = vsub.s32 %v3258, %v3500
          %v3502 = vrot.slane %v2326, %v3501
          %v3503 = vsel %vm3263, %v3502, %v3498
          %v3504 = vlaneseq
          %v3505 = vshrl.u32 %v3504, 7
          %v3506 = vsub.s32 %v3265, %v3505
          %v3507 = vrot.slane %v2327, %v3506
          %v3508 = vsel %vm3270, %v3507, %v3503
          %vm3509 = vcmask 1041409
          %v3510 = vsel %vm3509, %v3429, %v3271
          %v3511 = vsel %vm3509, %v3508, %v3350
          %3514 = vmatprep.subr.mxu0 %v2970
          %3515 = vmatpush1.msra.mxu0 %v2969
          %3516 = vmatprep.subr.mxu0 %v2974
          %3517 = vmatpush1.msra.mxu0 %v2973
          %3518 = vmatprep.subr.mxu0 %v2978
          %3519 = vmatpush1.msra.mxu0 %v2977
          %3520 = vmatprep.subr.mxu0 %v2982
          %3521 = vmatpush1.msra.mxu0 %v2981
          %3522 = vmatprep.subr.mxu0 %v2986
          %3523 = vmatpush1.msra.mxu0 %v2985
          %3524 = vmatprep.subr.mxu0 %v2990
          %3525 = vmatpush1.msra.mxu0 %v2989
          %3526 = vmatprep.subr.mxu0 %v2994
          %3527 = vmatpush1.msra.mxu0 %v2993
          %3528 = vmatprep.subr.mxu0 %v2998
          %3529 = vmatpush1.msra.mxu0 %v2997
          %3530 = vmatprep.subr.mxu0 %v3002
          %3531 = vmatpush1.msra.mxu0 %v3001
          %3532 = vmatprep.subr.mxu0 %v3006
          %3533 = vmatpush1.msra.mxu0 %v3005
          %3534 = vmatprep.subr.mxu0 %v3010
          %3535 = vmatpush1.msra.mxu0 %v3009
          %3536 = vmatprep.subr.mxu0 %v3014
          %3537 = vmatpush1.msra.mxu0 %v3013
          %3538 = vmatprep.subr.mxu0 %v3018
          %3539 = vmatpush1.msra.mxu0 %v3017
          %3540 = vmatprep.subr.mxu0 %v3022
          %3541 = vmatpush1.msra.mxu0 %v3021
          %3542 = vmatprep.subr.mxu0 %v3026
          %3543 = vmatpush1.msra.mxu0 %v3025
          %3544 = vmatprep.subr.mxu0 %v3030
          %3545 = vmatpush1.msra.mxu0 %v3029
          %3546 = vmatprep.subr.mxu0 %v3034
          %3547 = vmatpush1.msra.mxu0 %v3033
          %3548 = vmatprep.subr.mxu0 %v3038
          %3549 = vmatpush1.msra.mxu0 %v3037
          %3550 = vmatprep.subr.mxu0 %v3042
          %3551 = vmatpush1.msra.mxu0 %v3041
          %3552 = vmatprep.subr.mxu0 %v3046
          %3553 = vmatpush1.msra.mxu0 %v3045
          %3554 = vmatprep.subr.mxu0 %v3050
          %3555 = vmatpush1.msra.mxu0 %v3049
          %3556 = vmatprep.subr.mxu0 %v3054
          %3557 = vmatpush1.msra.mxu0 %v3053
          %3558 = vmatprep.subr.mxu0 %v3058
          %3559 = vmatpush1.msra.mxu0 %v3057
          %3560 = vmatprep.subr.mxu0 %v3062
          %3561 = vmatpush1.msra.mxu0 %v3061
          %3562 = vmatprep.subr.mxu0 %v3066
          %3563 = vmatpush1.msra.mxu0 %v3065
          %3564 = vmatprep.subr.mxu0 %v3070
          %3565 = vmatpush1.msra.mxu0 %v3069
          %3566 = vmatprep.subr.mxu0 %v3074
          %3567 = vmatpush1.msra.mxu0 %v3073
          %3568 = vmatprep.subr.mxu0 %v3078
          %3569 = vmatpush1.msra.mxu0 %v3077
          %3570 = vmatprep.subr.mxu0 %v3082
          %3571 = vmatpush1.msra.mxu0 %v3081
          %3572 = vmatprep.subr.mxu0 %v3086
          %3573 = vmatpush1.msra.mxu0 %v3085
          %3574 = vmatprep.subr.mxu0 %v3090
          %3575 = vmatpush1.msra.mxu0 %v3089
          %3576 = vmatprep.subr.mxu0 %v3094
          %3577 = vmatpush1.msra.mxu0 %v3093
          %3578 = vmatprep.mubr.f32.mxu0 %v3511
          %3579 = vmatmul.mubr.f32.gmra.mrb[0].mxu0 %v3510
          %v3580 = vpop.f32.mrb[0].mxu0
          %v3581 = vadd.f32 0.0, %v3580
          %v3582 = vpop.f32.mrb[0].mxu0
          %v3583 = vadd.f32 0.0, %v3582
          %3584 = vdwg.mxu0
          %3585 = vmatprep.subr.mxu0 %v2972
          %3586 = vmatpush1.msra.mxu0 %v2971
          %3587 = vmatprep.subr.mxu0 %v2976
          %3588 = vmatpush1.msra.mxu0 %v2975
          %3589 = vmatprep.subr.mxu0 %v2980
          %3590 = vmatpush1.msra.mxu0 %v2979
          %3591 = vmatprep.subr.mxu0 %v2984
          %3592 = vmatpush1.msra.mxu0 %v2983
          %3593 = vmatprep.subr.mxu0 %v2988
          %3594 = vmatpush1.msra.mxu0 %v2987
          %3595 = vmatprep.subr.mxu0 %v2992
          %3596 = vmatpush1.msra.mxu0 %v2991
          %3597 = vmatprep.subr.mxu0 %v2996
          %3598 = vmatpush1.msra.mxu0 %v2995
          %3599 = vmatprep.subr.mxu0 %v3000
          %3600 = vmatpush1.msra.mxu0 %v2999
          %3601 = vmatprep.subr.mxu0 %v3004
          %3602 = vmatpush1.msra.mxu0 %v3003
          %3603 = vmatprep.subr.mxu0 %v3008
          %3604 = vmatpush1.msra.mxu0 %v3007
          %3605 = vmatprep.subr.mxu0 %v3012
          %3606 = vmatpush1.msra.mxu0 %v3011
          %3607 = vmatprep.subr.mxu0 %v3016
          %3608 = vmatpush1.msra.mxu0 %v3015
          %3609 = vmatprep.subr.mxu0 %v3020
          %3610 = vmatpush1.msra.mxu0 %v3019
          %3611 = vmatprep.subr.mxu0 %v3024
          %3612 = vmatpush1.msra.mxu0 %v3023
          %3613 = vmatprep.subr.mxu0 %v3028
          %3614 = vmatpush1.msra.mxu0 %v3027
          %3615 = vmatprep.subr.mxu0 %v3032
          %3616 = vmatpush1.msra.mxu0 %v3031
          %3617 = vmatprep.subr.mxu0 %v3036
          %3618 = vmatpush1.msra.mxu0 %v3035
          %3619 = vmatprep.subr.mxu0 %v3040
          %3620 = vmatpush1.msra.mxu0 %v3039
          %3621 = vmatprep.subr.mxu0 %v3044
          %3622 = vmatpush1.msra.mxu0 %v3043
          %3623 = vmatprep.subr.mxu0 %v3048
          %3624 = vmatpush1.msra.mxu0 %v3047
          %3625 = vmatprep.subr.mxu0 %v3052
          %3626 = vmatpush1.msra.mxu0 %v3051
          %3627 = vmatprep.subr.mxu0 %v3056
          %3628 = vmatpush1.msra.mxu0 %v3055
          %3629 = vmatprep.subr.mxu0 %v3060
          %3630 = vmatpush1.msra.mxu0 %v3059
          %3631 = vmatprep.subr.mxu0 %v3064
          %3632 = vmatpush1.msra.mxu0 %v3063
          %3633 = vmatprep.subr.mxu0 %v3068
          %3634 = vmatpush1.msra.mxu0 %v3067
          %3635 = vmatprep.subr.mxu0 %v3072
          %3636 = vmatpush1.msra.mxu0 %v3071
          %3637 = vmatprep.subr.mxu0 %v3076
          %3638 = vmatpush1.msra.mxu0 %v3075
          %3639 = vmatprep.subr.mxu0 %v3080
          %3640 = vmatpush1.msra.mxu0 %v3079
          %3641 = vmatprep.subr.mxu0 %v3084
          %3642 = vmatpush1.msra.mxu0 %v3083
          %3643 = vmatprep.subr.mxu0 %v3088
          %3644 = vmatpush1.msra.mxu0 %v3087
          %3645 = vmatprep.subr.mxu0 %v3092
          %3646 = vmatpush1.msra.mxu0 %v3091
          %3647 = vmatprep.subr.mxu0 %v3096
          %3648 = vmatpush1.msra.mxu0 %v3095
          %3649 = vmatprep.mubr.f32.mxu0 %v3511
          %3650 = vmatmul.mubr.f32.gmra.mrb[0].mxu0 %v3510
          %v3651 = vpop.f32.mrb[0].mxu0
          %v3652 = vadd.f32 0.0, %v3651
          %v3653 = vpop.f32.mrb[0].mxu0
          %v3654 = vadd.f32 0.0, %v3653
          %3655 = vdwg.mxu0
          %v3720 = vlaneseq
          %v3721 = vshrl.u32 %v3720, 7
          %v3722 = vsub.s32 %v3162, %v3721
          %v3723 = vrot.slane %v2008, %v3722
          %v3724 = vlaneseq
          %v3725 = vshrl.u32 %v3724, 7
          %v3726 = vsub.s32 %v3167, %v3725
          %v3727 = vrot.slane %v2009, %v3726
          %v3728 = vsel %vm3172, %v3727, %v3723
          %v3729 = vlaneseq
          %v3730 = vshrl.u32 %v3729, 7
          %v3731 = vsub.s32 %v3174, %v3730
          %v3732 = vrot.slane %v2010, %v3731
          %v3733 = vsel %vm3179, %v3732, %v3728
          %v3734 = vlaneseq
          %v3735 = vshrl.u32 %v3734, 7
          %v3736 = vsub.s32 %v3181, %v3735
          %v3737 = vrot.slane %v2011, %v3736
          %v3738 = vsel %vm3186, %v3737, %v3733
          %v3739 = vlaneseq
          %v3740 = vshrl.u32 %v3739, 7
          %v3741 = vsub.s32 %v3188, %v3740
          %v3742 = vrot.slane %v2012, %v3741
          %v3743 = vsel %vm3193, %v3742, %v3738
          %v3744 = vlaneseq
          %v3745 = vshrl.u32 %v3744, 7
          %v3746 = vsub.s32 %v3195, %v3745
          %v3747 = vrot.slane %v2013, %v3746
          %v3748 = vsel %vm3200, %v3747, %v3743
          %v3749 = vlaneseq
          %v3750 = vshrl.u32 %v3749, 7
          %v3751 = vsub.s32 %v3202, %v3750
          %v3752 = vrot.slane %v2014, %v3751
          %v3753 = vsel %vm3207, %v3752, %v3748
          %v3754 = vlaneseq
          %v3755 = vshrl.u32 %v3754, 7
          %v3756 = vsub.s32 %v3209, %v3755
          %v3757 = vrot.slane %v2015, %v3756
          %v3758 = vsel %vm3214, %v3757, %v3753
          %v3759 = vlaneseq
          %v3760 = vshrl.u32 %v3759, 7
          %v3761 = vsub.s32 %v3216, %v3760
          %v3762 = vrot.slane %v2016, %v3761
          %v3763 = vsel %vm3221, %v3762, %v3758
          %v3764 = vlaneseq
          %v3765 = vshrl.u32 %v3764, 7
          %v3766 = vsub.s32 %v3223, %v3765
          %v3767 = vrot.slane %v2017, %v3766
          %v3768 = vsel %vm3228, %v3767, %v3763
          %v3769 = vlaneseq
          %v3770 = vshrl.u32 %v3769, 7
          %v3771 = vsub.s32 %v3230, %v3770
          %v3772 = vrot.slane %v2018, %v3771
          %v3773 = vsel %vm3235, %v3772, %v3768
          %v3774 = vlaneseq
          %v3775 = vshrl.u32 %v3774, 7
          %v3776 = vsub.s32 %v3237, %v3775
          %v3777 = vrot.slane %v2019, %v3776
          %v3778 = vsel %vm3242, %v3777, %v3773
          %v3779 = vlaneseq
          %v3780 = vshrl.u32 %v3779, 7
          %v3781 = vsub.s32 %v3244, %v3780
          %v3782 = vrot.slane %v2020, %v3781
          %v3783 = vsel %vm3249, %v3782, %v3778
          %v3784 = vlaneseq
          %v3785 = vshrl.u32 %v3784, 7
          %v3786 = vsub.s32 %v3251, %v3785
          %v3787 = vrot.slane %v2021, %v3786
          %v3788 = vsel %vm3256, %v3787, %v3783
          %v3789 = vlaneseq
          %v3790 = vshrl.u32 %v3789, 7
          %v3791 = vsub.s32 %v3258, %v3790
          %v3792 = vrot.slane %v2022, %v3791
          %v3793 = vsel %vm3263, %v3792, %v3788
          %v3794 = vlaneseq
          %v3795 = vshrl.u32 %v3794, 7
          %v3796 = vsub.s32 %v3265, %v3795
          %v3797 = vrot.slane %v2023, %v3796
          %v3798 = vsel %vm3270, %v3797, %v3793
          %v3799 = vlaneseq
          %v3800 = vshrl.u32 %v3799, 7
          %v3801 = vsub.s32 %v3162, %v3800
          %v3802 = vrot.slane %v2024, %v3801
          %v3803 = vlaneseq
          %v3804 = vshrl.u32 %v3803, 7
          %v3805 = vsub.s32 %v3167, %v3804
          %v3806 = vrot.slane %v2025, %v3805
          %v3807 = vsel %vm3172, %v3806, %v3802
          %v3808 = vlaneseq
          %v3809 = vshrl.u32 %v3808, 7
          %v3810 = vsub.s32 %v3174, %v3809
          %v3811 = vrot.slane %v2026, %v3810
          %v3812 = vsel %vm3179, %v3811, %v3807
          %v3813 = vlaneseq
          %v3814 = vshrl.u32 %v3813, 7
          %v3815 = vsub.s32 %v3181, %v3814
          %v3816 = vrot.slane %v2027, %v3815
          %v3817 = vsel %vm3186, %v3816, %v3812
          %v3818 = vlaneseq
          %v3819 = vshrl.u32 %v3818, 7
          %v3820 = vsub.s32 %v3188, %v3819
          %v3821 = vrot.slane %v2028, %v3820
          %v3822 = vsel %vm3193, %v3821, %v3817
          %v3823 = vlaneseq
          %v3824 = vshrl.u32 %v3823, 7
          %v3825 = vsub.s32 %v3195, %v3824
          %v3826 = vrot.slane %v2029, %v3825
          %v3827 = vsel %vm3200, %v3826, %v3822
          %v3828 = vlaneseq
          %v3829 = vshrl.u32 %v3828, 7
          %v3830 = vsub.s32 %v3202, %v3829
          %v3831 = vrot.slane %v2030, %v3830
          %v3832 = vsel %vm3207, %v3831, %v3827
          %v3833 = vlaneseq
          %v3834 = vshrl.u32 %v3833, 7
          %v3835 = vsub.s32 %v3209, %v3834
          %v3836 = vrot.slane %v2031, %v3835
          %v3837 = vsel %vm3214, %v3836, %v3832
          %v3838 = vlaneseq
          %v3839 = vshrl.u32 %v3838, 7
          %v3840 = vsub.s32 %v3216, %v3839
          %v3841 = vrot.slane %v2032, %v3840
          %v3842 = vsel %vm3221, %v3841, %v3837
          %v3843 = vlaneseq
          %v3844 = vshrl.u32 %v3843, 7
          %v3845 = vsub.s32 %v3223, %v3844
          %v3846 = vrot.slane %v2033, %v3845
          %v3847 = vsel %vm3228, %v3846, %v3842
          %v3848 = vlaneseq
          %v3849 = vshrl.u32 %v3848, 7
          %v3850 = vsub.s32 %v3230, %v3849
          %v3851 = vrot.slane %v2034, %v3850
          %v3852 = vsel %vm3235, %v3851, %v3847
          %v3853 = vlaneseq
          %v3854 = vshrl.u32 %v3853, 7
          %v3855 = vsub.s32 %v3237, %v3854
          %v3856 = vrot.slane %v2035, %v3855
          %v3857 = vsel %vm3242, %v3856, %v3852
          %v3858 = vlaneseq
          %v3859 = vshrl.u32 %v3858, 7
          %v3860 = vsub.s32 %v3244, %v3859
          %v3861 = vrot.slane %v2036, %v3860
          %v3862 = vsel %vm3249, %v3861, %v3857
          %v3863 = vlaneseq
          %v3864 = vshrl.u32 %v3863, 7
          %v3865 = vsub.s32 %v3251, %v3864
          %v3866 = vrot.slane %v2037, %v3865
          %v3867 = vsel %vm3256, %v3866, %v3862
          %v3868 = vlaneseq
          %v3869 = vshrl.u32 %v3868, 7
          %v3870 = vsub.s32 %v3258, %v3869
          %v3871 = vrot.slane %v2038, %v3870
          %v3872 = vsel %vm3263, %v3871, %v3867
          %v3873 = vlaneseq
          %v3874 = vshrl.u32 %v3873, 7
          %v3875 = vsub.s32 %v3265, %v3874
          %v3876 = vrot.slane %v2039, %v3875
          %v3877 = vsel %vm3270, %v3876, %v3872
          %v3878 = vlaneseq
          %v3879 = vshrl.u32 %v3878, 7
          %v3880 = vsub.s32 %v3162, %v3879
          %v3881 = vrot.slane %v2040, %v3880
          %v3882 = vlaneseq
          %v3883 = vshrl.u32 %v3882, 7
          %v3884 = vsub.s32 %v3167, %v3883
          %v3885 = vrot.slane %v2041, %v3884
          %v3886 = vsel %vm3172, %v3885, %v3881
          %v3887 = vlaneseq
          %v3888 = vshrl.u32 %v3887, 7
          %v3889 = vsub.s32 %v3174, %v3888
          %v3890 = vrot.slane %v2042, %v3889
          %v3891 = vsel %vm3179, %v3890, %v3886
          %v3892 = vlaneseq
          %v3893 = vshrl.u32 %v3892, 7
          %v3894 = vsub.s32 %v3181, %v3893
          %v3895 = vrot.slane %v2043, %v3894
          %v3896 = vsel %vm3186, %v3895, %v3891
          %v3897 = vlaneseq
          %v3898 = vshrl.u32 %v3897, 7
          %v3899 = vsub.s32 %v3188, %v3898
          %v3900 = vrot.slane %v2044, %v3899
          %v3901 = vsel %vm3193, %v3900, %v3896
          %v3902 = vlaneseq
          %v3903 = vshrl.u32 %v3902, 7
          %v3904 = vsub.s32 %v3195, %v3903
          %v3905 = vrot.slane %v2045, %v3904
          %v3906 = vsel %vm3200, %v3905, %v3901
          %v3907 = vlaneseq
          %v3908 = vshrl.u32 %v3907, 7
          %v3909 = vsub.s32 %v3202, %v3908
          %v3910 = vrot.slane %v2046, %v3909
          %v3911 = vsel %vm3207, %v3910, %v3906
          %v3912 = vlaneseq
          %v3913 = vshrl.u32 %v3912, 7
          %v3914 = vsub.s32 %v3209, %v3913
          %v3915 = vrot.slane %v2047, %v3914
          %v3916 = vsel %vm3214, %v3915, %v3911
          %v3917 = vlaneseq
          %v3918 = vshrl.u32 %v3917, 7
          %v3919 = vsub.s32 %v3216, %v3918
          %v3920 = vrot.slane %v2048, %v3919
          %v3921 = vsel %vm3221, %v3920, %v3916
          %v3922 = vlaneseq
          %v3923 = vshrl.u32 %v3922, 7
          %v3924 = vsub.s32 %v3223, %v3923
          %v3925 = vrot.slane %v2049, %v3924
          %v3926 = vsel %vm3228, %v3925, %v3921
          %v3927 = vlaneseq
          %v3928 = vshrl.u32 %v3927, 7
          %v3929 = vsub.s32 %v3230, %v3928
          %v3930 = vrot.slane %v2050, %v3929
          %v3931 = vsel %vm3235, %v3930, %v3926
          %v3932 = vlaneseq
          %v3933 = vshrl.u32 %v3932, 7
          %v3934 = vsub.s32 %v3237, %v3933
          %v3935 = vrot.slane %v2051, %v3934
          %v3936 = vsel %vm3242, %v3935, %v3931
          %v3937 = vlaneseq
          %v3938 = vshrl.u32 %v3937, 7
          %v3939 = vsub.s32 %v3244, %v3938
          %v3940 = vrot.slane %v2052, %v3939
          %v3941 = vsel %vm3249, %v3940, %v3936
          %v3942 = vlaneseq
          %v3943 = vshrl.u32 %v3942, 7
          %v3944 = vsub.s32 %v3251, %v3943
          %v3945 = vrot.slane %v2053, %v3944
          %v3946 = vsel %vm3256, %v3945, %v3941
          %v3947 = vlaneseq
          %v3948 = vshrl.u32 %v3947, 7
          %v3949 = vsub.s32 %v3258, %v3948
          %v3950 = vrot.slane %v2054, %v3949
          %v3951 = vsel %vm3263, %v3950, %v3946
          %v3952 = vlaneseq
          %v3953 = vshrl.u32 %v3952, 7
          %v3954 = vsub.s32 %v3265, %v3953
          %v3955 = vrot.slane %v2055, %v3954
          %v3956 = vsel %vm3270, %v3955, %v3951
          %v3957 = vlaneseq
          %v3958 = vshrl.u32 %v3957, 7
          %v3959 = vsub.s32 %v3162, %v3958
          %v3960 = vrot.slane %v2056, %v3959
          %v3961 = vlaneseq
          %v3962 = vshrl.u32 %v3961, 7
          %v3963 = vsub.s32 %v3167, %v3962
          %v3964 = vrot.slane %v2057, %v3963
          %v3965 = vsel %vm3172, %v3964, %v3960
          %v3966 = vlaneseq
          %v3967 = vshrl.u32 %v3966, 7
          %v3968 = vsub.s32 %v3174, %v3967
          %v3969 = vrot.slane %v2058, %v3968
          %v3970 = vsel %vm3179, %v3969, %v3965
          %v3971 = vlaneseq
          %v3972 = vshrl.u32 %v3971, 7
          %v3973 = vsub.s32 %v3181, %v3972
          %v3974 = vrot.slane %v2059, %v3973
          %v3975 = vsel %vm3186, %v3974, %v3970
          %v3976 = vlaneseq
          %v3977 = vshrl.u32 %v3976, 7
          %v3978 = vsub.s32 %v3188, %v3977
          %v3979 = vrot.slane %v2060, %v3978
          %v3980 = vsel %vm3193, %v3979, %v3975
          %v3981 = vlaneseq
          %v3982 = vshrl.u32 %v3981, 7
          %v3983 = vsub.s32 %v3195, %v3982
          %v3984 = vrot.slane %v2061, %v3983
          %v3985 = vsel %vm3200, %v3984, %v3980
          %v3986 = vlaneseq
          %v3987 = vshrl.u32 %v3986, 7
          %v3988 = vsub.s32 %v3202, %v3987
          %v3989 = vrot.slane %v2062, %v3988
          %v3990 = vsel %vm3207, %v3989, %v3985
          %v3991 = vlaneseq
          %v3992 = vshrl.u32 %v3991, 7
          %v3993 = vsub.s32 %v3209, %v3992
          %v3994 = vrot.slane %v2063, %v3993
          %v3995 = vsel %vm3214, %v3994, %v3990
          %v3996 = vlaneseq
          %v3997 = vshrl.u32 %v3996, 7
          %v3998 = vsub.s32 %v3216, %v3997
          %v3999 = vrot.slane %v2064, %v3998
          %v4000 = vsel %vm3221, %v3999, %v3995
          %v4001 = vlaneseq
          %v4002 = vshrl.u32 %v4001, 7
          %v4003 = vsub.s32 %v3223, %v4002
          %v4004 = vrot.slane %v2065, %v4003
          %v4005 = vsel %vm3228, %v4004, %v4000
          %v4006 = vlaneseq
          %v4007 = vshrl.u32 %v4006, 7
          %v4008 = vsub.s32 %v3230, %v4007
          %v4009 = vrot.slane %v2066, %v4008
          %v4010 = vsel %vm3235, %v4009, %v4005
          %v4011 = vlaneseq
          %v4012 = vshrl.u32 %v4011, 7
          %v4013 = vsub.s32 %v3237, %v4012
          %v4014 = vrot.slane %v2067, %v4013
          %v4015 = vsel %vm3242, %v4014, %v4010
          %v4016 = vlaneseq
          %v4017 = vshrl.u32 %v4016, 7
          %v4018 = vsub.s32 %v3244, %v4017
          %v4019 = vrot.slane %v2068, %v4018
          %v4020 = vsel %vm3249, %v4019, %v4015
          %v4021 = vlaneseq
          %v4022 = vshrl.u32 %v4021, 7
          %v4023 = vsub.s32 %v3251, %v4022
          %v4024 = vrot.slane %v2069, %v4023
          %v4025 = vsel %vm3256, %v4024, %v4020
          %v4026 = vlaneseq
          %v4027 = vshrl.u32 %v4026, 7
          %v4028 = vsub.s32 %v3258, %v4027
          %v4029 = vrot.slane %v2070, %v4028
          %v4030 = vsel %vm3263, %v4029, %v4025
          %v4031 = vlaneseq
          %v4032 = vshrl.u32 %v4031, 7
          %v4033 = vsub.s32 %v3265, %v4032
          %v4034 = vrot.slane %v2071, %v4033
          %v4035 = vsel %vm3270, %v4034, %v4030
          %v4036 = vsel %vm3509, %v3956, %v3798
          %v4037 = vsel %vm3509, %v4035, %v3877
          %4040 = vmatprep.subr.mxu0 %v2841
          %4041 = vmatpush1.msra.mxu0 %v2840
          %4042 = vmatprep.subr.mxu0 %v2845
          %4043 = vmatpush1.msra.mxu0 %v2844
          %4044 = vmatprep.subr.mxu0 %v2849
          %4045 = vmatpush1.msra.mxu0 %v2848
          %4046 = vmatprep.subr.mxu0 %v2853
          %4047 = vmatpush1.msra.mxu0 %v2852
          %4048 = vmatprep.subr.mxu0 %v2857
          %4049 = vmatpush1.msra.mxu0 %v2856
          %4050 = vmatprep.subr.mxu0 %v2861
          %4051 = vmatpush1.msra.mxu0 %v2860
          %4052 = vmatprep.subr.mxu0 %v2865
          %4053 = vmatpush1.msra.mxu0 %v2864
          %4054 = vmatprep.subr.mxu0 %v2869
          %4055 = vmatpush1.msra.mxu0 %v2868
          %4056 = vmatprep.subr.mxu0 %v2873
          %4057 = vmatpush1.msra.mxu0 %v2872
          %4058 = vmatprep.subr.mxu0 %v2877
          %4059 = vmatpush1.msra.mxu0 %v2876
          %4060 = vmatprep.subr.mxu0 %v2881
          %4061 = vmatpush1.msra.mxu0 %v2880
          %4062 = vmatprep.subr.mxu0 %v2885
          %4063 = vmatpush1.msra.mxu0 %v2884
          %4064 = vmatprep.subr.mxu0 %v2889
          %4065 = vmatpush1.msra.mxu0 %v2888
          %4066 = vmatprep.subr.mxu0 %v2893
          %4067 = vmatpush1.msra.mxu0 %v2892
          %4068 = vmatprep.subr.mxu0 %v2897
          %4069 = vmatpush1.msra.mxu0 %v2896
          %4070 = vmatprep.subr.mxu0 %v2901
          %4071 = vmatpush1.msra.mxu0 %v2900
          %4072 = vmatprep.subr.mxu0 %v2905
          %4073 = vmatpush1.msra.mxu0 %v2904
          %4074 = vmatprep.subr.mxu0 %v2909
          %4075 = vmatpush1.msra.mxu0 %v2908
          %4076 = vmatprep.subr.mxu0 %v2913
          %4077 = vmatpush1.msra.mxu0 %v2912
          %4078 = vmatprep.subr.mxu0 %v2917
          %4079 = vmatpush1.msra.mxu0 %v2916
          %4080 = vmatprep.subr.mxu0 %v2921
          %4081 = vmatpush1.msra.mxu0 %v2920
          %4082 = vmatprep.subr.mxu0 %v2925
          %4083 = vmatpush1.msra.mxu0 %v2924
          %4084 = vmatprep.subr.mxu0 %v2929
          %4085 = vmatpush1.msra.mxu0 %v2928
          %4086 = vmatprep.subr.mxu0 %v2933
          %4087 = vmatpush1.msra.mxu0 %v2932
          %4088 = vmatprep.subr.mxu0 %v2937
          %4089 = vmatpush1.msra.mxu0 %v2936
          %4090 = vmatprep.subr.mxu0 %v2941
          %4091 = vmatpush1.msra.mxu0 %v2940
          %4092 = vmatprep.subr.mxu0 %v2945
          %4093 = vmatpush1.msra.mxu0 %v2944
          %4094 = vmatprep.subr.mxu0 %v2949
          %4095 = vmatpush1.msra.mxu0 %v2948
          %4096 = vmatprep.subr.mxu0 %v2953
          %4097 = vmatpush1.msra.mxu0 %v2952
          %4098 = vmatprep.subr.mxu0 %v2957
          %4099 = vmatpush1.msra.mxu0 %v2956
          %4100 = vmatprep.subr.mxu0 %v2961
          %4101 = vmatpush1.msra.mxu0 %v2960
          %4102 = vmatprep.subr.mxu0 %v2965
          %4103 = vmatpush1.msra.mxu0 %v2964
          %4104 = vmatprep.mubr.f32.mxu0 %v4037
          %4105 = vmatmul.mubr.f32.gmra.mrb[0].mxu0 %v4036
          %v4106 = vpop.f32.mrb[0].mxu0
          %v4107 = vadd.f32 %v3581, %v4106
          %v4108 = vpop.f32.mrb[0].mxu0
          %v4109 = vadd.f32 %v3583, %v4108
          %4110 = vdwg.mxu0
          %4111 = vmatprep.subr.mxu0 %v2843
          %4112 = vmatpush1.msra.mxu0 %v2842
          %4113 = vmatprep.subr.mxu0 %v2847
          %4114 = vmatpush1.msra.mxu0 %v2846
          %4115 = vmatprep.subr.mxu0 %v2851
          %4116 = vmatpush1.msra.mxu0 %v2850
          %4117 = vmatprep.subr.mxu0 %v2855
          %4118 = vmatpush1.msra.mxu0 %v2854
          %4119 = vmatprep.subr.mxu0 %v2859
          %4120 = vmatpush1.msra.mxu0 %v2858
          %4121 = vmatprep.subr.mxu0 %v2863
          %4122 = vmatpush1.msra.mxu0 %v2862
          %4123 = vmatprep.subr.mxu0 %v2867
          %4124 = vmatpush1.msra.mxu0 %v2866
          %4125 = vmatprep.subr.mxu0 %v2871
          %4126 = vmatpush1.msra.mxu0 %v2870
          %4127 = vmatprep.subr.mxu0 %v2875
          %4128 = vmatpush1.msra.mxu0 %v2874
          %4129 = vmatprep.subr.mxu0 %v2879
          %4130 = vmatpush1.msra.mxu0 %v2878
          %4131 = vmatprep.subr.mxu0 %v2883
          %4132 = vmatpush1.msra.mxu0 %v2882
          %4133 = vmatprep.subr.mxu0 %v2887
          %4134 = vmatpush1.msra.mxu0 %v2886
          %4135 = vmatprep.subr.mxu0 %v2891
          %4136 = vmatpush1.msra.mxu0 %v2890
          %4137 = vmatprep.subr.mxu0 %v2895
          %4138 = vmatpush1.msra.mxu0 %v2894
          %4139 = vmatprep.subr.mxu0 %v2899
          %4140 = vmatpush1.msra.mxu0 %v2898
          %4141 = vmatprep.subr.mxu0 %v2903
          %4142 = vmatpush1.msra.mxu0 %v2902
          %4143 = vmatprep.subr.mxu0 %v2907
          %4144 = vmatpush1.msra.mxu0 %v2906
          %4145 = vmatprep.subr.mxu0 %v2911
          %4146 = vmatpush1.msra.mxu0 %v2910
          %4147 = vmatprep.subr.mxu0 %v2915
          %4148 = vmatpush1.msra.mxu0 %v2914
          %4149 = vmatprep.subr.mxu0 %v2919
          %4150 = vmatpush1.msra.mxu0 %v2918
          %4151 = vmatprep.subr.mxu0 %v2923
          %4152 = vmatpush1.msra.mxu0 %v2922
          %4153 = vmatprep.subr.mxu0 %v2927
          %4154 = vmatpush1.msra.mxu0 %v2926
          %4155 = vmatprep.subr.mxu0 %v2931
          %4156 = vmatpush1.msra.mxu0 %v2930
          %4157 = vmatprep.subr.mxu0 %v2935
          %4158 = vmatpush1.msra.mxu0 %v2934
          %4159 = vmatprep.subr.mxu0 %v2939
          %4160 = vmatpush1.msra.mxu0 %v2938
          %4161 = vmatprep.subr.mxu0 %v2943
          %4162 = vmatpush1.msra.mxu0 %v2942
          %4163 = vmatprep.subr.mxu0 %v2947
          %4164 = vmatpush1.msra.mxu0 %v2946
          %4165 = vmatprep.subr.mxu0 %v2951
          %4166 = vmatpush1.msra.mxu0 %v2950
          %4167 = vmatprep.subr.mxu0 %v2955
          %4168 = vmatpush1.msra.mxu0 %v2954
          %4169 = vmatprep.subr.mxu0 %v2959
          %4170 = vmatpush1.msra.mxu0 %v2958
          %4171 = vmatprep.subr.mxu0 %v2963
          %4172 = vmatpush1.msra.mxu0 %v2962
          %4173 = vmatprep.subr.mxu0 %v2967
          %4174 = vmatpush1.msra.mxu0 %v2966
          %4175 = vmatprep.mubr.f32.mxu0 %v4037
          %4176 = vmatmul.mubr.f32.gmra.mrb[0].mxu0 %v4036
          %v4177 = vpop.f32.mrb[0].mxu0
          %v4178 = vadd.f32 %v3652, %v4177
          %v4179 = vpop.f32.mrb[0].mxu0
          %v4180 = vadd.f32 %v3654, %v4179
          %4181 = vdwg.mxu0
          %v4182 = vld [vmem:[#allocation15] sm:$0xf]
          %v4184 = vlaneseq
          %v4185 = vshrl.u32 %v4184, 7
          %v4186 = vsub.s32 0, %v4185
          %v4187 = vrot.slane %v4182, %v4186
          %v4188 = vlaneseq
          %v4189 = vshrl.u32 %v4188, 7
          %v4190 = vsub.s32 1, %v4189
          %v4191 = vrot.slane %v4182, %v4190
          %v4192 = vlaneseq
          %v4193 = vshrl.u32 %v4192, 7
          %v4194 = vsub.s32 2, %v4193
          %v4195 = vrot.slane %v4182, %v4194
          %v4196 = vlaneseq
          %v4197 = vshrl.u32 %v4196, 7
          %v4198 = vsub.s32 3, %v4197
          %v4199 = vrot.slane %v4182, %v4198
          %v4204 = vadd.f32 %v4107, %v4187
          %v4205 = vadd.f32 %v4109, %v4191
          %v4206 = vadd.f32 %v4178, %v4195
          %v4207 = vadd.f32 %v4180, %v4199
          %v4208 = vmax.f32 %v4204, 0.0
          %v4209 = vmax.f32 %v4205, 0.0
          %v4210 = vmax.f32 %v4206, 0.0
          %v4211 = vmax.f32 %v4207, 0.0
          %v4212 = vld [vmem:[#allocation17] sm:$0xf]
          %v4214 = vlaneseq
          %v4215 = vshrl.u32 %v4214, 7
          %v4216 = vsub.s32 0, %v4215
          %v4217 = vrot.slane %v4212, %v4216
          %v4218 = vlaneseq
          %v4219 = vshrl.u32 %v4218, 7
          %v4220 = vsub.s32 1, %v4219
          %v4221 = vrot.slane %v4212, %v4220
          %v4222 = vlaneseq
          %v4223 = vshrl.u32 %v4222, 7
          %v4224 = vsub.s32 2, %v4223
          %v4225 = vrot.slane %v4212, %v4224
          %v4226 = vlaneseq
          %v4227 = vshrl.u32 %v4226, 7
          %v4228 = vsub.s32 3, %v4227
          %v4229 = vrot.slane %v4212, %v4228
          %v4234 = vmul.f32 %v4208, %v4217
          %v4235 = vmul.f32 %v4209, %v4221
          %v4236 = vmul.f32 %v4210, %v4225
          %v4237 = vmul.f32 %v4211, %v4229
          %vm4238 = vcmask 1041408
          %v4239 = vsel %vm4238, %v4234, 0.0
          %v4240 = vsel %vm4238, %v4235, 0.0
          %v4241 = vadd.f32 %v4239, %v4240
          %v4242 = vsel %vm4238, %v4236, 0.0
          %v4243 = vadd.f32 %v4241, %v4242
          %v4244 = vsel %vm4238, %v4237, 0.0
          %v4245 = vadd.f32 %v4243, %v4244
          %4246 = vadd.xlane.f32.xlu0 %v4245
          %v4247 = vpop.xlane.xlu0 %4246
          %s4248 = sld [smem:[#allocation18]]
          %v4249 = vstv %s4248
          %v4250 = vadd.f32 %v4247, %v4249
          %v4251 = vxor.u32 %v4250, 2147483648
          %v4252 = vmul.f32 %v4251, 1.442695
          %v4253 = vpow.pop %v4252
          %v4254 = vadd.f32 %v4253, 1.0
          %v4255 = vrcp.pop %v4254
          %v4256 = vmul.f32 1.0, %v4255
          %s4257 = scalar_lea.vmem [#allocation14], 2048
          %v4258 = vld [vmem:[%s4257] sm:$0xff]
          %v4259 = vld [vmem:[%s4257 + $0x8] sm:$0xff]
          %v4260 = vld [vmem:[%s4257 + $0x10] sm:$0xff]
          %v4261 = vld [vmem:[%s4257 + $0x18] sm:$0xff]
          %v4262 = vld [vmem:[%s4257 + $0x20] sm:$0xff]
          %v4263 = vld [vmem:[%s4257 + $0x28] sm:$0xff]
          %v4264 = vld [vmem:[%s4257 + $0x30] sm:$0xff]
          %v4265 = vld [vmem:[%s4257 + $0x38] sm:$0xff]
          %v4266 = vld [vmem:[%s4257 + $0x40] sm:$0xff]
          %v4267 = vld [vmem:[%s4257 + $0x48] sm:$0xff]
          %v4268 = vld [vmem:[%s4257 + $0x50] sm:$0xff]
          %v4269 = vld [vmem:[%s4257 + $0x58] sm:$0xff]
          %v4270 = vld [vmem:[%s4257 + $0x60] sm:$0xff]
          %v4271 = vld [vmem:[%s4257 + $0x68] sm:$0xff]
          %v4272 = vld [vmem:[%s4257 + $0x70] sm:$0xff]
          %v4273 = vld [vmem:[%s4257 + $0x78] sm:$0xff]
          %v4274 = vld [vmem:[%s4257 + $0x80] sm:$0xff]
          %v4275 = vld [vmem:[%s4257 + $0x88] sm:$0xff]
          %v4276 = vld [vmem:[%s4257 + $0x90] sm:$0xff]
          %v4277 = vld [vmem:[%s4257 + $0x98] sm:$0xff]
          %v4278 = vld [vmem:[%s4257 + $0xa0] sm:$0xff]
          %v4279 = vld [vmem:[%s4257 + $0xa8] sm:$0xff]
          %v4280 = vld [vmem:[%s4257 + $0xb0] sm:$0xff]
          %v4281 = vld [vmem:[%s4257 + $0xb8] sm:$0xff]
          %v4282 = vld [vmem:[%s4257 + $0xc0] sm:$0xff]
          %v4283 = vld [vmem:[%s4257 + $0xc8] sm:$0xff]
          %v4284 = vld [vmem:[%s4257 + $0xd0] sm:$0xff]
          %v4285 = vld [vmem:[%s4257 + $0xd8] sm:$0xff]
          %v4286 = vld [vmem:[%s4257 + $0xe0] sm:$0xff]
          %v4287 = vld [vmem:[%s4257 + $0xe8] sm:$0xff]
          %v4288 = vld [vmem:[%s4257 + $0xf0] sm:$0xff]
          %v4289 = vld [vmem:[%s4257 + $0xf8] sm:$0xff]
          %v4290 = vld [vmem:[%s4257 + $0x100] sm:$0xff]
          %v4291 = vld [vmem:[%s4257 + $0x108] sm:$0xff]
          %v4292 = vld [vmem:[%s4257 + $0x110] sm:$0xff]
          %v4293 = vld [vmem:[%s4257 + $0x118] sm:$0xff]
          %v4294 = vld [vmem:[%s4257 + $0x120] sm:$0xff]
          %v4295 = vld [vmem:[%s4257 + $0x128] sm:$0xff]
          %v4296 = vld [vmem:[%s4257 + $0x130] sm:$0xff]
          %v4297 = vld [vmem:[%s4257 + $0x138] sm:$0xff]
          %v4298 = vld [vmem:[%s4257 + $0x140] sm:$0xff]
          %v4299 = vld [vmem:[%s4257 + $0x148] sm:$0xff]
          %v4300 = vld [vmem:[%s4257 + $0x150] sm:$0xff]
          %v4301 = vld [vmem:[%s4257 + $0x158] sm:$0xff]
          %v4302 = vld [vmem:[%s4257 + $0x160] sm:$0xff]
          %v4303 = vld [vmem:[%s4257 + $0x168] sm:$0xff]
          %v4304 = vld [vmem:[%s4257 + $0x170] sm:$0xff]
          %v4305 = vld [vmem:[%s4257 + $0x178] sm:$0xff]
          %v4306 = vld [vmem:[%s4257 + $0x180] sm:$0xff]
          %v4307 = vld [vmem:[%s4257 + $0x188] sm:$0xff]
          %v4308 = vld [vmem:[%s4257 + $0x190] sm:$0xff]
          %v4309 = vld [vmem:[%s4257 + $0x198] sm:$0xff]
          %v4310 = vld [vmem:[%s4257 + $0x1a0] sm:$0xff]
          %v4311 = vld [vmem:[%s4257 + $0x1a8] sm:$0xff]
          %v4312 = vld [vmem:[%s4257 + $0x1b0] sm:$0xff]
          %v4313 = vld [vmem:[%s4257 + $0x1b8] sm:$0xff]
          %v4314 = vld [vmem:[%s4257 + $0x1c0] sm:$0xff]
          %v4315 = vld [vmem:[%s4257 + $0x1c8] sm:$0xff]
          %v4316 = vld [vmem:[%s4257 + $0x1d0] sm:$0xff]
          %v4317 = vld [vmem:[%s4257 + $0x1d8] sm:$0xff]
          %v4318 = vld [vmem:[%s4257 + $0x1e0] sm:$0xff]
          %v4319 = vld [vmem:[%s4257 + $0x1e8] sm:$0xff]
          %v4320 = vld [vmem:[%s4257 + $0x1f0] sm:$0xff]
          %v4321 = vld [vmem:[%s4257 + $0x1f8] sm:$0xff]
          %v4322 = vld [vmem:[%s4257 + $0x200] sm:$0xff]
          %v4323 = vld [vmem:[%s4257 + $0x208] sm:$0xff]
          %v4324 = vld [vmem:[%s4257 + $0x210] sm:$0xff]
          %v4325 = vld [vmem:[%s4257 + $0x218] sm:$0xff]
          %v4326 = vld [vmem:[%s4257 + $0x220] sm:$0xff]
          %v4327 = vld [vmem:[%s4257 + $0x228] sm:$0xff]
          %v4328 = vld [vmem:[%s4257 + $0x230] sm:$0xff]
          %v4329 = vld [vmem:[%s4257 + $0x238] sm:$0xff]
          %v4330 = vld [vmem:[%s4257 + $0x240] sm:$0xff]
          %v4331 = vld [vmem:[%s4257 + $0x248] sm:$0xff]
          %v4332 = vld [vmem:[%s4257 + $0x250] sm:$0xff]
          %v4333 = vld [vmem:[%s4257 + $0x258] sm:$0xff]
          %v4334 = vld [vmem:[%s4257 + $0x260] sm:$0xff]
          %v4335 = vld [vmem:[%s4257 + $0x268] sm:$0xff]
          %v4336 = vld [vmem:[%s4257 + $0x270] sm:$0xff]
          %v4337 = vld [vmem:[%s4257 + $0x278] sm:$0xff]
          %v4338 = vld [vmem:[%s4257 + $0x280] sm:$0xff]
          %v4339 = vld [vmem:[%s4257 + $0x288] sm:$0xff]
          %v4340 = vld [vmem:[%s4257 + $0x290] sm:$0xff]
          %v4341 = vld [vmem:[%s4257 + $0x298] sm:$0xff]
          %v4342 = vld [vmem:[%s4257 + $0x2a0] sm:$0xff]
          %v4343 = vld [vmem:[%s4257 + $0x2a8] sm:$0xff]
          %v4344 = vld [vmem:[%s4257 + $0x2b0] sm:$0xff]
          %v4345 = vld [vmem:[%s4257 + $0x2b8] sm:$0xff]
          %v4346 = vld [vmem:[%s4257 + $0x2c0] sm:$0xff]
          %v4347 = vld [vmem:[%s4257 + $0x2c8] sm:$0xff]
          %v4348 = vld [vmem:[%s4257 + $0x2d0] sm:$0xff]
          %v4349 = vld [vmem:[%s4257 + $0x2d8] sm:$0xff]
          %v4350 = vld [vmem:[%s4257 + $0x2e0] sm:$0xff]
          %v4351 = vld [vmem:[%s4257 + $0x2e8] sm:$0xff]
          %v4352 = vld [vmem:[%s4257 + $0x2f0] sm:$0xff]
          %v4353 = vld [vmem:[%s4257 + $0x2f8] sm:$0xff]
          %v4354 = vld [vmem:[%s4257 + $0x300] sm:$0xff]
          %v4355 = vld [vmem:[%s4257 + $0x308] sm:$0xff]
          %v4356 = vld [vmem:[%s4257 + $0x310] sm:$0xff]
          %v4357 = vld [vmem:[%s4257 + $0x318] sm:$0xff]
          %v4358 = vld [vmem:[%s4257 + $0x320] sm:$0xff]
          %v4359 = vld [vmem:[%s4257 + $0x328] sm:$0xff]
          %v4360 = vld [vmem:[%s4257 + $0x330] sm:$0xff]
          %v4361 = vld [vmem:[%s4257 + $0x338] sm:$0xff]
          %v4362 = vld [vmem:[%s4257 + $0x340] sm:$0xff]
          %v4363 = vld [vmem:[%s4257 + $0x348] sm:$0xff]
          %v4364 = vld [vmem:[%s4257 + $0x350] sm:$0xff]
          %v4365 = vld [vmem:[%s4257 + $0x358] sm:$0xff]
          %v4366 = vld [vmem:[%s4257 + $0x360] sm:$0xff]
          %v4367 = vld [vmem:[%s4257 + $0x368] sm:$0xff]
          %v4368 = vld [vmem:[%s4257 + $0x370] sm:$0xff]
          %v4369 = vld [vmem:[%s4257 + $0x378] sm:$0xff]
          %v4370 = vld [vmem:[%s4257 + $0x380] sm:$0xff]
          %v4371 = vld [vmem:[%s4257 + $0x388] sm:$0xff]
          %v4372 = vld [vmem:[%s4257 + $0x390] sm:$0xff]
          %v4373 = vld [vmem:[%s4257 + $0x398] sm:$0xff]
          %v4374 = vld [vmem:[%s4257 + $0x3a0] sm:$0xff]
          %v4375 = vld [vmem:[%s4257 + $0x3a8] sm:$0xff]
          %v4376 = vld [vmem:[%s4257 + $0x3b0] sm:$0xff]
          %v4377 = vld [vmem:[%s4257 + $0x3b8] sm:$0xff]
          %v4378 = vld [vmem:[%s4257 + $0x3c0] sm:$0xff]
          %v4379 = vld [vmem:[%s4257 + $0x3c8] sm:$0xff]
          %v4380 = vld [vmem:[%s4257 + $0x3d0] sm:$0xff]
          %v4381 = vld [vmem:[%s4257 + $0x3d8] sm:$0xff]
          %v4382 = vld [vmem:[%s4257 + $0x3e0] sm:$0xff]
          %v4383 = vld [vmem:[%s4257 + $0x3e8] sm:$0xff]
          %v4384 = vld [vmem:[%s4257 + $0x3f0] sm:$0xff]
          %v4385 = vld [vmem:[%s4257 + $0x3f8] sm:$0xff]
          %s4386 = scalar_lea.vmem [#allocation14], 3072
          %v4387 = vld [vmem:[%s4386] sm:$0xff]
          %v4388 = vld [vmem:[%s4386 + $0x8] sm:$0xff]
          %v4389 = vld [vmem:[%s4386 + $0x10] sm:$0xff]
          %v4390 = vld [vmem:[%s4386 + $0x18] sm:$0xff]
          %v4391 = vld [vmem:[%s4386 + $0x20] sm:$0xff]
          %v4392 = vld [vmem:[%s4386 + $0x28] sm:$0xff]
          %v4393 = vld [vmem:[%s4386 + $0x30] sm:$0xff]
          %v4394 = vld [vmem:[%s4386 + $0x38] sm:$0xff]
          %v4395 = vld [vmem:[%s4386 + $0x40] sm:$0xff]
          %v4396 = vld [vmem:[%s4386 + $0x48] sm:$0xff]
          %v4397 = vld [vmem:[%s4386 + $0x50] sm:$0xff]
          %v4398 = vld [vmem:[%s4386 + $0x58] sm:$0xff]
          %v4399 = vld [vmem:[%s4386 + $0x60] sm:$0xff]
          %v4400 = vld [vmem:[%s4386 + $0x68] sm:$0xff]
          %v4401 = vld [vmem:[%s4386 + $0x70] sm:$0xff]
          %v4402 = vld [vmem:[%s4386 + $0x78] sm:$0xff]
          %v4403 = vld [vmem:[%s4386 + $0x80] sm:$0xff]
          %v4404 = vld [vmem:[%s4386 + $0x88] sm:$0xff]
          %v4405 = vld [vmem:[%s4386 + $0x90] sm:$0xff]
          %v4406 = vld [vmem:[%s4386 + $0x98] sm:$0xff]
          %v4407 = vld [vmem:[%s4386 + $0xa0] sm:$0xff]
          %v4408 = vld [vmem:[%s4386 + $0xa8] sm:$0xff]
          %v4409 = vld [vmem:[%s4386 + $0xb0] sm:$0xff]
          %v4410 = vld [vmem:[%s4386 + $0xb8] sm:$0xff]
          %v4411 = vld [vmem:[%s4386 + $0xc0] sm:$0xff]
          %v4412 = vld [vmem:[%s4386 + $0xc8] sm:$0xff]
          %v4413 = vld [vmem:[%s4386 + $0xd0] sm:$0xff]
          %v4414 = vld [vmem:[%s4386 + $0xd8] sm:$0xff]
          %v4415 = vld [vmem:[%s4386 + $0xe0] sm:$0xff]
          %v4416 = vld [vmem:[%s4386 + $0xe8] sm:$0xff]
          %v4417 = vld [vmem:[%s4386 + $0xf0] sm:$0xff]
          %v4418 = vld [vmem:[%s4386 + $0xf8] sm:$0xff]
          %v4419 = vld [vmem:[%s4386 + $0x100] sm:$0xff]
          %v4420 = vld [vmem:[%s4386 + $0x108] sm:$0xff]
          %v4421 = vld [vmem:[%s4386 + $0x110] sm:$0xff]
          %v4422 = vld [vmem:[%s4386 + $0x118] sm:$0xff]
          %v4423 = vld [vmem:[%s4386 + $0x120] sm:$0xff]
          %v4424 = vld [vmem:[%s4386 + $0x128] sm:$0xff]
          %v4425 = vld [vmem:[%s4386 + $0x130] sm:$0xff]
          %v4426 = vld [vmem:[%s4386 + $0x138] sm:$0xff]
          %v4427 = vld [vmem:[%s4386 + $0x140] sm:$0xff]
          %v4428 = vld [vmem:[%s4386 + $0x148] sm:$0xff]
          %v4429 = vld [vmem:[%s4386 + $0x150] sm:$0xff]
          %v4430 = vld [vmem:[%s4386 + $0x158] sm:$0xff]
          %v4431 = vld [vmem:[%s4386 + $0x160] sm:$0xff]
          %v4432 = vld [vmem:[%s4386 + $0x168] sm:$0xff]
          %v4433 = vld [vmem:[%s4386 + $0x170] sm:$0xff]
          %v4434 = vld [vmem:[%s4386 + $0x178] sm:$0xff]
          %v4435 = vld [vmem:[%s4386 + $0x180] sm:$0xff]
          %v4436 = vld [vmem:[%s4386 + $0x188] sm:$0xff]
          %v4437 = vld [vmem:[%s4386 + $0x190] sm:$0xff]
          %v4438 = vld [vmem:[%s4386 + $0x198] sm:$0xff]
          %v4439 = vld [vmem:[%s4386 + $0x1a0] sm:$0xff]
          %v4440 = vld [vmem:[%s4386 + $0x1a8] sm:$0xff]
          %v4441 = vld [vmem:[%s4386 + $0x1b0] sm:$0xff]
          %v4442 = vld [vmem:[%s4386 + $0x1b8] sm:$0xff]
          %v4443 = vld [vmem:[%s4386 + $0x1c0] sm:$0xff]
          %v4444 = vld [vmem:[%s4386 + $0x1c8] sm:$0xff]
          %v4445 = vld [vmem:[%s4386 + $0x1d0] sm:$0xff]
          %v4446 = vld [vmem:[%s4386 + $0x1d8] sm:$0xff]
          %v4447 = vld [vmem:[%s4386 + $0x1e0] sm:$0xff]
          %v4448 = vld [vmem:[%s4386 + $0x1e8] sm:$0xff]
          %v4449 = vld [vmem:[%s4386 + $0x1f0] sm:$0xff]
          %v4450 = vld [vmem:[%s4386 + $0x1f8] sm:$0xff]
          %v4451 = vld [vmem:[%s4386 + $0x200] sm:$0xff]
          %v4452 = vld [vmem:[%s4386 + $0x208] sm:$0xff]
          %v4453 = vld [vmem:[%s4386 + $0x210] sm:$0xff]
          %v4454 = vld [vmem:[%s4386 + $0x218] sm:$0xff]
          %v4455 = vld [vmem:[%s4386 + $0x220] sm:$0xff]
          %v4456 = vld [vmem:[%s4386 + $0x228] sm:$0xff]
          %v4457 = vld [vmem:[%s4386 + $0x230] sm:$0xff]
          %v4458 = vld [vmem:[%s4386 + $0x238] sm:$0xff]
          %v4459 = vld [vmem:[%s4386 + $0x240] sm:$0xff]
          %v4460 = vld [vmem:[%s4386 + $0x248] sm:$0xff]
          %v4461 = vld [vmem:[%s4386 + $0x250] sm:$0xff]
          %v4462 = vld [vmem:[%s4386 + $0x258] sm:$0xff]
          %v4463 = vld [vmem:[%s4386 + $0x260] sm:$0xff]
          %v4464 = vld [vmem:[%s4386 + $0x268] sm:$0xff]
          %v4465 = vld [vmem:[%s4386 + $0x270] sm:$0xff]
          %v4466 = vld [vmem:[%s4386 + $0x278] sm:$0xff]
          %v4467 = vld [vmem:[%s4386 + $0x280] sm:$0xff]
          %v4468 = vld [vmem:[%s4386 + $0x288] sm:$0xff]
          %v4469 = vld [vmem:[%s4386 + $0x290] sm:$0xff]
          %v4470 = vld [vmem:[%s4386 + $0x298] sm:$0xff]
          %v4471 = vld [vmem:[%s4386 + $0x2a0] sm:$0xff]
          %v4472 = vld [vmem:[%s4386 + $0x2a8] sm:$0xff]
          %v4473 = vld [vmem:[%s4386 + $0x2b0] sm:$0xff]
          %v4474 = vld [vmem:[%s4386 + $0x2b8] sm:$0xff]
          %v4475 = vld [vmem:[%s4386 + $0x2c0] sm:$0xff]
          %v4476 = vld [vmem:[%s4386 + $0x2c8] sm:$0xff]
          %v4477 = vld [vmem:[%s4386 + $0x2d0] sm:$0xff]
          %v4478 = vld [vmem:[%s4386 + $0x2d8] sm:$0xff]
          %v4479 = vld [vmem:[%s4386 + $0x2e0] sm:$0xff]
          %v4480 = vld [vmem:[%s4386 + $0x2e8] sm:$0xff]
          %v4481 = vld [vmem:[%s4386 + $0x2f0] sm:$0xff]
          %v4482 = vld [vmem:[%s4386 + $0x2f8] sm:$0xff]
          %v4483 = vld [vmem:[%s4386 + $0x300] sm:$0xff]
          %v4484 = vld [vmem:[%s4386 + $0x308] sm:$0xff]
          %v4485 = vld [vmem:[%s4386 + $0x310] sm:$0xff]
          %v4486 = vld [vmem:[%s4386 + $0x318] sm:$0xff]
          %v4487 = vld [vmem:[%s4386 + $0x320] sm:$0xff]
          %v4488 = vld [vmem:[%s4386 + $0x328] sm:$0xff]
          %v4489 = vld [vmem:[%s4386 + $0x330] sm:$0xff]
          %v4490 = vld [vmem:[%s4386 + $0x338] sm:$0xff]
          %v4491 = vld [vmem:[%s4386 + $0x340] sm:$0xff]
          %v4492 = vld [vmem:[%s4386 + $0x348] sm:$0xff]
          %v4493 = vld [vmem:[%s4386 + $0x350] sm:$0xff]
          %v4494 = vld [vmem:[%s4386 + $0x358] sm:$0xff]
          %v4495 = vld [vmem:[%s4386 + $0x360] sm:$0xff]
          %v4496 = vld [vmem:[%s4386 + $0x368] sm:$0xff]
          %v4497 = vld [vmem:[%s4386 + $0x370] sm:$0xff]
          %v4498 = vld [vmem:[%s4386 + $0x378] sm:$0xff]
          %v4499 = vld [vmem:[%s4386 + $0x380] sm:$0xff]
          %v4500 = vld [vmem:[%s4386 + $0x388] sm:$0xff]
          %v4501 = vld [vmem:[%s4386 + $0x390] sm:$0xff]
          %v4502 = vld [vmem:[%s4386 + $0x398] sm:$0xff]
          %v4503 = vld [vmem:[%s4386 + $0x3a0] sm:$0xff]
          %v4504 = vld [vmem:[%s4386 + $0x3a8] sm:$0xff]
          %v4505 = vld [vmem:[%s4386 + $0x3b0] sm:$0xff]
          %v4506 = vld [vmem:[%s4386 + $0x3b8] sm:$0xff]
          %v4507 = vld [vmem:[%s4386 + $0x3c0] sm:$0xff]
          %v4508 = vld [vmem:[%s4386 + $0x3c8] sm:$0xff]
          %v4509 = vld [vmem:[%s4386 + $0x3d0] sm:$0xff]
          %v4510 = vld [vmem:[%s4386 + $0x3d8] sm:$0xff]
          %v4511 = vld [vmem:[%s4386 + $0x3e0] sm:$0xff]
          %v4512 = vld [vmem:[%s4386 + $0x3e8] sm:$0xff]
          %v4513 = vld [vmem:[%s4386 + $0x3f0] sm:$0xff]
          %v4514 = vld [vmem:[%s4386 + $0x3f8] sm:$0xff]
          %v4579 = vlaneseq
          %v4580 = vshrl.u32 %v4579, 7
          %v4581 = vsub.s32 %v3162, %v4580
          %v4582 = vrot.slane %v2776, %v4581
          %v4583 = vlaneseq
          %v4584 = vshrl.u32 %v4583, 7
          %v4585 = vsub.s32 %v3167, %v4584
          %v4586 = vrot.slane %v2777, %v4585
          %v4587 = vsel %vm3172, %v4586, %v4582
          %v4588 = vlaneseq
          %v4589 = vshrl.u32 %v4588, 7
          %v4590 = vsub.s32 %v3174, %v4589
          %v4591 = vrot.slane %v2778, %v4590
          %v4592 = vsel %vm3179, %v4591, %v4587
          %v4593 = vlaneseq
          %v4594 = vshrl.u32 %v4593, 7
          %v4595 = vsub.s32 %v3181, %v4594
          %v4596 = vrot.slane %v2779, %v4595
          %v4597 = vsel %vm3186, %v4596, %v4592
          %v4598 = vlaneseq
          %v4599 = vshrl.u32 %v4598, 7
          %v4600 = vsub.s32 %v3188, %v4599
          %v4601 = vrot.slane %v2780, %v4600
          %v4602 = vsel %vm3193, %v4601, %v4597
          %v4603 = vlaneseq
          %v4604 = vshrl.u32 %v4603, 7
          %v4605 = vsub.s32 %v3195, %v4604
          %v4606 = vrot.slane %v2781, %v4605
          %v4607 = vsel %vm3200, %v4606, %v4602
          %v4608 = vlaneseq
          %v4609 = vshrl.u32 %v4608, 7
          %v4610 = vsub.s32 %v3202, %v4609
          %v4611 = vrot.slane %v2782, %v4610
          %v4612 = vsel %vm3207, %v4611, %v4607
          %v4613 = vlaneseq
          %v4614 = vshrl.u32 %v4613, 7
          %v4615 = vsub.s32 %v3209, %v4614
          %v4616 = vrot.slane %v2783, %v4615
          %v4617 = vsel %vm3214, %v4616, %v4612
          %v4618 = vlaneseq
          %v4619 = vshrl.u32 %v4618, 7
          %v4620 = vsub.s32 %v3216, %v4619
          %v4621 = vrot.slane %v2784, %v4620
          %v4622 = vsel %vm3221, %v4621, %v4617
          %v4623 = vlaneseq
          %v4624 = vshrl.u32 %v4623, 7
          %v4625 = vsub.s32 %v3223, %v4624
          %v4626 = vrot.slane %v2785, %v4625
          %v4627 = vsel %vm3228, %v4626, %v4622
          %v4628 = vlaneseq
          %v4629 = vshrl.u32 %v4628, 7
          %v4630 = vsub.s32 %v3230, %v4629
          %v4631 = vrot.slane %v2786, %v4630
          %v4632 = vsel %vm3235, %v4631, %v4627
          %v4633 = vlaneseq
          %v4634 = vshrl.u32 %v4633, 7
          %v4635 = vsub.s32 %v3237, %v4634
          %v4636 = vrot.slane %v2787, %v4635
          %v4637 = vsel %vm3242, %v4636, %v4632
          %v4638 = vlaneseq
          %v4639 = vshrl.u32 %v4638, 7
          %v4640 = vsub.s32 %v3244, %v4639
          %v4641 = vrot.slane %v2788, %v4640
          %v4642 = vsel %vm3249, %v4641, %v4637
          %v4643 = vlaneseq
          %v4644 = vshrl.u32 %v4643, 7
          %v4645 = vsub.s32 %v3251, %v4644
          %v4646 = vrot.slane %v2789, %v4645
          %v4647 = vsel %vm3256, %v4646, %v4642
          %v4648 = vlaneseq
          %v4649 = vshrl.u32 %v4648, 7
          %v4650 = vsub.s32 %v3258, %v4649
          %v4651 = vrot.slane %v2790, %v4650
          %v4652 = vsel %vm3263, %v4651, %v4647
          %v4653 = vlaneseq
          %v4654 = vshrl.u32 %v4653, 7
          %v4655 = vsub.s32 %v3265, %v4654
          %v4656 = vrot.slane %v2791, %v4655
          %v4657 = vsel %vm3270, %v4656, %v4652
          %v4658 = vlaneseq
          %v4659 = vshrl.u32 %v4658, 7
          %v4660 = vsub.s32 %v3162, %v4659
          %v4661 = vrot.slane %v2792, %v4660
          %v4662 = vlaneseq
          %v4663 = vshrl.u32 %v4662, 7
          %v4664 = vsub.s32 %v3167, %v4663
          %v4665 = vrot.slane %v2793, %v4664
          %v4666 = vsel %vm3172, %v4665, %v4661
          %v4667 = vlaneseq
          %v4668 = vshrl.u32 %v4667, 7
          %v4669 = vsub.s32 %v3174, %v4668
          %v4670 = vrot.slane %v2794, %v4669
          %v4671 = vsel %vm3179, %v4670, %v4666
          %v4672 = vlaneseq
          %v4673 = vshrl.u32 %v4672, 7
          %v4674 = vsub.s32 %v3181, %v4673
          %v4675 = vrot.slane %v2795, %v4674
          %v4676 = vsel %vm3186, %v4675, %v4671
          %v4677 = vlaneseq
          %v4678 = vshrl.u32 %v4677, 7
          %v4679 = vsub.s32 %v3188, %v4678
          %v4680 = vrot.slane %v2796, %v4679
          %v4681 = vsel %vm3193, %v4680, %v4676
          %v4682 = vlaneseq
          %v4683 = vshrl.u32 %v4682, 7
          %v4684 = vsub.s32 %v3195, %v4683
          %v4685 = vrot.slane %v2797, %v4684
          %v4686 = vsel %vm3200, %v4685, %v4681
          %v4687 = vlaneseq
          %v4688 = vshrl.u32 %v4687, 7
          %v4689 = vsub.s32 %v3202, %v4688
          %v4690 = vrot.slane %v2798, %v4689
          %v4691 = vsel %vm3207, %v4690, %v4686
          %v4692 = vlaneseq
          %v4693 = vshrl.u32 %v4692, 7
          %v4694 = vsub.s32 %v3209, %v4693
          %v4695 = vrot.slane %v2799, %v4694
          %v4696 = vsel %vm3214, %v4695, %v4691
          %v4697 = vlaneseq
          %v4698 = vshrl.u32 %v4697, 7
          %v4699 = vsub.s32 %v3216, %v4698
          %v4700 = vrot.slane %v2800, %v4699
          %v4701 = vsel %vm3221, %v4700, %v4696
          %v4702 = vlaneseq
          %v4703 = vshrl.u32 %v4702, 7
          %v4704 = vsub.s32 %v3223, %v4703
          %v4705 = vrot.slane %v2801, %v4704
          %v4706 = vsel %vm3228, %v4705, %v4701
          %v4707 = vlaneseq
          %v4708 = vshrl.u32 %v4707, 7
          %v4709 = vsub.s32 %v3230, %v4708
          %v4710 = vrot.slane %v2802, %v4709
          %v4711 = vsel %vm3235, %v4710, %v4706
          %v4712 = vlaneseq
          %v4713 = vshrl.u32 %v4712, 7
          %v4714 = vsub.s32 %v3237, %v4713
          %v4715 = vrot.slane %v2803, %v4714
          %v4716 = vsel %vm3242, %v4715, %v4711
          %v4717 = vlaneseq
          %v4718 = vshrl.u32 %v4717, 7
          %v4719 = vsub.s32 %v3244, %v4718
          %v4720 = vrot.slane %v2804, %v4719
          %v4721 = vsel %vm3249, %v4720, %v4716
          %v4722 = vlaneseq
          %v4723 = vshrl.u32 %v4722, 7
          %v4724 = vsub.s32 %v3251, %v4723
          %v4725 = vrot.slane %v2805, %v4724
          %v4726 = vsel %vm3256, %v4725, %v4721
          %v4727 = vlaneseq
          %v4728 = vshrl.u32 %v4727, 7
          %v4729 = vsub.s32 %v3258, %v4728
          %v4730 = vrot.slane %v2806, %v4729
          %v4731 = vsel %vm3263, %v4730, %v4726
          %v4732 = vlaneseq
          %v4733 = vshrl.u32 %v4732, 7
          %v4734 = vsub.s32 %v3265, %v4733
          %v4735 = vrot.slane %v2807, %v4734
          %v4736 = vsel %vm3270, %v4735, %v4731
          %v4737 = vlaneseq
          %v4738 = vshrl.u32 %v4737, 7
          %v4739 = vsub.s32 %v3162, %v4738
          %v4740 = vrot.slane %v2808, %v4739
          %v4741 = vlaneseq
          %v4742 = vshrl.u32 %v4741, 7
          %v4743 = vsub.s32 %v3167, %v4742
          %v4744 = vrot.slane %v2809, %v4743
          %v4745 = vsel %vm3172, %v4744, %v4740
          %v4746 = vlaneseq
          %v4747 = vshrl.u32 %v4746, 7
          %v4748 = vsub.s32 %v3174, %v4747
          %v4749 = vrot.slane %v2810, %v4748
          %v4750 = vsel %vm3179, %v4749, %v4745
          %v4751 = vlaneseq
          %v4752 = vshrl.u32 %v4751, 7
          %v4753 = vsub.s32 %v3181, %v4752
          %v4754 = vrot.slane %v2811, %v4753
          %v4755 = vsel %vm3186, %v4754, %v4750
          %v4756 = vlaneseq
          %v4757 = vshrl.u32 %v4756, 7
          %v4758 = vsub.s32 %v3188, %v4757
          %v4759 = vrot.slane %v2812, %v4758
          %v4760 = vsel %vm3193, %v4759, %v4755
          %v4761 = vlaneseq
          %v4762 = vshrl.u32 %v4761, 7
          %v4763 = vsub.s32 %v3195, %v4762
          %v4764 = vrot.slane %v2813, %v4763
          %v4765 = vsel %vm3200, %v4764, %v4760
          %v4766 = vlaneseq
          %v4767 = vshrl.u32 %v4766, 7
          %v4768 = vsub.s32 %v3202, %v4767
          %v4769 = vrot.slane %v2814, %v4768
          %v4770 = vsel %vm3207, %v4769, %v4765
          %v4771 = vlaneseq
          %v4772 = vshrl.u32 %v4771, 7
          %v4773 = vsub.s32 %v3209, %v4772
          %v4774 = vrot.slane %v2815, %v4773
          %v4775 = vsel %vm3214, %v4774, %v4770
          %v4776 = vlaneseq
          %v4777 = vshrl.u32 %v4776, 7
          %v4778 = vsub.s32 %v3216, %v4777
          %v4779 = vrot.slane %v2816, %v4778
          %v4780 = vsel %vm3221, %v4779, %v4775
          %v4781 = vlaneseq
          %v4782 = vshrl.u32 %v4781, 7
          %v4783 = vsub.s32 %v3223, %v4782
          %v4784 = vrot.slane %v2817, %v4783
          %v4785 = vsel %vm3228, %v4784, %v4780
          %v4786 = vlaneseq
          %v4787 = vshrl.u32 %v4786, 7
          %v4788 = vsub.s32 %v3230, %v4787
          %v4789 = vrot.slane %v2818, %v4788
          %v4790 = vsel %vm3235, %v4789, %v4785
          %v4791 = vlaneseq
          %v4792 = vshrl.u32 %v4791, 7
          %v4793 = vsub.s32 %v3237, %v4792
          %v4794 = vrot.slane %v2819, %v4793
          %v4795 = vsel %vm3242, %v4794, %v4790
          %v4796 = vlaneseq
          %v4797 = vshrl.u32 %v4796, 7
          %v4798 = vsub.s32 %v3244, %v4797
          %v4799 = vrot.slane %v2820, %v4798
          %v4800 = vsel %vm3249, %v4799, %v4795
          %v4801 = vlaneseq
          %v4802 = vshrl.u32 %v4801, 7
          %v4803 = vsub.s32 %v3251, %v4802
          %v4804 = vrot.slane %v2821, %v4803
          %v4805 = vsel %vm3256, %v4804, %v4800
          %v4806 = vlaneseq
          %v4807 = vshrl.u32 %v4806, 7
          %v4808 = vsub.s32 %v3258, %v4807
          %v4809 = vrot.slane %v2822, %v4808
          %v4810 = vsel %vm3263, %v4809, %v4805
          %v4811 = vlaneseq
          %v4812 = vshrl.u32 %v4811, 7
          %v4813 = vsub.s32 %v3265, %v4812
          %v4814 = vrot.slane %v2823, %v4813
          %v4815 = vsel %vm3270, %v4814, %v4810
          %v4816 = vlaneseq
          %v4817 = vshrl.u32 %v4816, 7
          %v4818 = vsub.s32 %v3162, %v4817
          %v4819 = vrot.slane %v2824, %v4818
          %v4820 = vlaneseq
          %v4821 = vshrl.u32 %v4820, 7
          %v4822 = vsub.s32 %v3167, %v4821
          %v4823 = vrot.slane %v2825, %v4822
          %v4824 = vsel %vm3172, %v4823, %v4819
          %v4825 = vlaneseq
          %v4826 = vshrl.u32 %v4825, 7
          %v4827 = vsub.s32 %v3174, %v4826
          %v4828 = vrot.slane %v2826, %v4827
          %v4829 = vsel %vm3179, %v4828, %v4824
          %v4830 = vlaneseq
          %v4831 = vshrl.u32 %v4830, 7
          %v4832 = vsub.s32 %v3181, %v4831
          %v4833 = vrot.slane %v2827, %v4832
          %v4834 = vsel %vm3186, %v4833, %v4829
          %v4835 = vlaneseq
          %v4836 = vshrl.u32 %v4835, 7
          %v4837 = vsub.s32 %v3188, %v4836
          %v4838 = vrot.slane %v2828, %v4837
          %v4839 = vsel %vm3193, %v4838, %v4834
          %v4840 = vlaneseq
          %v4841 = vshrl.u32 %v4840, 7
          %v4842 = vsub.s32 %v3195, %v4841
          %v4843 = vrot.slane %v2829, %v4842
          %v4844 = vsel %vm3200, %v4843, %v4839
          %v4845 = vlaneseq
          %v4846 = vshrl.u32 %v4845, 7
          %v4847 = vsub.s32 %v3202, %v4846
          %v4848 = vrot.slane %v2830, %v4847
          %v4849 = vsel %vm3207, %v4848, %v4844
          %v4850 = vlaneseq
          %v4851 = vshrl.u32 %v4850, 7
          %v4852 = vsub.s32 %v3209, %v4851
          %v4853 = vrot.slane %v2831, %v4852
          %v4854 = vsel %vm3214, %v4853, %v4849
          %v4855 = vlaneseq
          %v4856 = vshrl.u32 %v4855, 7
          %v4857 = vsub.s32 %v3216, %v4856
          %v4858 = vrot.slane %v2832, %v4857
          %v4859 = vsel %vm3221, %v4858, %v4854
          %v4860 = vlaneseq
          %v4861 = vshrl.u32 %v4860, 7
          %v4862 = vsub.s32 %v3223, %v4861
          %v4863 = vrot.slane %v2833, %v4862
          %v4864 = vsel %vm3228, %v4863, %v4859
          %v4865 = vlaneseq
          %v4866 = vshrl.u32 %v4865, 7
          %v4867 = vsub.s32 %v3230, %v4866
          %v4868 = vrot.slane %v2834, %v4867
          %v4869 = vsel %vm3235, %v4868, %v4864
          %v4870 = vlaneseq
          %v4871 = vshrl.u32 %v4870, 7
          %v4872 = vsub.s32 %v3237, %v4871
          %v4873 = vrot.slane %v2835, %v4872
          %v4874 = vsel %vm3242, %v4873, %v4869
          %v4875 = vlaneseq
          %v4876 = vshrl.u32 %v4875, 7
          %v4877 = vsub.s32 %v3244, %v4876
          %v4878 = vrot.slane %v2836, %v4877
          %v4879 = vsel %vm3249, %v4878, %v4874
          %v4880 = vlaneseq
          %v4881 = vshrl.u32 %v4880, 7
          %v4882 = vsub.s32 %v3251, %v4881
          %v4883 = vrot.slane %v2837, %v4882
          %v4884 = vsel %vm3256, %v4883, %v4879
          %v4885 = vlaneseq
          %v4886 = vshrl.u32 %v4885, 7
          %v4887 = vsub.s32 %v3258, %v4886
          %v4888 = vrot.slane %v2838, %v4887
          %v4889 = vsel %vm3263, %v4888, %v4884
          %v4890 = vlaneseq
          %v4891 = vshrl.u32 %v4890, 7
          %v4892 = vsub.s32 %v3265, %v4891
          %v4893 = vrot.slane %v2839, %v4892
          %v4894 = vsel %vm3270, %v4893, %v4889
          %v4895 = vsel %vm3509, %v4815, %v4657
          %v4896 = vsel %vm3509, %v4894, %v4736
          %4899 = vmatprep.subr.mxu0 %v4388
          %4900 = vmatpush1.msra.mxu0 %v4387
          %4901 = vmatprep.subr.mxu0 %v4392
          %4902 = vmatpush1.msra.mxu0 %v4391
          %4903 = vmatprep.subr.mxu0 %v4396
          %4904 = vmatpush1.msra.mxu0 %v4395
          %4905 = vmatprep.subr.mxu0 %v4400
          %4906 = vmatpush1.msra.mxu0 %v4399
          %4907 = vmatprep.subr.mxu0 %v4404
          %4908 = vmatpush1.msra.mxu0 %v4403
          %4909 = vmatprep.subr.mxu0 %v4408
          %4910 = vmatpush1.msra.mxu0 %v4407
          %4911 = vmatprep.subr.mxu0 %v4412
          %4912 = vmatpush1.msra.mxu0 %v4411
          %4913 = vmatprep.subr.mxu0 %v4416
          %4914 = vmatpush1.msra.mxu0 %v4415
          %4915 = vmatprep.subr.mxu0 %v4420
          %4916 = vmatpush1.msra.mxu0 %v4419
          %4917 = vmatprep.subr.mxu0 %v4424
          %4918 = vmatpush1.msra.mxu0 %v4423
          %4919 = vmatprep.subr.mxu0 %v4428
          %4920 = vmatpush1.msra.mxu0 %v4427
          %4921 = vmatprep.subr.mxu0 %v4432
          %4922 = vmatpush1.msra.mxu0 %v4431
          %4923 = vmatprep.subr.mxu0 %v4436
          %4924 = vmatpush1.msra.mxu0 %v4435
          %4925 = vmatprep.subr.mxu0 %v4440
          %4926 = vmatpush1.msra.mxu0 %v4439
          %4927 = vmatprep.subr.mxu0 %v4444
          %4928 = vmatpush1.msra.mxu0 %v4443
          %4929 = vmatprep.subr.mxu0 %v4448
          %4930 = vmatpush1.msra.mxu0 %v4447
          %4931 = vmatprep.subr.mxu0 %v4452
          %4932 = vmatpush1.msra.mxu0 %v4451
          %4933 = vmatprep.subr.mxu0 %v4456
          %4934 = vmatpush1.msra.mxu0 %v4455
          %4935 = vmatprep.subr.mxu0 %v4460
          %4936 = vmatpush1.msra.mxu0 %v4459
          %4937 = vmatprep.subr.mxu0 %v4464
          %4938 = vmatpush1.msra.mxu0 %v4463
          %4939 = vmatprep.subr.mxu0 %v4468
          %4940 = vmatpush1.msra.mxu0 %v4467
          %4941 = vmatprep.subr.mxu0 %v4472
          %4942 = vmatpush1.msra.mxu0 %v4471
          %4943 = vmatprep.subr.mxu0 %v4476
          %4944 = vmatpush1.msra.mxu0 %v4475
          %4945 = vmatprep.subr.mxu0 %v4480
          %4946 = vmatpush1.msra.mxu0 %v4479
          %4947 = vmatprep.subr.mxu0 %v4484
          %4948 = vmatpush1.msra.mxu0 %v4483
          %4949 = vmatprep.subr.mxu0 %v4488
          %4950 = vmatpush1.msra.mxu0 %v4487
          %4951 = vmatprep.subr.mxu0 %v4492
          %4952 = vmatpush1.msra.mxu0 %v4491
          %4953 = vmatprep.subr.mxu0 %v4496
          %4954 = vmatpush1.msra.mxu0 %v4495
          %4955 = vmatprep.subr.mxu0 %v4500
          %4956 = vmatpush1.msra.mxu0 %v4499
          %4957 = vmatprep.subr.mxu0 %v4504
          %4958 = vmatpush1.msra.mxu0 %v4503
          %4959 = vmatprep.subr.mxu0 %v4508
          %4960 = vmatpush1.msra.mxu0 %v4507
          %4961 = vmatprep.subr.mxu0 %v4512
          %4962 = vmatpush1.msra.mxu0 %v4511
          %4963 = vmatprep.mubr.f32.mxu0 %v4896
          %4964 = vmatmul.mubr.f32.gmra.mrb[0].mxu0 %v4895
          %v4965 = vpop.f32.mrb[0].mxu0
          %v4966 = vadd.f32 0.0, %v4965
          %v4967 = vpop.f32.mrb[0].mxu0
          %v4968 = vadd.f32 0.0, %v4967
          %4969 = vdwg.mxu0
          %4970 = vmatprep.subr.mxu0 %v4390
          %4971 = vmatpush1.msra.mxu0 %v4389
          %4972 = vmatprep.subr.mxu0 %v4394
          %4973 = vmatpush1.msra.mxu0 %v4393
          %4974 = vmatprep.subr.mxu0 %v4398
          %4975 = vmatpush1.msra.mxu0 %v4397
          %4976 = vmatprep.subr.mxu0 %v4402
          %4977 = vmatpush1.msra.mxu0 %v4401
          %4978 = vmatprep.subr.mxu0 %v4406
          %4979 = vmatpush1.msra.mxu0 %v4405
          %4980 = vmatprep.subr.mxu0 %v4410
          %4981 = vmatpush1.msra.mxu0 %v4409
          %4982 = vmatprep.subr.mxu0 %v4414
          %4983 = vmatpush1.msra.mxu0 %v4413
          %4984 = vmatprep.subr.mxu0 %v4418
          %4985 = vmatpush1.msra.mxu0 %v4417
          %4986 = vmatprep.subr.mxu0 %v4422
          %4987 = vmatpush1.msra.mxu0 %v4421
          %4988 = vmatprep.subr.mxu0 %v4426
          %4989 = vmatpush1.msra.mxu0 %v4425
          %4990 = vmatprep.subr.mxu0 %v4430
          %4991 = vmatpush1.msra.mxu0 %v4429
          %4992 = vmatprep.subr.mxu0 %v4434
          %4993 = vmatpush1.msra.mxu0 %v4433
          %4994 = vmatprep.subr.mxu0 %v4438
          %4995 = vmatpush1.msra.mxu0 %v4437
          %4996 = vmatprep.subr.mxu0 %v4442
          %4997 = vmatpush1.msra.mxu0 %v4441
          %4998 = vmatprep.subr.mxu0 %v4446
          %4999 = vmatpush1.msra.mxu0 %v4445
          %5000 = vmatprep.subr.mxu0 %v4450
          %5001 = vmatpush1.msra.mxu0 %v4449
          %5002 = vmatprep.subr.mxu0 %v4454
          %5003 = vmatpush1.msra.mxu0 %v4453
          %5004 = vmatprep.subr.mxu0 %v4458
          %5005 = vmatpush1.msra.mxu0 %v4457
          %5006 = vmatprep.subr.mxu0 %v4462
          %5007 = vmatpush1.msra.mxu0 %v4461
          %5008 = vmatprep.subr.mxu0 %v4466
          %5009 = vmatpush1.msra.mxu0 %v4465
          %5010 = vmatprep.subr.mxu0 %v4470
          %5011 = vmatpush1.msra.mxu0 %v4469
          %5012 = vmatprep.subr.mxu0 %v4474
          %5013 = vmatpush1.msra.mxu0 %v4473
          %5014 = vmatprep.subr.mxu0 %v4478
          %5015 = vmatpush1.msra.mxu0 %v4477
          %5016 = vmatprep.subr.mxu0 %v4482
          %5017 = vmatpush1.msra.mxu0 %v4481
          %5018 = vmatprep.subr.mxu0 %v4486
          %5019 = vmatpush1.msra.mxu0 %v4485
          %5020 = vmatprep.subr.mxu0 %v4490
          %5021 = vmatpush1.msra.mxu0 %v4489
          %5022 = vmatprep.subr.mxu0 %v4494
          %5023 = vmatpush1.msra.mxu0 %v4493
          %5024 = vmatprep.subr.mxu0 %v4498
          %5025 = vmatpush1.msra.mxu0 %v4497
          %5026 = vmatprep.subr.mxu0 %v4502
          %5027 = vmatpush1.msra.mxu0 %v4501
          %5028 = vmatprep.subr.mxu0 %v4506
          %5029 = vmatpush1.msra.mxu0 %v4505
          %5030 = vmatprep.subr.mxu0 %v4510
          %5031 = vmatpush1.msra.mxu0 %v4509
          %5032 = vmatprep.subr.mxu0 %v4514
          %5033 = vmatpush1.msra.mxu0 %v4513
          %5034 = vmatprep.mubr.f32.mxu0 %v4896
          %5035 = vmatmul.mubr.f32.gmra.mrb[0].mxu0 %v4895
          %v5036 = vpop.f32.mrb[0].mxu0
          %v5037 = vadd.f32 0.0, %v5036
          %v5038 = vpop.f32.mrb[0].mxu0
          %v5039 = vadd.f32 0.0, %v5038
          %5040 = vdwg.mxu0
          %v5105 = vlaneseq
          %v5106 = vshrl.u32 %v5105, 7
          %v5107 = vsub.s32 %v3162, %v5106
          %v5108 = vrot.slane %v2520, %v5107
          %v5109 = vlaneseq
          %v5110 = vshrl.u32 %v5109, 7
          %v5111 = vsub.s32 %v3167, %v5110
          %v5112 = vrot.slane %v2521, %v5111
          %v5113 = vsel %vm3172, %v5112, %v5108
          %v5114 = vlaneseq
          %v5115 = vshrl.u32 %v5114, 7
          %v5116 = vsub.s32 %v3174, %v5115
          %v5117 = vrot.slane %v2522, %v5116
          %v5118 = vsel %vm3179, %v5117, %v5113
          %v5119 = vlaneseq
          %v5120 = vshrl.u32 %v5119, 7
          %v5121 = vsub.s32 %v3181, %v5120
          %v5122 = vrot.slane %v2523, %v5121
          %v5123 = vsel %vm3186, %v5122, %v5118
          %v5124 = vlaneseq
          %v5125 = vshrl.u32 %v5124, 7
          %v5126 = vsub.s32 %v3188, %v5125
          %v5127 = vrot.slane %v2524, %v5126
          %v5128 = vsel %vm3193, %v5127, %v5123
          %v5129 = vlaneseq
          %v5130 = vshrl.u32 %v5129, 7
          %v5131 = vsub.s32 %v3195, %v5130
          %v5132 = vrot.slane %v2525, %v5131
          %v5133 = vsel %vm3200, %v5132, %v5128
          %v5134 = vlaneseq
          %v5135 = vshrl.u32 %v5134, 7
          %v5136 = vsub.s32 %v3202, %v5135
          %v5137 = vrot.slane %v2526, %v5136
          %v5138 = vsel %vm3207, %v5137, %v5133
          %v5139 = vlaneseq
          %v5140 = vshrl.u32 %v5139, 7
          %v5141 = vsub.s32 %v3209, %v5140
          %v5142 = vrot.slane %v2527, %v5141
          %v5143 = vsel %vm3214, %v5142, %v5138
          %v5144 = vlaneseq
          %v5145 = vshrl.u32 %v5144, 7
          %v5146 = vsub.s32 %v3216, %v5145
          %v5147 = vrot.slane %v2528, %v5146
          %v5148 = vsel %vm3221, %v5147, %v5143
          %v5149 = vlaneseq
          %v5150 = vshrl.u32 %v5149, 7
          %v5151 = vsub.s32 %v3223, %v5150
          %v5152 = vrot.slane %v2529, %v5151
          %v5153 = vsel %vm3228, %v5152, %v5148
          %v5154 = vlaneseq
          %v5155 = vshrl.u32 %v5154, 7
          %v5156 = vsub.s32 %v3230, %v5155
          %v5157 = vrot.slane %v2530, %v5156
          %v5158 = vsel %vm3235, %v5157, %v5153
          %v5159 = vlaneseq
          %v5160 = vshrl.u32 %v5159, 7
          %v5161 = vsub.s32 %v3237, %v5160
          %v5162 = vrot.slane %v2531, %v5161
          %v5163 = vsel %vm3242, %v5162, %v5158
          %v5164 = vlaneseq
          %v5165 = vshrl.u32 %v5164, 7
          %v5166 = vsub.s32 %v3244, %v5165
          %v5167 = vrot.slane %v2532, %v5166
          %v5168 = vsel %vm3249, %v5167, %v5163
          %v5169 = vlaneseq
          %v5170 = vshrl.u32 %v5169, 7
          %v5171 = vsub.s32 %v3251, %v5170
          %v5172 = vrot.slane %v2533, %v5171
          %v5173 = vsel %vm3256, %v5172, %v5168
          %v5174 = vlaneseq
          %v5175 = vshrl.u32 %v5174, 7
          %v5176 = vsub.s32 %v3258, %v5175
          %v5177 = vrot.slane %v2534, %v5176
          %v5178 = vsel %vm3263, %v5177, %v5173
          %v5179 = vlaneseq
          %v5180 = vshrl.u32 %v5179, 7
          %v5181 = vsub.s32 %v3265, %v5180
          %v5182 = vrot.slane %v2535, %v5181
          %v5183 = vsel %vm3270, %v5182, %v5178
          %v5184 = vlaneseq
          %v5185 = vshrl.u32 %v5184, 7
          %v5186 = vsub.s32 %v3162, %v5185
          %v5187 = vrot.slane %v2536, %v5186
          %v5188 = vlaneseq
          %v5189 = vshrl.u32 %v5188, 7
          %v5190 = vsub.s32 %v3167, %v5189
          %v5191 = vrot.slane %v2537, %v5190
          %v5192 = vsel %vm3172, %v5191, %v5187
          %v5193 = vlaneseq
          %v5194 = vshrl.u32 %v5193, 7
          %v5195 = vsub.s32 %v3174, %v5194
          %v5196 = vrot.slane %v2538, %v5195
          %v5197 = vsel %vm3179, %v5196, %v5192
          %v5198 = vlaneseq
          %v5199 = vshrl.u32 %v5198, 7
          %v5200 = vsub.s32 %v3181, %v5199
          %v5201 = vrot.slane %v2539, %v5200
          %v5202 = vsel %vm3186, %v5201, %v5197
          %v5203 = vlaneseq
          %v5204 = vshrl.u32 %v5203, 7
          %v5205 = vsub.s32 %v3188, %v5204
          %v5206 = vrot.slane %v2540, %v5205
          %v5207 = vsel %vm3193, %v5206, %v5202
          %v5208 = vlaneseq
          %v5209 = vshrl.u32 %v5208, 7
          %v5210 = vsub.s32 %v3195, %v5209
          %v5211 = vrot.slane %v2541, %v5210
          %v5212 = vsel %vm3200, %v5211, %v5207
          %v5213 = vlaneseq
          %v5214 = vshrl.u32 %v5213, 7
          %v5215 = vsub.s32 %v3202, %v5214
          %v5216 = vrot.slane %v2542, %v5215
          %v5217 = vsel %vm3207, %v5216, %v5212
          %v5218 = vlaneseq
          %v5219 = vshrl.u32 %v5218, 7
          %v5220 = vsub.s32 %v3209, %v5219
          %v5221 = vrot.slane %v2543, %v5220
          %v5222 = vsel %vm3214, %v5221, %v5217
          %v5223 = vlaneseq
          %v5224 = vshrl.u32 %v5223, 7
          %v5225 = vsub.s32 %v3216, %v5224
          %v5226 = vrot.slane %v2544, %v5225
          %v5227 = vsel %vm3221, %v5226, %v5222
          %v5228 = vlaneseq
          %v5229 = vshrl.u32 %v5228, 7
          %v5230 = vsub.s32 %v3223, %v5229
          %v5231 = vrot.slane %v2545, %v5230
          %v5232 = vsel %vm3228, %v5231, %v5227
          %v5233 = vlaneseq
          %v5234 = vshrl.u32 %v5233, 7
          %v5235 = vsub.s32 %v3230, %v5234
          %v5236 = vrot.slane %v2546, %v5235
          %v5237 = vsel %vm3235, %v5236, %v5232
          %v5238 = vlaneseq
          %v5239 = vshrl.u32 %v5238, 7
          %v5240 = vsub.s32 %v3237, %v5239
          %v5241 = vrot.slane %v2547, %v5240
          %v5242 = vsel %vm3242, %v5241, %v5237
          %v5243 = vlaneseq
          %v5244 = vshrl.u32 %v5243, 7
          %v5245 = vsub.s32 %v3244, %v5244
          %v5246 = vrot.slane %v2548, %v5245
          %v5247 = vsel %vm3249, %v5246, %v5242
          %v5248 = vlaneseq
          %v5249 = vshrl.u32 %v5248, 7
          %v5250 = vsub.s32 %v3251, %v5249
          %v5251 = vrot.slane %v2549, %v5250
          %v5252 = vsel %vm3256, %v5251, %v5247
          %v5253 = vlaneseq
          %v5254 = vshrl.u32 %v5253, 7
          %v5255 = vsub.s32 %v3258, %v5254
          %v5256 = vrot.slane %v2550, %v5255
          %v5257 = vsel %vm3263, %v5256, %v5252
          %v5258 = vlaneseq
          %v5259 = vshrl.u32 %v5258, 7
          %v5260 = vsub.s32 %v3265, %v5259
          %v5261 = vrot.slane %v2551, %v5260
          %v5262 = vsel %vm3270, %v5261, %v5257
          %v5263 = vlaneseq
          %v5264 = vshrl.u32 %v5263, 7
          %v5265 = vsub.s32 %v3162, %v5264
          %v5266 = vrot.slane %v2552, %v5265
          %v5267 = vlaneseq
          %v5268 = vshrl.u32 %v5267, 7
          %v5269 = vsub.s32 %v3167, %v5268
          %v5270 = vrot.slane %v2553, %v5269
          %v5271 = vsel %vm3172, %v5270, %v5266
          %v5272 = vlaneseq
          %v5273 = vshrl.u32 %v5272, 7
          %v5274 = vsub.s32 %v3174, %v5273
          %v5275 = vrot.slane %v2554, %v5274
          %v5276 = vsel %vm3179, %v5275, %v5271
          %v5277 = vlaneseq
          %v5278 = vshrl.u32 %v5277, 7
          %v5279 = vsub.s32 %v3181, %v5278
          %v5280 = vrot.slane %v2555, %v5279
          %v5281 = vsel %vm3186, %v5280, %v5276
          %v5282 = vlaneseq
          %v5283 = vshrl.u32 %v5282, 7
          %v5284 = vsub.s32 %v3188, %v5283
          %v5285 = vrot.slane %v2556, %v5284
          %v5286 = vsel %vm3193, %v5285, %v5281
          %v5287 = vlaneseq
          %v5288 = vshrl.u32 %v5287, 7
          %v5289 = vsub.s32 %v3195, %v5288
          %v5290 = vrot.slane %v2557, %v5289
          %v5291 = vsel %vm3200, %v5290, %v5286
          %v5292 = vlaneseq
          %v5293 = vshrl.u32 %v5292, 7
          %v5294 = vsub.s32 %v3202, %v5293
          %v5295 = vrot.slane %v2558, %v5294
          %v5296 = vsel %vm3207, %v5295, %v5291
          %v5297 = vlaneseq
          %v5298 = vshrl.u32 %v5297, 7
          %v5299 = vsub.s32 %v3209, %v5298
          %v5300 = vrot.slane %v2559, %v5299
          %v5301 = vsel %vm3214, %v5300, %v5296
          %v5302 = vlaneseq
          %v5303 = vshrl.u32 %v5302, 7
          %v5304 = vsub.s32 %v3216, %v5303
          %v5305 = vrot.slane %v2560, %v5304
          %v5306 = vsel %vm3221, %v5305, %v5301
          %v5307 = vlaneseq
          %v5308 = vshrl.u32 %v5307, 7
          %v5309 = vsub.s32 %v3223, %v5308
          %v5310 = vrot.slane %v2561, %v5309
          %v5311 = vsel %vm3228, %v5310, %v5306
          %v5312 = vlaneseq
          %v5313 = vshrl.u32 %v5312, 7
          %v5314 = vsub.s32 %v3230, %v5313
          %v5315 = vrot.slane %v2562, %v5314
          %v5316 = vsel %vm3235, %v5315, %v5311
          %v5317 = vlaneseq
          %v5318 = vshrl.u32 %v5317, 7
          %v5319 = vsub.s32 %v3237, %v5318
          %v5320 = vrot.slane %v2563, %v5319
          %v5321 = vsel %vm3242, %v5320, %v5316
          %v5322 = vlaneseq
          %v5323 = vshrl.u32 %v5322, 7
          %v5324 = vsub.s32 %v3244, %v5323
          %v5325 = vrot.slane %v2564, %v5324
          %v5326 = vsel %vm3249, %v5325, %v5321
          %v5327 = vlaneseq
          %v5328 = vshrl.u32 %v5327, 7
          %v5329 = vsub.s32 %v3251, %v5328
          %v5330 = vrot.slane %v2565, %v5329
          %v5331 = vsel %vm3256, %v5330, %v5326
          %v5332 = vlaneseq
          %v5333 = vshrl.u32 %v5332, 7
          %v5334 = vsub.s32 %v3258, %v5333
          %v5335 = vrot.slane %v2566, %v5334
          %v5336 = vsel %vm3263, %v5335, %v5331
          %v5337 = vlaneseq
          %v5338 = vshrl.u32 %v5337, 7
          %v5339 = vsub.s32 %v3265, %v5338
          %v5340 = vrot.slane %v2567, %v5339
          %v5341 = vsel %vm3270, %v5340, %v5336
          %v5342 = vlaneseq
          %v5343 = vshrl.u32 %v5342, 7
          %v5344 = vsub.s32 %v3162, %v5343
          %v5345 = vrot.slane %v2568, %v5344
          %v5346 = vlaneseq
          %v5347 = vshrl.u32 %v5346, 7
          %v5348 = vsub.s32 %v3167, %v5347
          %v5349 = vrot.slane %v2569, %v5348
          %v5350 = vsel %vm3172, %v5349, %v5345
          %v5351 = vlaneseq
          %v5352 = vshrl.u32 %v5351, 7
          %v5353 = vsub.s32 %v3174, %v5352
          %v5354 = vrot.slane %v2570, %v5353
          %v5355 = vsel %vm3179, %v5354, %v5350
          %v5356 = vlaneseq
          %v5357 = vshrl.u32 %v5356, 7
          %v5358 = vsub.s32 %v3181, %v5357
          %v5359 = vrot.slane %v2571, %v5358
          %v5360 = vsel %vm3186, %v5359, %v5355
          %v5361 = vlaneseq
          %v5362 = vshrl.u32 %v5361, 7
          %v5363 = vsub.s32 %v3188, %v5362
          %v5364 = vrot.slane %v2572, %v5363
          %v5365 = vsel %vm3193, %v5364, %v5360
          %v5366 = vlaneseq
          %v5367 = vshrl.u32 %v5366, 7
          %v5368 = vsub.s32 %v3195, %v5367
          %v5369 = vrot.slane %v2573, %v5368
          %v5370 = vsel %vm3200, %v5369, %v5365
          %v5371 = vlaneseq
          %v5372 = vshrl.u32 %v5371, 7
          %v5373 = vsub.s32 %v3202, %v5372
          %v5374 = vrot.slane %v2574, %v5373
          %v5375 = vsel %vm3207, %v5374, %v5370
          %v5376 = vlaneseq
          %v5377 = vshrl.u32 %v5376, 7
          %v5378 = vsub.s32 %v3209, %v5377
          %v5379 = vrot.slane %v2575, %v5378
          %v5380 = vsel %vm3214, %v5379, %v5375
          %v5381 = vlaneseq
          %v5382 = vshrl.u32 %v5381, 7
          %v5383 = vsub.s32 %v3216, %v5382
          %v5384 = vrot.slane %v2576, %v5383
          %v5385 = vsel %vm3221, %v5384, %v5380
          %v5386 = vlaneseq
          %v5387 = vshrl.u32 %v5386, 7
          %v5388 = vsub.s32 %v3223, %v5387
          %v5389 = vrot.slane %v2577, %v5388
          %v5390 = vsel %vm3228, %v5389, %v5385
          %v5391 = vlaneseq
          %v5392 = vshrl.u32 %v5391, 7
          %v5393 = vsub.s32 %v3230, %v5392
          %v5394 = vrot.slane %v2578, %v5393
          %v5395 = vsel %vm3235, %v5394, %v5390
          %v5396 = vlaneseq
          %v5397 = vshrl.u32 %v5396, 7
          %v5398 = vsub.s32 %v3237, %v5397
          %v5399 = vrot.slane %v2579, %v5398
          %v5400 = vsel %vm3242, %v5399, %v5395
          %v5401 = vlaneseq
          %v5402 = vshrl.u32 %v5401, 7
          %v5403 = vsub.s32 %v3244, %v5402
          %v5404 = vrot.slane %v2580, %v5403
          %v5405 = vsel %vm3249, %v5404, %v5400
          %v5406 = vlaneseq
          %v5407 = vshrl.u32 %v5406, 7
          %v5408 = vsub.s32 %v3251, %v5407
          %v5409 = vrot.slane %v2581, %v5408
          %v5410 = vsel %vm3256, %v5409, %v5405
          %v5411 = vlaneseq
          %v5412 = vshrl.u32 %v5411, 7
          %v5413 = vsub.s32 %v3258, %v5412
          %v5414 = vrot.slane %v2582, %v5413
          %v5415 = vsel %vm3263, %v5414, %v5410
          %v5416 = vlaneseq
          %v5417 = vshrl.u32 %v5416, 7
          %v5418 = vsub.s32 %v3265, %v5417
          %v5419 = vrot.slane %v2583, %v5418
          %v5420 = vsel %vm3270, %v5419, %v5415
          %v5421 = vsel %vm3509, %v5341, %v5183
          %v5422 = vsel %vm3509, %v5420, %v5262
          %5425 = vmatprep.subr.mxu0 %v4259
          %5426 = vmatpush1.msra.mxu0 %v4258
          %5427 = vmatprep.subr.mxu0 %v4263
          %5428 = vmatpush1.msra.mxu0 %v4262
          %5429 = vmatprep.subr.mxu0 %v4267
          %5430 = vmatpush1.msra.mxu0 %v4266
          %5431 = vmatprep.subr.mxu0 %v4271
          %5432 = vmatpush1.msra.mxu0 %v4270
          %5433 = vmatprep.subr.mxu0 %v4275
          %5434 = vmatpush1.msra.mxu0 %v4274
          %5435 = vmatprep.subr.mxu0 %v4279
          %5436 = vmatpush1.msra.mxu0 %v4278
          %5437 = vmatprep.subr.mxu0 %v4283
          %5438 = vmatpush1.msra.mxu0 %v4282
          %5439 = vmatprep.subr.mxu0 %v4287
          %5440 = vmatpush1.msra.mxu0 %v4286
          %5441 = vmatprep.subr.mxu0 %v4291
          %5442 = vmatpush1.msra.mxu0 %v4290
          %5443 = vmatprep.subr.mxu0 %v4295
          %5444 = vmatpush1.msra.mxu0 %v4294
          %5445 = vmatprep.subr.mxu0 %v4299
          %5446 = vmatpush1.msra.mxu0 %v4298
          %5447 = vmatprep.subr.mxu0 %v4303
          %5448 = vmatpush1.msra.mxu0 %v4302
          %5449 = vmatprep.subr.mxu0 %v4307
          %5450 = vmatpush1.msra.mxu0 %v4306
          %5451 = vmatprep.subr.mxu0 %v4311
          %5452 = vmatpush1.msra.mxu0 %v4310
          %5453 = vmatprep.subr.mxu0 %v4315
          %5454 = vmatpush1.msra.mxu0 %v4314
          %5455 = vmatprep.subr.mxu0 %v4319
          %5456 = vmatpush1.msra.mxu0 %v4318
          %5457 = vmatprep.subr.mxu0 %v4323
          %5458 = vmatpush1.msra.mxu0 %v4322
          %5459 = vmatprep.subr.mxu0 %v4327
          %5460 = vmatpush1.msra.mxu0 %v4326
          %5461 = vmatprep.subr.mxu0 %v4331
          %5462 = vmatpush1.msra.mxu0 %v4330
          %5463 = vmatprep.subr.mxu0 %v4335
          %5464 = vmatpush1.msra.mxu0 %v4334
          %5465 = vmatprep.subr.mxu0 %v4339
          %5466 = vmatpush1.msra.mxu0 %v4338
          %5467 = vmatprep.subr.mxu0 %v4343
          %5468 = vmatpush1.msra.mxu0 %v4342
          %5469 = vmatprep.subr.mxu0 %v4347
          %5470 = vmatpush1.msra.mxu0 %v4346
          %5471 = vmatprep.subr.mxu0 %v4351
          %5472 = vmatpush1.msra.mxu0 %v4350
          %5473 = vmatprep.subr.mxu0 %v4355
          %5474 = vmatpush1.msra.mxu0 %v4354
          %5475 = vmatprep.subr.mxu0 %v4359
          %5476 = vmatpush1.msra.mxu0 %v4358
          %5477 = vmatprep.subr.mxu0 %v4363
          %5478 = vmatpush1.msra.mxu0 %v4362
          %5479 = vmatprep.subr.mxu0 %v4367
          %5480 = vmatpush1.msra.mxu0 %v4366
          %5481 = vmatprep.subr.mxu0 %v4371
          %5482 = vmatpush1.msra.mxu0 %v4370
          %5483 = vmatprep.subr.mxu0 %v4375
          %5484 = vmatpush1.msra.mxu0 %v4374
          %5485 = vmatprep.subr.mxu0 %v4379
          %5486 = vmatpush1.msra.mxu0 %v4378
          %5487 = vmatprep.subr.mxu0 %v4383
          %5488 = vmatpush1.msra.mxu0 %v4382
          %5489 = vmatprep.mubr.f32.mxu0 %v5422
          %5490 = vmatmul.mubr.f32.gmra.mrb[0].mxu0 %v5421
          %v5491 = vpop.f32.mrb[0].mxu0
          %v5492 = vadd.f32 %v4966, %v5491
          %v5493 = vpop.f32.mrb[0].mxu0
          %v5494 = vadd.f32 %v4968, %v5493
          %5495 = vdwg.mxu0
          %5496 = vmatprep.subr.mxu0 %v4261
          %5497 = vmatpush1.msra.mxu0 %v4260
          %5498 = vmatprep.subr.mxu0 %v4265
          %5499 = vmatpush1.msra.mxu0 %v4264
          %5500 = vmatprep.subr.mxu0 %v4269
          %5501 = vmatpush1.msra.mxu0 %v4268
          %5502 = vmatprep.subr.mxu0 %v4273
          %5503 = vmatpush1.msra.mxu0 %v4272
          %5504 = vmatprep.subr.mxu0 %v4277
          %5505 = vmatpush1.msra.mxu0 %v4276
          %5506 = vmatprep.subr.mxu0 %v4281
          %5507 = vmatpush1.msra.mxu0 %v4280
          %5508 = vmatprep.subr.mxu0 %v4285
          %5509 = vmatpush1.msra.mxu0 %v4284
          %5510 = vmatprep.subr.mxu0 %v4289
          %5511 = vmatpush1.msra.mxu0 %v4288
          %5512 = vmatprep.subr.mxu0 %v4293
          %5513 = vmatpush1.msra.mxu0 %v4292
          %5514 = vmatprep.subr.mxu0 %v4297
          %5515 = vmatpush1.msra.mxu0 %v4296
          %5516 = vmatprep.subr.mxu0 %v4301
          %5517 = vmatpush1.msra.mxu0 %v4300
          %5518 = vmatprep.subr.mxu0 %v4305
          %5519 = vmatpush1.msra.mxu0 %v4304
          %5520 = vmatprep.subr.mxu0 %v4309
          %5521 = vmatpush1.msra.mxu0 %v4308
          %5522 = vmatprep.subr.mxu0 %v4313
          %5523 = vmatpush1.msra.mxu0 %v4312
          %5524 = vmatprep.subr.mxu0 %v4317
          %5525 = vmatpush1.msra.mxu0 %v4316
          %5526 = vmatprep.subr.mxu0 %v4321
          %5527 = vmatpush1.msra.mxu0 %v4320
          %5528 = vmatprep.subr.mxu0 %v4325
          %5529 = vmatpush1.msra.mxu0 %v4324
          %5530 = vmatprep.subr.mxu0 %v4329
          %5531 = vmatpush1.msra.mxu0 %v4328
          %5532 = vmatprep.subr.mxu0 %v4333
          %5533 = vmatpush1.msra.mxu0 %v4332
          %5534 = vmatprep.subr.mxu0 %v4337
          %5535 = vmatpush1.msra.mxu0 %v4336
          %5536 = vmatprep.subr.mxu0 %v4341
          %5537 = vmatpush1.msra.mxu0 %v4340
          %5538 = vmatprep.subr.mxu0 %v4345
          %5539 = vmatpush1.msra.mxu0 %v4344
          %5540 = vmatprep.subr.mxu0 %v4349
          %5541 = vmatpush1.msra.mxu0 %v4348
          %5542 = vmatprep.subr.mxu0 %v4353
          %5543 = vmatpush1.msra.mxu0 %v4352
          %5544 = vmatprep.subr.mxu0 %v4357
          %5545 = vmatpush1.msra.mxu0 %v4356
          %5546 = vmatprep.subr.mxu0 %v4361
          %5547 = vmatpush1.msra.mxu0 %v4360
          %5548 = vmatprep.subr.mxu0 %v4365
          %5549 = vmatpush1.msra.mxu0 %v4364
          %5550 = vmatprep.subr.mxu0 %v4369
          %5551 = vmatpush1.msra.mxu0 %v4368
          %5552 = vmatprep.subr.mxu0 %v4373
          %5553 = vmatpush1.msra.mxu0 %v4372
          %5554 = vmatprep.subr.mxu0 %v4377
          %5555 = vmatpush1.msra.mxu0 %v4376
          %5556 = vmatprep.subr.mxu0 %v4381
          %5557 = vmatpush1.msra.mxu0 %v4380
          %5558 = vmatprep.subr.mxu0 %v4385
          %5559 = vmatpush1.msra.mxu0 %v4384
          %5560 = vmatprep.mubr.f32.mxu0 %v5422
          %5561 = vmatmul.mubr.f32.gmra.mrb[0].mxu0 %v5421
          %v5562 = vpop.f32.mrb[0].mxu0
          %v5563 = vadd.f32 %v5037, %v5562
          %v5564 = vpop.f32.mrb[0].mxu0
          %v5565 = vadd.f32 %v5039, %v5564
          %5566 = vdwg.mxu0
          %s5567 = scalar_lea.vmem [#allocation15], 4
          %v5568 = vld [vmem:[%s5567] sm:$0xf]
          %v5570 = vlaneseq
          %v5571 = vshrl.u32 %v5570, 7
          %v5572 = vsub.s32 0, %v5571
          %v5573 = vrot.slane %v5568, %v5572
          %v5574 = vlaneseq
          %v5575 = vshrl.u32 %v5574, 7
          %v5576 = vsub.s32 1, %v5575
          %v5577 = vrot.slane %v5568, %v5576
          %v5578 = vlaneseq
          %v5579 = vshrl.u32 %v5578, 7
          %v5580 = vsub.s32 2, %v5579
          %v5581 = vrot.slane %v5568, %v5580
          %v5582 = vlaneseq
          %v5583 = vshrl.u32 %v5582, 7
          %v5584 = vsub.s32 3, %v5583
          %v5585 = vrot.slane %v5568, %v5584
          %v5590 = vadd.f32 %v5492, %v5573
          %v5591 = vadd.f32 %v5494, %v5577
          %v5592 = vadd.f32 %v5563, %v5581
          %v5593 = vadd.f32 %v5565, %v5585
          %v5594 = vmax.f32 %v5590, 0.0
          %v5595 = vmax.f32 %v5591, 0.0
          %v5596 = vmax.f32 %v5592, 0.0
          %v5597 = vmax.f32 %v5593, 0.0
          %s5598 = scalar_lea.vmem [#allocation17], 4
          %v5599 = vld [vmem:[%s5598] sm:$0xf]
          %v5601 = vlaneseq
          %v5602 = vshrl.u32 %v5601, 7
          %v5603 = vsub.s32 0, %v5602
          %v5604 = vrot.slane %v5599, %v5603
          %v5605 = vlaneseq
          %v5606 = vshrl.u32 %v5605, 7
          %v5607 = vsub.s32 1, %v5606
          %v5608 = vrot.slane %v5599, %v5607
          %v5609 = vlaneseq
          %v5610 = vshrl.u32 %v5609, 7
          %v5611 = vsub.s32 2, %v5610
          %v5612 = vrot.slane %v5599, %v5611
          %v5613 = vlaneseq
          %v5614 = vshrl.u32 %v5613, 7
          %v5615 = vsub.s32 3, %v5614
          %v5616 = vrot.slane %v5599, %v5615
          %v5621 = vmul.f32 %v5594, %v5604
          %v5622 = vmul.f32 %v5595, %v5608
          %v5623 = vmul.f32 %v5596, %v5612
          %v5624 = vmul.f32 %v5597, %v5616
          %v5625 = vsel %vm4238, %v5621, 0.0
          %v5626 = vsel %vm4238, %v5622, 0.0
          %v5627 = vadd.f32 %v5625, %v5626
          %v5628 = vsel %vm4238, %v5623, 0.0
          %v5629 = vadd.f32 %v5627, %v5628
          %v5630 = vsel %vm4238, %v5624, 0.0
          %v5631 = vadd.f32 %v5629, %v5630
          %5632 = vadd.xlane.f32.xlu0 %v5631
          %v5633 = vpop.xlane.xlu0 %5632
          %s5634 = sld [smem:[#allocation18 + $0x1]]
          %v5635 = vstv %s5634
          %v5636 = vadd.f32 %v5633, %v5635
          %v5637 = vxor.u32 %v5636, 2147483648
          %v5638 = vmul.f32 %v5637, 1.442695
          %v5639 = vpow.pop %v5638
          %v5640 = vadd.f32 %v5639, 1.0
          %v5641 = vrcp.pop %v5640
          %v5642 = vmul.f32 1.0, %v5641
          %v5643 = vadd.f32 %v4256, %v5642
          %v5644 = vmul.f32 %v5643, 0.5
          %vm5645 = vcmask 1024
          %5646 = vst.msk [vmem:[%s527] sm:$0x3] %vm5645, %v5644
        $region92: #{tpu_custom_call.1} parent=51 // pred_fallthru
          _
        %p5647 = scmp.lt.s32.totalorder %s34, 0
        %s5648 = scalar_select %p5647, %s34, 0
        %s5649 = smul.addr %s5648, 2
        %s5650 = scalar_lea.vmem %s8, %s5649
        // Predicated region
        $region93: #{tpu_custom_call.1} parent=51 // pred_check
          %p5651 = pneg %p256
        $region94: #{tpu_custom_call.1} parent=51 // pred_check_branch
          %5653 = sbr.rel (%p5651) target = $region96
        $region95: #{tpu_custom_call.1} parent=51 // pred_region
          _
        $region96: #{tpu_custom_call.1} parent=51 // pred_fallthru
          _
        // Predicated region
        $region97: #{tpu_custom_call.1} parent=51 // pred_check
          %p5654 = pneg %p256
        $region98: #{tpu_custom_call.1} parent=51 // pred_check_branch
          %5656 = sbr.rel (%p5654) target = $region100
        $region99: #{tpu_custom_call.1} parent=51 // pred_region
          %p5657 = scmp.lt.s32.totalorder %s34, 0
          %s5658 = scalar_select %p5657, %s34, 0
          %s5659 = smul.addr %s5658, 2
          %s5660 = scalar_lea.vmem %s8, %s5659
        $region100: #{tpu_custom_call.1} parent=51 // pred_fallthru
          _
      $region52: #{tpu_custom_call.1} parent=5 // pred_fallthru
        _
      %p5661 = scmp.le.s32.totalorder 2, %s25
      // Predicated region
      $region101: #{tpu_custom_call.1} parent=5 // pred_check
        %p5662 = pneg %p5661
      $region102: #{tpu_custom_call.1} parent=5 // pred_check_branch
        %5664 = sbr.rel (%p5662) target = $region104
      $region103: #{tpu_custom_call.1} parent=5 // pred_region
        %s5665 = ssub.s32 %s25, 2
      $region104: #{tpu_custom_call.1} parent=5 // pred_fallthru
        _
    $region6: #{tpu_custom_call.1} parent=1 // loop_footer
      %s29 = sadd.s32 1, %s25
    $region7: #{tpu_custom_call.1} parent=1 // loop_footer_branch
      %24 = sbr.rel target = $region3
    $region8: #{tpu_custom_call.1} parent=1 // loop_exit
      _
    %5666 = vsyncpa [#allocation7], 1
    %s5667 = scalar_lea.sflag [#allocation7], 1
    %5668 = vsyncpa %s5667, 1
    %5669 = vsyncpa [#allocation10], 1
    %s5670 = scalar_lea.sflag [#allocation10], 1
    %5671 = vsyncpa %s5670, 1
    %5672 = vsyncpa [#allocation13], 1
    %s5673 = scalar_lea.sflag [#allocation13], 1
    %5674 = vsyncpa %s5673, 1
    %5675 = vsyncpa [#allocation16], 1
    %5676 = vsyncpa [#allocation8], 1
    %s5677 = scalar_lea.sflag [#allocation8], 1
    %5678 = vsyncpa %s5677, 1

</llo_original>
